<compile_context>
chip_gen: v5e
topology: v5e:2x2
jax: 0.10.0
libtpu: 0.0.40
codegen_flags: <defaults>
</compile_context>

<pallas_src>
import functools

import jax
import jax.numpy as jnp
from jax.experimental import pallas as pl
from jax.experimental.pallas import tpu as pltpu


LAYER_NAMES = ("in", "1", "2", "3", "4", "3d", "2d", "1d")
LAYER_DILATIONS = (1, 1, 2, 4, 8, 4, 2, 1)
_UNIQUE_DILATIONS = tuple(sorted(set(LAYER_DILATIONS)))   # (1, 2, 4, 8)


def _round_up(n, m):
    return ((n + m - 1) // m) * m


# ---------------------------------------------------------------------------
# Fused RSU4F kernel (one grid step == one batch element)
# ---------------------------------------------------------------------------
def _rsu4f_kernel(x_ref, masks_ref, *rest, img_w, s, lpad, dil_to_idx,
                  compute_dtype):
    # x_ref    : (1, Cin_p, S)      one image, channel-major, flat spatial (bf16)
    # masks_ref: (n_dil*2, S)       horizontal-wrap validity, rows = (dil, kx in {0,2})
    # rest     : 16 weight/bias refs (w9_i: (9, Cout_p, Cin_tot_p) bf16,
    #            b_i: (Cout_p, 1) f32), then o_ref (1, Cout_p, S),
    #            then slab_ref (C_max, S + 2*lpad) bf16 scratch.
    o_ref = rest[-2]
    slab_ref = rest[-1]
    wb = rest[:-2]

    c_max = slab_ref.shape[0]
    # Zero only the halo columns each step (interior is fully rewritten by each
    # layer's staging before it is read; halos are never written afterwards).
    zeros_halo = jnp.zeros((c_max, lpad), slab_ref.dtype)
    slab_ref[:, pl.ds(0, lpad)] = zeros_halo
    slab_ref[:, pl.ds(lpad + s, lpad)] = zeros_halo

    def conv_bn_relu(parts, layer, dilation, out_dtype):
        """parts: list of (C_i, S) tensors (the torch.cat operands, already
        channel-padded).  Returns ReLU(dilated 3x3 conv + folded-BN bias)."""
        w_ref = wb[2 * layer]                           # (9, Cout_p, Cin_tot_p) bf16
        b = wb[2 * layer + 1][...]                      # (Cout_p, 1)            f32

        # Stage each concat operand directly into its sublane range of the
        # zero-haloed slab (no materialized concatenation).
        off = 0
        for p in parts:
            c = p.shape[0]
            slab_ref[pl.ds(off, c), pl.ds(lpad, s)] = p.astype(compute_dtype)
            off += c
        cin = off

        base = dil_to_idx[dilation] * 2
        acc = None
        for ky in range(3):
            for kx in range(3):
                delta = ((ky - 1) * img_w + (kx - 1)) * dilation
                shifted = slab_ref[pl.ds(0, cin), pl.ds(lpad + delta, s)]
                if kx != 1:
                    # Only horizontal wrap needs masking; vertical OOB already
                    # reads the zero halo.
                    m = masks_ref[pl.ds(base + (0 if kx == 0 else 1), 1), :]
                    shifted = shifted * m
                d = jnp.dot(w_ref[ky * 3 + kx], shifted,
                            preferred_element_type=jnp.float32)
                acc = d if acc is None else acc + d
        return jnp.maximum(acc + b, 0.0).astype(out_dtype)

    cd = compute_dtype
    hxin = conv_bn_relu([x_ref[0]], 0, 1, jnp.float32)      # f32: residual operand
    hx1 = conv_bn_relu([hxin], 1, 1, cd)
    hx2 = conv_bn_relu([hx1], 2, 2, cd)
    hx3 = conv_bn_relu([hx2], 3, 4, cd)
    hx4 = conv_bn_relu([hx3], 4, 8, cd)
    # torch.cat((a, b), dim=1) == staging a then b into adjacent sublane ranges
    hx3d = conv_bn_relu([hx4, hx3], 5, 4, cd)
    hx2d = conv_bn_relu([hx3d, hx2], 6, 2, cd)
    hx1d = conv_bn_relu([hx2d, hx1], 7, 1, jnp.float32)

    o_ref[0] = (hx1d + hxin).astype(o_ref.dtype)            # residual add (f32)


# ---------------------------------------------------------------------------
# Host-side helpers: masks, BN folding, channel padding, tap packing
# ---------------------------------------------------------------------------
def _build_tap_masks(h, w, dtype):
    """(len(dilations)*2, h*w) 0/1 masks for horizontal wrap only.

    Row (2*d_idx + 0): tap kx=0 (dx=-d) valid  <=>  x >= d
    Row (2*d_idx + 1): tap kx=2 (dx=+d) valid  <=>  x <  w - d
    Vertical out-of-bounds needs no mask: those reads land in the zero halo of
    the flat slab (requires lpad >= max_dil*(w+1), preserved below).
    """
    xx = jnp.arange(w).reshape(1, w)
    rows = []
    for d in _UNIQUE_DILATIONS:
        left_ok = jnp.broadcast_to(xx >= d, (h, w)).reshape(h * w)
        right_ok = jnp.broadcast_to(xx < w - d, (h, w)).reshape(h * w)
        rows.append(left_ok)
        rows.append(right_ok)
    return jnp.stack(rows, axis=0).astype(dtype)


def make_rebnconv_params(key, in_ch, out_ch, eps=1e-5):
    """Deterministic synthetic conv + eval-mode BN params, BN folded into conv (f32)."""
    k1, k2, k3, k4, k5, k6 = jax.random.split(key, 6)
    w = 0.1 * jax.random.normal(k1, (3, 3, in_ch, out_ch), jnp.float32)   # HWIO
    conv_b = 0.1 * jax.random.normal(k2, (out_ch,), jnp.float32)
    gamma = 1.0 + 0.1 * jax.random.normal(k3, (out_ch,), jnp.float32)
    beta = 0.1 * jax.random.normal(k4, (out_ch,), jnp.float32)
    r_mean = 0.1 * jax.random.normal(k5, (out_ch,), jnp.float32)
    r_var = jnp.abs(jax.random.normal(k6, (out_ch,), jnp.float32)) + 0.5
    scale = gamma / jnp.sqrt(r_var + eps)
    return w * scale, beta + (conv_b - r_mean) * scale


def make_rsu4f_params(key, in_ch=3, mid_ch=12, out_ch=3):
    keys = jax.random.split(key, 8)
    return {
        "in": make_rebnconv_params(keys[0], in_ch, out_ch),
        "1": make_rebnconv_params(keys[1], out_ch, mid_ch),
        "2": make_rebnconv_params(keys[2], mid_ch, mid_ch),
        "3": make_rebnconv_params(keys[3], mid_ch, mid_ch),
        "4": make_rebnconv_params(keys[4], mid_ch, mid_ch),
        "3d": make_rebnconv_params(keys[5], 2 * mid_ch, mid_ch),
        "2d": make_rebnconv_params(keys[6], 2 * mid_ch, mid_ch),
        "1d": make_rebnconv_params(keys[7], 2 * mid_ch, out_ch),
    }


def _pack_rebnconv(w, b, cin_splits, cin_pad, cout_pad, matmul_dtype):
    """Pack (3,3,Cin,Cout) HWIO folded weights into (9, Cout_p, sum_pad(Cin)).

    Each input chunk (two for concat layers) is channel-padded to cin_pad
    independently so the kernel can stage the padded activations of the
    concatenated tensors directly.  First axis order is ky*3+kx, matching the
    kernel's tap loop.
    """
    cout = w.shape[-1]
    pieces, off = [], 0
    for csz in cin_splits:
        piece = jnp.zeros((3, 3, cin_pad, cout), jnp.float32)
        piece = piece.at[:, :, :csz, :].set(w[:, :, off:off + csz, :])
        pieces.append(piece)
        off += csz
    wp = jnp.concatenate(pieces, axis=2)                              # (3,3,Cin_tot_p,Cout)
    wp = jnp.pad(wp, ((0, 0), (0, 0), (0, 0), (0, cout_pad - cout)))  # pad Cout
    w9 = jnp.transpose(wp, (0, 1, 3, 2)).reshape(9, cout_pad, wp.shape[2])
    bp = jnp.zeros((cout_pad, 1), jnp.float32).at[:cout, 0].set(b)
    return w9.astype(matmul_dtype), bp


def _pick_vmem_limit_bytes():
    """Per-chip VMEM cap: ~3/4 of physical per-core VMEM, at most 96 MiB."""
    try:
        cap = int(pltpu.get_tpu_info().vmem_capacity_bytes)
    except Exception:
        cap = 128 * 1024 * 1024
    return int(min(cap * 3 // 4, 96 * 1024 * 1024))


# ---------------------------------------------------------------------------
# Public forward (NCHW in / NCHW out, like the PyTorch module)
# ---------------------------------------------------------------------------
def rsu4f_forward(x_nchw, params, compute_dtype=jnp.bfloat16):
    n, in_ch, h, w = x_nchw.shape
    out_ch = params["in"][0].shape[3]
    mid_ch = params["1"][0].shape[3]
    s = h * w

    # Channel padding to the sublane granularity of the matmul dtype.
    sub = 16 if jnp.dtype(compute_dtype).itemsize == 2 else 8
    in_p, mid_p, out_p = (_round_up(c, sub) for c in (in_ch, mid_ch, out_ch))

    layer_cfg = {
        "in": ((in_ch,), in_p, out_p),
        "1": ((out_ch,), out_p, mid_p),
        "2": ((mid_ch,), mid_p, mid_p),
        "3": ((mid_ch,), mid_p, mid_p),
        "4": ((mid_ch,), mid_p, mid_p),
        "3d": ((mid_ch, mid_ch), mid_p, mid_p),
        "2d": ((mid_ch, mid_ch), mid_p, mid_p),
        "1d": ((mid_ch, mid_ch), mid_p, out_p),
    }
    flat_wb = []
    for name in LAYER_NAMES:
        splits, cin_pad, cout_pad = layer_cfg[name]
        w9, bp = _pack_rebnconv(params[name][0], params[name][1],
                                splits, cin_pad, cout_pad, compute_dtype)
        flat_wb += [w9, bp]

    # NCHW -> channel-padded (N, Cin_p, H*W) in compute_dtype: pure reshape,
    # no transpose, and half the input DMA vs f32.
    x_p = jnp.zeros((n, in_p, h, w), compute_dtype).at[:, :in_ch].set(
        x_nchw.astype(compute_dtype))
    x_flat = x_p.reshape(n, in_p, s)

    masks = _build_tap_masks(h, w, compute_dtype)
    dil_to_idx = {d: i for i, d in enumerate(_UNIQUE_DILATIONS)}

    # Flat halo: largest shift is max_dil*(W+1); round up to a lane tile so the
    # interior of the scratch slab stays 128-aligned.  (Invariant required by
    # the horizontal-only masking scheme: lpad >= max_dil*(W+1).)
    lpad = _round_up(max(LAYER_DILATIONS) * (w + 1), 128)
    c_max = max(in_p, out_p, 2 * mid_p)

    kernel = functools.partial(
        _rsu4f_kernel, img_w=w, s=s, lpad=lpad, dil_to_idx=dil_to_idx,
        compute_dtype=compute_dtype)

    def resident(arr):
        nd = arr.ndim
        return pl.BlockSpec(arr.shape, lambda i, _nd=nd: (0,) * _nd)

    out_flat = pl.pallas_call(
        kernel,
        out_shape=jax.ShapeDtypeStruct((n, out_p, s), jnp.float32),
        grid=(n,),
        in_specs=[pl.BlockSpec((1, in_p, s), lambda i: (i, 0, 0)),
                  resident(masks)] + [resident(a) for a in flat_wb],
        out_specs=pl.BlockSpec((1, out_p, s), lambda i: (i, 0, 0)),
        scratch_shapes=[pltpu.VMEM((c_max, s + 2 * lpad), compute_dtype)],
        compiler_params=pltpu.CompilerParams(
            dimension_semantics=("parallel",),     # split batch across TCs (v7x)
            vmem_limit_bytes=_pick_vmem_limit_bytes()),
    )(x_flat, masks, *flat_wb)

    return out_flat[:, :out_ch, :].reshape(n, out_ch, h, w)


# ---------------------------------------------------------------------------
# Pure-JAX reference (lax.conv) with the same folded parameters, for checking
# ---------------------------------------------------------------------------
def _reference_rebnconv(x, w, b, dilation, operand_dtype):
    if operand_dtype is not None:
        x = x.astype(operand_dtype)
        w = w.astype(operand_dtype)
    w_oihw = jnp.transpose(w, (3, 2, 0, 1))
    y = jax.lax.conv_general_dilated(
        x, w_oihw, window_strides=(1, 1),
        padding=[(dilation, dilation), (dilation, dilation)],
        rhs_dilation=(dilation, dilation),
        dimension_numbers=("NCHW", "OIHW", "NCHW"),
        preferred_element_type=jnp.float32)
    return jnp.maximum(y + b[None, :, None, None], 0.0)


def rsu4f_reference(x, params, operand_dtype=None):
    def c(hx, name, d):
        return _reference_rebnconv(hx, params[name][0], params[name][1], d,
                                   operand_dtype)
    hxin = c(x, "in", 1)
    hx1 = c(hxin, "1", 1)
    hx2 = c(hx1, "2", 2)
    hx3 = c(hx2, "3", 4)
    hx4 = c(hx3, "4", 8)
    hx3d = c(jnp.concatenate([hx4, hx3], axis=1), "3d", 4)
    hx2d = c(jnp.concatenate([hx3d, hx2], axis=1), "2d", 2)
    hx1d = c(jnp.concatenate([hx2d, hx1], axis=1), "1d", 1)
    return hx1d + hxin


if __name__ == "__main__":
    key = jax.random.PRNGKey(0)
    kx, kp = jax.random.split(key)

    in_ch, mid_ch, out_ch = 3, 12, 3
    n, h, w = 2, 16, 16

    x = jax.random.normal(kx, (n, in_ch, h, w), jnp.float32)   # NCHW, like PyTorch
    params = make_rsu4f_params(kp, in_ch=in_ch, mid_ch=mid_ch, out_ch=out_ch)

    y = jax.jit(rsu4f_forward)(x, params)
    y = jax.block_until_ready(y)

    assert y.shape == (n, out_ch, h, w), y.shape
    assert y.dtype == jnp.float32

    # Kernel-logic check: pure-JAX reference using the same deliberate bf16
    # rounding of the conv operands (f32 accumulation/epilogue, matching the
    # kernel).  Any shift/mask/layout/weight-packing bug would be O(0.1-1) off.
    ref = rsu4f_reference(x, params, operand_dtype=jnp.bfloat16)
    max_err = float(jnp.max(jnp.abs(y - ref)))
    assert max_err < 1e-2, f"max |kernel - reference| = {max_err}"

    print("KERNEL_OK")
</pallas_src>

<mosaic_0001>
module attributes {stable_mosaic.version = 11 : i64} {
  func.func @_rsu4f_kernel(%arg0: i32, %arg1: memref<1x16x256xbf16, #tpu.memory_space<vmem>>, %arg2: memref<8x256xbf16, #tpu.memory_space<vmem>>, %arg3: memref<9x16x16xbf16, #tpu.memory_space<vmem>>, %arg4: memref<16x1xf32, #tpu.memory_space<vmem>>, %arg5: memref<9x16x16xbf16, #tpu.memory_space<vmem>>, %arg6: memref<16x1xf32, #tpu.memory_space<vmem>>, %arg7: memref<9x16x16xbf16, #tpu.memory_space<vmem>>, %arg8: memref<16x1xf32, #tpu.memory_space<vmem>>, %arg9: memref<9x16x16xbf16, #tpu.memory_space<vmem>>, %arg10: memref<16x1xf32, #tpu.memory_space<vmem>>, %arg11: memref<9x16x16xbf16, #tpu.memory_space<vmem>>, %arg12: memref<16x1xf32, #tpu.memory_space<vmem>>, %arg13: memref<9x16x32xbf16, #tpu.memory_space<vmem>>, %arg14: memref<16x1xf32, #tpu.memory_space<vmem>>, %arg15: memref<9x16x32xbf16, #tpu.memory_space<vmem>>, %arg16: memref<16x1xf32, #tpu.memory_space<vmem>>, %arg17: memref<9x16x32xbf16, #tpu.memory_space<vmem>>, %arg18: memref<16x1xf32, #tpu.memory_space<vmem>>, %arg19: memref<1x16x256xf32, #tpu.memory_space<vmem>>, %arg20: memref<32x768xbf16, #tpu.memory_space<vmem>>) attributes {dimension_semantics = [#tpu.dimension_semantics<parallel>], iteration_bounds = array<i64: 2>, scalar_prefetch = 0 : i64, scratch_operands = 1 : i64, tpu.core_type = #tpu.core_type<tc>, window_params = [{transform_indices = @transform_0, window_bounds = array<i64: 1, 16, 256>}, {pipeline_mode = #tpu.pipeline_mode<synchronous>, transform_indices = @transform_1, window_bounds = array<i64: 8, 256>}, {pipeline_mode = #tpu.pipeline_mode<synchronous>, transform_indices = @transform_2, window_bounds = array<i64: 9, 16, 16>}, {pipeline_mode = #tpu.pipeline_mode<synchronous>, transform_indices = @transform_3, window_bounds = array<i64: 16, 1>}, {pipeline_mode = #tpu.pipeline_mode<synchronous>, transform_indices = @transform_4, window_bounds = array<i64: 9, 16, 16>}, {pipeline_mode = #tpu.pipeline_mode<synchronous>, transform_indices = @transform_5, window_bounds = array<i64: 16, 1>}, {pipeline_mode = #tpu.pipeline_mode<synchronous>, transform_indices = @transform_6, window_bounds = array<i64: 9, 16, 16>}, {pipeline_mode = #tpu.pipeline_mode<synchronous>, transform_indices = @transform_7, window_bounds = array<i64: 16, 1>}, {pipeline_mode = #tpu.pipeline_mode<synchronous>, transform_indices = @transform_8, window_bounds = array<i64: 9, 16, 16>}, {pipeline_mode = #tpu.pipeline_mode<synchronous>, transform_indices = @transform_9, window_bounds = array<i64: 16, 1>}, {pipeline_mode = #tpu.pipeline_mode<synchronous>, transform_indices = @transform_10, window_bounds = array<i64: 9, 16, 16>}, {pipeline_mode = #tpu.pipeline_mode<synchronous>, transform_indices = @transform_11, window_bounds = array<i64: 16, 1>}, {pipeline_mode = #tpu.pipeline_mode<synchronous>, transform_indices = @transform_12, window_bounds = array<i64: 9, 16, 32>}, {pipeline_mode = #tpu.pipeline_mode<synchronous>, transform_indices = @transform_13, window_bounds = array<i64: 16, 1>}, {pipeline_mode = #tpu.pipeline_mode<synchronous>, transform_indices = @transform_14, window_bounds = array<i64: 9, 16, 32>}, {pipeline_mode = #tpu.pipeline_mode<synchronous>, transform_indices = @transform_15, window_bounds = array<i64: 16, 1>}, {pipeline_mode = #tpu.pipeline_mode<synchronous>, transform_indices = @transform_16, window_bounds = array<i64: 9, 16, 32>}, {pipeline_mode = #tpu.pipeline_mode<synchronous>, transform_indices = @transform_17, window_bounds = array<i64: 16, 1>}, {transform_indices = @transform_18, window_bounds = array<i64: 1, 16, 256>}]} {
    %cst = arith.constant 0.000000e+00 : bf16
    %0 = vector.broadcast %cst : bf16 to vector<32x256xbf16>
    %c0 = arith.constant 0 : index
    %c0_0 = arith.constant 0 : index
    %1 = vector.load %arg20[%c0, %c0_0] : memref<32x768xbf16, #tpu.memory_space<vmem>>, vector<32x256xbf16>
    tpu.vector_store %arg20[%c0, %c0_0], %0 {strides = array<i32>} : memref<32x768xbf16, #tpu.memory_space<vmem>>, vector<32x256xbf16>,
    %c0_1 = arith.constant 0 : index
    %c512 = arith.constant 512 : index
    %2 = vector.load %arg20[%c0_1, %c512] : memref<32x768xbf16, #tpu.memory_space<vmem>>, vector<32x256xbf16>
    tpu.vector_store %arg20[%c0_1, %c512], %0 {strides = array<i32>} : memref<32x768xbf16, #tpu.memory_space<vmem>>, vector<32x256xbf16>,
    %c0_2 = arith.constant 0 : index
    %c0_3 = arith.constant 0 : index
    %c0_4 = arith.constant 0 : index
    %3 = vector.load %arg1[%c0_2, %c0_3, %c0_4] : memref<1x16x256xbf16, #tpu.memory_space<vmem>>, vector<1x16x256xbf16>
    %4 = vector.shape_cast %3 : vector<1x16x256xbf16> to vector<16x256xbf16>
    %c0_5 = arith.constant 0 : index
    %c0_6 = arith.constant 0 : index
    %5 = vector.load %arg4[%c0_5, %c0_6] : memref<16x1xf32, #tpu.memory_space<vmem>>, vector<16x1xf32>
    %c0_7 = arith.constant 0 : index
    %c256 = arith.constant 256 : index
    %6 = vector.load %arg20[%c0_7, %c256] : memref<32x768xbf16, #tpu.memory_space<vmem>>, vector<16x256xbf16>
    tpu.vector_store %arg20[%c0_7, %c256], %4 {strides = array<i32>} : memref<32x768xbf16, #tpu.memory_space<vmem>>, vector<16x256xbf16>,
    %c0_8 = arith.constant 0 : index
    %c239 = arith.constant 239 : index
    %7 = vector.load %arg20[%c0_8, %c239] : memref<32x768xbf16, #tpu.memory_space<vmem>>, vector<16x256xbf16>
    %c0_9 = arith.constant 0 : index
    %c0_10 = arith.constant 0 : index
    %8 = vector.load %arg2[%c0_9, %c0_10] : memref<8x256xbf16, #tpu.memory_space<vmem>>, vector<1x256xbf16>
    %9 = vector.broadcast %8 : vector<1x256xbf16> to vector<16x256xbf16>
    %10 = arith.mulf %7, %9 : vector<16x256xbf16>
    %c0_11 = arith.constant 0 : index
    %c0_12 = arith.constant 0 : index
    %c0_13 = arith.constant 0 : index
    %11 = vector.load %arg3[%c0_11, %c0_12, %c0_13] : memref<9x16x16xbf16, #tpu.memory_space<vmem>>, vector<1x16x16xbf16>
    %12 = vector.shape_cast %11 : vector<1x16x16xbf16> to vector<16x16xbf16>
    %cst_14 = arith.constant dense<0.000000e+00> : vector<16x256xf32>
    %13 = tpu.matmul %12, %10, %cst_14 {dimension_numbers = #tpu.dot_dimension_numbers<[1], [0], [0], [1], [0, 0, 1, 1], [], []>} : vector<16x16xbf16>, vector<16x256xbf16>, vector<16x256xf32> -> vector<16x256xf32>
    %c0_15 = arith.constant 0 : index
    %c240 = arith.constant 240 : index
    %14 = vector.load %arg20[%c0_15, %c240] : memref<32x768xbf16, #tpu.memory_space<vmem>>, vector<16x256xbf16>
    %c1 = arith.constant 1 : index
    %c0_16 = arith.constant 0 : index
    %c0_17 = arith.constant 0 : index
    %15 = vector.load %arg3[%c1, %c0_16, %c0_17] : memref<9x16x16xbf16, #tpu.memory_space<vmem>>, vector<1x16x16xbf16>
    %16 = vector.shape_cast %15 : vector<1x16x16xbf16> to vector<16x16xbf16>
    %cst_18 = arith.constant dense<0.000000e+00> : vector<16x256xf32>
    %17 = tpu.matmul %16, %14, %cst_18 {dimension_numbers = #tpu.dot_dimension_numbers<[1], [0], [0], [1], [0, 0, 1, 1], [], []>} : vector<16x16xbf16>, vector<16x256xbf16>, vector<16x256xf32> -> vector<16x256xf32>
    %18 = arith.addf %13, %17 : vector<16x256xf32>
    %c0_19 = arith.constant 0 : index
    %c241 = arith.constant 241 : index
    %19 = vector.load %arg20[%c0_19, %c241] : memref<32x768xbf16, #tpu.memory_space<vmem>>, vector<16x256xbf16>
    %c1_20 = arith.constant 1 : index
    %c0_21 = arith.constant 0 : index
    %20 = vector.load %arg2[%c1_20, %c0_21] : memref<8x256xbf16, #tpu.memory_space<vmem>>, vector<1x256xbf16>
    %21 = vector.broadcast %20 : vector<1x256xbf16> to vector<16x256xbf16>
    %22 = arith.mulf %19, %21 : vector<16x256xbf16>
    %c2 = arith.constant 2 : index
    %c0_22 = arith.constant 0 : index
    %c0_23 = arith.constant 0 : index
    %23 = vector.load %arg3[%c2, %c0_22, %c0_23] : memref<9x16x16xbf16, #tpu.memory_space<vmem>>, vector<1x16x16xbf16>
    %24 = vector.shape_cast %23 : vector<1x16x16xbf16> to vector<16x16xbf16>
    %cst_24 = arith.constant dense<0.000000e+00> : vector<16x256xf32>
    %25 = tpu.matmul %24, %22, %cst_24 {dimension_numbers = #tpu.dot_dimension_numbers<[1], [0], [0], [1], [0, 0, 1, 1], [], []>} : vector<16x16xbf16>, vector<16x256xbf16>, vector<16x256xf32> -> vector<16x256xf32>
    %26 = arith.addf %18, %25 : vector<16x256xf32>
    %c0_25 = arith.constant 0 : index
    %c255 = arith.constant 255 : index
    %27 = vector.load %arg20[%c0_25, %c255] : memref<32x768xbf16, #tpu.memory_space<vmem>>, vector<16x256xbf16>
    %c0_26 = arith.constant 0 : index
    %c0_27 = arith.constant 0 : index
    %28 = vector.load %arg2[%c0_26, %c0_27] : memref<8x256xbf16, #tpu.memory_space<vmem>>, vector<1x256xbf16>
    %29 = vector.broadcast %28 : vector<1x256xbf16> to vector<16x256xbf16>
    %30 = arith.mulf %27, %29 : vector<16x256xbf16>
    %c3 = arith.constant 3 : index
    %c0_28 = arith.constant 0 : index
    %c0_29 = arith.constant 0 : index
    %31 = vector.load %arg3[%c3, %c0_28, %c0_29] : memref<9x16x16xbf16, #tpu.memory_space<vmem>>, vector<1x16x16xbf16>
    %32 = vector.shape_cast %31 : vector<1x16x16xbf16> to vector<16x16xbf16>
    %cst_30 = arith.constant dense<0.000000e+00> : vector<16x256xf32>
    %33 = tpu.matmul %32, %30, %cst_30 {dimension_numbers = #tpu.dot_dimension_numbers<[1], [0], [0], [1], [0, 0, 1, 1], [], []>} : vector<16x16xbf16>, vector<16x256xbf16>, vector<16x256xf32> -> vector<16x256xf32>
    %34 = arith.addf %26, %33 : vector<16x256xf32>
    %c0_31 = arith.constant 0 : index
    %c256_32 = arith.constant 256 : index
    %35 = vector.load %arg20[%c0_31, %c256_32] : memref<32x768xbf16, #tpu.memory_space<vmem>>, vector<16x256xbf16>
    %c4 = arith.constant 4 : index
    %c0_33 = arith.constant 0 : index
    %c0_34 = arith.constant 0 : index
    %36 = vector.load %arg3[%c4, %c0_33, %c0_34] : memref<9x16x16xbf16, #tpu.memory_space<vmem>>, vector<1x16x16xbf16>
    %37 = vector.shape_cast %36 : vector<1x16x16xbf16> to vector<16x16xbf16>
    %cst_35 = arith.constant dense<0.000000e+00> : vector<16x256xf32>
    %38 = tpu.matmul %37, %35, %cst_35 {dimension_numbers = #tpu.dot_dimension_numbers<[1], [0], [0], [1], [0, 0, 1, 1], [], []>} : vector<16x16xbf16>, vector<16x256xbf16>, vector<16x256xf32> -> vector<16x256xf32>
    %39 = arith.addf %34, %38 : vector<16x256xf32>
    %c0_36 = arith.constant 0 : index
    %c257 = arith.constant 257 : index
    %40 = vector.load %arg20[%c0_36, %c257] : memref<32x768xbf16, #tpu.memory_space<vmem>>, vector<16x256xbf16>
    %c1_37 = arith.constant 1 : index
    %c0_38 = arith.constant 0 : index
    %41 = vector.load %arg2[%c1_37, %c0_38] : memref<8x256xbf16, #tpu.memory_space<vmem>>, vector<1x256xbf16>
    %42 = vector.broadcast %41 : vector<1x256xbf16> to vector<16x256xbf16>
    %43 = arith.mulf %40, %42 : vector<16x256xbf16>
    %c5 = arith.constant 5 : index
    %c0_39 = arith.constant 0 : index
    %c0_40 = arith.constant 0 : index
    %44 = vector.load %arg3[%c5, %c0_39, %c0_40] : memref<9x16x16xbf16, #tpu.memory_space<vmem>>, vector<1x16x16xbf16>
    %45 = vector.shape_cast %44 : vector<1x16x16xbf16> to vector<16x16xbf16>
    %cst_41 = arith.constant dense<0.000000e+00> : vector<16x256xf32>
    %46 = tpu.matmul %45, %43, %cst_41 {dimension_numbers = #tpu.dot_dimension_numbers<[1], [0], [0], [1], [0, 0, 1, 1], [], []>} : vector<16x16xbf16>, vector<16x256xbf16>, vector<16x256xf32> -> vector<16x256xf32>
    %47 = arith.addf %39, %46 : vector<16x256xf32>
    %c0_42 = arith.constant 0 : index
    %c271 = arith.constant 271 : index
    %48 = vector.load %arg20[%c0_42, %c271] : memref<32x768xbf16, #tpu.memory_space<vmem>>, vector<16x256xbf16>
    %c0_43 = arith.constant 0 : index
    %c0_44 = arith.constant 0 : index
    %49 = vector.load %arg2[%c0_43, %c0_44] : memref<8x256xbf16, #tpu.memory_space<vmem>>, vector<1x256xbf16>
    %50 = vector.broadcast %49 : vector<1x256xbf16> to vector<16x256xbf16>
    %51 = arith.mulf %48, %50 : vector<16x256xbf16>
    %c6 = arith.constant 6 : index
    %c0_45 = arith.constant 0 : index
    %c0_46 = arith.constant 0 : index
    %52 = vector.load %arg3[%c6, %c0_45, %c0_46] : memref<9x16x16xbf16, #tpu.memory_space<vmem>>, vector<1x16x16xbf16>
    %53 = vector.shape_cast %52 : vector<1x16x16xbf16> to vector<16x16xbf16>
    %cst_47 = arith.constant dense<0.000000e+00> : vector<16x256xf32>
    %54 = tpu.matmul %53, %51, %cst_47 {dimension_numbers = #tpu.dot_dimension_numbers<[1], [0], [0], [1], [0, 0, 1, 1], [], []>} : vector<16x16xbf16>, vector<16x256xbf16>, vector<16x256xf32> -> vector<16x256xf32>
    %55 = arith.addf %47, %54 : vector<16x256xf32>
    %c0_48 = arith.constant 0 : index
    %c272 = arith.constant 272 : index
    %56 = vector.load %arg20[%c0_48, %c272] : memref<32x768xbf16, #tpu.memory_space<vmem>>, vector<16x256xbf16>
    %c7 = arith.constant 7 : index
    %c0_49 = arith.constant 0 : index
    %c0_50 = arith.constant 0 : index
    %57 = vector.load %arg3[%c7, %c0_49, %c0_50] : memref<9x16x16xbf16, #tpu.memory_space<vmem>>, vector<1x16x16xbf16>
    %58 = vector.shape_cast %57 : vector<1x16x16xbf16> to vector<16x16xbf16>
    %cst_51 = arith.constant dense<0.000000e+00> : vector<16x256xf32>
    %59 = tpu.matmul %58, %56, %cst_51 {dimension_numbers = #tpu.dot_dimension_numbers<[1], [0], [0], [1], [0, 0, 1, 1], [], []>} : vector<16x16xbf16>, vector<16x256xbf16>, vector<16x256xf32> -> vector<16x256xf32>
    %60 = arith.addf %55, %59 : vector<16x256xf32>
    %c0_52 = arith.constant 0 : index
    %c273 = arith.constant 273 : index
    %61 = vector.load %arg20[%c0_52, %c273] : memref<32x768xbf16, #tpu.memory_space<vmem>>, vector<16x256xbf16>
    %c1_53 = arith.constant 1 : index
    %c0_54 = arith.constant 0 : index
    %62 = vector.load %arg2[%c1_53, %c0_54] : memref<8x256xbf16, #tpu.memory_space<vmem>>, vector<1x256xbf16>
    %63 = vector.broadcast %62 : vector<1x256xbf16> to vector<16x256xbf16>
    %64 = arith.mulf %61, %63 : vector<16x256xbf16>
    %c8 = arith.constant 8 : index
    %c0_55 = arith.constant 0 : index
    %c0_56 = arith.constant 0 : index
    %65 = vector.load %arg3[%c8, %c0_55, %c0_56] : memref<9x16x16xbf16, #tpu.memory_space<vmem>>, vector<1x16x16xbf16>
    %66 = vector.shape_cast %65 : vector<1x16x16xbf16> to vector<16x16xbf16>
    %cst_57 = arith.constant dense<0.000000e+00> : vector<16x256xf32>
    %67 = tpu.matmul %66, %64, %cst_57 {dimension_numbers = #tpu.dot_dimension_numbers<[1], [0], [0], [1], [0, 0, 1, 1], [], []>} : vector<16x16xbf16>, vector<16x256xbf16>, vector<16x256xf32> -> vector<16x256xf32>
    %68 = arith.addf %60, %67 : vector<16x256xf32>
    %69 = vector.broadcast %5 : vector<16x1xf32> to vector<16x256xf32>
    %70 = arith.addf %68, %69 : vector<16x256xf32>
    %cst_58 = arith.constant 0.000000e+00 : f32
    %71 = vector.broadcast %cst_58 : f32 to vector<16x256xf32>
    %72 = arith.maximumf %70, %71 : vector<16x256xf32>
    %c0_59 = arith.constant 0 : index
    %c0_60 = arith.constant 0 : index
    %73 = vector.load %arg6[%c0_59, %c0_60] : memref<16x1xf32, #tpu.memory_space<vmem>>, vector<16x1xf32>
    %74 = arith.truncf %72 : vector<16x256xf32> to vector<16x256xbf16>
    %c0_61 = arith.constant 0 : index
    %c256_62 = arith.constant 256 : index
    %75 = vector.load %arg20[%c0_61, %c256_62] : memref<32x768xbf16, #tpu.memory_space<vmem>>, vector<16x256xbf16>
    tpu.vector_store %arg20[%c0_61, %c256_62], %74 {strides = array<i32>} : memref<32x768xbf16, #tpu.memory_space<vmem>>, vector<16x256xbf16>,
    %c0_63 = arith.constant 0 : index
    %c239_64 = arith.constant 239 : index
    %76 = vector.load %arg20[%c0_63, %c239_64] : memref<32x768xbf16, #tpu.memory_space<vmem>>, vector<16x256xbf16>
    %c0_65 = arith.constant 0 : index
    %c0_66 = arith.constant 0 : index
    %77 = vector.load %arg2[%c0_65, %c0_66] : memref<8x256xbf16, #tpu.memory_space<vmem>>, vector<1x256xbf16>
    %78 = vector.broadcast %77 : vector<1x256xbf16> to vector<16x256xbf16>
    %79 = arith.mulf %76, %78 : vector<16x256xbf16>
    %c0_67 = arith.constant 0 : index
    %c0_68 = arith.constant 0 : index
    %c0_69 = arith.constant 0 : index
    %80 = vector.load %arg5[%c0_67, %c0_68, %c0_69] : memref<9x16x16xbf16, #tpu.memory_space<vmem>>, vector<1x16x16xbf16>
    %81 = vector.shape_cast %80 : vector<1x16x16xbf16> to vector<16x16xbf16>
    %cst_70 = arith.constant dense<0.000000e+00> : vector<16x256xf32>
    %82 = tpu.matmul %81, %79, %cst_70 {dimension_numbers = #tpu.dot_dimension_numbers<[1], [0], [0], [1], [0, 0, 1, 1], [], []>} : vector<16x16xbf16>, vector<16x256xbf16>, vector<16x256xf32> -> vector<16x256xf32>
    %c0_71 = arith.constant 0 : index
    %c240_72 = arith.constant 240 : index
    %83 = vector.load %arg20[%c0_71, %c240_72] : memref<32x768xbf16, #tpu.memory_space<vmem>>, vector<16x256xbf16>
    %c1_73 = arith.constant 1 : index
    %c0_74 = arith.constant 0 : index
    %c0_75 = arith.constant 0 : index
    %84 = vector.load %arg5[%c1_73, %c0_74, %c0_75] : memref<9x16x16xbf16, #tpu.memory_space<vmem>>, vector<1x16x16xbf16>
    %85 = vector.shape_cast %84 : vector<1x16x16xbf16> to vector<16x16xbf16>
    %cst_76 = arith.constant dense<0.000000e+00> : vector<16x256xf32>
    %86 = tpu.matmul %85, %83, %cst_76 {dimension_numbers = #tpu.dot_dimension_numbers<[1], [0], [0], [1], [0, 0, 1, 1], [], []>} : vector<16x16xbf16>, vector<16x256xbf16>, vector<16x256xf32> -> vector<16x256xf32>
    %87 = arith.addf %82, %86 : vector<16x256xf32>
    %c0_77 = arith.constant 0 : index
    %c241_78 = arith.constant 241 : index
    %88 = vector.load %arg20[%c0_77, %c241_78] : memref<32x768xbf16, #tpu.memory_space<vmem>>, vector<16x256xbf16>
    %c1_79 = arith.constant 1 : index
    %c0_80 = arith.constant 0 : index
    %89 = vector.load %arg2[%c1_79, %c0_80] : memref<8x256xbf16, #tpu.memory_space<vmem>>, vector<1x256xbf16>
    %90 = vector.broadcast %89 : vector<1x256xbf16> to vector<16x256xbf16>
    %91 = arith.mulf %88, %90 : vector<16x256xbf16>
    %c2_81 = arith.constant 2 : index
    %c0_82 = arith.constant 0 : index
    %c0_83 = arith.constant 0 : index
    %92 = vector.load %arg5[%c2_81, %c0_82, %c0_83] : memref<9x16x16xbf16, #tpu.memory_space<vmem>>, vector<1x16x16xbf16>
    %93 = vector.shape_cast %92 : vector<1x16x16xbf16> to vector<16x16xbf16>
    %cst_84 = arith.constant dense<0.000000e+00> : vector<16x256xf32>
    %94 = tpu.matmul %93, %91, %cst_84 {dimension_numbers = #tpu.dot_dimension_numbers<[1], [0], [0], [1], [0, 0, 1, 1], [], []>} : vector<16x16xbf16>, vector<16x256xbf16>, vector<16x256xf32> -> vector<16x256xf32>
    %95 = arith.addf %87, %94 : vector<16x256xf32>
    %c0_85 = arith.constant 0 : index
    %c255_86 = arith.constant 255 : index
    %96 = vector.load %arg20[%c0_85, %c255_86] : memref<32x768xbf16, #tpu.memory_space<vmem>>, vector<16x256xbf16>
    %c0_87 = arith.constant 0 : index
    %c0_88 = arith.constant 0 : index
    %97 = vector.load %arg2[%c0_87, %c0_88] : memref<8x256xbf16, #tpu.memory_space<vmem>>, vector<1x256xbf16>
    %98 = vector.broadcast %97 : vector<1x256xbf16> to vector<16x256xbf16>
    %99 = arith.mulf %96, %98 : vector<16x256xbf16>
    %c3_89 = arith.constant 3 : index
    %c0_90 = arith.constant 0 : index
    %c0_91 = arith.constant 0 : index
    %100 = vector.load %arg5[%c3_89, %c0_90, %c0_91] : memref<9x16x16xbf16, #tpu.memory_space<vmem>>, vector<1x16x16xbf16>
    %101 = vector.shape_cast %100 : vector<1x16x16xbf16> to vector<16x16xbf16>
    %cst_92 = arith.constant dense<0.000000e+00> : vector<16x256xf32>
    %102 = tpu.matmul %101, %99, %cst_92 {dimension_numbers = #tpu.dot_dimension_numbers<[1], [0], [0], [1], [0, 0, 1, 1], [], []>} : vector<16x16xbf16>, vector<16x256xbf16>, vector<16x256xf32> -> vector<16x256xf32>
    %103 = arith.addf %95, %102 : vector<16x256xf32>
    %c0_93 = arith.constant 0 : index
    %c256_94 = arith.constant 256 : index
    %104 = vector.load %arg20[%c0_93, %c256_94] : memref<32x768xbf16, #tpu.memory_space<vmem>>, vector<16x256xbf16>
    %c4_95 = arith.constant 4 : index
    %c0_96 = arith.constant 0 : index
    %c0_97 = arith.constant 0 : index
    %105 = vector.load %arg5[%c4_95, %c0_96, %c0_97] : memref<9x16x16xbf16, #tpu.memory_space<vmem>>, vector<1x16x16xbf16>
    %106 = vector.shape_cast %105 : vector<1x16x16xbf16> to vector<16x16xbf16>
    %cst_98 = arith.constant dense<0.000000e+00> : vector<16x256xf32>
    %107 = tpu.matmul %106, %104, %cst_98 {dimension_numbers = #tpu.dot_dimension_numbers<[1], [0], [0], [1], [0, 0, 1, 1], [], []>} : vector<16x16xbf16>, vector<16x256xbf16>, vector<16x256xf32> -> vector<16x256xf32>
    %108 = arith.addf %103, %107 : vector<16x256xf32>
    %c0_99 = arith.constant 0 : index
    %c257_100 = arith.constant 257 : index
    %109 = vector.load %arg20[%c0_99, %c257_100] : memref<32x768xbf16, #tpu.memory_space<vmem>>, vector<16x256xbf16>
    %c1_101 = arith.constant 1 : index
    %c0_102 = arith.constant 0 : index
    %110 = vector.load %arg2[%c1_101, %c0_102] : memref<8x256xbf16, #tpu.memory_space<vmem>>, vector<1x256xbf16>
    %111 = vector.broadcast %110 : vector<1x256xbf16> to vector<16x256xbf16>
    %112 = arith.mulf %109, %111 : vector<16x256xbf16>
    %c5_103 = arith.constant 5 : index
    %c0_104 = arith.constant 0 : index
    %c0_105 = arith.constant 0 : index
    %113 = vector.load %arg5[%c5_103, %c0_104, %c0_105] : memref<9x16x16xbf16, #tpu.memory_space<vmem>>, vector<1x16x16xbf16>
    %114 = vector.shape_cast %113 : vector<1x16x16xbf16> to vector<16x16xbf16>
    %cst_106 = arith.constant dense<0.000000e+00> : vector<16x256xf32>
    %115 = tpu.matmul %114, %112, %cst_106 {dimension_numbers = #tpu.dot_dimension_numbers<[1], [0], [0], [1], [0, 0, 1, 1], [], []>} : vector<16x16xbf16>, vector<16x256xbf16>, vector<16x256xf32> -> vector<16x256xf32>
    %116 = arith.addf %108, %115 : vector<16x256xf32>
    %c0_107 = arith.constant 0 : index
    %c271_108 = arith.constant 271 : index
    %117 = vector.load %arg20[%c0_107, %c271_108] : memref<32x768xbf16, #tpu.memory_space<vmem>>, vector<16x256xbf16>
    %c0_109 = arith.constant 0 : index
    %c0_110 = arith.constant 0 : index
    %118 = vector.load %arg2[%c0_109, %c0_110] : memref<8x256xbf16, #tpu.memory_space<vmem>>, vector<1x256xbf16>
    %119 = vector.broadcast %118 : vector<1x256xbf16> to vector<16x256xbf16>
    %120 = arith.mulf %117, %119 : vector<16x256xbf16>
    %c6_111 = arith.constant 6 : index
    %c0_112 = arith.constant 0 : index
    %c0_113 = arith.constant 0 : index
    %121 = vector.load %arg5[%c6_111, %c0_112, %c0_113] : memref<9x16x16xbf16, #tpu.memory_space<vmem>>, vector<1x16x16xbf16>
    %122 = vector.shape_cast %121 : vector<1x16x16xbf16> to vector<16x16xbf16>
    %cst_114 = arith.constant dense<0.000000e+00> : vector<16x256xf32>
    %123 = tpu.matmul %122, %120, %cst_114 {dimension_numbers = #tpu.dot_dimension_numbers<[1], [0], [0], [1], [0, 0, 1, 1], [], []>} : vector<16x16xbf16>, vector<16x256xbf16>, vector<16x256xf32> -> vector<16x256xf32>
    %124 = arith.addf %116, %123 : vector<16x256xf32>
    %c0_115 = arith.constant 0 : index
    %c272_116 = arith.constant 272 : index
    %125 = vector.load %arg20[%c0_115, %c272_116] : memref<32x768xbf16, #tpu.memory_space<vmem>>, vector<16x256xbf16>
    %c7_117 = arith.constant 7 : index
    %c0_118 = arith.constant 0 : index
    %c0_119 = arith.constant 0 : index
    %126 = vector.load %arg5[%c7_117, %c0_118, %c0_119] : memref<9x16x16xbf16, #tpu.memory_space<vmem>>, vector<1x16x16xbf16>
    %127 = vector.shape_cast %126 : vector<1x16x16xbf16> to vector<16x16xbf16>
    %cst_120 = arith.constant dense<0.000000e+00> : vector<16x256xf32>
    %128 = tpu.matmul %127, %125, %cst_120 {dimension_numbers = #tpu.dot_dimension_numbers<[1], [0], [0], [1], [0, 0, 1, 1], [], []>} : vector<16x16xbf16>, vector<16x256xbf16>, vector<16x256xf32> -> vector<16x256xf32>
    %129 = arith.addf %124, %128 : vector<16x256xf32>
    %c0_121 = arith.constant 0 : index
    %c273_122 = arith.constant 273 : index
    %130 = vector.load %arg20[%c0_121, %c273_122] : memref<32x768xbf16, #tpu.memory_space<vmem>>, vector<16x256xbf16>
    %c1_123 = arith.constant 1 : index
    %c0_124 = arith.constant 0 : index
    %131 = vector.load %arg2[%c1_123, %c0_124] : memref<8x256xbf16, #tpu.memory_space<vmem>>, vector<1x256xbf16>
    %132 = vector.broadcast %131 : vector<1x256xbf16> to vector<16x256xbf16>
    %133 = arith.mulf %130, %132 : vector<16x256xbf16>
    %c8_125 = arith.constant 8 : index
    %c0_126 = arith.constant 0 : index
    %c0_127 = arith.constant 0 : index
    %134 = vector.load %arg5[%c8_125, %c0_126, %c0_127] : memref<9x16x16xbf16, #tpu.memory_space<vmem>>, vector<1x16x16xbf16>
    %135 = vector.shape_cast %134 : vector<1x16x16xbf16> to vector<16x16xbf16>
    %cst_128 = arith.constant dense<0.000000e+00> : vector<16x256xf32>
    %136 = tpu.matmul %135, %133, %cst_128 {dimension_numbers = #tpu.dot_dimension_numbers<[1], [0], [0], [1], [0, 0, 1, 1], [], []>} : vector<16x16xbf16>, vector<16x256xbf16>, vector<16x256xf32> -> vector<16x256xf32>
    %137 = arith.addf %129, %136 : vector<16x256xf32>
    %138 = vector.broadcast %73 : vector<16x1xf32> to vector<16x256xf32>
    %139 = arith.addf %137, %138 : vector<16x256xf32>
    %cst_129 = arith.constant 0.000000e+00 : f32
    %140 = vector.broadcast %cst_129 : f32 to vector<16x256xf32>
    %141 = arith.maximumf %139, %140 : vector<16x256xf32>
    %142 = arith.truncf %141 : vector<16x256xf32> to vector<16x256xbf16>
    %c0_130 = arith.constant 0 : index
    %c0_131 = arith.constant 0 : index
    %143 = vector.load %arg8[%c0_130, %c0_131] : memref<16x1xf32, #tpu.memory_space<vmem>>, vector<16x1xf32>
    %c0_132 = arith.constant 0 : index
    %c256_133 = arith.constant 256 : index
    %144 = vector.load %arg20[%c0_132, %c256_133] : memref<32x768xbf16, #tpu.memory_space<vmem>>, vector<16x256xbf16>
    tpu.vector_store %arg20[%c0_132, %c256_133], %142 {strides = array<i32>} : memref<32x768xbf16, #tpu.memory_space<vmem>>, vector<16x256xbf16>,
    %c0_134 = arith.constant 0 : index
    %c222 = arith.constant 222 : index
    %145 = vector.load %arg20[%c0_134, %c222] : memref<32x768xbf16, #tpu.memory_space<vmem>>, vector<16x256xbf16>
    %c2_135 = arith.constant 2 : index
    %c0_136 = arith.constant 0 : index
    %146 = vector.load %arg2[%c2_135, %c0_136] : memref<8x256xbf16, #tpu.memory_space<vmem>>, vector<1x256xbf16>
    %147 = vector.broadcast %146 : vector<1x256xbf16> to vector<16x256xbf16>
    %148 = arith.mulf %145, %147 : vector<16x256xbf16>
    %c0_137 = arith.constant 0 : index
    %c0_138 = arith.constant 0 : index
    %c0_139 = arith.constant 0 : index
    %149 = vector.load %arg7[%c0_137, %c0_138, %c0_139] : memref<9x16x16xbf16, #tpu.memory_space<vmem>>, vector<1x16x16xbf16>
    %150 = vector.shape_cast %149 : vector<1x16x16xbf16> to vector<16x16xbf16>
    %cst_140 = arith.constant dense<0.000000e+00> : vector<16x256xf32>
    %151 = tpu.matmul %150, %148, %cst_140 {dimension_numbers = #tpu.dot_dimension_numbers<[1], [0], [0], [1], [0, 0, 1, 1], [], []>} : vector<16x16xbf16>, vector<16x256xbf16>, vector<16x256xf32> -> vector<16x256xf32>
    %c0_141 = arith.constant 0 : index
    %c224 = arith.constant 224 : index
    %152 = vector.load %arg20[%c0_141, %c224] : memref<32x768xbf16, #tpu.memory_space<vmem>>, vector<16x256xbf16>
    %c1_142 = arith.constant 1 : index
    %c0_143 = arith.constant 0 : index
    %c0_144 = arith.constant 0 : index
    %153 = vector.load %arg7[%c1_142, %c0_143, %c0_144] : memref<9x16x16xbf16, #tpu.memory_space<vmem>>, vector<1x16x16xbf16>
    %154 = vector.shape_cast %153 : vector<1x16x16xbf16> to vector<16x16xbf16>
    %cst_145 = arith.constant dense<0.000000e+00> : vector<16x256xf32>
    %155 = tpu.matmul %154, %152, %cst_145 {dimension_numbers = #tpu.dot_dimension_numbers<[1], [0], [0], [1], [0, 0, 1, 1], [], []>} : vector<16x16xbf16>, vector<16x256xbf16>, vector<16x256xf32> -> vector<16x256xf32>
    %156 = arith.addf %151, %155 : vector<16x256xf32>
    %c0_146 = arith.constant 0 : index
    %c226 = arith.constant 226 : index
    %157 = vector.load %arg20[%c0_146, %c226] : memref<32x768xbf16, #tpu.memory_space<vmem>>, vector<16x256xbf16>
    %c3_147 = arith.constant 3 : index
    %c0_148 = arith.constant 0 : index
    %158 = vector.load %arg2[%c3_147, %c0_148] : memref<8x256xbf16, #tpu.memory_space<vmem>>, vector<1x256xbf16>
    %159 = vector.broadcast %158 : vector<1x256xbf16> to vector<16x256xbf16>
    %160 = arith.mulf %157, %159 : vector<16x256xbf16>
    %c2_149 = arith.constant 2 : index
    %c0_150 = arith.constant 0 : index
    %c0_151 = arith.constant 0 : index
    %161 = vector.load %arg7[%c2_149, %c0_150, %c0_151] : memref<9x16x16xbf16, #tpu.memory_space<vmem>>, vector<1x16x16xbf16>
    %162 = vector.shape_cast %161 : vector<1x16x16xbf16> to vector<16x16xbf16>
    %cst_152 = arith.constant dense<0.000000e+00> : vector<16x256xf32>
    %163 = tpu.matmul %162, %160, %cst_152 {dimension_numbers = #tpu.dot_dimension_numbers<[1], [0], [0], [1], [0, 0, 1, 1], [], []>} : vector<16x16xbf16>, vector<16x256xbf16>, vector<16x256xf32> -> vector<16x256xf32>
    %164 = arith.addf %156, %163 : vector<16x256xf32>
    %c0_153 = arith.constant 0 : index
    %c254 = arith.constant 254 : index
    %165 = vector.load %arg20[%c0_153, %c254] : memref<32x768xbf16, #tpu.memory_space<vmem>>, vector<16x256xbf16>
    %c2_154 = arith.constant 2 : index
    %c0_155 = arith.constant 0 : index
    %166 = vector.load %arg2[%c2_154, %c0_155] : memref<8x256xbf16, #tpu.memory_space<vmem>>, vector<1x256xbf16>
    %167 = vector.broadcast %166 : vector<1x256xbf16> to vector<16x256xbf16>
    %168 = arith.mulf %165, %167 : vector<16x256xbf16>
    %c3_156 = arith.constant 3 : index
    %c0_157 = arith.constant 0 : index
    %c0_158 = arith.constant 0 : index
    %169 = vector.load %arg7[%c3_156, %c0_157, %c0_158] : memref<9x16x16xbf16, #tpu.memory_space<vmem>>, vector<1x16x16xbf16>
    %170 = vector.shape_cast %169 : vector<1x16x16xbf16> to vector<16x16xbf16>
    %cst_159 = arith.constant dense<0.000000e+00> : vector<16x256xf32>
    %171 = tpu.matmul %170, %168, %cst_159 {dimension_numbers = #tpu.dot_dimension_numbers<[1], [0], [0], [1], [0, 0, 1, 1], [], []>} : vector<16x16xbf16>, vector<16x256xbf16>, vector<16x256xf32> -> vector<16x256xf32>
    %172 = arith.addf %164, %171 : vector<16x256xf32>
    %c0_160 = arith.constant 0 : index
    %c256_161 = arith.constant 256 : index
    %173 = vector.load %arg20[%c0_160, %c256_161] : memref<32x768xbf16, #tpu.memory_space<vmem>>, vector<16x256xbf16>
    %c4_162 = arith.constant 4 : index
    %c0_163 = arith.constant 0 : index
    %c0_164 = arith.constant 0 : index
    %174 = vector.load %arg7[%c4_162, %c0_163, %c0_164] : memref<9x16x16xbf16, #tpu.memory_space<vmem>>, vector<1x16x16xbf16>
    %175 = vector.shape_cast %174 : vector<1x16x16xbf16> to vector<16x16xbf16>
    %cst_165 = arith.constant dense<0.000000e+00> : vector<16x256xf32>
    %176 = tpu.matmul %175, %173, %cst_165 {dimension_numbers = #tpu.dot_dimension_numbers<[1], [0], [0], [1], [0, 0, 1, 1], [], []>} : vector<16x16xbf16>, vector<16x256xbf16>, vector<16x256xf32> -> vector<16x256xf32>
    %177 = arith.addf %172, %176 : vector<16x256xf32>
    %c0_166 = arith.constant 0 : index
    %c258 = arith.constant 258 : index
    %178 = vector.load %arg20[%c0_166, %c258] : memref<32x768xbf16, #tpu.memory_space<vmem>>, vector<16x256xbf16>
    %c3_167 = arith.constant 3 : index
    %c0_168 = arith.constant 0 : index
    %179 = vector.load %arg2[%c3_167, %c0_168] : memref<8x256xbf16, #tpu.memory_space<vmem>>, vector<1x256xbf16>
    %180 = vector.broadcast %179 : vector<1x256xbf16> to vector<16x256xbf16>
    %181 = arith.mulf %178, %180 : vector<16x256xbf16>
    %c5_169 = arith.constant 5 : index
    %c0_170 = arith.constant 0 : index
    %c0_171 = arith.constant 0 : index
    %182 = vector.load %arg7[%c5_169, %c0_170, %c0_171] : memref<9x16x16xbf16, #tpu.memory_space<vmem>>, vector<1x16x16xbf16>
    %183 = vector.shape_cast %182 : vector<1x16x16xbf16> to vector<16x16xbf16>
    %cst_172 = arith.constant dense<0.000000e+00> : vector<16x256xf32>
    %184 = tpu.matmul %183, %181, %cst_172 {dimension_numbers = #tpu.dot_dimension_numbers<[1], [0], [0], [1], [0, 0, 1, 1], [], []>} : vector<16x16xbf16>, vector<16x256xbf16>, vector<16x256xf32> -> vector<16x256xf32>
    %185 = arith.addf %177, %184 : vector<16x256xf32>
    %c0_173 = arith.constant 0 : index
    %c286 = arith.constant 286 : index
    %186 = vector.load %arg20[%c0_173, %c286] : memref<32x768xbf16, #tpu.memory_space<vmem>>, vector<16x256xbf16>
    %c2_174 = arith.constant 2 : index
    %c0_175 = arith.constant 0 : index
    %187 = vector.load %arg2[%c2_174, %c0_175] : memref<8x256xbf16, #tpu.memory_space<vmem>>, vector<1x256xbf16>
    %188 = vector.broadcast %187 : vector<1x256xbf16> to vector<16x256xbf16>
    %189 = arith.mulf %186, %188 : vector<16x256xbf16>
    %c6_176 = arith.constant 6 : index
    %c0_177 = arith.constant 0 : index
    %c0_178 = arith.constant 0 : index
    %190 = vector.load %arg7[%c6_176, %c0_177, %c0_178] : memref<9x16x16xbf16, #tpu.memory_space<vmem>>, vector<1x16x16xbf16>
    %191 = vector.shape_cast %190 : vector<1x16x16xbf16> to vector<16x16xbf16>
    %cst_179 = arith.constant dense<0.000000e+00> : vector<16x256xf32>
    %192 = tpu.matmul %191, %189, %cst_179 {dimension_numbers = #tpu.dot_dimension_numbers<[1], [0], [0], [1], [0, 0, 1, 1], [], []>} : vector<16x16xbf16>, vector<16x256xbf16>, vector<16x256xf32> -> vector<16x256xf32>
    %193 = arith.addf %185, %192 : vector<16x256xf32>
    %c0_180 = arith.constant 0 : index
    %c288 = arith.constant 288 : index
    %194 = vector.load %arg20[%c0_180, %c288] : memref<32x768xbf16, #tpu.memory_space<vmem>>, vector<16x256xbf16>
    %c7_181 = arith.constant 7 : index
    %c0_182 = arith.constant 0 : index
    %c0_183 = arith.constant 0 : index
    %195 = vector.load %arg7[%c7_181, %c0_182, %c0_183] : memref<9x16x16xbf16, #tpu.memory_space<vmem>>, vector<1x16x16xbf16>
    %196 = vector.shape_cast %195 : vector<1x16x16xbf16> to vector<16x16xbf16>
    %cst_184 = arith.constant dense<0.000000e+00> : vector<16x256xf32>
    %197 = tpu.matmul %196, %194, %cst_184 {dimension_numbers = #tpu.dot_dimension_numbers<[1], [0], [0], [1], [0, 0, 1, 1], [], []>} : vector<16x16xbf16>, vector<16x256xbf16>, vector<16x256xf32> -> vector<16x256xf32>
    %198 = arith.addf %193, %197 : vector<16x256xf32>
    %c0_185 = arith.constant 0 : index
    %c290 = arith.constant 290 : index
    %199 = vector.load %arg20[%c0_185, %c290] : memref<32x768xbf16, #tpu.memory_space<vmem>>, vector<16x256xbf16>
    %c3_186 = arith.constant 3 : index
    %c0_187 = arith.constant 0 : index
    %200 = vector.load %arg2[%c3_186, %c0_187] : memref<8x256xbf16, #tpu.memory_space<vmem>>, vector<1x256xbf16>
    %201 = vector.broadcast %200 : vector<1x256xbf16> to vector<16x256xbf16>
    %202 = arith.mulf %199, %201 : vector<16x256xbf16>
    %c8_188 = arith.constant 8 : index
    %c0_189 = arith.constant 0 : index
    %c0_190 = arith.constant 0 : index
    %203 = vector.load %arg7[%c8_188, %c0_189, %c0_190] : memref<9x16x16xbf16, #tpu.memory_space<vmem>>, vector<1x16x16xbf16>
    %204 = vector.shape_cast %203 : vector<1x16x16xbf16> to vector<16x16xbf16>
    %cst_191 = arith.constant dense<0.000000e+00> : vector<16x256xf32>
    %205 = tpu.matmul %204, %202, %cst_191 {dimension_numbers = #tpu.dot_dimension_numbers<[1], [0], [0], [1], [0, 0, 1, 1], [], []>} : vector<16x16xbf16>, vector<16x256xbf16>, vector<16x256xf32> -> vector<16x256xf32>
    %206 = arith.addf %198, %205 : vector<16x256xf32>
    %207 = vector.broadcast %143 : vector<16x1xf32> to vector<16x256xf32>
    %208 = arith.addf %206, %207 : vector<16x256xf32>
    %cst_192 = arith.constant 0.000000e+00 : f32
    %209 = vector.broadcast %cst_192 : f32 to vector<16x256xf32>
    %210 = arith.maximumf %208, %209 : vector<16x256xf32>
    %211 = arith.truncf %210 : vector<16x256xf32> to vector<16x256xbf16>
    %c0_193 = arith.constant 0 : index
    %c0_194 = arith.constant 0 : index
    %212 = vector.load %arg10[%c0_193, %c0_194] : memref<16x1xf32, #tpu.memory_space<vmem>>, vector<16x1xf32>
    %c0_195 = arith.constant 0 : index
    %c256_196 = arith.constant 256 : index
    %213 = vector.load %arg20[%c0_195, %c256_196] : memref<32x768xbf16, #tpu.memory_space<vmem>>, vector<16x256xbf16>
    tpu.vector_store %arg20[%c0_195, %c256_196], %211 {strides = array<i32>} : memref<32x768xbf16, #tpu.memory_space<vmem>>, vector<16x256xbf16>,
    %c0_197 = arith.constant 0 : index
    %c188 = arith.constant 188 : index
    %214 = vector.load %arg20[%c0_197, %c188] : memref<32x768xbf16, #tpu.memory_space<vmem>>, vector<16x256xbf16>
    %c4_198 = arith.constant 4 : index
    %c0_199 = arith.constant 0 : index
    %215 = vector.load %arg2[%c4_198, %c0_199] : memref<8x256xbf16, #tpu.memory_space<vmem>>, vector<1x256xbf16>
    %216 = vector.broadcast %215 : vector<1x256xbf16> to vector<16x256xbf16>
    %217 = arith.mulf %214, %216 : vector<16x256xbf16>
    %c0_200 = arith.constant 0 : index
    %c0_201 = arith.constant 0 : index
    %c0_202 = arith.constant 0 : index
    %218 = vector.load %arg9[%c0_200, %c0_201, %c0_202] : memref<9x16x16xbf16, #tpu.memory_space<vmem>>, vector<1x16x16xbf16>
    %219 = vector.shape_cast %218 : vector<1x16x16xbf16> to vector<16x16xbf16>
    %cst_203 = arith.constant dense<0.000000e+00> : vector<16x256xf32>
    %220 = tpu.matmul %219, %217, %cst_203 {dimension_numbers = #tpu.dot_dimension_numbers<[1], [0], [0], [1], [0, 0, 1, 1], [], []>} : vector<16x16xbf16>, vector<16x256xbf16>, vector<16x256xf32> -> vector<16x256xf32>
    %c0_204 = arith.constant 0 : index
    %c192 = arith.constant 192 : index
    %221 = vector.load %arg20[%c0_204, %c192] : memref<32x768xbf16, #tpu.memory_space<vmem>>, vector<16x256xbf16>
    %c1_205 = arith.constant 1 : index
    %c0_206 = arith.constant 0 : index
    %c0_207 = arith.constant 0 : index
    %222 = vector.load %arg9[%c1_205, %c0_206, %c0_207] : memref<9x16x16xbf16, #tpu.memory_space<vmem>>, vector<1x16x16xbf16>
    %223 = vector.shape_cast %222 : vector<1x16x16xbf16> to vector<16x16xbf16>
    %cst_208 = arith.constant dense<0.000000e+00> : vector<16x256xf32>
    %224 = tpu.matmul %223, %221, %cst_208 {dimension_numbers = #tpu.dot_dimension_numbers<[1], [0], [0], [1], [0, 0, 1, 1], [], []>} : vector<16x16xbf16>, vector<16x256xbf16>, vector<16x256xf32> -> vector<16x256xf32>
    %225 = arith.addf %220, %224 : vector<16x256xf32>
    %c0_209 = arith.constant 0 : index
    %c196 = arith.constant 196 : index
    %226 = vector.load %arg20[%c0_209, %c196] : memref<32x768xbf16, #tpu.memory_space<vmem>>, vector<16x256xbf16>
    %c5_210 = arith.constant 5 : index
    %c0_211 = arith.constant 0 : index
    %227 = vector.load %arg2[%c5_210, %c0_211] : memref<8x256xbf16, #tpu.memory_space<vmem>>, vector<1x256xbf16>
    %228 = vector.broadcast %227 : vector<1x256xbf16> to vector<16x256xbf16>
    %229 = arith.mulf %226, %228 : vector<16x256xbf16>
    %c2_212 = arith.constant 2 : index
    %c0_213 = arith.constant 0 : index
    %c0_214 = arith.constant 0 : index
    %230 = vector.load %arg9[%c2_212, %c0_213, %c0_214] : memref<9x16x16xbf16, #tpu.memory_space<vmem>>, vector<1x16x16xbf16>
    %231 = vector.shape_cast %230 : vector<1x16x16xbf16> to vector<16x16xbf16>
    %cst_215 = arith.constant dense<0.000000e+00> : vector<16x256xf32>
    %232 = tpu.matmul %231, %229, %cst_215 {dimension_numbers = #tpu.dot_dimension_numbers<[1], [0], [0], [1], [0, 0, 1, 1], [], []>} : vector<16x16xbf16>, vector<16x256xbf16>, vector<16x256xf32> -> vector<16x256xf32>
    %233 = arith.addf %225, %232 : vector<16x256xf32>
    %c0_216 = arith.constant 0 : index
    %c252 = arith.constant 252 : index
    %234 = vector.load %arg20[%c0_216, %c252] : memref<32x768xbf16, #tpu.memory_space<vmem>>, vector<16x256xbf16>
    %c4_217 = arith.constant 4 : index
    %c0_218 = arith.constant 0 : index
    %235 = vector.load %arg2[%c4_217, %c0_218] : memref<8x256xbf16, #tpu.memory_space<vmem>>, vector<1x256xbf16>
    %236 = vector.broadcast %235 : vector<1x256xbf16> to vector<16x256xbf16>
    %237 = arith.mulf %234, %236 : vector<16x256xbf16>
    %c3_219 = arith.constant 3 : index
    %c0_220 = arith.constant 0 : index
    %c0_221 = arith.constant 0 : index
    %238 = vector.load %arg9[%c3_219, %c0_220, %c0_221] : memref<9x16x16xbf16, #tpu.memory_space<vmem>>, vector<1x16x16xbf16>
    %239 = vector.shape_cast %238 : vector<1x16x16xbf16> to vector<16x16xbf16>
    %cst_222 = arith.constant dense<0.000000e+00> : vector<16x256xf32>
    %240 = tpu.matmul %239, %237, %cst_222 {dimension_numbers = #tpu.dot_dimension_numbers<[1], [0], [0], [1], [0, 0, 1, 1], [], []>} : vector<16x16xbf16>, vector<16x256xbf16>, vector<16x256xf32> -> vector<16x256xf32>
    %241 = arith.addf %233, %240 : vector<16x256xf32>
    %c0_223 = arith.constant 0 : index
    %c256_224 = arith.constant 256 : index
    %242 = vector.load %arg20[%c0_223, %c256_224] : memref<32x768xbf16, #tpu.memory_space<vmem>>, vector<16x256xbf16>
    %c4_225 = arith.constant 4 : index
    %c0_226 = arith.constant 0 : index
    %c0_227 = arith.constant 0 : index
    %243 = vector.load %arg9[%c4_225, %c0_226, %c0_227] : memref<9x16x16xbf16, #tpu.memory_space<vmem>>, vector<1x16x16xbf16>
    %244 = vector.shape_cast %243 : vector<1x16x16xbf16> to vector<16x16xbf16>
    %cst_228 = arith.constant dense<0.000000e+00> : vector<16x256xf32>
    %245 = tpu.matmul %244, %242, %cst_228 {dimension_numbers = #tpu.dot_dimension_numbers<[1], [0], [0], [1], [0, 0, 1, 1], [], []>} : vector<16x16xbf16>, vector<16x256xbf16>, vector<16x256xf32> -> vector<16x256xf32>
    %246 = arith.addf %241, %245 : vector<16x256xf32>
    %c0_229 = arith.constant 0 : index
    %c260 = arith.constant 260 : index
    %247 = vector.load %arg20[%c0_229, %c260] : memref<32x768xbf16, #tpu.memory_space<vmem>>, vector<16x256xbf16>
    %c5_230 = arith.constant 5 : index
    %c0_231 = arith.constant 0 : index
    %248 = vector.load %arg2[%c5_230, %c0_231] : memref<8x256xbf16, #tpu.memory_space<vmem>>, vector<1x256xbf16>
    %249 = vector.broadcast %248 : vector<1x256xbf16> to vector<16x256xbf16>
    %250 = arith.mulf %247, %249 : vector<16x256xbf16>
    %c5_232 = arith.constant 5 : index
    %c0_233 = arith.constant 0 : index
    %c0_234 = arith.constant 0 : index
    %251 = vector.load %arg9[%c5_232, %c0_233, %c0_234] : memref<9x16x16xbf16, #tpu.memory_space<vmem>>, vector<1x16x16xbf16>
    %252 = vector.shape_cast %251 : vector<1x16x16xbf16> to vector<16x16xbf16>
    %cst_235 = arith.constant dense<0.000000e+00> : vector<16x256xf32>
    %253 = tpu.matmul %252, %250, %cst_235 {dimension_numbers = #tpu.dot_dimension_numbers<[1], [0], [0], [1], [0, 0, 1, 1], [], []>} : vector<16x16xbf16>, vector<16x256xbf16>, vector<16x256xf32> -> vector<16x256xf32>
    %254 = arith.addf %246, %253 : vector<16x256xf32>
    %c0_236 = arith.constant 0 : index
    %c316 = arith.constant 316 : index
    %255 = vector.load %arg20[%c0_236, %c316] : memref<32x768xbf16, #tpu.memory_space<vmem>>, vector<16x256xbf16>
    %c4_237 = arith.constant 4 : index
    %c0_238 = arith.constant 0 : index
    %256 = vector.load %arg2[%c4_237, %c0_238] : memref<8x256xbf16, #tpu.memory_space<vmem>>, vector<1x256xbf16>
    %257 = vector.broadcast %256 : vector<1x256xbf16> to vector<16x256xbf16>
    %258 = arith.mulf %255, %257 : vector<16x256xbf16>
    %c6_239 = arith.constant 6 : index
    %c0_240 = arith.constant 0 : index
    %c0_241 = arith.constant 0 : index
    %259 = vector.load %arg9[%c6_239, %c0_240, %c0_241] : memref<9x16x16xbf16, #tpu.memory_space<vmem>>, vector<1x16x16xbf16>
    %260 = vector.shape_cast %259 : vector<1x16x16xbf16> to vector<16x16xbf16>
    %cst_242 = arith.constant dense<0.000000e+00> : vector<16x256xf32>
    %261 = tpu.matmul %260, %258, %cst_242 {dimension_numbers = #tpu.dot_dimension_numbers<[1], [0], [0], [1], [0, 0, 1, 1], [], []>} : vector<16x16xbf16>, vector<16x256xbf16>, vector<16x256xf32> -> vector<16x256xf32>
    %262 = arith.addf %254, %261 : vector<16x256xf32>
    %c0_243 = arith.constant 0 : index
    %c320 = arith.constant 320 : index
    %263 = vector.load %arg20[%c0_243, %c320] : memref<32x768xbf16, #tpu.memory_space<vmem>>, vector<16x256xbf16>
    %c7_244 = arith.constant 7 : index
    %c0_245 = arith.constant 0 : index
    %c0_246 = arith.constant 0 : index
    %264 = vector.load %arg9[%c7_244, %c0_245, %c0_246] : memref<9x16x16xbf16, #tpu.memory_space<vmem>>, vector<1x16x16xbf16>
    %265 = vector.shape_cast %264 : vector<1x16x16xbf16> to vector<16x16xbf16>
    %cst_247 = arith.constant dense<0.000000e+00> : vector<16x256xf32>
    %266 = tpu.matmul %265, %263, %cst_247 {dimension_numbers = #tpu.dot_dimension_numbers<[1], [0], [0], [1], [0, 0, 1, 1], [], []>} : vector<16x16xbf16>, vector<16x256xbf16>, vector<16x256xf32> -> vector<16x256xf32>
    %267 = arith.addf %262, %266 : vector<16x256xf32>
    %c0_248 = arith.constant 0 : index
    %c324 = arith.constant 324 : index
    %268 = vector.load %arg20[%c0_248, %c324] : memref<32x768xbf16, #tpu.memory_space<vmem>>, vector<16x256xbf16>
    %c5_249 = arith.constant 5 : index
    %c0_250 = arith.constant 0 : index
    %269 = vector.load %arg2[%c5_249, %c0_250] : memref<8x256xbf16, #tpu.memory_space<vmem>>, vector<1x256xbf16>
    %270 = vector.broadcast %269 : vector<1x256xbf16> to vector<16x256xbf16>
    %271 = arith.mulf %268, %270 : vector<16x256xbf16>
    %c8_251 = arith.constant 8 : index
    %c0_252 = arith.constant 0 : index
    %c0_253 = arith.constant 0 : index
    %272 = vector.load %arg9[%c8_251, %c0_252, %c0_253] : memref<9x16x16xbf16, #tpu.memory_space<vmem>>, vector<1x16x16xbf16>
    %273 = vector.shape_cast %272 : vector<1x16x16xbf16> to vector<16x16xbf16>
    %cst_254 = arith.constant dense<0.000000e+00> : vector<16x256xf32>
    %274 = tpu.matmul %273, %271, %cst_254 {dimension_numbers = #tpu.dot_dimension_numbers<[1], [0], [0], [1], [0, 0, 1, 1], [], []>} : vector<16x16xbf16>, vector<16x256xbf16>, vector<16x256xf32> -> vector<16x256xf32>
    %275 = arith.addf %267, %274 : vector<16x256xf32>
    %276 = vector.broadcast %212 : vector<16x1xf32> to vector<16x256xf32>
    %277 = arith.addf %275, %276 : vector<16x256xf32>
    %cst_255 = arith.constant 0.000000e+00 : f32
    %278 = vector.broadcast %cst_255 : f32 to vector<16x256xf32>
    %279 = arith.maximumf %277, %278 : vector<16x256xf32>
    %280 = arith.truncf %279 : vector<16x256xf32> to vector<16x256xbf16>
    %c0_256 = arith.constant 0 : index
    %c0_257 = arith.constant 0 : index
    %281 = vector.load %arg12[%c0_256, %c0_257] : memref<16x1xf32, #tpu.memory_space<vmem>>, vector<16x1xf32>
    %c0_258 = arith.constant 0 : index
    %c256_259 = arith.constant 256 : index
    %282 = vector.load %arg20[%c0_258, %c256_259] : memref<32x768xbf16, #tpu.memory_space<vmem>>, vector<16x256xbf16>
    tpu.vector_store %arg20[%c0_258, %c256_259], %280 {strides = array<i32>} : memref<32x768xbf16, #tpu.memory_space<vmem>>, vector<16x256xbf16>,
    %c0_260 = arith.constant 0 : index
    %c120 = arith.constant 120 : index
    %283 = vector.load %arg20[%c0_260, %c120] : memref<32x768xbf16, #tpu.memory_space<vmem>>, vector<16x256xbf16>
    %c6_261 = arith.constant 6 : index
    %c0_262 = arith.constant 0 : index
    %284 = vector.load %arg2[%c6_261, %c0_262] : memref<8x256xbf16, #tpu.memory_space<vmem>>, vector<1x256xbf16>
    %285 = vector.broadcast %284 : vector<1x256xbf16> to vector<16x256xbf16>
    %286 = arith.mulf %283, %285 : vector<16x256xbf16>
    %c0_263 = arith.constant 0 : index
    %c0_264 = arith.constant 0 : index
    %c0_265 = arith.constant 0 : index
    %287 = vector.load %arg11[%c0_263, %c0_264, %c0_265] : memref<9x16x16xbf16, #tpu.memory_space<vmem>>, vector<1x16x16xbf16>
    %288 = vector.shape_cast %287 : vector<1x16x16xbf16> to vector<16x16xbf16>
    %cst_266 = arith.constant dense<0.000000e+00> : vector<16x256xf32>
    %289 = tpu.matmul %288, %286, %cst_266 {dimension_numbers = #tpu.dot_dimension_numbers<[1], [0], [0], [1], [0, 0, 1, 1], [], []>} : vector<16x16xbf16>, vector<16x256xbf16>, vector<16x256xf32> -> vector<16x256xf32>
    %c0_267 = arith.constant 0 : index
    %c128 = arith.constant 128 : index
    %290 = vector.load %arg20[%c0_267, %c128] : memref<32x768xbf16, #tpu.memory_space<vmem>>, vector<16x256xbf16>
    %c1_268 = arith.constant 1 : index
    %c0_269 = arith.constant 0 : index
    %c0_270 = arith.constant 0 : index
    %291 = vector.load %arg11[%c1_268, %c0_269, %c0_270] : memref<9x16x16xbf16, #tpu.memory_space<vmem>>, vector<1x16x16xbf16>
    %292 = vector.shape_cast %291 : vector<1x16x16xbf16> to vector<16x16xbf16>
    %cst_271 = arith.constant dense<0.000000e+00> : vector<16x256xf32>
    %293 = tpu.matmul %292, %290, %cst_271 {dimension_numbers = #tpu.dot_dimension_numbers<[1], [0], [0], [1], [0, 0, 1, 1], [], []>} : vector<16x16xbf16>, vector<16x256xbf16>, vector<16x256xf32> -> vector<16x256xf32>
    %294 = arith.addf %289, %293 : vector<16x256xf32>
    %c0_272 = arith.constant 0 : index
    %c136 = arith.constant 136 : index
    %295 = vector.load %arg20[%c0_272, %c136] : memref<32x768xbf16, #tpu.memory_space<vmem>>, vector<16x256xbf16>
    %c7_273 = arith.constant 7 : index
    %c0_274 = arith.constant 0 : index
    %296 = vector.load %arg2[%c7_273, %c0_274] : memref<8x256xbf16, #tpu.memory_space<vmem>>, vector<1x256xbf16>
    %297 = vector.broadcast %296 : vector<1x256xbf16> to vector<16x256xbf16>
    %298 = arith.mulf %295, %297 : vector<16x256xbf16>
    %c2_275 = arith.constant 2 : index
    %c0_276 = arith.constant 0 : index
    %c0_277 = arith.constant 0 : index
    %299 = vector.load %arg11[%c2_275, %c0_276, %c0_277] : memref<9x16x16xbf16, #tpu.memory_space<vmem>>, vector<1x16x16xbf16>
    %300 = vector.shape_cast %299 : vector<1x16x16xbf16> to vector<16x16xbf16>
    %cst_278 = arith.constant dense<0.000000e+00> : vector<16x256xf32>
    %301 = tpu.matmul %300, %298, %cst_278 {dimension_numbers = #tpu.dot_dimension_numbers<[1], [0], [0], [1], [0, 0, 1, 1], [], []>} : vector<16x16xbf16>, vector<16x256xbf16>, vector<16x256xf32> -> vector<16x256xf32>
    %302 = arith.addf %294, %301 : vector<16x256xf32>
    %c0_279 = arith.constant 0 : index
    %c248 = arith.constant 248 : index
    %303 = vector.load %arg20[%c0_279, %c248] : memref<32x768xbf16, #tpu.memory_space<vmem>>, vector<16x256xbf16>
    %c6_280 = arith.constant 6 : index
    %c0_281 = arith.constant 0 : index
    %304 = vector.load %arg2[%c6_280, %c0_281] : memref<8x256xbf16, #tpu.memory_space<vmem>>, vector<1x256xbf16>
    %305 = vector.broadcast %304 : vector<1x256xbf16> to vector<16x256xbf16>
    %306 = arith.mulf %303, %305 : vector<16x256xbf16>
    %c3_282 = arith.constant 3 : index
    %c0_283 = arith.constant 0 : index
    %c0_284 = arith.constant 0 : index
    %307 = vector.load %arg11[%c3_282, %c0_283, %c0_284] : memref<9x16x16xbf16, #tpu.memory_space<vmem>>, vector<1x16x16xbf16>
    %308 = vector.shape_cast %307 : vector<1x16x16xbf16> to vector<16x16xbf16>
    %cst_285 = arith.constant dense<0.000000e+00> : vector<16x256xf32>
    %309 = tpu.matmul %308, %306, %cst_285 {dimension_numbers = #tpu.dot_dimension_numbers<[1], [0], [0], [1], [0, 0, 1, 1], [], []>} : vector<16x16xbf16>, vector<16x256xbf16>, vector<16x256xf32> -> vector<16x256xf32>
    %310 = arith.addf %302, %309 : vector<16x256xf32>
    %c0_286 = arith.constant 0 : index
    %c256_287 = arith.constant 256 : index
    %311 = vector.load %arg20[%c0_286, %c256_287] : memref<32x768xbf16, #tpu.memory_space<vmem>>, vector<16x256xbf16>
    %c4_288 = arith.constant 4 : index
    %c0_289 = arith.constant 0 : index
    %c0_290 = arith.constant 0 : index
    %312 = vector.load %arg11[%c4_288, %c0_289, %c0_290] : memref<9x16x16xbf16, #tpu.memory_space<vmem>>, vector<1x16x16xbf16>
    %313 = vector.shape_cast %312 : vector<1x16x16xbf16> to vector<16x16xbf16>
    %cst_291 = arith.constant dense<0.000000e+00> : vector<16x256xf32>
    %314 = tpu.matmul %313, %311, %cst_291 {dimension_numbers = #tpu.dot_dimension_numbers<[1], [0], [0], [1], [0, 0, 1, 1], [], []>} : vector<16x16xbf16>, vector<16x256xbf16>, vector<16x256xf32> -> vector<16x256xf32>
    %315 = arith.addf %310, %314 : vector<16x256xf32>
    %c0_292 = arith.constant 0 : index
    %c264 = arith.constant 264 : index
    %316 = vector.load %arg20[%c0_292, %c264] : memref<32x768xbf16, #tpu.memory_space<vmem>>, vector<16x256xbf16>
    %c7_293 = arith.constant 7 : index
    %c0_294 = arith.constant 0 : index
    %317 = vector.load %arg2[%c7_293, %c0_294] : memref<8x256xbf16, #tpu.memory_space<vmem>>, vector<1x256xbf16>
    %318 = vector.broadcast %317 : vector<1x256xbf16> to vector<16x256xbf16>
    %319 = arith.mulf %316, %318 : vector<16x256xbf16>
    %c5_295 = arith.constant 5 : index
    %c0_296 = arith.constant 0 : index
    %c0_297 = arith.constant 0 : index
    %320 = vector.load %arg11[%c5_295, %c0_296, %c0_297] : memref<9x16x16xbf16, #tpu.memory_space<vmem>>, vector<1x16x16xbf16>
    %321 = vector.shape_cast %320 : vector<1x16x16xbf16> to vector<16x16xbf16>
    %cst_298 = arith.constant dense<0.000000e+00> : vector<16x256xf32>
    %322 = tpu.matmul %321, %319, %cst_298 {dimension_numbers = #tpu.dot_dimension_numbers<[1], [0], [0], [1], [0, 0, 1, 1], [], []>} : vector<16x16xbf16>, vector<16x256xbf16>, vector<16x256xf32> -> vector<16x256xf32>
    %323 = arith.addf %315, %322 : vector<16x256xf32>
    %c0_299 = arith.constant 0 : index
    %c376 = arith.constant 376 : index
    %324 = vector.load %arg20[%c0_299, %c376] : memref<32x768xbf16, #tpu.memory_space<vmem>>, vector<16x256xbf16>
    %c6_300 = arith.constant 6 : index
    %c0_301 = arith.constant 0 : index
    %325 = vector.load %arg2[%c6_300, %c0_301] : memref<8x256xbf16, #tpu.memory_space<vmem>>, vector<1x256xbf16>
    %326 = vector.broadcast %325 : vector<1x256xbf16> to vector<16x256xbf16>
    %327 = arith.mulf %324, %326 : vector<16x256xbf16>
    %c6_302 = arith.constant 6 : index
    %c0_303 = arith.constant 0 : index
    %c0_304 = arith.constant 0 : index
    %328 = vector.load %arg11[%c6_302, %c0_303, %c0_304] : memref<9x16x16xbf16, #tpu.memory_space<vmem>>, vector<1x16x16xbf16>
    %329 = vector.shape_cast %328 : vector<1x16x16xbf16> to vector<16x16xbf16>
    %cst_305 = arith.constant dense<0.000000e+00> : vector<16x256xf32>
    %330 = tpu.matmul %329, %327, %cst_305 {dimension_numbers = #tpu.dot_dimension_numbers<[1], [0], [0], [1], [0, 0, 1, 1], [], []>} : vector<16x16xbf16>, vector<16x256xbf16>, vector<16x256xf32> -> vector<16x256xf32>
    %331 = arith.addf %323, %330 : vector<16x256xf32>
    %c0_306 = arith.constant 0 : index
    %c384 = arith.constant 384 : index
    %332 = vector.load %arg20[%c0_306, %c384] : memref<32x768xbf16, #tpu.memory_space<vmem>>, vector<16x256xbf16>
    %c7_307 = arith.constant 7 : index
    %c0_308 = arith.constant 0 : index
    %c0_309 = arith.constant 0 : index
    %333 = vector.load %arg11[%c7_307, %c0_308, %c0_309] : memref<9x16x16xbf16, #tpu.memory_space<vmem>>, vector<1x16x16xbf16>
    %334 = vector.shape_cast %333 : vector<1x16x16xbf16> to vector<16x16xbf16>
    %cst_310 = arith.constant dense<0.000000e+00> : vector<16x256xf32>
    %335 = tpu.matmul %334, %332, %cst_310 {dimension_numbers = #tpu.dot_dimension_numbers<[1], [0], [0], [1], [0, 0, 1, 1], [], []>} : vector<16x16xbf16>, vector<16x256xbf16>, vector<16x256xf32> -> vector<16x256xf32>
    %336 = arith.addf %331, %335 : vector<16x256xf32>
    %c0_311 = arith.constant 0 : index
    %c392 = arith.constant 392 : index
    %337 = vector.load %arg20[%c0_311, %c392] : memref<32x768xbf16, #tpu.memory_space<vmem>>, vector<16x256xbf16>
    %c7_312 = arith.constant 7 : index
    %c0_313 = arith.constant 0 : index
    %338 = vector.load %arg2[%c7_312, %c0_313] : memref<8x256xbf16, #tpu.memory_space<vmem>>, vector<1x256xbf16>
    %339 = vector.broadcast %338 : vector<1x256xbf16> to vector<16x256xbf16>
    %340 = arith.mulf %337, %339 : vector<16x256xbf16>
    %c8_314 = arith.constant 8 : index
    %c0_315 = arith.constant 0 : index
    %c0_316 = arith.constant 0 : index
    %341 = vector.load %arg11[%c8_314, %c0_315, %c0_316] : memref<9x16x16xbf16, #tpu.memory_space<vmem>>, vector<1x16x16xbf16>
    %342 = vector.shape_cast %341 : vector<1x16x16xbf16> to vector<16x16xbf16>
    %cst_317 = arith.constant dense<0.000000e+00> : vector<16x256xf32>
    %343 = tpu.matmul %342, %340, %cst_317 {dimension_numbers = #tpu.dot_dimension_numbers<[1], [0], [0], [1], [0, 0, 1, 1], [], []>} : vector<16x16xbf16>, vector<16x256xbf16>, vector<16x256xf32> -> vector<16x256xf32>
    %344 = arith.addf %336, %343 : vector<16x256xf32>
    %345 = vector.broadcast %281 : vector<16x1xf32> to vector<16x256xf32>
    %346 = arith.addf %344, %345 : vector<16x256xf32>
    %cst_318 = arith.constant 0.000000e+00 : f32
    %347 = vector.broadcast %cst_318 : f32 to vector<16x256xf32>
    %348 = arith.maximumf %346, %347 : vector<16x256xf32>
    %349 = arith.truncf %348 : vector<16x256xf32> to vector<16x256xbf16>
    %c0_319 = arith.constant 0 : index
    %c0_320 = arith.constant 0 : index
    %350 = vector.load %arg14[%c0_319, %c0_320] : memref<16x1xf32, #tpu.memory_space<vmem>>, vector<16x1xf32>
    %c0_321 = arith.constant 0 : index
    %c256_322 = arith.constant 256 : index
    %351 = vector.load %arg20[%c0_321, %c256_322] : memref<32x768xbf16, #tpu.memory_space<vmem>>, vector<16x256xbf16>
    tpu.vector_store %arg20[%c0_321, %c256_322], %349 {strides = array<i32>} : memref<32x768xbf16, #tpu.memory_space<vmem>>, vector<16x256xbf16>,
    %c16 = arith.constant 16 : index
    %c256_323 = arith.constant 256 : index
    %352 = vector.load %arg20[%c16, %c256_323] : memref<32x768xbf16, #tpu.memory_space<vmem>>, vector<16x256xbf16>
    tpu.vector_store %arg20[%c16, %c256_323], %280 {strides = array<i32>} : memref<32x768xbf16, #tpu.memory_space<vmem>>, vector<16x256xbf16>,
    %c0_324 = arith.constant 0 : index
    %c188_325 = arith.constant 188 : index
    %353 = vector.load %arg20[%c0_324, %c188_325] : memref<32x768xbf16, #tpu.memory_space<vmem>>, vector<32x256xbf16>
    %c4_326 = arith.constant 4 : index
    %c0_327 = arith.constant 0 : index
    %354 = vector.load %arg2[%c4_326, %c0_327] : memref<8x256xbf16, #tpu.memory_space<vmem>>, vector<1x256xbf16>
    %355 = vector.broadcast %354 : vector<1x256xbf16> to vector<32x256xbf16>
    %356 = arith.mulf %353, %355 : vector<32x256xbf16>
    %c0_328 = arith.constant 0 : index
    %c0_329 = arith.constant 0 : index
    %c0_330 = arith.constant 0 : index
    %357 = vector.load %arg13[%c0_328, %c0_329, %c0_330] : memref<9x16x32xbf16, #tpu.memory_space<vmem>>, vector<1x16x32xbf16>
    %358 = vector.shape_cast %357 : vector<1x16x32xbf16> to vector<16x32xbf16>
    %cst_331 = arith.constant dense<0.000000e+00> : vector<16x256xf32>
    %359 = tpu.matmul %358, %356, %cst_331 {dimension_numbers = #tpu.dot_dimension_numbers<[1], [0], [0], [1], [0, 0, 1, 1], [], []>} : vector<16x32xbf16>, vector<32x256xbf16>, vector<16x256xf32> -> vector<16x256xf32>
    %c0_332 = arith.constant 0 : index
    %c192_333 = arith.constant 192 : index
    %360 = vector.load %arg20[%c0_332, %c192_333] : memref<32x768xbf16, #tpu.memory_space<vmem>>, vector<32x256xbf16>
    %c1_334 = arith.constant 1 : index
    %c0_335 = arith.constant 0 : index
    %c0_336 = arith.constant 0 : index
    %361 = vector.load %arg13[%c1_334, %c0_335, %c0_336] : memref<9x16x32xbf16, #tpu.memory_space<vmem>>, vector<1x16x32xbf16>
    %362 = vector.shape_cast %361 : vector<1x16x32xbf16> to vector<16x32xbf16>
    %cst_337 = arith.constant dense<0.000000e+00> : vector<16x256xf32>
    %363 = tpu.matmul %362, %360, %cst_337 {dimension_numbers = #tpu.dot_dimension_numbers<[1], [0], [0], [1], [0, 0, 1, 1], [], []>} : vector<16x32xbf16>, vector<32x256xbf16>, vector<16x256xf32> -> vector<16x256xf32>
    %364 = arith.addf %359, %363 : vector<16x256xf32>
    %c0_338 = arith.constant 0 : index
    %c196_339 = arith.constant 196 : index
    %365 = vector.load %arg20[%c0_338, %c196_339] : memref<32x768xbf16, #tpu.memory_space<vmem>>, vector<32x256xbf16>
    %c5_340 = arith.constant 5 : index
    %c0_341 = arith.constant 0 : index
    %366 = vector.load %arg2[%c5_340, %c0_341] : memref<8x256xbf16, #tpu.memory_space<vmem>>, vector<1x256xbf16>
    %367 = vector.broadcast %366 : vector<1x256xbf16> to vector<32x256xbf16>
    %368 = arith.mulf %365, %367 : vector<32x256xbf16>
    %c2_342 = arith.constant 2 : index
    %c0_343 = arith.constant 0 : index
    %c0_344 = arith.constant 0 : index
    %369 = vector.load %arg13[%c2_342, %c0_343, %c0_344] : memref<9x16x32xbf16, #tpu.memory_space<vmem>>, vector<1x16x32xbf16>
    %370 = vector.shape_cast %369 : vector<1x16x32xbf16> to vector<16x32xbf16>
    %cst_345 = arith.constant dense<0.000000e+00> : vector<16x256xf32>
    %371 = tpu.matmul %370, %368, %cst_345 {dimension_numbers = #tpu.dot_dimension_numbers<[1], [0], [0], [1], [0, 0, 1, 1], [], []>} : vector<16x32xbf16>, vector<32x256xbf16>, vector<16x256xf32> -> vector<16x256xf32>
    %372 = arith.addf %364, %371 : vector<16x256xf32>
    %c0_346 = arith.constant 0 : index
    %c252_347 = arith.constant 252 : index
    %373 = vector.load %arg20[%c0_346, %c252_347] : memref<32x768xbf16, #tpu.memory_space<vmem>>, vector<32x256xbf16>
    %c4_348 = arith.constant 4 : index
    %c0_349 = arith.constant 0 : index
    %374 = vector.load %arg2[%c4_348, %c0_349] : memref<8x256xbf16, #tpu.memory_space<vmem>>, vector<1x256xbf16>
    %375 = vector.broadcast %374 : vector<1x256xbf16> to vector<32x256xbf16>
    %376 = arith.mulf %373, %375 : vector<32x256xbf16>
    %c3_350 = arith.constant 3 : index
    %c0_351 = arith.constant 0 : index
    %c0_352 = arith.constant 0 : index
    %377 = vector.load %arg13[%c3_350, %c0_351, %c0_352] : memref<9x16x32xbf16, #tpu.memory_space<vmem>>, vector<1x16x32xbf16>
    %378 = vector.shape_cast %377 : vector<1x16x32xbf16> to vector<16x32xbf16>
    %cst_353 = arith.constant dense<0.000000e+00> : vector<16x256xf32>
    %379 = tpu.matmul %378, %376, %cst_353 {dimension_numbers = #tpu.dot_dimension_numbers<[1], [0], [0], [1], [0, 0, 1, 1], [], []>} : vector<16x32xbf16>, vector<32x256xbf16>, vector<16x256xf32> -> vector<16x256xf32>
    %380 = arith.addf %372, %379 : vector<16x256xf32>
    %c0_354 = arith.constant 0 : index
    %c256_355 = arith.constant 256 : index
    %381 = vector.load %arg20[%c0_354, %c256_355] : memref<32x768xbf16, #tpu.memory_space<vmem>>, vector<32x256xbf16>
    %c4_356 = arith.constant 4 : index
    %c0_357 = arith.constant 0 : index
    %c0_358 = arith.constant 0 : index
    %382 = vector.load %arg13[%c4_356, %c0_357, %c0_358] : memref<9x16x32xbf16, #tpu.memory_space<vmem>>, vector<1x16x32xbf16>
    %383 = vector.shape_cast %382 : vector<1x16x32xbf16> to vector<16x32xbf16>
    %cst_359 = arith.constant dense<0.000000e+00> : vector<16x256xf32>
    %384 = tpu.matmul %383, %381, %cst_359 {dimension_numbers = #tpu.dot_dimension_numbers<[1], [0], [0], [1], [0, 0, 1, 1], [], []>} : vector<16x32xbf16>, vector<32x256xbf16>, vector<16x256xf32> -> vector<16x256xf32>
    %385 = arith.addf %380, %384 : vector<16x256xf32>
    %c0_360 = arith.constant 0 : index
    %c260_361 = arith.constant 260 : index
    %386 = vector.load %arg20[%c0_360, %c260_361] : memref<32x768xbf16, #tpu.memory_space<vmem>>, vector<32x256xbf16>
    %c5_362 = arith.constant 5 : index
    %c0_363 = arith.constant 0 : index
    %387 = vector.load %arg2[%c5_362, %c0_363] : memref<8x256xbf16, #tpu.memory_space<vmem>>, vector<1x256xbf16>
    %388 = vector.broadcast %387 : vector<1x256xbf16> to vector<32x256xbf16>
    %389 = arith.mulf %386, %388 : vector<32x256xbf16>
    %c5_364 = arith.constant 5 : index
    %c0_365 = arith.constant 0 : index
    %c0_366 = arith.constant 0 : index
    %390 = vector.load %arg13[%c5_364, %c0_365, %c0_366] : memref<9x16x32xbf16, #tpu.memory_space<vmem>>, vector<1x16x32xbf16>
    %391 = vector.shape_cast %390 : vector<1x16x32xbf16> to vector<16x32xbf16>
    %cst_367 = arith.constant dense<0.000000e+00> : vector<16x256xf32>
    %392 = tpu.matmul %391, %389, %cst_367 {dimension_numbers = #tpu.dot_dimension_numbers<[1], [0], [0], [1], [0, 0, 1, 1], [], []>} : vector<16x32xbf16>, vector<32x256xbf16>, vector<16x256xf32> -> vector<16x256xf32>
    %393 = arith.addf %385, %392 : vector<16x256xf32>
    %c0_368 = arith.constant 0 : index
    %c316_369 = arith.constant 316 : index
    %394 = vector.load %arg20[%c0_368, %c316_369] : memref<32x768xbf16, #tpu.memory_space<vmem>>, vector<32x256xbf16>
    %c4_370 = arith.constant 4 : index
    %c0_371 = arith.constant 0 : index
    %395 = vector.load %arg2[%c4_370, %c0_371] : memref<8x256xbf16, #tpu.memory_space<vmem>>, vector<1x256xbf16>
    %396 = vector.broadcast %395 : vector<1x256xbf16> to vector<32x256xbf16>
    %397 = arith.mulf %394, %396 : vector<32x256xbf16>
    %c6_372 = arith.constant 6 : index
    %c0_373 = arith.constant 0 : index
    %c0_374 = arith.constant 0 : index
    %398 = vector.load %arg13[%c6_372, %c0_373, %c0_374] : memref<9x16x32xbf16, #tpu.memory_space<vmem>>, vector<1x16x32xbf16>
    %399 = vector.shape_cast %398 : vector<1x16x32xbf16> to vector<16x32xbf16>
    %cst_375 = arith.constant dense<0.000000e+00> : vector<16x256xf32>
    %400 = tpu.matmul %399, %397, %cst_375 {dimension_numbers = #tpu.dot_dimension_numbers<[1], [0], [0], [1], [0, 0, 1, 1], [], []>} : vector<16x32xbf16>, vector<32x256xbf16>, vector<16x256xf32> -> vector<16x256xf32>
    %401 = arith.addf %393, %400 : vector<16x256xf32>
    %c0_376 = arith.constant 0 : index
    %c320_377 = arith.constant 320 : index
    %402 = vector.load %arg20[%c0_376, %c320_377] : memref<32x768xbf16, #tpu.memory_space<vmem>>, vector<32x256xbf16>
    %c7_378 = arith.constant 7 : index
    %c0_379 = arith.constant 0 : index
    %c0_380 = arith.constant 0 : index
    %403 = vector.load %arg13[%c7_378, %c0_379, %c0_380] : memref<9x16x32xbf16, #tpu.memory_space<vmem>>, vector<1x16x32xbf16>
    %404 = vector.shape_cast %403 : vector<1x16x32xbf16> to vector<16x32xbf16>
    %cst_381 = arith.constant dense<0.000000e+00> : vector<16x256xf32>
    %405 = tpu.matmul %404, %402, %cst_381 {dimension_numbers = #tpu.dot_dimension_numbers<[1], [0], [0], [1], [0, 0, 1, 1], [], []>} : vector<16x32xbf16>, vector<32x256xbf16>, vector<16x256xf32> -> vector<16x256xf32>
    %406 = arith.addf %401, %405 : vector<16x256xf32>
    %c0_382 = arith.constant 0 : index
    %c324_383 = arith.constant 324 : index
    %407 = vector.load %arg20[%c0_382, %c324_383] : memref<32x768xbf16, #tpu.memory_space<vmem>>, vector<32x256xbf16>
    %c5_384 = arith.constant 5 : index
    %c0_385 = arith.constant 0 : index
    %408 = vector.load %arg2[%c5_384, %c0_385] : memref<8x256xbf16, #tpu.memory_space<vmem>>, vector<1x256xbf16>
    %409 = vector.broadcast %408 : vector<1x256xbf16> to vector<32x256xbf16>
    %410 = arith.mulf %407, %409 : vector<32x256xbf16>
    %c8_386 = arith.constant 8 : index
    %c0_387 = arith.constant 0 : index
    %c0_388 = arith.constant 0 : index
    %411 = vector.load %arg13[%c8_386, %c0_387, %c0_388] : memref<9x16x32xbf16, #tpu.memory_space<vmem>>, vector<1x16x32xbf16>
    %412 = vector.shape_cast %411 : vector<1x16x32xbf16> to vector<16x32xbf16>
    %cst_389 = arith.constant dense<0.000000e+00> : vector<16x256xf32>
    %413 = tpu.matmul %412, %410, %cst_389 {dimension_numbers = #tpu.dot_dimension_numbers<[1], [0], [0], [1], [0, 0, 1, 1], [], []>} : vector<16x32xbf16>, vector<32x256xbf16>, vector<16x256xf32> -> vector<16x256xf32>
    %414 = arith.addf %406, %413 : vector<16x256xf32>
    %415 = vector.broadcast %350 : vector<16x1xf32> to vector<16x256xf32>
    %416 = arith.addf %414, %415 : vector<16x256xf32>
    %cst_390 = arith.constant 0.000000e+00 : f32
    %417 = vector.broadcast %cst_390 : f32 to vector<16x256xf32>
    %418 = arith.maximumf %416, %417 : vector<16x256xf32>
    %419 = arith.truncf %418 : vector<16x256xf32> to vector<16x256xbf16>
    %c0_391 = arith.constant 0 : index
    %c0_392 = arith.constant 0 : index
    %420 = vector.load %arg16[%c0_391, %c0_392] : memref<16x1xf32, #tpu.memory_space<vmem>>, vector<16x1xf32>
    %c0_393 = arith.constant 0 : index
    %c256_394 = arith.constant 256 : index
    %421 = vector.load %arg20[%c0_393, %c256_394] : memref<32x768xbf16, #tpu.memory_space<vmem>>, vector<16x256xbf16>
    tpu.vector_store %arg20[%c0_393, %c256_394], %419 {strides = array<i32>} : memref<32x768xbf16, #tpu.memory_space<vmem>>, vector<16x256xbf16>,
    %c16_395 = arith.constant 16 : index
    %c256_396 = arith.constant 256 : index
    %422 = vector.load %arg20[%c16_395, %c256_396] : memref<32x768xbf16, #tpu.memory_space<vmem>>, vector<16x256xbf16>
    tpu.vector_store %arg20[%c16_395, %c256_396], %211 {strides = array<i32>} : memref<32x768xbf16, #tpu.memory_space<vmem>>, vector<16x256xbf16>,
    %c0_397 = arith.constant 0 : index
    %c222_398 = arith.constant 222 : index
    %423 = vector.load %arg20[%c0_397, %c222_398] : memref<32x768xbf16, #tpu.memory_space<vmem>>, vector<32x256xbf16>
    %c2_399 = arith.constant 2 : index
    %c0_400 = arith.constant 0 : index
    %424 = vector.load %arg2[%c2_399, %c0_400] : memref<8x256xbf16, #tpu.memory_space<vmem>>, vector<1x256xbf16>
    %425 = vector.broadcast %424 : vector<1x256xbf16> to vector<32x256xbf16>
    %426 = arith.mulf %423, %425 : vector<32x256xbf16>
    %c0_401 = arith.constant 0 : index
    %c0_402 = arith.constant 0 : index
    %c0_403 = arith.constant 0 : index
    %427 = vector.load %arg15[%c0_401, %c0_402, %c0_403] : memref<9x16x32xbf16, #tpu.memory_space<vmem>>, vector<1x16x32xbf16>
    %428 = vector.shape_cast %427 : vector<1x16x32xbf16> to vector<16x32xbf16>
    %cst_404 = arith.constant dense<0.000000e+00> : vector<16x256xf32>
    %429 = tpu.matmul %428, %426, %cst_404 {dimension_numbers = #tpu.dot_dimension_numbers<[1], [0], [0], [1], [0, 0, 1, 1], [], []>} : vector<16x32xbf16>, vector<32x256xbf16>, vector<16x256xf32> -> vector<16x256xf32>
    %c0_405 = arith.constant 0 : index
    %c224_406 = arith.constant 224 : index
    %430 = vector.load %arg20[%c0_405, %c224_406] : memref<32x768xbf16, #tpu.memory_space<vmem>>, vector<32x256xbf16>
    %c1_407 = arith.constant 1 : index
    %c0_408 = arith.constant 0 : index
    %c0_409 = arith.constant 0 : index
    %431 = vector.load %arg15[%c1_407, %c0_408, %c0_409] : memref<9x16x32xbf16, #tpu.memory_space<vmem>>, vector<1x16x32xbf16>
    %432 = vector.shape_cast %431 : vector<1x16x32xbf16> to vector<16x32xbf16>
    %cst_410 = arith.constant dense<0.000000e+00> : vector<16x256xf32>
    %433 = tpu.matmul %432, %430, %cst_410 {dimension_numbers = #tpu.dot_dimension_numbers<[1], [0], [0], [1], [0, 0, 1, 1], [], []>} : vector<16x32xbf16>, vector<32x256xbf16>, vector<16x256xf32> -> vector<16x256xf32>
    %434 = arith.addf %429, %433 : vector<16x256xf32>
    %c0_411 = arith.constant 0 : index
    %c226_412 = arith.constant 226 : index
    %435 = vector.load %arg20[%c0_411, %c226_412] : memref<32x768xbf16, #tpu.memory_space<vmem>>, vector<32x256xbf16>
    %c3_413 = arith.constant 3 : index
    %c0_414 = arith.constant 0 : index
    %436 = vector.load %arg2[%c3_413, %c0_414] : memref<8x256xbf16, #tpu.memory_space<vmem>>, vector<1x256xbf16>
    %437 = vector.broadcast %436 : vector<1x256xbf16> to vector<32x256xbf16>
    %438 = arith.mulf %435, %437 : vector<32x256xbf16>
    %c2_415 = arith.constant 2 : index
    %c0_416 = arith.constant 0 : index
    %c0_417 = arith.constant 0 : index
    %439 = vector.load %arg15[%c2_415, %c0_416, %c0_417] : memref<9x16x32xbf16, #tpu.memory_space<vmem>>, vector<1x16x32xbf16>
    %440 = vector.shape_cast %439 : vector<1x16x32xbf16> to vector<16x32xbf16>
    %cst_418 = arith.constant dense<0.000000e+00> : vector<16x256xf32>
    %441 = tpu.matmul %440, %438, %cst_418 {dimension_numbers = #tpu.dot_dimension_numbers<[1], [0], [0], [1], [0, 0, 1, 1], [], []>} : vector<16x32xbf16>, vector<32x256xbf16>, vector<16x256xf32> -> vector<16x256xf32>
    %442 = arith.addf %434, %441 : vector<16x256xf32>
    %c0_419 = arith.constant 0 : index
    %c254_420 = arith.constant 254 : index
    %443 = vector.load %arg20[%c0_419, %c254_420] : memref<32x768xbf16, #tpu.memory_space<vmem>>, vector<32x256xbf16>
    %c2_421 = arith.constant 2 : index
    %c0_422 = arith.constant 0 : index
    %444 = vector.load %arg2[%c2_421, %c0_422] : memref<8x256xbf16, #tpu.memory_space<vmem>>, vector<1x256xbf16>
    %445 = vector.broadcast %444 : vector<1x256xbf16> to vector<32x256xbf16>
    %446 = arith.mulf %443, %445 : vector<32x256xbf16>
    %c3_423 = arith.constant 3 : index
    %c0_424 = arith.constant 0 : index
    %c0_425 = arith.constant 0 : index
    %447 = vector.load %arg15[%c3_423, %c0_424, %c0_425] : memref<9x16x32xbf16, #tpu.memory_space<vmem>>, vector<1x16x32xbf16>
    %448 = vector.shape_cast %447 : vector<1x16x32xbf16> to vector<16x32xbf16>
    %cst_426 = arith.constant dense<0.000000e+00> : vector<16x256xf32>
    %449 = tpu.matmul %448, %446, %cst_426 {dimension_numbers = #tpu.dot_dimension_numbers<[1], [0], [0], [1], [0, 0, 1, 1], [], []>} : vector<16x32xbf16>, vector<32x256xbf16>, vector<16x256xf32> -> vector<16x256xf32>
    %450 = arith.addf %442, %449 : vector<16x256xf32>
    %c0_427 = arith.constant 0 : index
    %c256_428 = arith.constant 256 : index
    %451 = vector.load %arg20[%c0_427, %c256_428] : memref<32x768xbf16, #tpu.memory_space<vmem>>, vector<32x256xbf16>
    %c4_429 = arith.constant 4 : index
    %c0_430 = arith.constant 0 : index
    %c0_431 = arith.constant 0 : index
    %452 = vector.load %arg15[%c4_429, %c0_430, %c0_431] : memref<9x16x32xbf16, #tpu.memory_space<vmem>>, vector<1x16x32xbf16>
    %453 = vector.shape_cast %452 : vector<1x16x32xbf16> to vector<16x32xbf16>
    %cst_432 = arith.constant dense<0.000000e+00> : vector<16x256xf32>
    %454 = tpu.matmul %453, %451, %cst_432 {dimension_numbers = #tpu.dot_dimension_numbers<[1], [0], [0], [1], [0, 0, 1, 1], [], []>} : vector<16x32xbf16>, vector<32x256xbf16>, vector<16x256xf32> -> vector<16x256xf32>
    %455 = arith.addf %450, %454 : vector<16x256xf32>
    %c0_433 = arith.constant 0 : index
    %c258_434 = arith.constant 258 : index
    %456 = vector.load %arg20[%c0_433, %c258_434] : memref<32x768xbf16, #tpu.memory_space<vmem>>, vector<32x256xbf16>
    %c3_435 = arith.constant 3 : index
    %c0_436 = arith.constant 0 : index
    %457 = vector.load %arg2[%c3_435, %c0_436] : memref<8x256xbf16, #tpu.memory_space<vmem>>, vector<1x256xbf16>
    %458 = vector.broadcast %457 : vector<1x256xbf16> to vector<32x256xbf16>
    %459 = arith.mulf %456, %458 : vector<32x256xbf16>
    %c5_437 = arith.constant 5 : index
    %c0_438 = arith.constant 0 : index
    %c0_439 = arith.constant 0 : index
    %460 = vector.load %arg15[%c5_437, %c0_438, %c0_439] : memref<9x16x32xbf16, #tpu.memory_space<vmem>>, vector<1x16x32xbf16>
    %461 = vector.shape_cast %460 : vector<1x16x32xbf16> to vector<16x32xbf16>
    %cst_440 = arith.constant dense<0.000000e+00> : vector<16x256xf32>
    %462 = tpu.matmul %461, %459, %cst_440 {dimension_numbers = #tpu.dot_dimension_numbers<[1], [0], [0], [1], [0, 0, 1, 1], [], []>} : vector<16x32xbf16>, vector<32x256xbf16>, vector<16x256xf32> -> vector<16x256xf32>
    %463 = arith.addf %455, %462 : vector<16x256xf32>
    %c0_441 = arith.constant 0 : index
    %c286_442 = arith.constant 286 : index
    %464 = vector.load %arg20[%c0_441, %c286_442] : memref<32x768xbf16, #tpu.memory_space<vmem>>, vector<32x256xbf16>
    %c2_443 = arith.constant 2 : index
    %c0_444 = arith.constant 0 : index
    %465 = vector.load %arg2[%c2_443, %c0_444] : memref<8x256xbf16, #tpu.memory_space<vmem>>, vector<1x256xbf16>
    %466 = vector.broadcast %465 : vector<1x256xbf16> to vector<32x256xbf16>
    %467 = arith.mulf %464, %466 : vector<32x256xbf16>
    %c6_445 = arith.constant 6 : index
    %c0_446 = arith.constant 0 : index
    %c0_447 = arith.constant 0 : index
    %468 = vector.load %arg15[%c6_445, %c0_446, %c0_447] : memref<9x16x32xbf16, #tpu.memory_space<vmem>>, vector<1x16x32xbf16>
    %469 = vector.shape_cast %468 : vector<1x16x32xbf16> to vector<16x32xbf16>
    %cst_448 = arith.constant dense<0.000000e+00> : vector<16x256xf32>
    %470 = tpu.matmul %469, %467, %cst_448 {dimension_numbers = #tpu.dot_dimension_numbers<[1], [0], [0], [1], [0, 0, 1, 1], [], []>} : vector<16x32xbf16>, vector<32x256xbf16>, vector<16x256xf32> -> vector<16x256xf32>
    %471 = arith.addf %463, %470 : vector<16x256xf32>
    %c0_449 = arith.constant 0 : index
    %c288_450 = arith.constant 288 : index
    %472 = vector.load %arg20[%c0_449, %c288_450] : memref<32x768xbf16, #tpu.memory_space<vmem>>, vector<32x256xbf16>
    %c7_451 = arith.constant 7 : index
    %c0_452 = arith.constant 0 : index
    %c0_453 = arith.constant 0 : index
    %473 = vector.load %arg15[%c7_451, %c0_452, %c0_453] : memref<9x16x32xbf16, #tpu.memory_space<vmem>>, vector<1x16x32xbf16>
    %474 = vector.shape_cast %473 : vector<1x16x32xbf16> to vector<16x32xbf16>
    %cst_454 = arith.constant dense<0.000000e+00> : vector<16x256xf32>
    %475 = tpu.matmul %474, %472, %cst_454 {dimension_numbers = #tpu.dot_dimension_numbers<[1], [0], [0], [1], [0, 0, 1, 1], [], []>} : vector<16x32xbf16>, vector<32x256xbf16>, vector<16x256xf32> -> vector<16x256xf32>
    %476 = arith.addf %471, %475 : vector<16x256xf32>
    %c0_455 = arith.constant 0 : index
    %c290_456 = arith.constant 290 : index
    %477 = vector.load %arg20[%c0_455, %c290_456] : memref<32x768xbf16, #tpu.memory_space<vmem>>, vector<32x256xbf16>
    %c3_457 = arith.constant 3 : index
    %c0_458 = arith.constant 0 : index
    %478 = vector.load %arg2[%c3_457, %c0_458] : memref<8x256xbf16, #tpu.memory_space<vmem>>, vector<1x256xbf16>
    %479 = vector.broadcast %478 : vector<1x256xbf16> to vector<32x256xbf16>
    %480 = arith.mulf %477, %479 : vector<32x256xbf16>
    %c8_459 = arith.constant 8 : index
    %c0_460 = arith.constant 0 : index
    %c0_461 = arith.constant 0 : index
    %481 = vector.load %arg15[%c8_459, %c0_460, %c0_461] : memref<9x16x32xbf16, #tpu.memory_space<vmem>>, vector<1x16x32xbf16>
    %482 = vector.shape_cast %481 : vector<1x16x32xbf16> to vector<16x32xbf16>
    %cst_462 = arith.constant dense<0.000000e+00> : vector<16x256xf32>
    %483 = tpu.matmul %482, %480, %cst_462 {dimension_numbers = #tpu.dot_dimension_numbers<[1], [0], [0], [1], [0, 0, 1, 1], [], []>} : vector<16x32xbf16>, vector<32x256xbf16>, vector<16x256xf32> -> vector<16x256xf32>
    %484 = arith.addf %476, %483 : vector<16x256xf32>
    %485 = vector.broadcast %420 : vector<16x1xf32> to vector<16x256xf32>
    %486 = arith.addf %484, %485 : vector<16x256xf32>
    %cst_463 = arith.constant 0.000000e+00 : f32
    %487 = vector.broadcast %cst_463 : f32 to vector<16x256xf32>
    %488 = arith.maximumf %486, %487 : vector<16x256xf32>
    %489 = arith.truncf %488 : vector<16x256xf32> to vector<16x256xbf16>
    %c0_464 = arith.constant 0 : index
    %c0_465 = arith.constant 0 : index
    %490 = vector.load %arg18[%c0_464, %c0_465] : memref<16x1xf32, #tpu.memory_space<vmem>>, vector<16x1xf32>
    %c0_466 = arith.constant 0 : index
    %c256_467 = arith.constant 256 : index
    %491 = vector.load %arg20[%c0_466, %c256_467] : memref<32x768xbf16, #tpu.memory_space<vmem>>, vector<16x256xbf16>
    tpu.vector_store %arg20[%c0_466, %c256_467], %489 {strides = array<i32>} : memref<32x768xbf16, #tpu.memory_space<vmem>>, vector<16x256xbf16>,
    %c16_468 = arith.constant 16 : index
    %c256_469 = arith.constant 256 : index
    %492 = vector.load %arg20[%c16_468, %c256_469] : memref<32x768xbf16, #tpu.memory_space<vmem>>, vector<16x256xbf16>
    tpu.vector_store %arg20[%c16_468, %c256_469], %142 {strides = array<i32>} : memref<32x768xbf16, #tpu.memory_space<vmem>>, vector<16x256xbf16>,
    %c0_470 = arith.constant 0 : index
    %c239_471 = arith.constant 239 : index
    %493 = vector.load %arg20[%c0_470, %c239_471] : memref<32x768xbf16, #tpu.memory_space<vmem>>, vector<32x256xbf16>
    %c0_472 = arith.constant 0 : index
    %c0_473 = arith.constant 0 : index
    %494 = vector.load %arg2[%c0_472, %c0_473] : memref<8x256xbf16, #tpu.memory_space<vmem>>, vector<1x256xbf16>
    %495 = vector.broadcast %494 : vector<1x256xbf16> to vector<32x256xbf16>
    %496 = arith.mulf %493, %495 : vector<32x256xbf16>
    %c0_474 = arith.constant 0 : index
    %c0_475 = arith.constant 0 : index
    %c0_476 = arith.constant 0 : index
    %497 = vector.load %arg17[%c0_474, %c0_475, %c0_476] : memref<9x16x32xbf16, #tpu.memory_space<vmem>>, vector<1x16x32xbf16>
    %498 = vector.shape_cast %497 : vector<1x16x32xbf16> to vector<16x32xbf16>
    %cst_477 = arith.constant dense<0.000000e+00> : vector<16x256xf32>
    %499 = tpu.matmul %498, %496, %cst_477 {dimension_numbers = #tpu.dot_dimension_numbers<[1], [0], [0], [1], [0, 0, 1, 1], [], []>} : vector<16x32xbf16>, vector<32x256xbf16>, vector<16x256xf32> -> vector<16x256xf32>
    %c0_478 = arith.constant 0 : index
    %c240_479 = arith.constant 240 : index
    %500 = vector.load %arg20[%c0_478, %c240_479] : memref<32x768xbf16, #tpu.memory_space<vmem>>, vector<32x256xbf16>
    %c1_480 = arith.constant 1 : index
    %c0_481 = arith.constant 0 : index
    %c0_482 = arith.constant 0 : index
    %501 = vector.load %arg17[%c1_480, %c0_481, %c0_482] : memref<9x16x32xbf16, #tpu.memory_space<vmem>>, vector<1x16x32xbf16>
    %502 = vector.shape_cast %501 : vector<1x16x32xbf16> to vector<16x32xbf16>
    %cst_483 = arith.constant dense<0.000000e+00> : vector<16x256xf32>
    %503 = tpu.matmul %502, %500, %cst_483 {dimension_numbers = #tpu.dot_dimension_numbers<[1], [0], [0], [1], [0, 0, 1, 1], [], []>} : vector<16x32xbf16>, vector<32x256xbf16>, vector<16x256xf32> -> vector<16x256xf32>
    %504 = arith.addf %499, %503 : vector<16x256xf32>
    %c0_484 = arith.constant 0 : index
    %c241_485 = arith.constant 241 : index
    %505 = vector.load %arg20[%c0_484, %c241_485] : memref<32x768xbf16, #tpu.memory_space<vmem>>, vector<32x256xbf16>
    %c1_486 = arith.constant 1 : index
    %c0_487 = arith.constant 0 : index
    %506 = vector.load %arg2[%c1_486, %c0_487] : memref<8x256xbf16, #tpu.memory_space<vmem>>, vector<1x256xbf16>
    %507 = vector.broadcast %506 : vector<1x256xbf16> to vector<32x256xbf16>
    %508 = arith.mulf %505, %507 : vector<32x256xbf16>
    %c2_488 = arith.constant 2 : index
    %c0_489 = arith.constant 0 : index
    %c0_490 = arith.constant 0 : index
    %509 = vector.load %arg17[%c2_488, %c0_489, %c0_490] : memref<9x16x32xbf16, #tpu.memory_space<vmem>>, vector<1x16x32xbf16>
    %510 = vector.shape_cast %509 : vector<1x16x32xbf16> to vector<16x32xbf16>
    %cst_491 = arith.constant dense<0.000000e+00> : vector<16x256xf32>
    %511 = tpu.matmul %510, %508, %cst_491 {dimension_numbers = #tpu.dot_dimension_numbers<[1], [0], [0], [1], [0, 0, 1, 1], [], []>} : vector<16x32xbf16>, vector<32x256xbf16>, vector<16x256xf32> -> vector<16x256xf32>
    %512 = arith.addf %504, %511 : vector<16x256xf32>
    %c0_492 = arith.constant 0 : index
    %c255_493 = arith.constant 255 : index
    %513 = vector.load %arg20[%c0_492, %c255_493] : memref<32x768xbf16, #tpu.memory_space<vmem>>, vector<32x256xbf16>
    %c0_494 = arith.constant 0 : index
    %c0_495 = arith.constant 0 : index
    %514 = vector.load %arg2[%c0_494, %c0_495] : memref<8x256xbf16, #tpu.memory_space<vmem>>, vector<1x256xbf16>
    %515 = vector.broadcast %514 : vector<1x256xbf16> to vector<32x256xbf16>
    %516 = arith.mulf %513, %515 : vector<32x256xbf16>
    %c3_496 = arith.constant 3 : index
    %c0_497 = arith.constant 0 : index
    %c0_498 = arith.constant 0 : index
    %517 = vector.load %arg17[%c3_496, %c0_497, %c0_498] : memref<9x16x32xbf16, #tpu.memory_space<vmem>>, vector<1x16x32xbf16>
    %518 = vector.shape_cast %517 : vector<1x16x32xbf16> to vector<16x32xbf16>
    %cst_499 = arith.constant dense<0.000000e+00> : vector<16x256xf32>
    %519 = tpu.matmul %518, %516, %cst_499 {dimension_numbers = #tpu.dot_dimension_numbers<[1], [0], [0], [1], [0, 0, 1, 1], [], []>} : vector<16x32xbf16>, vector<32x256xbf16>, vector<16x256xf32> -> vector<16x256xf32>
    %520 = arith.addf %512, %519 : vector<16x256xf32>
    %c0_500 = arith.constant 0 : index
    %c256_501 = arith.constant 256 : index
    %521 = vector.load %arg20[%c0_500, %c256_501] : memref<32x768xbf16, #tpu.memory_space<vmem>>, vector<32x256xbf16>
    %c4_502 = arith.constant 4 : index
    %c0_503 = arith.constant 0 : index
    %c0_504 = arith.constant 0 : index
    %522 = vector.load %arg17[%c4_502, %c0_503, %c0_504] : memref<9x16x32xbf16, #tpu.memory_space<vmem>>, vector<1x16x32xbf16>
    %523 = vector.shape_cast %522 : vector<1x16x32xbf16> to vector<16x32xbf16>
    %cst_505 = arith.constant dense<0.000000e+00> : vector<16x256xf32>
    %524 = tpu.matmul %523, %521, %cst_505 {dimension_numbers = #tpu.dot_dimension_numbers<[1], [0], [0], [1], [0, 0, 1, 1], [], []>} : vector<16x32xbf16>, vector<32x256xbf16>, vector<16x256xf32> -> vector<16x256xf32>
    %525 = arith.addf %520, %524 : vector<16x256xf32>
    %c0_506 = arith.constant 0 : index
    %c257_507 = arith.constant 257 : index
    %526 = vector.load %arg20[%c0_506, %c257_507] : memref<32x768xbf16, #tpu.memory_space<vmem>>, vector<32x256xbf16>
    %c1_508 = arith.constant 1 : index
    %c0_509 = arith.constant 0 : index
    %527 = vector.load %arg2[%c1_508, %c0_509] : memref<8x256xbf16, #tpu.memory_space<vmem>>, vector<1x256xbf16>
    %528 = vector.broadcast %527 : vector<1x256xbf16> to vector<32x256xbf16>
    %529 = arith.mulf %526, %528 : vector<32x256xbf16>
    %c5_510 = arith.constant 5 : index
    %c0_511 = arith.constant 0 : index
    %c0_512 = arith.constant 0 : index
    %530 = vector.load %arg17[%c5_510, %c0_511, %c0_512] : memref<9x16x32xbf16, #tpu.memory_space<vmem>>, vector<1x16x32xbf16>
    %531 = vector.shape_cast %530 : vector<1x16x32xbf16> to vector<16x32xbf16>
    %cst_513 = arith.constant dense<0.000000e+00> : vector<16x256xf32>
    %532 = tpu.matmul %531, %529, %cst_513 {dimension_numbers = #tpu.dot_dimension_numbers<[1], [0], [0], [1], [0, 0, 1, 1], [], []>} : vector<16x32xbf16>, vector<32x256xbf16>, vector<16x256xf32> -> vector<16x256xf32>
    %533 = arith.addf %525, %532 : vector<16x256xf32>
    %c0_514 = arith.constant 0 : index
    %c271_515 = arith.constant 271 : index
    %534 = vector.load %arg20[%c0_514, %c271_515] : memref<32x768xbf16, #tpu.memory_space<vmem>>, vector<32x256xbf16>
    %c0_516 = arith.constant 0 : index
    %c0_517 = arith.constant 0 : index
    %535 = vector.load %arg2[%c0_516, %c0_517] : memref<8x256xbf16, #tpu.memory_space<vmem>>, vector<1x256xbf16>
    %536 = vector.broadcast %535 : vector<1x256xbf16> to vector<32x256xbf16>
    %537 = arith.mulf %534, %536 : vector<32x256xbf16>
    %c6_518 = arith.constant 6 : index
    %c0_519 = arith.constant 0 : index
    %c0_520 = arith.constant 0 : index
    %538 = vector.load %arg17[%c6_518, %c0_519, %c0_520] : memref<9x16x32xbf16, #tpu.memory_space<vmem>>, vector<1x16x32xbf16>
    %539 = vector.shape_cast %538 : vector<1x16x32xbf16> to vector<16x32xbf16>
    %cst_521 = arith.constant dense<0.000000e+00> : vector<16x256xf32>
    %540 = tpu.matmul %539, %537, %cst_521 {dimension_numbers = #tpu.dot_dimension_numbers<[1], [0], [0], [1], [0, 0, 1, 1], [], []>} : vector<16x32xbf16>, vector<32x256xbf16>, vector<16x256xf32> -> vector<16x256xf32>
    %541 = arith.addf %533, %540 : vector<16x256xf32>
    %c0_522 = arith.constant 0 : index
    %c272_523 = arith.constant 272 : index
    %542 = vector.load %arg20[%c0_522, %c272_523] : memref<32x768xbf16, #tpu.memory_space<vmem>>, vector<32x256xbf16>
    %c7_524 = arith.constant 7 : index
    %c0_525 = arith.constant 0 : index
    %c0_526 = arith.constant 0 : index
    %543 = vector.load %arg17[%c7_524, %c0_525, %c0_526] : memref<9x16x32xbf16, #tpu.memory_space<vmem>>, vector<1x16x32xbf16>
    %544 = vector.shape_cast %543 : vector<1x16x32xbf16> to vector<16x32xbf16>
    %cst_527 = arith.constant dense<0.000000e+00> : vector<16x256xf32>
    %545 = tpu.matmul %544, %542, %cst_527 {dimension_numbers = #tpu.dot_dimension_numbers<[1], [0], [0], [1], [0, 0, 1, 1], [], []>} : vector<16x32xbf16>, vector<32x256xbf16>, vector<16x256xf32> -> vector<16x256xf32>
    %546 = arith.addf %541, %545 : vector<16x256xf32>
    %c0_528 = arith.constant 0 : index
    %c273_529 = arith.constant 273 : index
    %547 = vector.load %arg20[%c0_528, %c273_529] : memref<32x768xbf16, #tpu.memory_space<vmem>>, vector<32x256xbf16>
    %c1_530 = arith.constant 1 : index
    %c0_531 = arith.constant 0 : index
    %548 = vector.load %arg2[%c1_530, %c0_531] : memref<8x256xbf16, #tpu.memory_space<vmem>>, vector<1x256xbf16>
    %549 = vector.broadcast %548 : vector<1x256xbf16> to vector<32x256xbf16>
    %550 = arith.mulf %547, %549 : vector<32x256xbf16>
    %c8_532 = arith.constant 8 : index
    %c0_533 = arith.constant 0 : index
    %c0_534 = arith.constant 0 : index
    %551 = vector.load %arg17[%c8_532, %c0_533, %c0_534] : memref<9x16x32xbf16, #tpu.memory_space<vmem>>, vector<1x16x32xbf16>
    %552 = vector.shape_cast %551 : vector<1x16x32xbf16> to vector<16x32xbf16>
    %cst_535 = arith.constant dense<0.000000e+00> : vector<16x256xf32>
    %553 = tpu.matmul %552, %550, %cst_535 {dimension_numbers = #tpu.dot_dimension_numbers<[1], [0], [0], [1], [0, 0, 1, 1], [], []>} : vector<16x32xbf16>, vector<32x256xbf16>, vector<16x256xf32> -> vector<16x256xf32>
    %554 = arith.addf %546, %553 : vector<16x256xf32>
    %555 = vector.broadcast %490 : vector<16x1xf32> to vector<16x256xf32>
    %556 = arith.addf %554, %555 : vector<16x256xf32>
    %cst_536 = arith.constant 0.000000e+00 : f32
    %557 = vector.broadcast %cst_536 : f32 to vector<16x256xf32>
    %558 = arith.maximumf %556, %557 : vector<16x256xf32>
    %559 = arith.addf %558, %72 : vector<16x256xf32>
    %c0_537 = arith.constant 0 : index
    %c0_538 = arith.constant 0 : index
    %c0_539 = arith.constant 0 : index
    %560 = vector.load %arg19[%c0_537, %c0_538, %c0_539] : memref<1x16x256xf32, #tpu.memory_space<vmem>>, vector<1x16x256xf32>
    %561 = vector.shape_cast %560 : vector<1x16x256xf32> to vector<16x256xf32>
    %562 = vector.shape_cast %559 : vector<16x256xf32> to vector<1x16x256xf32>
    tpu.vector_store %arg19[%c0_537, %c0_538, %c0_539], %562 {strides = array<i32>} : memref<1x16x256xf32, #tpu.memory_space<vmem>>, vector<1x16x256xf32>,
    return
  }
  func.func @transform_0(%arg0: i32) -> (i32, i32, i32) {
    %c0_i32 = arith.constant 0 : i32
    %c0_i32_0 = arith.constant 0 : i32
    %c0_i32_1 = arith.constant 0 : i32
    return %arg0, %c0_i32, %c0_i32_0 : i32, i32, i32
  }
  func.func @transform_1(%arg0: i32) -> (i32, i32) {
    %c0_i32 = arith.constant 0 : i32
    %c0_i32_0 = arith.constant 0 : i32
    %c0_i32_1 = arith.constant 0 : i32
    return %c0_i32, %c0_i32_0 : i32, i32
  }
  func.func @transform_2(%arg0: i32) -> (i32, i32, i32) {
    %c0_i32 = arith.constant 0 : i32
    %c0_i32_0 = arith.constant 0 : i32
    %c0_i32_1 = arith.constant 0 : i32
    %c0_i32_2 = arith.constant 0 : i32
    return %c0_i32, %c0_i32_0, %c0_i32_1 : i32, i32, i32
  }
  func.func @transform_3(%arg0: i32) -> (i32, i32) {
    %c0_i32 = arith.constant 0 : i32
    %c0_i32_0 = arith.constant 0 : i32
    %c0_i32_1 = arith.constant 0 : i32
    return %c0_i32, %c0_i32_0 : i32, i32
  }
  func.func @transform_4(%arg0: i32) -> (i32, i32, i32) {
    %c0_i32 = arith.constant 0 : i32
    %c0_i32_0 = arith.constant 0 : i32
    %c0_i32_1 = arith.constant 0 : i32
    %c0_i32_2 = arith.constant 0 : i32
    return %c0_i32, %c0_i32_0, %c0_i32_1 : i32, i32, i32
  }
  func.func @transform_5(%arg0: i32) -> (i32, i32) {
    %c0_i32 = arith.constant 0 : i32
    %c0_i32_0 = arith.constant 0 : i32
    %c0_i32_1 = arith.constant 0 : i32
    return %c0_i32, %c0_i32_0 : i32, i32
  }
  func.func @transform_6(%arg0: i32) -> (i32, i32, i32) {
    %c0_i32 = arith.constant 0 : i32
    %c0_i32_0 = arith.constant 0 : i32
    %c0_i32_1 = arith.constant 0 : i32
    %c0_i32_2 = arith.constant 0 : i32
    return %c0_i32, %c0_i32_0, %c0_i32_1 : i32, i32, i32
  }
  func.func @transform_7(%arg0: i32) -> (i32, i32) {
    %c0_i32 = arith.constant 0 : i32
    %c0_i32_0 = arith.constant 0 : i32
    %c0_i32_1 = arith.constant 0 : i32
    return %c0_i32, %c0_i32_0 : i32, i32
  }
  func.func @transform_8(%arg0: i32) -> (i32, i32, i32) {
    %c0_i32 = arith.constant 0 : i32
    %c0_i32_0 = arith.constant 0 : i32
    %c0_i32_1 = arith.constant 0 : i32
    %c0_i32_2 = arith.constant 0 : i32
    return %c0_i32, %c0_i32_0, %c0_i32_1 : i32, i32, i32
  }
  func.func @transform_9(%arg0: i32) -> (i32, i32) {
    %c0_i32 = arith.constant 0 : i32
    %c0_i32_0 = arith.constant 0 : i32
    %c0_i32_1 = arith.constant 0 : i32
    return %c0_i32, %c0_i32_0 : i32, i32
  }
  func.func @transform_10(%arg0: i32) -> (i32, i32, i32) {
    %c0_i32 = arith.constant 0 : i32
    %c0_i32_0 = arith.constant 0 : i32
    %c0_i32_1 = arith.constant 0 : i32
    %c0_i32_2 = arith.constant 0 : i32
    return %c0_i32, %c0_i32_0, %c0_i32_1 : i32, i32, i32
  }
  func.func @transform_11(%arg0: i32) -> (i32, i32) {
    %c0_i32 = arith.constant 0 : i32
    %c0_i32_0 = arith.constant 0 : i32
    %c0_i32_1 = arith.constant 0 : i32
    return %c0_i32, %c0_i32_0 : i32, i32
  }
  func.func @transform_12(%arg0: i32) -> (i32, i32, i32) {
    %c0_i32 = arith.constant 0 : i32
    %c0_i32_0 = arith.constant 0 : i32
    %c0_i32_1 = arith.constant 0 : i32
    %c0_i32_2 = arith.constant 0 : i32
    return %c0_i32, %c0_i32_0, %c0_i32_1 : i32, i32, i32
  }
  func.func @transform_13(%arg0: i32) -> (i32, i32) {
    %c0_i32 = arith.constant 0 : i32
    %c0_i32_0 = arith.constant 0 : i32
    %c0_i32_1 = arith.constant 0 : i32
    return %c0_i32, %c0_i32_0 : i32, i32
  }
  func.func @transform_14(%arg0: i32) -> (i32, i32, i32) {
    %c0_i32 = arith.constant 0 : i32
    %c0_i32_0 = arith.constant 0 : i32
    %c0_i32_1 = arith.constant 0 : i32
    %c0_i32_2 = arith.constant 0 : i32
    return %c0_i32, %c0_i32_0, %c0_i32_1 : i32, i32, i32
  }
  func.func @transform_15(%arg0: i32) -> (i32, i32) {
    %c0_i32 = arith.constant 0 : i32
    %c0_i32_0 = arith.constant 0 : i32
    %c0_i32_1 = arith.constant 0 : i32
    return %c0_i32, %c0_i32_0 : i32, i32
  }
  func.func @transform_16(%arg0: i32) -> (i32, i32, i32) {
    %c0_i32 = arith.constant 0 : i32
    %c0_i32_0 = arith.constant 0 : i32
    %c0_i32_1 = arith.constant 0 : i32
    %c0_i32_2 = arith.constant 0 : i32
    return %c0_i32, %c0_i32_0, %c0_i32_1 : i32, i32, i32
  }
  func.func @transform_17(%arg0: i32) -> (i32, i32) {
    %c0_i32 = arith.constant 0 : i32
    %c0_i32_0 = arith.constant 0 : i32
    %c0_i32_1 = arith.constant 0 : i32
    return %c0_i32, %c0_i32_0 : i32, i32
  }
  func.func @transform_18(%arg0: i32) -> (i32, i32, i32) {
    %c0_i32 = arith.constant 0 : i32
    %c0_i32_0 = arith.constant 0 : i32
    %c0_i32_1 = arith.constant 0 : i32
    return %arg0, %c0_i32, %c0_i32_0 : i32, i32, i32
  }
}

</mosaic_0001>

<llo_original>
// kernel: rsu4f_forward.1
$region0: #{rsu4f_forward.1}
  #allocation0 [shape = 'u32[]', space=smem, size = 0x4, offset = 0x4, fixed_abs, tag = 'smem constant byte address 0x4 - core index']
  #allocation1 [shape = 'u32[72,128]{1,0:T(1,128)}', space=vmem, size = 0x9000, scoped, tag = 'internal scratch']
  #allocation2 [shape = 'bf16[32,768]{1,0:T(8,128)(2,1)}', space=vmem, size = 0xc000, scoped, tag = 'scratch operand']
  %s0 = inlined_call_operand.vmem [shape: bf16[2,16,256], index: 0, kind: input, shape index: {}]
  %s1 = inlined_call_operand.vmem [shape: bf16[8,256], index: 1, kind: input, shape index: {}]
  %s2 = inlined_call_operand.vmem [shape: bf16[9,16,16], index: 2, kind: input, shape index: {}]
  %s3 = inlined_call_operand.vmem [shape: f32[16,1], index: 3, kind: input, shape index: {}]
  %s4 = inlined_call_operand.vmem [shape: bf16[9,16,16], index: 4, kind: input, shape index: {}]
  %s5 = inlined_call_operand.vmem [shape: f32[16,1], index: 5, kind: input, shape index: {}]
  %s6 = inlined_call_operand.vmem [shape: bf16[9,16,16], index: 6, kind: input, shape index: {}]
  %s7 = inlined_call_operand.vmem [shape: f32[16,1], index: 7, kind: input, shape index: {}]
  %s8 = inlined_call_operand.vmem [shape: bf16[9,16,16], index: 8, kind: input, shape index: {}]
  %s9 = inlined_call_operand.vmem [shape: f32[16,1], index: 9, kind: input, shape index: {}]
  %s10 = inlined_call_operand.vmem [shape: bf16[9,16,16], index: 10, kind: input, shape index: {}]
  %s11 = inlined_call_operand.vmem [shape: f32[16,1], index: 11, kind: input, shape index: {}]
  %s12 = inlined_call_operand.vmem [shape: bf16[9,16,32], index: 12, kind: input, shape index: {}]
  %s13 = inlined_call_operand.vmem [shape: f32[16,1], index: 13, kind: input, shape index: {}]
  %s14 = inlined_call_operand.vmem [shape: bf16[9,16,32], index: 14, kind: input, shape index: {}]
  %s15 = inlined_call_operand.vmem [shape: f32[16,1], index: 15, kind: input, shape index: {}]
  %s16 = inlined_call_operand.vmem [shape: bf16[9,16,32], index: 16, kind: input, shape index: {}]
  %s17 = inlined_call_operand.vmem [shape: f32[16,1], index: 17, kind: input, shape index: {}]
  %s18 = inlined_call_operand.vmem [shape: f32[2,16,256], index: 18, kind: output, shape index: {}]
  %s19 = sld [smem:[#allocation0]]
  $region105: #{rsu4f_forward.1} parent=0
    _
  %s21 = ssub.s32 1, %s19
  %s22 = scalar_select 0, %s21, %s19
  loop: start=0, step=1, limit=4
  $region2: #{rsu4f_forward.1} parent=0 // loop_pre_header
    _
  $region3: #{rsu4f_forward.1} parent=0 // loop_header
    %s24 = sphi 0, %s28
    %p25 = scmp.ge.s32.totalorder %s24, 4
    %s34 = sphi 0, %s36
    %s37 = sphi 0, %s34
    %s38 = sphi 0, %s37
    %s54 = sphi 0, %s38
    %s58 = sphi 0, %s58
    %s60 = sphi 0, %s58
    %s61 = sphi 0, %s60
    %s75 = sphi 0, %s61
    %s79 = sphi 0, %s79
    %s81 = sphi 0, %s79
    %s82 = sphi 0, %s81
    %s96 = sphi 0, %s82
    %s100 = sphi 0, %s100
    %s102 = sphi 0, %s100
    %s103 = sphi 0, %s102
    %s117 = sphi 0, %s103
    %s121 = sphi 0, %s121
    %s123 = sphi 0, %s121
    %s124 = sphi 0, %s123
    %s138 = sphi 0, %s124
    %s142 = sphi 0, %s142
    %s144 = sphi 0, %s142
    %s145 = sphi 0, %s144
    %s159 = sphi 0, %s145
    %s163 = sphi 0, %s163
    %s165 = sphi 0, %s163
    %s166 = sphi 0, %s165
    %s180 = sphi 0, %s166
    %s184 = sphi 0, %s184
    %s186 = sphi 0, %s184
    %s187 = sphi 0, %s186
    %s201 = sphi 0, %s187
    %s205 = sphi 0, %s205
    %s207 = sphi 0, %s205
    %s208 = sphi 0, %s207
    %s222 = sphi 0, %s208
    %s226 = sphi 0, %s226
    %s228 = sphi 0, %s226
    %s229 = sphi 0, %s228
    %s243 = sphi 0, %s229
    %s247 = sphi 0, %s247
    %s249 = sphi 0, %s247
    %s250 = sphi 0, %s249
    %s264 = sphi 0, %s250
    %s268 = sphi 0, %s268
    %s270 = sphi 0, %s268
    %s271 = sphi 0, %s270
    %s285 = sphi 0, %s271
    %s289 = sphi 0, %s289
    %s291 = sphi 0, %s289
    %s292 = sphi 0, %s291
    %s306 = sphi 0, %s292
    %s310 = sphi 0, %s310
    %s312 = sphi 0, %s310
    %s313 = sphi 0, %s312
    %s327 = sphi 0, %s313
    %s331 = sphi 0, %s331
    %s333 = sphi 0, %s331
    %s334 = sphi 0, %s333
    %s348 = sphi 0, %s334
    %s352 = sphi 0, %s352
    %s354 = sphi 0, %s352
    %s355 = sphi 0, %s354
    %s369 = sphi 0, %s355
    %s373 = sphi 0, %s373
    %s375 = sphi 0, %s373
    %s376 = sphi 0, %s375
    %s390 = sphi 0, %s376
    %s394 = sphi 0, %s394
    %s396 = sphi 0, %s394
    %s397 = sphi 0, %s396
    %s411 = sphi 0, %s397
    %s417 = sphi 0, %s419
    %s420 = sphi 0, %s417
    %s421 = sphi 0, %s420
    %s437 = sphi 0, %s421
  $region4: #{rsu4f_forward.1} parent=0 // loop_header_branch
    %27 = sbr.rel (%p25) target = $region8
  $region5: #{rsu4f_forward.1} parent=0 // loop_body
    %s29 = ssub.s32 %s24, 1
    %s30 = ssub.s32 %s24, 2
    %s31 = sadd.s32 %s24, 1
    %s32 = ssub.s32 %s24, %s31
    %p33 = scmp.eq.s32.totalorder %s32, 0
    %s35 = sadd.s32 %s34, 1
    %s36 = scalar_select %p33, %s34, %s35
    %p39 = pneg %p33
    %p40 = scmp.eq.s32.totalorder %s24, 1
    %p41 = por %p39, %p40
    %p42 = scmp.ne.s32.totalorder %s34, %s37
    %p43 = scmp.eq.s32.totalorder %s24, 0
    %p44 = por %p42, %p43
    %p45 = scmp.ne.s32.totalorder %s34, %s37
    %p46 = scmp.eq.s32.totalorder %s29, 1
    %p47 = por %p45, %p46
    %p48 = scmp.ne.s32.totalorder %s37, %s38
    %p49 = scmp.eq.s32.totalorder %s29, 0
    %p50 = por %p48, %p49
    %p51 = scmp.ne.s32.totalorder %s37, %s38
    %p52 = scmp.eq.s32.totalorder %s30, 1
    %p53 = por %p51, %p52
    %p55 = scmp.ne.s32.totalorder %s38, %s54
    %p56 = scmp.eq.s32.totalorder %s30, 0
    %p57 = por %p55, %p56
    %s59 = sadd.s32 %s58, 1
    %p62 = scmp.eq.s32.totalorder %s24, 1
    %p63 = scmp.ne.s32.totalorder %s58, %s60
    %p64 = scmp.eq.s32.totalorder %s24, 0
    %p65 = por %p63, %p64
    %p66 = scmp.ne.s32.totalorder %s58, %s60
    %p67 = scmp.eq.s32.totalorder %s29, 1
    %p68 = por %p66, %p67
    %p69 = scmp.ne.s32.totalorder %s60, %s61
    %p70 = scmp.eq.s32.totalorder %s29, 0
    %p71 = por %p69, %p70
    %p72 = scmp.ne.s32.totalorder %s60, %s61
    %p73 = scmp.eq.s32.totalorder %s30, 1
    %p74 = por %p72, %p73
    %p76 = scmp.ne.s32.totalorder %s61, %s75
    %p77 = scmp.eq.s32.totalorder %s30, 0
    %p78 = por %p76, %p77
    %s80 = sadd.s32 %s79, 1
    %p83 = scmp.eq.s32.totalorder %s24, 1
    %p84 = scmp.ne.s32.totalorder %s79, %s81
    %p85 = scmp.eq.s32.totalorder %s24, 0
    %p86 = por %p84, %p85
    %p87 = scmp.ne.s32.totalorder %s79, %s81
    %p88 = scmp.eq.s32.totalorder %s29, 1
    %p89 = por %p87, %p88
    %p90 = scmp.ne.s32.totalorder %s81, %s82
    %p91 = scmp.eq.s32.totalorder %s29, 0
    %p92 = por %p90, %p91
    %p93 = scmp.ne.s32.totalorder %s81, %s82
    %p94 = scmp.eq.s32.totalorder %s30, 1
    %p95 = por %p93, %p94
    %p97 = scmp.ne.s32.totalorder %s82, %s96
    %p98 = scmp.eq.s32.totalorder %s30, 0
    %p99 = por %p97, %p98
    %s101 = sadd.s32 %s100, 1
    %p104 = scmp.eq.s32.totalorder %s24, 1
    %p105 = scmp.ne.s32.totalorder %s100, %s102
    %p106 = scmp.eq.s32.totalorder %s24, 0
    %p107 = por %p105, %p106
    %p108 = scmp.ne.s32.totalorder %s100, %s102
    %p109 = scmp.eq.s32.totalorder %s29, 1
    %p110 = por %p108, %p109
    %p111 = scmp.ne.s32.totalorder %s102, %s103
    %p112 = scmp.eq.s32.totalorder %s29, 0
    %p113 = por %p111, %p112
    %p114 = scmp.ne.s32.totalorder %s102, %s103
    %p115 = scmp.eq.s32.totalorder %s30, 1
    %p116 = por %p114, %p115
    %p118 = scmp.ne.s32.totalorder %s103, %s117
    %p119 = scmp.eq.s32.totalorder %s30, 0
    %p120 = por %p118, %p119
    %s122 = sadd.s32 %s121, 1
    %p125 = scmp.eq.s32.totalorder %s24, 1
    %p126 = scmp.ne.s32.totalorder %s121, %s123
    %p127 = scmp.eq.s32.totalorder %s24, 0
    %p128 = por %p126, %p127
    %p129 = scmp.ne.s32.totalorder %s121, %s123
    %p130 = scmp.eq.s32.totalorder %s29, 1
    %p131 = por %p129, %p130
    %p132 = scmp.ne.s32.totalorder %s123, %s124
    %p133 = scmp.eq.s32.totalorder %s29, 0
    %p134 = por %p132, %p133
    %p135 = scmp.ne.s32.totalorder %s123, %s124
    %p136 = scmp.eq.s32.totalorder %s30, 1
    %p137 = por %p135, %p136
    %p139 = scmp.ne.s32.totalorder %s124, %s138
    %p140 = scmp.eq.s32.totalorder %s30, 0
    %p141 = por %p139, %p140
    %s143 = sadd.s32 %s142, 1
    %p146 = scmp.eq.s32.totalorder %s24, 1
    %p147 = scmp.ne.s32.totalorder %s142, %s144
    %p148 = scmp.eq.s32.totalorder %s24, 0
    %p149 = por %p147, %p148
    %p150 = scmp.ne.s32.totalorder %s142, %s144
    %p151 = scmp.eq.s32.totalorder %s29, 1
    %p152 = por %p150, %p151
    %p153 = scmp.ne.s32.totalorder %s144, %s145
    %p154 = scmp.eq.s32.totalorder %s29, 0
    %p155 = por %p153, %p154
    %p156 = scmp.ne.s32.totalorder %s144, %s145
    %p157 = scmp.eq.s32.totalorder %s30, 1
    %p158 = por %p156, %p157
    %p160 = scmp.ne.s32.totalorder %s145, %s159
    %p161 = scmp.eq.s32.totalorder %s30, 0
    %p162 = por %p160, %p161
    %s164 = sadd.s32 %s163, 1
    %p167 = scmp.eq.s32.totalorder %s24, 1
    %p168 = scmp.ne.s32.totalorder %s163, %s165
    %p169 = scmp.eq.s32.totalorder %s24, 0
    %p170 = por %p168, %p169
    %p171 = scmp.ne.s32.totalorder %s163, %s165
    %p172 = scmp.eq.s32.totalorder %s29, 1
    %p173 = por %p171, %p172
    %p174 = scmp.ne.s32.totalorder %s165, %s166
    %p175 = scmp.eq.s32.totalorder %s29, 0
    %p176 = por %p174, %p175
    %p177 = scmp.ne.s32.totalorder %s165, %s166
    %p178 = scmp.eq.s32.totalorder %s30, 1
    %p179 = por %p177, %p178
    %p181 = scmp.ne.s32.totalorder %s166, %s180
    %p182 = scmp.eq.s32.totalorder %s30, 0
    %p183 = por %p181, %p182
    %s185 = sadd.s32 %s184, 1
    %p188 = scmp.eq.s32.totalorder %s24, 1
    %p189 = scmp.ne.s32.totalorder %s184, %s186
    %p190 = scmp.eq.s32.totalorder %s24, 0
    %p191 = por %p189, %p190
    %p192 = scmp.ne.s32.totalorder %s184, %s186
    %p193 = scmp.eq.s32.totalorder %s29, 1
    %p194 = por %p192, %p193
    %p195 = scmp.ne.s32.totalorder %s186, %s187
    %p196 = scmp.eq.s32.totalorder %s29, 0
    %p197 = por %p195, %p196
    %p198 = scmp.ne.s32.totalorder %s186, %s187
    %p199 = scmp.eq.s32.totalorder %s30, 1
    %p200 = por %p198, %p199
    %p202 = scmp.ne.s32.totalorder %s187, %s201
    %p203 = scmp.eq.s32.totalorder %s30, 0
    %p204 = por %p202, %p203
    %s206 = sadd.s32 %s205, 1
    %p209 = scmp.eq.s32.totalorder %s24, 1
    %p210 = scmp.ne.s32.totalorder %s205, %s207
    %p211 = scmp.eq.s32.totalorder %s24, 0
    %p212 = por %p210, %p211
    %p213 = scmp.ne.s32.totalorder %s205, %s207
    %p214 = scmp.eq.s32.totalorder %s29, 1
    %p215 = por %p213, %p214
    %p216 = scmp.ne.s32.totalorder %s207, %s208
    %p217 = scmp.eq.s32.totalorder %s29, 0
    %p218 = por %p216, %p217
    %p219 = scmp.ne.s32.totalorder %s207, %s208
    %p220 = scmp.eq.s32.totalorder %s30, 1
    %p221 = por %p219, %p220
    %p223 = scmp.ne.s32.totalorder %s208, %s222
    %p224 = scmp.eq.s32.totalorder %s30, 0
    %p225 = por %p223, %p224
    %s227 = sadd.s32 %s226, 1
    %p230 = scmp.eq.s32.totalorder %s24, 1
    %p231 = scmp.ne.s32.totalorder %s226, %s228
    %p232 = scmp.eq.s32.totalorder %s24, 0
    %p233 = por %p231, %p232
    %p234 = scmp.ne.s32.totalorder %s226, %s228
    %p235 = scmp.eq.s32.totalorder %s29, 1
    %p236 = por %p234, %p235
    %p237 = scmp.ne.s32.totalorder %s228, %s229
    %p238 = scmp.eq.s32.totalorder %s29, 0
    %p239 = por %p237, %p238
    %p240 = scmp.ne.s32.totalorder %s228, %s229
    %p241 = scmp.eq.s32.totalorder %s30, 1
    %p242 = por %p240, %p241
    %p244 = scmp.ne.s32.totalorder %s229, %s243
    %p245 = scmp.eq.s32.totalorder %s30, 0
    %p246 = por %p244, %p245
    %s248 = sadd.s32 %s247, 1
    %p251 = scmp.eq.s32.totalorder %s24, 1
    %p252 = scmp.ne.s32.totalorder %s247, %s249
    %p253 = scmp.eq.s32.totalorder %s24, 0
    %p254 = por %p252, %p253
    %p255 = scmp.ne.s32.totalorder %s247, %s249
    %p256 = scmp.eq.s32.totalorder %s29, 1
    %p257 = por %p255, %p256
    %p258 = scmp.ne.s32.totalorder %s249, %s250
    %p259 = scmp.eq.s32.totalorder %s29, 0
    %p260 = por %p258, %p259
    %p261 = scmp.ne.s32.totalorder %s249, %s250
    %p262 = scmp.eq.s32.totalorder %s30, 1
    %p263 = por %p261, %p262
    %p265 = scmp.ne.s32.totalorder %s250, %s264
    %p266 = scmp.eq.s32.totalorder %s30, 0
    %p267 = por %p265, %p266
    %s269 = sadd.s32 %s268, 1
    %p272 = scmp.eq.s32.totalorder %s24, 1
    %p273 = scmp.ne.s32.totalorder %s268, %s270
    %p274 = scmp.eq.s32.totalorder %s24, 0
    %p275 = por %p273, %p274
    %p276 = scmp.ne.s32.totalorder %s268, %s270
    %p277 = scmp.eq.s32.totalorder %s29, 1
    %p278 = por %p276, %p277
    %p279 = scmp.ne.s32.totalorder %s270, %s271
    %p280 = scmp.eq.s32.totalorder %s29, 0
    %p281 = por %p279, %p280
    %p282 = scmp.ne.s32.totalorder %s270, %s271
    %p283 = scmp.eq.s32.totalorder %s30, 1
    %p284 = por %p282, %p283
    %p286 = scmp.ne.s32.totalorder %s271, %s285
    %p287 = scmp.eq.s32.totalorder %s30, 0
    %p288 = por %p286, %p287
    %s290 = sadd.s32 %s289, 1
    %p293 = scmp.eq.s32.totalorder %s24, 1
    %p294 = scmp.ne.s32.totalorder %s289, %s291
    %p295 = scmp.eq.s32.totalorder %s24, 0
    %p296 = por %p294, %p295
    %p297 = scmp.ne.s32.totalorder %s289, %s291
    %p298 = scmp.eq.s32.totalorder %s29, 1
    %p299 = por %p297, %p298
    %p300 = scmp.ne.s32.totalorder %s291, %s292
    %p301 = scmp.eq.s32.totalorder %s29, 0
    %p302 = por %p300, %p301
    %p303 = scmp.ne.s32.totalorder %s291, %s292
    %p304 = scmp.eq.s32.totalorder %s30, 1
    %p305 = por %p303, %p304
    %p307 = scmp.ne.s32.totalorder %s292, %s306
    %p308 = scmp.eq.s32.totalorder %s30, 0
    %p309 = por %p307, %p308
    %s311 = sadd.s32 %s310, 1
    %p314 = scmp.eq.s32.totalorder %s24, 1
    %p315 = scmp.ne.s32.totalorder %s310, %s312
    %p316 = scmp.eq.s32.totalorder %s24, 0
    %p317 = por %p315, %p316
    %p318 = scmp.ne.s32.totalorder %s310, %s312
    %p319 = scmp.eq.s32.totalorder %s29, 1
    %p320 = por %p318, %p319
    %p321 = scmp.ne.s32.totalorder %s312, %s313
    %p322 = scmp.eq.s32.totalorder %s29, 0
    %p323 = por %p321, %p322
    %p324 = scmp.ne.s32.totalorder %s312, %s313
    %p325 = scmp.eq.s32.totalorder %s30, 1
    %p326 = por %p324, %p325
    %p328 = scmp.ne.s32.totalorder %s313, %s327
    %p329 = scmp.eq.s32.totalorder %s30, 0
    %p330 = por %p328, %p329
    %s332 = sadd.s32 %s331, 1
    %p335 = scmp.eq.s32.totalorder %s24, 1
    %p336 = scmp.ne.s32.totalorder %s331, %s333
    %p337 = scmp.eq.s32.totalorder %s24, 0
    %p338 = por %p336, %p337
    %p339 = scmp.ne.s32.totalorder %s331, %s333
    %p340 = scmp.eq.s32.totalorder %s29, 1
    %p341 = por %p339, %p340
    %p342 = scmp.ne.s32.totalorder %s333, %s334
    %p343 = scmp.eq.s32.totalorder %s29, 0
    %p344 = por %p342, %p343
    %p345 = scmp.ne.s32.totalorder %s333, %s334
    %p346 = scmp.eq.s32.totalorder %s30, 1
    %p347 = por %p345, %p346
    %p349 = scmp.ne.s32.totalorder %s334, %s348
    %p350 = scmp.eq.s32.totalorder %s30, 0
    %p351 = por %p349, %p350
    %s353 = sadd.s32 %s352, 1
    %p356 = scmp.eq.s32.totalorder %s24, 1
    %p357 = scmp.ne.s32.totalorder %s352, %s354
    %p358 = scmp.eq.s32.totalorder %s24, 0
    %p359 = por %p357, %p358
    %p360 = scmp.ne.s32.totalorder %s352, %s354
    %p361 = scmp.eq.s32.totalorder %s29, 1
    %p362 = por %p360, %p361
    %p363 = scmp.ne.s32.totalorder %s354, %s355
    %p364 = scmp.eq.s32.totalorder %s29, 0
    %p365 = por %p363, %p364
    %p366 = scmp.ne.s32.totalorder %s354, %s355
    %p367 = scmp.eq.s32.totalorder %s30, 1
    %p368 = por %p366, %p367
    %p370 = scmp.ne.s32.totalorder %s355, %s369
    %p371 = scmp.eq.s32.totalorder %s30, 0
    %p372 = por %p370, %p371
    %s374 = sadd.s32 %s373, 1
    %p377 = scmp.eq.s32.totalorder %s24, 1
    %p378 = scmp.ne.s32.totalorder %s373, %s375
    %p379 = scmp.eq.s32.totalorder %s24, 0
    %p380 = por %p378, %p379
    %p381 = scmp.ne.s32.totalorder %s373, %s375
    %p382 = scmp.eq.s32.totalorder %s29, 1
    %p383 = por %p381, %p382
    %p384 = scmp.ne.s32.totalorder %s375, %s376
    %p385 = scmp.eq.s32.totalorder %s29, 0
    %p386 = por %p384, %p385
    %p387 = scmp.ne.s32.totalorder %s375, %s376
    %p388 = scmp.eq.s32.totalorder %s30, 1
    %p389 = por %p387, %p388
    %p391 = scmp.ne.s32.totalorder %s376, %s390
    %p392 = scmp.eq.s32.totalorder %s30, 0
    %p393 = por %p391, %p392
    %s395 = sadd.s32 %s394, 1
    %p398 = scmp.eq.s32.totalorder %s24, 1
    %p399 = scmp.ne.s32.totalorder %s394, %s396
    %p400 = scmp.eq.s32.totalorder %s24, 0
    %p401 = por %p399, %p400
    %p402 = scmp.ne.s32.totalorder %s394, %s396
    %p403 = scmp.eq.s32.totalorder %s29, 1
    %p404 = por %p402, %p403
    %p405 = scmp.ne.s32.totalorder %s396, %s397
    %p406 = scmp.eq.s32.totalorder %s29, 0
    %p407 = por %p405, %p406
    %p408 = scmp.ne.s32.totalorder %s396, %s397
    %p409 = scmp.eq.s32.totalorder %s30, 1
    %p410 = por %p408, %p409
    %p412 = scmp.ne.s32.totalorder %s397, %s411
    %p413 = scmp.eq.s32.totalorder %s30, 0
    %p414 = por %p412, %p413
    %s415 = ssub.s32 %s24, %s31
    %p416 = scmp.eq.s32.totalorder %s415, 0
    %s418 = sadd.s32 %s417, 1
    %s419 = scalar_select %p416, %s417, %s418
    %p422 = pneg %p416
    %p423 = scmp.eq.s32.totalorder %s24, 1
    %p424 = por %p422, %p423
    %p425 = scmp.ne.s32.totalorder %s417, %s420
    %p426 = scmp.eq.s32.totalorder %s24, 0
    %p427 = por %p425, %p426
    %p428 = scmp.ne.s32.totalorder %s417, %s420
    %p429 = scmp.eq.s32.totalorder %s29, 1
    %p430 = por %p428, %p429
    %p431 = scmp.ne.s32.totalorder %s420, %s421
    %p432 = scmp.eq.s32.totalorder %s29, 0
    %p433 = por %p431, %p432
    %p434 = scmp.ne.s32.totalorder %s420, %s421
    %p435 = scmp.eq.s32.totalorder %s30, 1
    %p436 = por %p434, %p435
    %p438 = scmp.ne.s32.totalorder %s421, %s437
    %p439 = scmp.eq.s32.totalorder %s30, 0
    %p440 = por %p438, %p439
    %p441 = scmp.le.s32.totalorder 1, %s24
    %p442 = scmp.lt.s32.totalorder %s24, 3
    %p443 = pnand %p441, %p442
    %p444 = pneg %p443
    // Predicated region
    $region9: #{rsu4f_forward.1} parent=5 // pred_check
      _
    $region10: #{rsu4f_forward.1} parent=5 // pred_check_branch
      %446 = sbr.rel (%p443) target = $region12
    $region11: #{rsu4f_forward.1} parent=5 // pred_region
      %s447 = ssub.s32 %s24, 1
      // Predicated region
      $region13: #{rsu4f_forward.1} parent=11 // pred_check
        %p448 = pneg %p71
      $region14: #{rsu4f_forward.1} parent=11 // pred_check_branch
        %450 = sbr.rel (%p448) target = $region16
      $region15: #{rsu4f_forward.1} parent=11 // pred_region
        _
      $region16: #{rsu4f_forward.1} parent=11 // pred_fallthru
        _
      // Predicated region
      $region17: #{rsu4f_forward.1} parent=11 // pred_check
        %p451 = pneg %p92
      $region18: #{rsu4f_forward.1} parent=11 // pred_check_branch
        %453 = sbr.rel (%p451) target = $region20
      $region19: #{rsu4f_forward.1} parent=11 // pred_region
        _
      $region20: #{rsu4f_forward.1} parent=11 // pred_fallthru
        _
      // Predicated region
      $region21: #{rsu4f_forward.1} parent=11 // pred_check
        %p454 = pneg %p113
      $region22: #{rsu4f_forward.1} parent=11 // pred_check_branch
        %456 = sbr.rel (%p454) target = $region24
      $region23: #{rsu4f_forward.1} parent=11 // pred_region
        _
      $region24: #{rsu4f_forward.1} parent=11 // pred_fallthru
        _
      // Predicated region
      $region25: #{rsu4f_forward.1} parent=11 // pred_check
        %p457 = pneg %p134
      $region26: #{rsu4f_forward.1} parent=11 // pred_check_branch
        %459 = sbr.rel (%p457) target = $region28
      $region27: #{rsu4f_forward.1} parent=11 // pred_region
        _
      $region28: #{rsu4f_forward.1} parent=11 // pred_fallthru
        _
      // Predicated region
      $region29: #{rsu4f_forward.1} parent=11 // pred_check
        %p460 = pneg %p155
      $region30: #{rsu4f_forward.1} parent=11 // pred_check_branch
        %462 = sbr.rel (%p460) target = $region32
      $region31: #{rsu4f_forward.1} parent=11 // pred_region
        _
      $region32: #{rsu4f_forward.1} parent=11 // pred_fallthru
        _
      // Predicated region
      $region33: #{rsu4f_forward.1} parent=11 // pred_check
        %p463 = pneg %p176
      $region34: #{rsu4f_forward.1} parent=11 // pred_check_branch
        %465 = sbr.rel (%p463) target = $region36
      $region35: #{rsu4f_forward.1} parent=11 // pred_region
        _
      $region36: #{rsu4f_forward.1} parent=11 // pred_fallthru
        _
      // Predicated region
      $region37: #{rsu4f_forward.1} parent=11 // pred_check
        %p466 = pneg %p197
      $region38: #{rsu4f_forward.1} parent=11 // pred_check_branch
        %468 = sbr.rel (%p466) target = $region40
      $region39: #{rsu4f_forward.1} parent=11 // pred_region
        _
      $region40: #{rsu4f_forward.1} parent=11 // pred_fallthru
        _
      // Predicated region
      $region41: #{rsu4f_forward.1} parent=11 // pred_check
        %p469 = pneg %p218
      $region42: #{rsu4f_forward.1} parent=11 // pred_check_branch
        %471 = sbr.rel (%p469) target = $region44
      $region43: #{rsu4f_forward.1} parent=11 // pred_region
        _
      $region44: #{rsu4f_forward.1} parent=11 // pred_fallthru
        _
      // Predicated region
      $region45: #{rsu4f_forward.1} parent=11 // pred_check
        %p472 = pneg %p239
      $region46: #{rsu4f_forward.1} parent=11 // pred_check_branch
        %474 = sbr.rel (%p472) target = $region48
      $region47: #{rsu4f_forward.1} parent=11 // pred_region
        _
      $region48: #{rsu4f_forward.1} parent=11 // pred_fallthru
        _
      // Predicated region
      $region49: #{rsu4f_forward.1} parent=11 // pred_check
        %p475 = pneg %p260
      $region50: #{rsu4f_forward.1} parent=11 // pred_check_branch
        %477 = sbr.rel (%p475) target = $region52
      $region51: #{rsu4f_forward.1} parent=11 // pred_region
        _
      $region52: #{rsu4f_forward.1} parent=11 // pred_fallthru
        _
      // Predicated region
      $region53: #{rsu4f_forward.1} parent=11 // pred_check
        %p478 = pneg %p281
      $region54: #{rsu4f_forward.1} parent=11 // pred_check_branch
        %480 = sbr.rel (%p478) target = $region56
      $region55: #{rsu4f_forward.1} parent=11 // pred_region
        _
      $region56: #{rsu4f_forward.1} parent=11 // pred_fallthru
        _
      // Predicated region
      $region57: #{rsu4f_forward.1} parent=11 // pred_check
        %p481 = pneg %p302
      $region58: #{rsu4f_forward.1} parent=11 // pred_check_branch
        %483 = sbr.rel (%p481) target = $region60
      $region59: #{rsu4f_forward.1} parent=11 // pred_region
        _
      $region60: #{rsu4f_forward.1} parent=11 // pred_fallthru
        _
      // Predicated region
      $region61: #{rsu4f_forward.1} parent=11 // pred_check
        %p484 = pneg %p323
      $region62: #{rsu4f_forward.1} parent=11 // pred_check_branch
        %486 = sbr.rel (%p484) target = $region64
      $region63: #{rsu4f_forward.1} parent=11 // pred_region
        _
      $region64: #{rsu4f_forward.1} parent=11 // pred_fallthru
        _
      // Predicated region
      $region65: #{rsu4f_forward.1} parent=11 // pred_check
        %p487 = pneg %p344
      $region66: #{rsu4f_forward.1} parent=11 // pred_check_branch
        %489 = sbr.rel (%p487) target = $region68
      $region67: #{rsu4f_forward.1} parent=11 // pred_region
        _
      $region68: #{rsu4f_forward.1} parent=11 // pred_fallthru
        _
      // Predicated region
      $region69: #{rsu4f_forward.1} parent=11 // pred_check
        %p490 = pneg %p365
      $region70: #{rsu4f_forward.1} parent=11 // pred_check_branch
        %492 = sbr.rel (%p490) target = $region72
      $region71: #{rsu4f_forward.1} parent=11 // pred_region
        _
      $region72: #{rsu4f_forward.1} parent=11 // pred_fallthru
        _
      // Predicated region
      $region73: #{rsu4f_forward.1} parent=11 // pred_check
        %p493 = pneg %p386
      $region74: #{rsu4f_forward.1} parent=11 // pred_check_branch
        %495 = sbr.rel (%p493) target = $region76
      $region75: #{rsu4f_forward.1} parent=11 // pred_region
        _
      $region76: #{rsu4f_forward.1} parent=11 // pred_fallthru
        _
      // Predicated region
      $region77: #{rsu4f_forward.1} parent=11 // pred_check
        %p496 = pneg %p407
      $region78: #{rsu4f_forward.1} parent=11 // pred_check_branch
        %498 = sbr.rel (%p496) target = $region80
      $region79: #{rsu4f_forward.1} parent=11 // pred_region
        _
      $region80: #{rsu4f_forward.1} parent=11 // pred_fallthru
        _
    $region12: #{rsu4f_forward.1} parent=5 // pred_fallthru
      _
    %p499 = scmp.lt.s32.totalorder %s24, 2
    // Predicated region
    $region81: #{rsu4f_forward.1} parent=5 // pred_check
      %p500 = pneg %p499
    $region82: #{rsu4f_forward.1} parent=5 // pred_check_branch
      %502 = sbr.rel (%p500) target = $region84
    $region83: #{rsu4f_forward.1} parent=5 // pred_region
      // Predicated region
      $region85: #{rsu4f_forward.1} parent=83 // pred_check
        %p503 = pneg %p44
      $region86: #{rsu4f_forward.1} parent=83 // pred_check_branch
        %505 = sbr.rel (%p503) target = $region88
      $region87: #{rsu4f_forward.1} parent=83 // pred_region
        %p506 = scmp.lt.s32.totalorder %s24, 1
        %s507 = scalar_select %p506, %s24, 1
        %s508 = smul.addr %s507, 4
        %s509 = smul.addr %s508, 4
        %s510 = scalar_lea.vmem %s0, %s509
      $region88: #{rsu4f_forward.1} parent=83 // pred_fallthru
        _
    $region84: #{rsu4f_forward.1} parent=5 // pred_fallthru
      _
    %p511 = scmp.le.s32.totalorder 1, %s24
    %p512 = scmp.lt.s32.totalorder %s24, 3
    %p513 = pnand %p511, %p512
    %p514 = pneg %p513
    // Predicated region
    $region89: #{rsu4f_forward.1} parent=5 // pred_check
      _
    $region90: #{rsu4f_forward.1} parent=5 // pred_check_branch
      %516 = sbr.rel (%p513) target = $region92
    $region91: #{rsu4f_forward.1} parent=5 // pred_region
      %s517 = ssub.s32 %s24, 1
      %p518 = scmp.lt.s32.totalorder %s29, 1
      %s519 = scalar_select %p518, %s29, 1
      %s520 = smul.addr %s519, 4
      %s521 = smul.addr %s520, 4
      %s522 = scalar_lea.vmem %s0, %s521
      %p523 = pneg %p50
      %p524 = pneg %p47
      %p525 = pneg %p71
      %p526 = pneg %p68
      %p527 = pneg %p92
      %p528 = pneg %p89
      %p529 = pneg %p113
      %p530 = pneg %p110
      %p531 = pneg %p134
      %p532 = pneg %p131
      %p533 = pneg %p155
      %p534 = pneg %p152
      %p535 = pneg %p176
      %p536 = pneg %p173
      %p537 = pneg %p197
      %p538 = pneg %p194
      %p539 = pneg %p218
      %p540 = pneg %p215
      %p541 = pneg %p239
      %p542 = pneg %p236
      %p543 = pneg %p260
      %p544 = pneg %p257
      %p545 = pneg %p281
      %p546 = pneg %p278
      %p547 = pneg %p302
      %p548 = pneg %p299
      %p549 = pneg %p323
      %p550 = pneg %p320
      %p551 = pneg %p344
      %p552 = pneg %p341
      %p553 = pneg %p365
      %p554 = pneg %p362
      %p555 = pneg %p386
      %p556 = pneg %p383
      %p557 = pneg %p407
      %p558 = pneg %p404
      %p559 = pneg %p433
      %p560 = pneg %p430
      %p561 = scmp.lt.s32.totalorder %s29, 1
      %s562 = scalar_select %p561, %s29, 1
      %s563 = smul.addr %s562, 4
      %s564 = smul.addr %s563, 8
      %s565 = scalar_lea.vmem %s18, %s564
      %p566 = scmp.lt.s32.totalorder %s29, 1
      %s567 = scalar_select %p566, %s29, 1
      %s568 = smul.addr %s567, 4
      %s569 = smul.addr %s568, 4
      %s570 = scalar_lea.vmem %s0, %s569
      %p571 = scmp.lt.s32.totalorder %s29, 1
      %s572 = scalar_select %p571, %s29, 1
      %s573 = smul.addr %s572, 4
      %s574 = smul.addr %s573, 8
      %s575 = scalar_lea.vmem %s18, %s574
      %577 = vst [vmem:[#allocation2] sm:$0xff] 0
      %578 = vst [vmem:[#allocation2 + $0x18] sm:$0xff] 0
      %579 = vst [vmem:[#allocation2 + $0x30] sm:$0xff] 0
      %580 = vst [vmem:[#allocation2 + $0x48] sm:$0xff] 0
      %581 = vst [vmem:[#allocation2 + $0x10] sm:$0xff] 0
      %582 = vst [vmem:[#allocation2 + $0x28] sm:$0xff] 0
      %583 = vst [vmem:[#allocation2 + $0x40] sm:$0xff] 0
      %584 = vst [vmem:[#allocation2 + $0x58] sm:$0xff] 0
      %v585 = vld [vmem:[%s570] sm:$0xff]
      %v586 = vld [vmem:[%s570 + $0x8] sm:$0xff]
      %v587 = vld [vmem:[%s3] sm:$0xff]
      %v588 = vld [vmem:[%s3 + $0x8] sm:$0xff]
      %589 = vst [vmem:[#allocation2 + $0x8] sm:$0xff] %v585
      %590 = vst [vmem:[#allocation2 + $0x20] sm:$0xff] %v586
      %v591 = vld [vmem:[#allocation2 + $0x4] sm:$0xff]
      %v592 = vld [vmem:[#allocation2 + $0xc] sm:$0xf]
      %v593 = vld [vmem:[#allocation2 + $0x1c] sm:$0xff]
      %v594 = vld [vmem:[#allocation2 + $0x24] sm:$0xf]
      %v595 = vld [vmem:[%s1] sm:$0x11]
      %v597 = vunpack.c.l.b16 %v595
      %v598 = vunpack.c.h.b16 %v595
      %v599 = vpack.c.b16 %v597, %v597
      %v600 = vpack.c.b16 %v598, %v598
      %v602 = vpack.i.b16 %v599, %v599
      %v604 = vperm.slane %v602, 0
      %v606 = vpack.i.b16 %v600, %v600
      %v608 = vperm.slane %v606, 0
      %v609 = vunpack.c.l.bf16 %v591
      %v610 = vunpack.c.h.bf16 %v591
      %v611 = vunpack.c.l.bf16 %v592
      %v612 = vunpack.c.l.bf16 %v593
      %v613 = vunpack.c.h.bf16 %v593
      %v614 = vunpack.c.l.bf16 %v594
      %v615 = vunpack.c.l.bf16 %v604
      %v616 = vunpack.c.l.bf16 %v608
      %619 = vrot.lane.b32.xlu0 %v615, 111
      %v620 = vpop.permute.xlu0 %619
      %621 = vrot.lane.b32.xlu0 %v616, 111
      %v622 = vpop.permute.xlu0 %621
      %vm623 = vcmask 908288
      %v624 = vsel %vm623, %v620, %v622
      %v628 = vmul.f32 %v609, %v620
      %v629 = vmul.f32 %v610, %v624
      %v630 = vmul.f32 %v611, %v622
      %v631 = vmul.f32 %v612, %v620
      %v632 = vmul.f32 %v613, %v624
      %v633 = vmul.f32 %v614, %v622
      %v634 = vpack.c.bf16 %v631, %v628
      %v635 = vpack.c.bf16 %v632, %v629
      %v636 = vpack.c.bf16 %v633, %v630
      %v637 = vld [vmem:[%s2] sm:$0xf]
      %v638 = vld [vmem:[%s2 + $0x4] sm:$0xf]
      %s639 = scalar_lea.vmem %s2, 8
      %v640 = vld [vmem:[%s639] sm:$0xf]
      %v641 = vld [vmem:[%s639 + $0x4] sm:$0xf]
      %v644 = vunpack.c.l.b16 %v640
      %v645 = vunpack.c.l.b16 %v641
      %v646 = vpack.c.b16 %v645, %v644
      %v651 = vunpack.c.l.b16 %v591
      %v652 = vunpack.c.h.b16 %v591
      %v653 = vunpack.c.l.b16 %v592
      %v654 = vunpack.c.l.b16 %v593
      %v655 = vunpack.c.h.b16 %v593
      %v656 = vunpack.c.l.b16 %v594
      %v657 = vpack.c.b16 %v654, %v651
      %v658 = vpack.c.b16 %v655, %v652
      %v659 = vpack.c.b16 %v656, %v653
      %660 = vrot.lane.b32.xlu0 %v657, 16
      %v661 = vpop.permute.xlu0 %660
      %662 = vrot.lane.b32.xlu0 %v658, 16
      %v663 = vpop.permute.xlu0 %662
      %664 = vrot.lane.b32.xlu0 %v659, 16
      %v665 = vpop.permute.xlu0 %664
      %vm666 = vcmask 130048
      %v667 = vsel %vm666, %v661, %v663
      %v668 = vsel %vm666, %v663, %v665
      %vm671 = vcmask 130048
      %v673 = vsel %vm671, %v646, 0
      %675 = vmatpush.bf16.msra.mxu0 0
      %676 = vmatpush.bf16.msra.mxu0 0
      %677 = vmatpush.bf16.msra.mxu0 0
      %678 = vmatpush.bf16.msra.mxu0 0
      %679 = vmatpush.bf16.msra.mxu0 0
      %680 = vmatpush.bf16.msra.mxu0 0
      %681 = vmatpush.bf16.msra.mxu0 0
      %682 = vmatpush.bf16.msra.mxu0 %v667
      %683 = vmatmul.bf16.gmra.mxu0 %v673
      %v684 = vpop.f32.mrf.mxu0
      %v685 = vadd.f32 0.0, %v684
      %v686 = vpop.f32.mrf.mxu0
      %v687 = vadd.f32 0.0, %v686
      %688 = vdwg.mxu0
      %689 = vmatpush.bf16.msra.mxu0 0
      %690 = vmatpush.bf16.msra.mxu0 0
      %691 = vmatpush.bf16.msra.mxu0 0
      %692 = vmatpush.bf16.msra.mxu0 0
      %693 = vmatpush.bf16.msra.mxu0 0
      %694 = vmatpush.bf16.msra.mxu0 0
      %695 = vmatpush.bf16.msra.mxu0 0
      %696 = vmatpush.bf16.msra.mxu0 %v668
      %697 = vmatmul.bf16.gmra.mxu0 %v673
      %v698 = vpop.f32.mrf.mxu0
      %v699 = vadd.f32 0.0, %v698
      %v700 = vpop.f32.mrf.mxu0
      %v701 = vadd.f32 0.0, %v700
      %702 = vdwg.mxu0
      %v705 = vunpack.c.l.b16 %v637
      %v706 = vunpack.c.l.b16 %v638
      %v707 = vpack.c.b16 %v706, %v705
      %711 = vrot.lane.b32.xlu0 %v634, 17
      %v712 = vpop.permute.xlu0 %711
      %713 = vrot.lane.b32.xlu0 %v635, 17
      %v714 = vpop.permute.xlu0 %713
      %715 = vrot.lane.b32.xlu0 %v636, 17
      %v716 = vpop.permute.xlu0 %715
      %vm717 = vcmask 138240
      %v718 = vsel %vm717, %v712, %v714
      %v719 = vsel %vm717, %v714, %v716
      %v723 = vsel %vm671, %v707, 0
      %725 = vmatpush.bf16.msra.mxu0 0
      %726 = vmatpush.bf16.msra.mxu0 0
      %727 = vmatpush.bf16.msra.mxu0 0
      %728 = vmatpush.bf16.msra.mxu0 0
      %729 = vmatpush.bf16.msra.mxu0 0
      %730 = vmatpush.bf16.msra.mxu0 0
      %731 = vmatpush.bf16.msra.mxu0 0
      %732 = vmatpush.bf16.msra.mxu0 %v718
      %733 = vmatmul.bf16.gmra.mxu0 %v723
      %v734 = vpop.f32.mrf.mxu0
      %v735 = vadd.f32 %v685, %v734
      %v736 = vpop.f32.mrf.mxu0
      %v737 = vadd.f32 %v687, %v736
      %738 = vdwg.mxu0
      %739 = vmatpush.bf16.msra.mxu0 0
      %740 = vmatpush.bf16.msra.mxu0 0
      %741 = vmatpush.bf16.msra.mxu0 0
      %742 = vmatpush.bf16.msra.mxu0 0
      %743 = vmatpush.bf16.msra.mxu0 0
      %744 = vmatpush.bf16.msra.mxu0 0
      %745 = vmatpush.bf16.msra.mxu0 0
      %746 = vmatpush.bf16.msra.mxu0 %v719
      %747 = vmatmul.bf16.gmra.mxu0 %v723
      %v748 = vpop.f32.mrf.mxu0
      %v749 = vadd.f32 %v699, %v748
      %v750 = vpop.f32.mrf.mxu0
      %v751 = vadd.f32 %v701, %v750
      %752 = vdwg.mxu0
      %v753 = vshrl.u32 %v599, 16
      %v754 = vpack.i.b16 %v753, %v753
      %v756 = vperm.slane %v754, 0
      %v757 = vshrl.u32 %v600, 16
      %v758 = vpack.i.b16 %v757, %v757
      %v760 = vperm.slane %v758, 0
      %v761 = vunpack.c.l.bf16 %v756
      %v762 = vunpack.c.l.bf16 %v760
      %765 = vrot.lane.b32.xlu0 %v761, 113
      %v766 = vpop.permute.xlu0 %765
      %767 = vrot.lane.b32.xlu0 %v762, 113
      %v768 = vpop.permute.xlu0 %767
      %vm769 = vcmask 924672
      %v770 = vsel %vm769, %v766, %v768
      %v774 = vmul.f32 %v609, %v766
      %v775 = vmul.f32 %v610, %v770
      %v776 = vmul.f32 %v611, %v768
      %v777 = vmul.f32 %v612, %v766
      %v778 = vmul.f32 %v613, %v770
      %v779 = vmul.f32 %v614, %v768
      %v780 = vpack.c.bf16 %v777, %v774
      %v781 = vpack.c.bf16 %v778, %v775
      %v782 = vpack.c.bf16 %v779, %v776
      %s783 = scalar_lea.vmem %s2, 16
      %v784 = vld [vmem:[%s783] sm:$0xf]
      %v785 = vld [vmem:[%s783 + $0x4] sm:$0xf]
      %v788 = vunpack.c.l.b16 %v784
      %v789 = vunpack.c.l.b16 %v785
      %v790 = vpack.c.b16 %v789, %v788
      %794 = vrot.lane.b32.xlu0 %v780, 15
      %v795 = vpop.permute.xlu0 %794
      %796 = vrot.lane.b32.xlu0 %v781, 15
      %v797 = vpop.permute.xlu0 %796
      %798 = vrot.lane.b32.xlu0 %v782, 15
      %v799 = vpop.permute.xlu0 %798
      %vm800 = vcmask 121856
      %v801 = vsel %vm800, %v795, %v797
      %v802 = vsel %vm800, %v797, %v799
      %v806 = vsel %vm671, %v790, 0
      %808 = vmatpush.bf16.msra.mxu0 0
      %809 = vmatpush.bf16.msra.mxu0 0
      %810 = vmatpush.bf16.msra.mxu0 0
      %811 = vmatpush.bf16.msra.mxu0 0
      %812 = vmatpush.bf16.msra.mxu0 0
      %813 = vmatpush.bf16.msra.mxu0 0
      %814 = vmatpush.bf16.msra.mxu0 0
      %815 = vmatpush.bf16.msra.mxu0 %v801
      %816 = vmatmul.bf16.gmra.mxu0 %v806
      %v817 = vpop.f32.mrf.mxu0
      %v818 = vadd.f32 0.0, %v817
      %v819 = vpop.f32.mrf.mxu0
      %v820 = vadd.f32 0.0, %v819
      %821 = vdwg.mxu0
      %822 = vmatpush.bf16.msra.mxu0 0
      %823 = vmatpush.bf16.msra.mxu0 0
      %824 = vmatpush.bf16.msra.mxu0 0
      %825 = vmatpush.bf16.msra.mxu0 0
      %826 = vmatpush.bf16.msra.mxu0 0
      %827 = vmatpush.bf16.msra.mxu0 0
      %828 = vmatpush.bf16.msra.mxu0 0
      %829 = vmatpush.bf16.msra.mxu0 %v802
      %830 = vmatmul.bf16.gmra.mxu0 %v806
      %v831 = vpop.f32.mrf.mxu0
      %v832 = vadd.f32 0.0, %v831
      %v833 = vpop.f32.mrf.mxu0
      %v834 = vadd.f32 0.0, %v833
      %835 = vdwg.mxu0
      %v836 = vadd.f32 %v735, %v818
      %v837 = vadd.f32 %v749, %v832
      %v838 = vadd.f32 %v737, %v820
      %v839 = vadd.f32 %v751, %v834
      %840 = vrot.lane.b32.xlu0 %v615, 127
      %v841 = vpop.permute.xlu0 %840
      %842 = vrot.lane.b32.xlu0 %v616, 127
      %v843 = vpop.permute.xlu0 %842
      %vm844 = vcmask 1039360
      %v845 = vsel %vm844, %v841, %v843
      %v849 = vmul.f32 %v609, %v841
      %v850 = vmul.f32 %v610, %v845
      %v851 = vmul.f32 %v611, %v843
      %v852 = vmul.f32 %v612, %v841
      %v853 = vmul.f32 %v613, %v845
      %v854 = vmul.f32 %v614, %v843
      %v855 = vpack.c.bf16 %v852, %v849
      %v856 = vpack.c.bf16 %v853, %v850
      %v857 = vpack.c.bf16 %v854, %v851
      %s858 = scalar_lea.vmem %s2, 24
      %v859 = vld [vmem:[%s858] sm:$0xf]
      %v860 = vld [vmem:[%s858 + $0x4] sm:$0xf]
      %v863 = vunpack.c.l.b16 %v859
      %v864 = vunpack.c.l.b16 %v860
      %v865 = vpack.c.b16 %v864, %v863
      %869 = vrot.lane.b32.xlu0 %v855, 1
      %v870 = vpop.permute.xlu0 %869
      %871 = vrot.lane.b32.xlu0 %v856, 1
      %v872 = vpop.permute.xlu0 %871
      %873 = vrot.lane.b32.xlu0 %v857, 1
      %v874 = vpop.permute.xlu0 %873
      %vm875 = vcmask 7168
      %v876 = vsel %vm875, %v870, %v872
      %v877 = vsel %vm875, %v872, %v874
      %v881 = vsel %vm671, %v865, 0
      %883 = vmatpush.bf16.msra.mxu0 0
      %884 = vmatpush.bf16.msra.mxu0 0
      %885 = vmatpush.bf16.msra.mxu0 0
      %886 = vmatpush.bf16.msra.mxu0 0
      %887 = vmatpush.bf16.msra.mxu0 0
      %888 = vmatpush.bf16.msra.mxu0 0
      %889 = vmatpush.bf16.msra.mxu0 0
      %890 = vmatpush.bf16.msra.mxu0 %v876
      %891 = vmatmul.bf16.gmra.mxu0 %v881
      %v892 = vpop.f32.mrf.mxu0
      %v893 = vadd.f32 0.0, %v892
      %v894 = vpop.f32.mrf.mxu0
      %v895 = vadd.f32 0.0, %v894
      %896 = vdwg.mxu0
      %897 = vmatpush.bf16.msra.mxu0 0
      %898 = vmatpush.bf16.msra.mxu0 0
      %899 = vmatpush.bf16.msra.mxu0 0
      %900 = vmatpush.bf16.msra.mxu0 0
      %901 = vmatpush.bf16.msra.mxu0 0
      %902 = vmatpush.bf16.msra.mxu0 0
      %903 = vmatpush.bf16.msra.mxu0 0
      %904 = vmatpush.bf16.msra.mxu0 %v877
      %905 = vmatmul.bf16.gmra.mxu0 %v881
      %v906 = vpop.f32.mrf.mxu0
      %v907 = vadd.f32 0.0, %v906
      %v908 = vpop.f32.mrf.mxu0
      %v909 = vadd.f32 0.0, %v908
      %910 = vdwg.mxu0
      %v911 = vadd.f32 %v836, %v893
      %v912 = vadd.f32 %v837, %v907
      %v913 = vadd.f32 %v838, %v895
      %v914 = vadd.f32 %v839, %v909
      %v915 = vld [vmem:[#allocation2 + $0x8] sm:$0xff]
      %v916 = vld [vmem:[#allocation2 + $0x20] sm:$0xff]
      %s917 = scalar_lea.vmem %s2, 32
      %v918 = vld [vmem:[%s917] sm:$0xf]
      %v919 = vld [vmem:[%s917 + $0x4] sm:$0xf]
      %v922 = vunpack.c.l.b16 %v918
      %v923 = vunpack.c.l.b16 %v919
      %v924 = vpack.c.b16 %v923, %v922
      %v927 = vunpack.c.l.b16 %v915
      %v928 = vunpack.c.h.b16 %v915
      %v929 = vunpack.c.l.b16 %v916
      %v930 = vunpack.c.h.b16 %v916
      %v931 = vpack.c.b16 %v929, %v927
      %v932 = vpack.c.b16 %v930, %v928
      %v936 = vsel %vm671, %v924, 0
      %938 = vmatpush.bf16.msra.mxu0 0
      %939 = vmatpush.bf16.msra.mxu0 0
      %940 = vmatpush.bf16.msra.mxu0 0
      %941 = vmatpush.bf16.msra.mxu0 0
      %942 = vmatpush.bf16.msra.mxu0 0
      %943 = vmatpush.bf16.msra.mxu0 0
      %944 = vmatpush.bf16.msra.mxu0 0
      %945 = vmatpush.bf16.msra.mxu0 %v931
      %946 = vmatmul.bf16.gmra.mxu0 %v936
      %v947 = vpop.f32.mrf.mxu0
      %v948 = vadd.f32 0.0, %v947
      %v949 = vpop.f32.mrf.mxu0
      %v950 = vadd.f32 0.0, %v949
      %951 = vdwg.mxu0
      %952 = vmatpush.bf16.msra.mxu0 0
      %953 = vmatpush.bf16.msra.mxu0 0
      %954 = vmatpush.bf16.msra.mxu0 0
      %955 = vmatpush.bf16.msra.mxu0 0
      %956 = vmatpush.bf16.msra.mxu0 0
      %957 = vmatpush.bf16.msra.mxu0 0
      %958 = vmatpush.bf16.msra.mxu0 0
      %959 = vmatpush.bf16.msra.mxu0 %v932
      %960 = vmatmul.bf16.gmra.mxu0 %v936
      %v961 = vpop.f32.mrf.mxu0
      %v962 = vadd.f32 0.0, %v961
      %v963 = vpop.f32.mrf.mxu0
      %v964 = vadd.f32 0.0, %v963
      %965 = vdwg.mxu0
      %v966 = vadd.f32 %v911, %v948
      %v967 = vadd.f32 %v912, %v962
      %v968 = vadd.f32 %v913, %v950
      %v969 = vadd.f32 %v914, %v964
      %v970 = vld [vmem:[#allocation2 + $0x8] sm:$0xff]
      %v971 = vld [vmem:[#allocation2 + $0x10] sm:$0xf]
      %v972 = vld [vmem:[#allocation2 + $0x20] sm:$0xff]
      %v973 = vld [vmem:[#allocation2 + $0x28] sm:$0xf]
      %v974 = vunpack.c.l.bf16 %v970
      %v975 = vunpack.c.h.bf16 %v970
      %v976 = vunpack.c.l.bf16 %v971
      %v977 = vunpack.c.l.bf16 %v972
      %v978 = vunpack.c.h.bf16 %v972
      %v979 = vunpack.c.l.bf16 %v973
      %980 = vrot.lane.b32.xlu0 %v761, 1
      %v981 = vpop.permute.xlu0 %980
      %982 = vrot.lane.b32.xlu0 %v762, 1
      %v983 = vpop.permute.xlu0 %982
      %vm984 = vcmask 7168
      %v985 = vsel %vm984, %v981, %v983
      %v989 = vmul.f32 %v974, %v981
      %v990 = vmul.f32 %v975, %v985
      %v991 = vmul.f32 %v976, %v983
      %v992 = vmul.f32 %v977, %v981
      %v993 = vmul.f32 %v978, %v985
      %v994 = vmul.f32 %v979, %v983
      %v995 = vpack.c.bf16 %v992, %v989
      %v996 = vpack.c.bf16 %v993, %v990
      %v997 = vpack.c.bf16 %v994, %v991
      %s998 = scalar_lea.vmem %s2, 40
      %v999 = vld [vmem:[%s998] sm:$0xf]
      %v1000 = vld [vmem:[%s998 + $0x4] sm:$0xf]
      %v1003 = vunpack.c.l.b16 %v999
      %v1004 = vunpack.c.l.b16 %v1000
      %v1005 = vpack.c.b16 %v1004, %v1003
      %1009 = vrot.lane.b32.xlu0 %v995, 127
      %v1010 = vpop.permute.xlu0 %1009
      %1011 = vrot.lane.b32.xlu0 %v996, 127
      %v1012 = vpop.permute.xlu0 %1011
      %1013 = vrot.lane.b32.xlu0 %v997, 127
      %v1014 = vpop.permute.xlu0 %1013
      %vm1015 = vcmask 1039360
      %v1016 = vsel %vm1015, %v1010, %v1012
      %v1017 = vsel %vm1015, %v1012, %v1014
      %v1021 = vsel %vm671, %v1005, 0
      %1023 = vmatpush.bf16.msra.mxu0 0
      %1024 = vmatpush.bf16.msra.mxu0 0
      %1025 = vmatpush.bf16.msra.mxu0 0
      %1026 = vmatpush.bf16.msra.mxu0 0
      %1027 = vmatpush.bf16.msra.mxu0 0
      %1028 = vmatpush.bf16.msra.mxu0 0
      %1029 = vmatpush.bf16.msra.mxu0 0
      %1030 = vmatpush.bf16.msra.mxu0 %v1016
      %1031 = vmatmul.bf16.gmra.mxu0 %v1021
      %v1032 = vpop.f32.mrf.mxu0
      %v1033 = vadd.f32 0.0, %v1032
      %v1034 = vpop.f32.mrf.mxu0
      %v1035 = vadd.f32 0.0, %v1034
      %1036 = vdwg.mxu0
      %1037 = vmatpush.bf16.msra.mxu0 0
      %1038 = vmatpush.bf16.msra.mxu0 0
      %1039 = vmatpush.bf16.msra.mxu0 0
      %1040 = vmatpush.bf16.msra.mxu0 0
      %1041 = vmatpush.bf16.msra.mxu0 0
      %1042 = vmatpush.bf16.msra.mxu0 0
      %1043 = vmatpush.bf16.msra.mxu0 0
      %1044 = vmatpush.bf16.msra.mxu0 %v1017
      %1045 = vmatmul.bf16.gmra.mxu0 %v1021
      %v1046 = vpop.f32.mrf.mxu0
      %v1047 = vadd.f32 0.0, %v1046
      %v1048 = vpop.f32.mrf.mxu0
      %v1049 = vadd.f32 0.0, %v1048
      %1050 = vdwg.mxu0
      %v1051 = vadd.f32 %v966, %v1033
      %v1052 = vadd.f32 %v967, %v1047
      %v1053 = vadd.f32 %v968, %v1035
      %v1054 = vadd.f32 %v969, %v1049
      %1055 = vrot.lane.b32.xlu0 %v615, 15
      %v1056 = vpop.permute.xlu0 %1055
      %1057 = vrot.lane.b32.xlu0 %v616, 15
      %v1058 = vpop.permute.xlu0 %1057
      %vm1059 = vcmask 121856
      %v1060 = vsel %vm1059, %v1056, %v1058
      %v1064 = vmul.f32 %v974, %v1056
      %v1065 = vmul.f32 %v975, %v1060
      %v1066 = vmul.f32 %v976, %v1058
      %v1067 = vmul.f32 %v977, %v1056
      %v1068 = vmul.f32 %v978, %v1060
      %v1069 = vmul.f32 %v979, %v1058
      %v1070 = vpack.c.bf16 %v1067, %v1064
      %v1071 = vpack.c.bf16 %v1068, %v1065
      %v1072 = vpack.c.bf16 %v1069, %v1066
      %s1073 = scalar_lea.vmem %s2, 48
      %v1074 = vld [vmem:[%s1073] sm:$0xf]
      %v1075 = vld [vmem:[%s1073 + $0x4] sm:$0xf]
      %v1078 = vunpack.c.l.b16 %v1074
      %v1079 = vunpack.c.l.b16 %v1075
      %v1080 = vpack.c.b16 %v1079, %v1078
      %1084 = vrot.lane.b32.xlu0 %v1070, 113
      %v1085 = vpop.permute.xlu0 %1084
      %1086 = vrot.lane.b32.xlu0 %v1071, 113
      %v1087 = vpop.permute.xlu0 %1086
      %1088 = vrot.lane.b32.xlu0 %v1072, 113
      %v1089 = vpop.permute.xlu0 %1088
      %vm1090 = vcmask 924672
      %v1091 = vsel %vm1090, %v1085, %v1087
      %v1092 = vsel %vm1090, %v1087, %v1089
      %v1096 = vsel %vm671, %v1080, 0
      %1098 = vmatpush.bf16.msra.mxu0 0
      %1099 = vmatpush.bf16.msra.mxu0 0
      %1100 = vmatpush.bf16.msra.mxu0 0
      %1101 = vmatpush.bf16.msra.mxu0 0
      %1102 = vmatpush.bf16.msra.mxu0 0
      %1103 = vmatpush.bf16.msra.mxu0 0
      %1104 = vmatpush.bf16.msra.mxu0 0
      %1105 = vmatpush.bf16.msra.mxu0 %v1091
      %1106 = vmatmul.bf16.gmra.mxu0 %v1096
      %v1107 = vpop.f32.mrf.mxu0
      %v1108 = vadd.f32 0.0, %v1107
      %v1109 = vpop.f32.mrf.mxu0
      %v1110 = vadd.f32 0.0, %v1109
      %1111 = vdwg.mxu0
      %1112 = vmatpush.bf16.msra.mxu0 0
      %1113 = vmatpush.bf16.msra.mxu0 0
      %1114 = vmatpush.bf16.msra.mxu0 0
      %1115 = vmatpush.bf16.msra.mxu0 0
      %1116 = vmatpush.bf16.msra.mxu0 0
      %1117 = vmatpush.bf16.msra.mxu0 0
      %1118 = vmatpush.bf16.msra.mxu0 0
      %1119 = vmatpush.bf16.msra.mxu0 %v1092
      %1120 = vmatmul.bf16.gmra.mxu0 %v1096
      %v1121 = vpop.f32.mrf.mxu0
      %v1122 = vadd.f32 0.0, %v1121
      %v1123 = vpop.f32.mrf.mxu0
      %v1124 = vadd.f32 0.0, %v1123
      %1125 = vdwg.mxu0
      %v1126 = vadd.f32 %v1051, %v1108
      %v1127 = vadd.f32 %v1052, %v1122
      %v1128 = vadd.f32 %v1053, %v1110
      %v1129 = vadd.f32 %v1054, %v1124
      %s1130 = scalar_lea.vmem %s2, 56
      %v1131 = vld [vmem:[%s1130] sm:$0xf]
      %v1132 = vld [vmem:[%s1130 + $0x4] sm:$0xf]
      %v1135 = vunpack.c.l.b16 %v1131
      %v1136 = vunpack.c.l.b16 %v1132
      %v1137 = vpack.c.b16 %v1136, %v1135
      %v1142 = vunpack.c.l.b16 %v970
      %v1143 = vunpack.c.h.b16 %v970
      %v1144 = vunpack.c.l.b16 %v971
      %v1145 = vunpack.c.l.b16 %v972
      %v1146 = vunpack.c.h.b16 %v972
      %v1147 = vunpack.c.l.b16 %v973
      %v1148 = vpack.c.b16 %v1145, %v1142
      %v1149 = vpack.c.b16 %v1146, %v1143
      %v1150 = vpack.c.b16 %v1147, %v1144
      %1151 = vrot.lane.b32.xlu0 %v1148, 112
      %v1152 = vpop.permute.xlu0 %1151
      %1153 = vrot.lane.b32.xlu0 %v1149, 112
      %v1154 = vpop.permute.xlu0 %1153
      %1155 = vrot.lane.b32.xlu0 %v1150, 112
      %v1156 = vpop.permute.xlu0 %1155
      %vm1157 = vcmask 916480
      %v1158 = vsel %vm1157, %v1152, %v1154
      %v1159 = vsel %vm1157, %v1154, %v1156
      %v1163 = vsel %vm671, %v1137, 0
      %1165 = vmatpush.bf16.msra.mxu0 0
      %1166 = vmatpush.bf16.msra.mxu0 0
      %1167 = vmatpush.bf16.msra.mxu0 0
      %1168 = vmatpush.bf16.msra.mxu0 0
      %1169 = vmatpush.bf16.msra.mxu0 0
      %1170 = vmatpush.bf16.msra.mxu0 0
      %1171 = vmatpush.bf16.msra.mxu0 0
      %1172 = vmatpush.bf16.msra.mxu0 %v1158
      %1173 = vmatmul.bf16.gmra.mxu0 %v1163
      %v1174 = vpop.f32.mrf.mxu0
      %v1175 = vadd.f32 0.0, %v1174
      %v1176 = vpop.f32.mrf.mxu0
      %v1177 = vadd.f32 0.0, %v1176
      %1178 = vdwg.mxu0
      %1179 = vmatpush.bf16.msra.mxu0 0
      %1180 = vmatpush.bf16.msra.mxu0 0
      %1181 = vmatpush.bf16.msra.mxu0 0
      %1182 = vmatpush.bf16.msra.mxu0 0
      %1183 = vmatpush.bf16.msra.mxu0 0
      %1184 = vmatpush.bf16.msra.mxu0 0
      %1185 = vmatpush.bf16.msra.mxu0 0
      %1186 = vmatpush.bf16.msra.mxu0 %v1159
      %1187 = vmatmul.bf16.gmra.mxu0 %v1163
      %v1188 = vpop.f32.mrf.mxu0
      %v1189 = vadd.f32 0.0, %v1188
      %v1190 = vpop.f32.mrf.mxu0
      %v1191 = vadd.f32 0.0, %v1190
      %1192 = vdwg.mxu0
      %v1193 = vadd.f32 %v1126, %v1175
      %v1194 = vadd.f32 %v1127, %v1189
      %v1195 = vadd.f32 %v1128, %v1177
      %v1196 = vadd.f32 %v1129, %v1191
      %1197 = vrot.lane.b32.xlu0 %v761, 17
      %v1198 = vpop.permute.xlu0 %1197
      %1199 = vrot.lane.b32.xlu0 %v762, 17
      %v1200 = vpop.permute.xlu0 %1199
      %vm1201 = vcmask 138240
      %v1202 = vsel %vm1201, %v1198, %v1200
      %v1206 = vmul.f32 %v974, %v1198
      %v1207 = vmul.f32 %v975, %v1202
      %v1208 = vmul.f32 %v976, %v1200
      %v1209 = vmul.f32 %v977, %v1198
      %v1210 = vmul.f32 %v978, %v1202
      %v1211 = vmul.f32 %v979, %v1200
      %v1212 = vpack.c.bf16 %v1209, %v1206
      %v1213 = vpack.c.bf16 %v1210, %v1207
      %v1214 = vpack.c.bf16 %v1211, %v1208
      %s1215 = scalar_lea.vmem %s2, 64
      %v1216 = vld [vmem:[%s1215] sm:$0xf]
      %v1217 = vld [vmem:[%s1215 + $0x4] sm:$0xf]
      %v1220 = vunpack.c.l.b16 %v1216
      %v1221 = vunpack.c.l.b16 %v1217
      %v1222 = vpack.c.b16 %v1221, %v1220
      %1226 = vrot.lane.b32.xlu0 %v1212, 111
      %v1227 = vpop.permute.xlu0 %1226
      %1228 = vrot.lane.b32.xlu0 %v1213, 111
      %v1229 = vpop.permute.xlu0 %1228
      %1230 = vrot.lane.b32.xlu0 %v1214, 111
      %v1231 = vpop.permute.xlu0 %1230
      %vm1232 = vcmask 908288
      %v1233 = vsel %vm1232, %v1227, %v1229
      %v1234 = vsel %vm1232, %v1229, %v1231
      %v1238 = vsel %vm671, %v1222, 0
      %1240 = vmatpush.bf16.msra.mxu0 0
      %1241 = vmatpush.bf16.msra.mxu0 0
      %1242 = vmatpush.bf16.msra.mxu0 0
      %1243 = vmatpush.bf16.msra.mxu0 0
      %1244 = vmatpush.bf16.msra.mxu0 0
      %1245 = vmatpush.bf16.msra.mxu0 0
      %1246 = vmatpush.bf16.msra.mxu0 0
      %1247 = vmatpush.bf16.msra.mxu0 %v1233
      %1248 = vmatmul.bf16.gmra.mxu0 %v1238
      %v1249 = vpop.f32.mrf.mxu0
      %v1250 = vadd.f32 0.0, %v1249
      %v1251 = vpop.f32.mrf.mxu0
      %v1252 = vadd.f32 0.0, %v1251
      %1253 = vdwg.mxu0
      %1254 = vmatpush.bf16.msra.mxu0 0
      %1255 = vmatpush.bf16.msra.mxu0 0
      %1256 = vmatpush.bf16.msra.mxu0 0
      %1257 = vmatpush.bf16.msra.mxu0 0
      %1258 = vmatpush.bf16.msra.mxu0 0
      %1259 = vmatpush.bf16.msra.mxu0 0
      %1260 = vmatpush.bf16.msra.mxu0 0
      %1261 = vmatpush.bf16.msra.mxu0 %v1234
      %1262 = vmatmul.bf16.gmra.mxu0 %v1238
      %v1263 = vpop.f32.mrf.mxu0
      %v1264 = vadd.f32 0.0, %v1263
      %v1265 = vpop.f32.mrf.mxu0
      %v1266 = vadd.f32 0.0, %v1265
      %1267 = vdwg.mxu0
      %v1268 = vadd.f32 %v1193, %v1250
      %v1269 = vadd.f32 %v1194, %v1264
      %v1270 = vadd.f32 %v1195, %v1252
      %v1271 = vadd.f32 %v1196, %v1266
      %1273 = vset.pattern.permute.xlu0 0
      %1274 = vperm.xlu0 %1273, %v587
      %v1275 = vpop.permute.xlu0 %1274
      %1278 = vset.pattern.permute.xlu0 0
      %1279 = vperm.xlu0 %1278, %v588
      %v1280 = vpop.permute.xlu0 %1279
      %v1282 = vadd.f32 %v1268, %v1275
      %v1283 = vadd.f32 %v1269, %v1275
      %v1284 = vadd.f32 %v1270, %v1280
      %v1285 = vadd.f32 %v1271, %v1280
      %v1286 = vmax.f32 %v1282, 0.0
      %v1287 = vmax.f32 %v1283, 0.0
      %v1288 = vmax.f32 %v1284, 0.0
      %v1289 = vmax.f32 %v1285, 0.0
      %v1290 = vld [vmem:[%s5] sm:$0xff]
      %v1291 = vld [vmem:[%s5 + $0x8] sm:$0xff]
      %v1292 = vpack.c.bf16 %v1287, %v1286
      %v1293 = vpack.c.bf16 %v1289, %v1288
      %1294 = vst [vmem:[#allocation2 + $0x8] sm:$0xff] %v1292
      %1295 = vst [vmem:[#allocation2 + $0x20] sm:$0xff] %v1293
      %v1296 = vld [vmem:[#allocation2 + $0x4] sm:$0xff]
      %v1297 = vld [vmem:[#allocation2 + $0xc] sm:$0xf]
      %v1298 = vld [vmem:[#allocation2 + $0x1c] sm:$0xff]
      %v1299 = vld [vmem:[#allocation2 + $0x24] sm:$0xf]
      %v1300 = vld [vmem:[%s1] sm:$0x11]
      %v1302 = vunpack.c.l.b16 %v1300
      %v1303 = vunpack.c.h.b16 %v1300
      %v1304 = vpack.c.b16 %v1302, %v1302
      %v1305 = vpack.c.b16 %v1303, %v1303
      %v1307 = vpack.i.b16 %v1304, %v1304
      %v1309 = vperm.slane %v1307, 0
      %v1311 = vpack.i.b16 %v1305, %v1305
      %v1313 = vperm.slane %v1311, 0
      %v1314 = vunpack.c.l.bf16 %v1296
      %v1315 = vunpack.c.h.bf16 %v1296
      %v1316 = vunpack.c.l.bf16 %v1297
      %v1317 = vunpack.c.l.bf16 %v1298
      %v1318 = vunpack.c.h.bf16 %v1298
      %v1319 = vunpack.c.l.bf16 %v1299
      %v1320 = vunpack.c.l.bf16 %v1309
      %v1321 = vunpack.c.l.bf16 %v1313
      %1324 = vrot.lane.b32.xlu0 %v1320, 111
      %v1325 = vpop.permute.xlu0 %1324
      %1326 = vrot.lane.b32.xlu0 %v1321, 111
      %v1327 = vpop.permute.xlu0 %1326
      %v1328 = vsel %vm623, %v1325, %v1327
      %v1332 = vmul.f32 %v1314, %v1325
      %v1333 = vmul.f32 %v1315, %v1328
      %v1334 = vmul.f32 %v1316, %v1327
      %v1335 = vmul.f32 %v1317, %v1325
      %v1336 = vmul.f32 %v1318, %v1328
      %v1337 = vmul.f32 %v1319, %v1327
      %v1338 = vpack.c.bf16 %v1335, %v1332
      %v1339 = vpack.c.bf16 %v1336, %v1333
      %v1340 = vpack.c.bf16 %v1337, %v1334
      %v1341 = vld [vmem:[%s4] sm:$0xf]
      %v1342 = vld [vmem:[%s4 + $0x4] sm:$0xf]
      %s1343 = scalar_lea.vmem %s4, 8
      %v1344 = vld [vmem:[%s1343] sm:$0xf]
      %v1345 = vld [vmem:[%s1343 + $0x4] sm:$0xf]
      %v1348 = vunpack.c.l.b16 %v1344
      %v1349 = vunpack.c.l.b16 %v1345
      %v1350 = vpack.c.b16 %v1349, %v1348
      %v1355 = vunpack.c.l.b16 %v1296
      %v1356 = vunpack.c.h.b16 %v1296
      %v1357 = vunpack.c.l.b16 %v1297
      %v1358 = vunpack.c.l.b16 %v1298
      %v1359 = vunpack.c.h.b16 %v1298
      %v1360 = vunpack.c.l.b16 %v1299
      %v1361 = vpack.c.b16 %v1358, %v1355
      %v1362 = vpack.c.b16 %v1359, %v1356
      %v1363 = vpack.c.b16 %v1360, %v1357
      %1364 = vrot.lane.b32.xlu0 %v1361, 16
      %v1365 = vpop.permute.xlu0 %1364
      %1366 = vrot.lane.b32.xlu0 %v1362, 16
      %v1367 = vpop.permute.xlu0 %1366
      %1368 = vrot.lane.b32.xlu0 %v1363, 16
      %v1369 = vpop.permute.xlu0 %1368
      %v1370 = vsel %vm666, %v1365, %v1367
      %v1371 = vsel %vm666, %v1367, %v1369
      %v1375 = vsel %vm671, %v1350, 0
      %1377 = vmatpush.bf16.msra.mxu0 0
      %1378 = vmatpush.bf16.msra.mxu0 0
      %1379 = vmatpush.bf16.msra.mxu0 0
      %1380 = vmatpush.bf16.msra.mxu0 0
      %1381 = vmatpush.bf16.msra.mxu0 0
      %1382 = vmatpush.bf16.msra.mxu0 0
      %1383 = vmatpush.bf16.msra.mxu0 0
      %1384 = vmatpush.bf16.msra.mxu0 %v1370
      %1385 = vmatmul.bf16.gmra.mxu0 %v1375
      %v1386 = vpop.f32.mrf.mxu0
      %v1387 = vadd.f32 0.0, %v1386
      %v1388 = vpop.f32.mrf.mxu0
      %v1389 = vadd.f32 0.0, %v1388
      %1390 = vdwg.mxu0
      %1391 = vmatpush.bf16.msra.mxu0 0
      %1392 = vmatpush.bf16.msra.mxu0 0
      %1393 = vmatpush.bf16.msra.mxu0 0
      %1394 = vmatpush.bf16.msra.mxu0 0
      %1395 = vmatpush.bf16.msra.mxu0 0
      %1396 = vmatpush.bf16.msra.mxu0 0
      %1397 = vmatpush.bf16.msra.mxu0 0
      %1398 = vmatpush.bf16.msra.mxu0 %v1371
      %1399 = vmatmul.bf16.gmra.mxu0 %v1375
      %v1400 = vpop.f32.mrf.mxu0
      %v1401 = vadd.f32 0.0, %v1400
      %v1402 = vpop.f32.mrf.mxu0
      %v1403 = vadd.f32 0.0, %v1402
      %1404 = vdwg.mxu0
      %v1407 = vunpack.c.l.b16 %v1341
      %v1408 = vunpack.c.l.b16 %v1342
      %v1409 = vpack.c.b16 %v1408, %v1407
      %1413 = vrot.lane.b32.xlu0 %v1338, 17
      %v1414 = vpop.permute.xlu0 %1413
      %1415 = vrot.lane.b32.xlu0 %v1339, 17
      %v1416 = vpop.permute.xlu0 %1415
      %1417 = vrot.lane.b32.xlu0 %v1340, 17
      %v1418 = vpop.permute.xlu0 %1417
      %v1419 = vsel %vm717, %v1414, %v1416
      %v1420 = vsel %vm717, %v1416, %v1418
      %v1424 = vsel %vm671, %v1409, 0
      %1426 = vmatpush.bf16.msra.mxu0 0
      %1427 = vmatpush.bf16.msra.mxu0 0
      %1428 = vmatpush.bf16.msra.mxu0 0
      %1429 = vmatpush.bf16.msra.mxu0 0
      %1430 = vmatpush.bf16.msra.mxu0 0
      %1431 = vmatpush.bf16.msra.mxu0 0
      %1432 = vmatpush.bf16.msra.mxu0 0
      %1433 = vmatpush.bf16.msra.mxu0 %v1419
      %1434 = vmatmul.bf16.gmra.mxu0 %v1424
      %v1435 = vpop.f32.mrf.mxu0
      %v1436 = vadd.f32 %v1387, %v1435
      %v1437 = vpop.f32.mrf.mxu0
      %v1438 = vadd.f32 %v1389, %v1437
      %1439 = vdwg.mxu0
      %1440 = vmatpush.bf16.msra.mxu0 0
      %1441 = vmatpush.bf16.msra.mxu0 0
      %1442 = vmatpush.bf16.msra.mxu0 0
      %1443 = vmatpush.bf16.msra.mxu0 0
      %1444 = vmatpush.bf16.msra.mxu0 0
      %1445 = vmatpush.bf16.msra.mxu0 0
      %1446 = vmatpush.bf16.msra.mxu0 0
      %1447 = vmatpush.bf16.msra.mxu0 %v1420
      %1448 = vmatmul.bf16.gmra.mxu0 %v1424
      %v1449 = vpop.f32.mrf.mxu0
      %v1450 = vadd.f32 %v1401, %v1449
      %v1451 = vpop.f32.mrf.mxu0
      %v1452 = vadd.f32 %v1403, %v1451
      %1453 = vdwg.mxu0
      %v1454 = vshrl.u32 %v1304, 16
      %v1455 = vpack.i.b16 %v1454, %v1454
      %v1457 = vperm.slane %v1455, 0
      %v1458 = vshrl.u32 %v1305, 16
      %v1459 = vpack.i.b16 %v1458, %v1458
      %v1461 = vperm.slane %v1459, 0
      %v1462 = vunpack.c.l.bf16 %v1457
      %v1463 = vunpack.c.l.bf16 %v1461
      %1466 = vrot.lane.b32.xlu0 %v1462, 113
      %v1467 = vpop.permute.xlu0 %1466
      %1468 = vrot.lane.b32.xlu0 %v1463, 113
      %v1469 = vpop.permute.xlu0 %1468
      %v1470 = vsel %vm769, %v1467, %v1469
      %v1474 = vmul.f32 %v1314, %v1467
      %v1475 = vmul.f32 %v1315, %v1470
      %v1476 = vmul.f32 %v1316, %v1469
      %v1477 = vmul.f32 %v1317, %v1467
      %v1478 = vmul.f32 %v1318, %v1470
      %v1479 = vmul.f32 %v1319, %v1469
      %v1480 = vpack.c.bf16 %v1477, %v1474
      %v1481 = vpack.c.bf16 %v1478, %v1475
      %v1482 = vpack.c.bf16 %v1479, %v1476
      %s1483 = scalar_lea.vmem %s4, 16
      %v1484 = vld [vmem:[%s1483] sm:$0xf]
      %v1485 = vld [vmem:[%s1483 + $0x4] sm:$0xf]
      %v1488 = vunpack.c.l.b16 %v1484
      %v1489 = vunpack.c.l.b16 %v1485
      %v1490 = vpack.c.b16 %v1489, %v1488
      %1494 = vrot.lane.b32.xlu0 %v1480, 15
      %v1495 = vpop.permute.xlu0 %1494
      %1496 = vrot.lane.b32.xlu0 %v1481, 15
      %v1497 = vpop.permute.xlu0 %1496
      %1498 = vrot.lane.b32.xlu0 %v1482, 15
      %v1499 = vpop.permute.xlu0 %1498
      %v1500 = vsel %vm800, %v1495, %v1497
      %v1501 = vsel %vm800, %v1497, %v1499
      %v1505 = vsel %vm671, %v1490, 0
      %1507 = vmatpush.bf16.msra.mxu0 0
      %1508 = vmatpush.bf16.msra.mxu0 0
      %1509 = vmatpush.bf16.msra.mxu0 0
      %1510 = vmatpush.bf16.msra.mxu0 0
      %1511 = vmatpush.bf16.msra.mxu0 0
      %1512 = vmatpush.bf16.msra.mxu0 0
      %1513 = vmatpush.bf16.msra.mxu0 0
      %1514 = vmatpush.bf16.msra.mxu0 %v1500
      %1515 = vmatmul.bf16.gmra.mxu0 %v1505
      %v1516 = vpop.f32.mrf.mxu0
      %v1517 = vadd.f32 0.0, %v1516
      %v1518 = vpop.f32.mrf.mxu0
      %v1519 = vadd.f32 0.0, %v1518
      %1520 = vdwg.mxu0
      %1521 = vmatpush.bf16.msra.mxu0 0
      %1522 = vmatpush.bf16.msra.mxu0 0
      %1523 = vmatpush.bf16.msra.mxu0 0
      %1524 = vmatpush.bf16.msra.mxu0 0
      %1525 = vmatpush.bf16.msra.mxu0 0
      %1526 = vmatpush.bf16.msra.mxu0 0
      %1527 = vmatpush.bf16.msra.mxu0 0
      %1528 = vmatpush.bf16.msra.mxu0 %v1501
      %1529 = vmatmul.bf16.gmra.mxu0 %v1505
      %v1530 = vpop.f32.mrf.mxu0
      %v1531 = vadd.f32 0.0, %v1530
      %v1532 = vpop.f32.mrf.mxu0
      %v1533 = vadd.f32 0.0, %v1532
      %1534 = vdwg.mxu0
      %v1535 = vadd.f32 %v1436, %v1517
      %v1536 = vadd.f32 %v1450, %v1531
      %v1537 = vadd.f32 %v1438, %v1519
      %v1538 = vadd.f32 %v1452, %v1533
      %1539 = vrot.lane.b32.xlu0 %v1320, 127
      %v1540 = vpop.permute.xlu0 %1539
      %1541 = vrot.lane.b32.xlu0 %v1321, 127
      %v1542 = vpop.permute.xlu0 %1541
      %v1543 = vsel %vm844, %v1540, %v1542
      %v1547 = vmul.f32 %v1314, %v1540
      %v1548 = vmul.f32 %v1315, %v1543
      %v1549 = vmul.f32 %v1316, %v1542
      %v1550 = vmul.f32 %v1317, %v1540
      %v1551 = vmul.f32 %v1318, %v1543
      %v1552 = vmul.f32 %v1319, %v1542
      %v1553 = vpack.c.bf16 %v1550, %v1547
      %v1554 = vpack.c.bf16 %v1551, %v1548
      %v1555 = vpack.c.bf16 %v1552, %v1549
      %s1556 = scalar_lea.vmem %s4, 24
      %v1557 = vld [vmem:[%s1556] sm:$0xf]
      %v1558 = vld [vmem:[%s1556 + $0x4] sm:$0xf]
      %v1561 = vunpack.c.l.b16 %v1557
      %v1562 = vunpack.c.l.b16 %v1558
      %v1563 = vpack.c.b16 %v1562, %v1561
      %1567 = vrot.lane.b32.xlu0 %v1553, 1
      %v1568 = vpop.permute.xlu0 %1567
      %1569 = vrot.lane.b32.xlu0 %v1554, 1
      %v1570 = vpop.permute.xlu0 %1569
      %1571 = vrot.lane.b32.xlu0 %v1555, 1
      %v1572 = vpop.permute.xlu0 %1571
      %v1573 = vsel %vm875, %v1568, %v1570
      %v1574 = vsel %vm875, %v1570, %v1572
      %v1578 = vsel %vm671, %v1563, 0
      %1580 = vmatpush.bf16.msra.mxu0 0
      %1581 = vmatpush.bf16.msra.mxu0 0
      %1582 = vmatpush.bf16.msra.mxu0 0
      %1583 = vmatpush.bf16.msra.mxu0 0
      %1584 = vmatpush.bf16.msra.mxu0 0
      %1585 = vmatpush.bf16.msra.mxu0 0
      %1586 = vmatpush.bf16.msra.mxu0 0
      %1587 = vmatpush.bf16.msra.mxu0 %v1573
      %1588 = vmatmul.bf16.gmra.mxu0 %v1578
      %v1589 = vpop.f32.mrf.mxu0
      %v1590 = vadd.f32 0.0, %v1589
      %v1591 = vpop.f32.mrf.mxu0
      %v1592 = vadd.f32 0.0, %v1591
      %1593 = vdwg.mxu0
      %1594 = vmatpush.bf16.msra.mxu0 0
      %1595 = vmatpush.bf16.msra.mxu0 0
      %1596 = vmatpush.bf16.msra.mxu0 0
      %1597 = vmatpush.bf16.msra.mxu0 0
      %1598 = vmatpush.bf16.msra.mxu0 0
      %1599 = vmatpush.bf16.msra.mxu0 0
      %1600 = vmatpush.bf16.msra.mxu0 0
      %1601 = vmatpush.bf16.msra.mxu0 %v1574
      %1602 = vmatmul.bf16.gmra.mxu0 %v1578
      %v1603 = vpop.f32.mrf.mxu0
      %v1604 = vadd.f32 0.0, %v1603
      %v1605 = vpop.f32.mrf.mxu0
      %v1606 = vadd.f32 0.0, %v1605
      %1607 = vdwg.mxu0
      %v1608 = vadd.f32 %v1535, %v1590
      %v1609 = vadd.f32 %v1536, %v1604
      %v1610 = vadd.f32 %v1537, %v1592
      %v1611 = vadd.f32 %v1538, %v1606
      %v1612 = vld [vmem:[#allocation2 + $0x8] sm:$0xff]
      %v1613 = vld [vmem:[#allocation2 + $0x20] sm:$0xff]
      %s1614 = scalar_lea.vmem %s4, 32
      %v1615 = vld [vmem:[%s1614] sm:$0xf]
      %v1616 = vld [vmem:[%s1614 + $0x4] sm:$0xf]
      %v1619 = vunpack.c.l.b16 %v1615
      %v1620 = vunpack.c.l.b16 %v1616
      %v1621 = vpack.c.b16 %v1620, %v1619
      %v1624 = vunpack.c.l.b16 %v1612
      %v1625 = vunpack.c.h.b16 %v1612
      %v1626 = vunpack.c.l.b16 %v1613
      %v1627 = vunpack.c.h.b16 %v1613
      %v1628 = vpack.c.b16 %v1626, %v1624
      %v1629 = vpack.c.b16 %v1627, %v1625
      %v1633 = vsel %vm671, %v1621, 0
      %1635 = vmatpush.bf16.msra.mxu0 0
      %1636 = vmatpush.bf16.msra.mxu0 0
      %1637 = vmatpush.bf16.msra.mxu0 0
      %1638 = vmatpush.bf16.msra.mxu0 0
      %1639 = vmatpush.bf16.msra.mxu0 0
      %1640 = vmatpush.bf16.msra.mxu0 0
      %1641 = vmatpush.bf16.msra.mxu0 0
      %1642 = vmatpush.bf16.msra.mxu0 %v1628
      %1643 = vmatmul.bf16.gmra.mxu0 %v1633
      %v1644 = vpop.f32.mrf.mxu0
      %v1645 = vadd.f32 0.0, %v1644
      %v1646 = vpop.f32.mrf.mxu0
      %v1647 = vadd.f32 0.0, %v1646
      %1648 = vdwg.mxu0
      %1649 = vmatpush.bf16.msra.mxu0 0
      %1650 = vmatpush.bf16.msra.mxu0 0
      %1651 = vmatpush.bf16.msra.mxu0 0
      %1652 = vmatpush.bf16.msra.mxu0 0
      %1653 = vmatpush.bf16.msra.mxu0 0
      %1654 = vmatpush.bf16.msra.mxu0 0
      %1655 = vmatpush.bf16.msra.mxu0 0
      %1656 = vmatpush.bf16.msra.mxu0 %v1629
      %1657 = vmatmul.bf16.gmra.mxu0 %v1633
      %v1658 = vpop.f32.mrf.mxu0
      %v1659 = vadd.f32 0.0, %v1658
      %v1660 = vpop.f32.mrf.mxu0
      %v1661 = vadd.f32 0.0, %v1660
      %1662 = vdwg.mxu0
      %v1663 = vadd.f32 %v1608, %v1645
      %v1664 = vadd.f32 %v1609, %v1659
      %v1665 = vadd.f32 %v1610, %v1647
      %v1666 = vadd.f32 %v1611, %v1661
      %v1667 = vld [vmem:[#allocation2 + $0x8] sm:$0xff]
      %v1668 = vld [vmem:[#allocation2 + $0x10] sm:$0xf]
      %v1669 = vld [vmem:[#allocation2 + $0x20] sm:$0xff]
      %v1670 = vld [vmem:[#allocation2 + $0x28] sm:$0xf]
      %v1671 = vunpack.c.l.bf16 %v1667
      %v1672 = vunpack.c.h.bf16 %v1667
      %v1673 = vunpack.c.l.bf16 %v1668
      %v1674 = vunpack.c.l.bf16 %v1669
      %v1675 = vunpack.c.h.bf16 %v1669
      %v1676 = vunpack.c.l.bf16 %v1670
      %1677 = vrot.lane.b32.xlu0 %v1462, 1
      %v1678 = vpop.permute.xlu0 %1677
      %1679 = vrot.lane.b32.xlu0 %v1463, 1
      %v1680 = vpop.permute.xlu0 %1679
      %v1681 = vsel %vm984, %v1678, %v1680
      %v1685 = vmul.f32 %v1671, %v1678
      %v1686 = vmul.f32 %v1672, %v1681
      %v1687 = vmul.f32 %v1673, %v1680
      %v1688 = vmul.f32 %v1674, %v1678
      %v1689 = vmul.f32 %v1675, %v1681
      %v1690 = vmul.f32 %v1676, %v1680
      %v1691 = vpack.c.bf16 %v1688, %v1685
      %v1692 = vpack.c.bf16 %v1689, %v1686
      %v1693 = vpack.c.bf16 %v1690, %v1687
      %s1694 = scalar_lea.vmem %s4, 40
      %v1695 = vld [vmem:[%s1694] sm:$0xf]
      %v1696 = vld [vmem:[%s1694 + $0x4] sm:$0xf]
      %v1699 = vunpack.c.l.b16 %v1695
      %v1700 = vunpack.c.l.b16 %v1696
      %v1701 = vpack.c.b16 %v1700, %v1699
      %1705 = vrot.lane.b32.xlu0 %v1691, 127
      %v1706 = vpop.permute.xlu0 %1705
      %1707 = vrot.lane.b32.xlu0 %v1692, 127
      %v1708 = vpop.permute.xlu0 %1707
      %1709 = vrot.lane.b32.xlu0 %v1693, 127
      %v1710 = vpop.permute.xlu0 %1709
      %v1711 = vsel %vm1015, %v1706, %v1708
      %v1712 = vsel %vm1015, %v1708, %v1710
      %v1716 = vsel %vm671, %v1701, 0
      %1718 = vmatpush.bf16.msra.mxu0 0
      %1719 = vmatpush.bf16.msra.mxu0 0
      %1720 = vmatpush.bf16.msra.mxu0 0
      %1721 = vmatpush.bf16.msra.mxu0 0
      %1722 = vmatpush.bf16.msra.mxu0 0
      %1723 = vmatpush.bf16.msra.mxu0 0
      %1724 = vmatpush.bf16.msra.mxu0 0
      %1725 = vmatpush.bf16.msra.mxu0 %v1711
      %1726 = vmatmul.bf16.gmra.mxu0 %v1716
      %v1727 = vpop.f32.mrf.mxu0
      %v1728 = vadd.f32 0.0, %v1727
      %v1729 = vpop.f32.mrf.mxu0
      %v1730 = vadd.f32 0.0, %v1729
      %1731 = vdwg.mxu0
      %1732 = vmatpush.bf16.msra.mxu0 0
      %1733 = vmatpush.bf16.msra.mxu0 0
      %1734 = vmatpush.bf16.msra.mxu0 0
      %1735 = vmatpush.bf16.msra.mxu0 0
      %1736 = vmatpush.bf16.msra.mxu0 0
      %1737 = vmatpush.bf16.msra.mxu0 0
      %1738 = vmatpush.bf16.msra.mxu0 0
      %1739 = vmatpush.bf16.msra.mxu0 %v1712
      %1740 = vmatmul.bf16.gmra.mxu0 %v1716
      %v1741 = vpop.f32.mrf.mxu0
      %v1742 = vadd.f32 0.0, %v1741
      %v1743 = vpop.f32.mrf.mxu0
      %v1744 = vadd.f32 0.0, %v1743
      %1745 = vdwg.mxu0
      %v1746 = vadd.f32 %v1663, %v1728
      %v1747 = vadd.f32 %v1664, %v1742
      %v1748 = vadd.f32 %v1665, %v1730
      %v1749 = vadd.f32 %v1666, %v1744
      %1750 = vrot.lane.b32.xlu0 %v1320, 15
      %v1751 = vpop.permute.xlu0 %1750
      %1752 = vrot.lane.b32.xlu0 %v1321, 15
      %v1753 = vpop.permute.xlu0 %1752
      %v1754 = vsel %vm1059, %v1751, %v1753
      %v1758 = vmul.f32 %v1671, %v1751
      %v1759 = vmul.f32 %v1672, %v1754
      %v1760 = vmul.f32 %v1673, %v1753
      %v1761 = vmul.f32 %v1674, %v1751
      %v1762 = vmul.f32 %v1675, %v1754
      %v1763 = vmul.f32 %v1676, %v1753
      %v1764 = vpack.c.bf16 %v1761, %v1758
      %v1765 = vpack.c.bf16 %v1762, %v1759
      %v1766 = vpack.c.bf16 %v1763, %v1760
      %s1767 = scalar_lea.vmem %s4, 48
      %v1768 = vld [vmem:[%s1767] sm:$0xf]
      %v1769 = vld [vmem:[%s1767 + $0x4] sm:$0xf]
      %v1772 = vunpack.c.l.b16 %v1768
      %v1773 = vunpack.c.l.b16 %v1769
      %v1774 = vpack.c.b16 %v1773, %v1772
      %1778 = vrot.lane.b32.xlu0 %v1764, 113
      %v1779 = vpop.permute.xlu0 %1778
      %1780 = vrot.lane.b32.xlu0 %v1765, 113
      %v1781 = vpop.permute.xlu0 %1780
      %1782 = vrot.lane.b32.xlu0 %v1766, 113
      %v1783 = vpop.permute.xlu0 %1782
      %v1784 = vsel %vm1090, %v1779, %v1781
      %v1785 = vsel %vm1090, %v1781, %v1783
      %v1789 = vsel %vm671, %v1774, 0
      %1791 = vmatpush.bf16.msra.mxu0 0
      %1792 = vmatpush.bf16.msra.mxu0 0
      %1793 = vmatpush.bf16.msra.mxu0 0
      %1794 = vmatpush.bf16.msra.mxu0 0
      %1795 = vmatpush.bf16.msra.mxu0 0
      %1796 = vmatpush.bf16.msra.mxu0 0
      %1797 = vmatpush.bf16.msra.mxu0 0
      %1798 = vmatpush.bf16.msra.mxu0 %v1784
      %1799 = vmatmul.bf16.gmra.mxu0 %v1789
      %v1800 = vpop.f32.mrf.mxu0
      %v1801 = vadd.f32 0.0, %v1800
      %v1802 = vpop.f32.mrf.mxu0
      %v1803 = vadd.f32 0.0, %v1802
      %1804 = vdwg.mxu0
      %1805 = vmatpush.bf16.msra.mxu0 0
      %1806 = vmatpush.bf16.msra.mxu0 0
      %1807 = vmatpush.bf16.msra.mxu0 0
      %1808 = vmatpush.bf16.msra.mxu0 0
      %1809 = vmatpush.bf16.msra.mxu0 0
      %1810 = vmatpush.bf16.msra.mxu0 0
      %1811 = vmatpush.bf16.msra.mxu0 0
      %1812 = vmatpush.bf16.msra.mxu0 %v1785
      %1813 = vmatmul.bf16.gmra.mxu0 %v1789
      %v1814 = vpop.f32.mrf.mxu0
      %v1815 = vadd.f32 0.0, %v1814
      %v1816 = vpop.f32.mrf.mxu0
      %v1817 = vadd.f32 0.0, %v1816
      %1818 = vdwg.mxu0
      %v1819 = vadd.f32 %v1746, %v1801
      %v1820 = vadd.f32 %v1747, %v1815
      %v1821 = vadd.f32 %v1748, %v1803
      %v1822 = vadd.f32 %v1749, %v1817
      %s1823 = scalar_lea.vmem %s4, 56
      %v1824 = vld [vmem:[%s1823] sm:$0xf]
      %v1825 = vld [vmem:[%s1823 + $0x4] sm:$0xf]
      %v1828 = vunpack.c.l.b16 %v1824
      %v1829 = vunpack.c.l.b16 %v1825
      %v1830 = vpack.c.b16 %v1829, %v1828
      %v1835 = vunpack.c.l.b16 %v1667
      %v1836 = vunpack.c.h.b16 %v1667
      %v1837 = vunpack.c.l.b16 %v1668
      %v1838 = vunpack.c.l.b16 %v1669
      %v1839 = vunpack.c.h.b16 %v1669
      %v1840 = vunpack.c.l.b16 %v1670
      %v1841 = vpack.c.b16 %v1838, %v1835
      %v1842 = vpack.c.b16 %v1839, %v1836
      %v1843 = vpack.c.b16 %v1840, %v1837
      %1844 = vrot.lane.b32.xlu0 %v1841, 112
      %v1845 = vpop.permute.xlu0 %1844
      %1846 = vrot.lane.b32.xlu0 %v1842, 112
      %v1847 = vpop.permute.xlu0 %1846
      %1848 = vrot.lane.b32.xlu0 %v1843, 112
      %v1849 = vpop.permute.xlu0 %1848
      %v1850 = vsel %vm1157, %v1845, %v1847
      %v1851 = vsel %vm1157, %v1847, %v1849
      %v1855 = vsel %vm671, %v1830, 0
      %1857 = vmatpush.bf16.msra.mxu0 0
      %1858 = vmatpush.bf16.msra.mxu0 0
      %1859 = vmatpush.bf16.msra.mxu0 0
      %1860 = vmatpush.bf16.msra.mxu0 0
      %1861 = vmatpush.bf16.msra.mxu0 0
      %1862 = vmatpush.bf16.msra.mxu0 0
      %1863 = vmatpush.bf16.msra.mxu0 0
      %1864 = vmatpush.bf16.msra.mxu0 %v1850
      %1865 = vmatmul.bf16.gmra.mxu0 %v1855
      %v1866 = vpop.f32.mrf.mxu0
      %v1867 = vadd.f32 0.0, %v1866
      %v1868 = vpop.f32.mrf.mxu0
      %v1869 = vadd.f32 0.0, %v1868
      %1870 = vdwg.mxu0
      %1871 = vmatpush.bf16.msra.mxu0 0
      %1872 = vmatpush.bf16.msra.mxu0 0
      %1873 = vmatpush.bf16.msra.mxu0 0
      %1874 = vmatpush.bf16.msra.mxu0 0
      %1875 = vmatpush.bf16.msra.mxu0 0
      %1876 = vmatpush.bf16.msra.mxu0 0
      %1877 = vmatpush.bf16.msra.mxu0 0
      %1878 = vmatpush.bf16.msra.mxu0 %v1851
      %1879 = vmatmul.bf16.gmra.mxu0 %v1855
      %v1880 = vpop.f32.mrf.mxu0
      %v1881 = vadd.f32 0.0, %v1880
      %v1882 = vpop.f32.mrf.mxu0
      %v1883 = vadd.f32 0.0, %v1882
      %1884 = vdwg.mxu0
      %v1885 = vadd.f32 %v1819, %v1867
      %v1886 = vadd.f32 %v1820, %v1881
      %v1887 = vadd.f32 %v1821, %v1869
      %v1888 = vadd.f32 %v1822, %v1883
      %1889 = vrot.lane.b32.xlu0 %v1462, 17
      %v1890 = vpop.permute.xlu0 %1889
      %1891 = vrot.lane.b32.xlu0 %v1463, 17
      %v1892 = vpop.permute.xlu0 %1891
      %v1893 = vsel %vm1201, %v1890, %v1892
      %v1897 = vmul.f32 %v1671, %v1890
      %v1898 = vmul.f32 %v1672, %v1893
      %v1899 = vmul.f32 %v1673, %v1892
      %v1900 = vmul.f32 %v1674, %v1890
      %v1901 = vmul.f32 %v1675, %v1893
      %v1902 = vmul.f32 %v1676, %v1892
      %v1903 = vpack.c.bf16 %v1900, %v1897
      %v1904 = vpack.c.bf16 %v1901, %v1898
      %v1905 = vpack.c.bf16 %v1902, %v1899
      %s1906 = scalar_lea.vmem %s4, 64
      %v1907 = vld [vmem:[%s1906] sm:$0xf]
      %v1908 = vld [vmem:[%s1906 + $0x4] sm:$0xf]
      %v1911 = vunpack.c.l.b16 %v1907
      %v1912 = vunpack.c.l.b16 %v1908
      %v1913 = vpack.c.b16 %v1912, %v1911
      %1917 = vrot.lane.b32.xlu0 %v1903, 111
      %v1918 = vpop.permute.xlu0 %1917
      %1919 = vrot.lane.b32.xlu0 %v1904, 111
      %v1920 = vpop.permute.xlu0 %1919
      %1921 = vrot.lane.b32.xlu0 %v1905, 111
      %v1922 = vpop.permute.xlu0 %1921
      %v1923 = vsel %vm1232, %v1918, %v1920
      %v1924 = vsel %vm1232, %v1920, %v1922
      %v1928 = vsel %vm671, %v1913, 0
      %1930 = vmatpush.bf16.msra.mxu0 0
      %1931 = vmatpush.bf16.msra.mxu0 0
      %1932 = vmatpush.bf16.msra.mxu0 0
      %1933 = vmatpush.bf16.msra.mxu0 0
      %1934 = vmatpush.bf16.msra.mxu0 0
      %1935 = vmatpush.bf16.msra.mxu0 0
      %1936 = vmatpush.bf16.msra.mxu0 0
      %1937 = vmatpush.bf16.msra.mxu0 %v1923
      %1938 = vmatmul.bf16.gmra.mxu0 %v1928
      %v1939 = vpop.f32.mrf.mxu0
      %v1940 = vadd.f32 0.0, %v1939
      %v1941 = vpop.f32.mrf.mxu0
      %v1942 = vadd.f32 0.0, %v1941
      %1943 = vdwg.mxu0
      %1944 = vmatpush.bf16.msra.mxu0 0
      %1945 = vmatpush.bf16.msra.mxu0 0
      %1946 = vmatpush.bf16.msra.mxu0 0
      %1947 = vmatpush.bf16.msra.mxu0 0
      %1948 = vmatpush.bf16.msra.mxu0 0
      %1949 = vmatpush.bf16.msra.mxu0 0
      %1950 = vmatpush.bf16.msra.mxu0 0
      %1951 = vmatpush.bf16.msra.mxu0 %v1924
      %1952 = vmatmul.bf16.gmra.mxu0 %v1928
      %v1953 = vpop.f32.mrf.mxu0
      %v1954 = vadd.f32 0.0, %v1953
      %v1955 = vpop.f32.mrf.mxu0
      %v1956 = vadd.f32 0.0, %v1955
      %1957 = vdwg.mxu0
      %v1958 = vadd.f32 %v1885, %v1940
      %v1959 = vadd.f32 %v1886, %v1954
      %v1960 = vadd.f32 %v1887, %v1942
      %v1961 = vadd.f32 %v1888, %v1956
      %1963 = vset.pattern.permute.xlu0 0
      %1964 = vperm.xlu0 %1963, %v1290
      %v1965 = vpop.permute.xlu0 %1964
      %1968 = vset.pattern.permute.xlu0 0
      %1969 = vperm.xlu0 %1968, %v1291
      %v1970 = vpop.permute.xlu0 %1969
      %v1972 = vadd.f32 %v1958, %v1965
      %v1973 = vadd.f32 %v1959, %v1965
      %v1974 = vadd.f32 %v1960, %v1970
      %v1975 = vadd.f32 %v1961, %v1970
      %v1976 = vmax.f32 %v1972, 0.0
      %v1977 = vmax.f32 %v1973, 0.0
      %v1978 = vmax.f32 %v1974, 0.0
      %v1979 = vmax.f32 %v1975, 0.0
      %v1980 = vpack.c.bf16 %v1977, %v1976
      %v1981 = vpack.c.bf16 %v1979, %v1978
      %v1982 = vld [vmem:[%s7] sm:$0xff]
      %v1983 = vld [vmem:[%s7 + $0x8] sm:$0xff]
      %1984 = vst [vmem:[#allocation2 + $0x8] sm:$0xff] %v1980
      %1985 = vst [vmem:[#allocation2 + $0x20] sm:$0xff] %v1981
      %v1986 = vld [vmem:[#allocation2 + $0x4] sm:$0xff]
      %v1987 = vld [vmem:[#allocation2 + $0xc] sm:$0xf]
      %v1988 = vld [vmem:[#allocation2 + $0x1c] sm:$0xff]
      %v1989 = vld [vmem:[#allocation2 + $0x24] sm:$0xf]
      %v1990 = vld [vmem:[%s1] sm:$0x22]
      %v1992 = vunpack.c.l.b16 %v1990
      %v1993 = vunpack.c.h.b16 %v1990
      %v1994 = vpack.c.b16 %v1992, %v1992
      %v1995 = vpack.c.b16 %v1993, %v1993
      %v1997 = vpack.i.b16 %v1994, %v1994
      %v1999 = vperm.slane %v1997, 1
      %v2001 = vpack.i.b16 %v1995, %v1995
      %v2003 = vperm.slane %v2001, 1
      %v2004 = vunpack.c.l.bf16 %v1986
      %v2005 = vunpack.c.h.bf16 %v1986
      %v2006 = vunpack.c.l.bf16 %v1987
      %v2007 = vunpack.c.l.bf16 %v1988
      %v2008 = vunpack.c.h.bf16 %v1988
      %v2009 = vunpack.c.l.bf16 %v1989
      %v2010 = vunpack.c.l.bf16 %v1999
      %v2011 = vunpack.c.l.bf16 %v2003
      %2014 = vrot.lane.b32.xlu0 %v2010, 94
      %v2015 = vpop.permute.xlu0 %2014
      %2016 = vrot.lane.b32.xlu0 %v2011, 94
      %v2017 = vpop.permute.xlu0 %2016
      %vm2018 = vcmask 769024
      %v2019 = vsel %vm2018, %v2015, %v2017
      %v2023 = vmul.f32 %v2004, %v2015
      %v2024 = vmul.f32 %v2005, %v2019
      %v2025 = vmul.f32 %v2006, %v2017
      %v2026 = vmul.f32 %v2007, %v2015
      %v2027 = vmul.f32 %v2008, %v2019
      %v2028 = vmul.f32 %v2009, %v2017
      %v2029 = vpack.c.bf16 %v2026, %v2023
      %v2030 = vpack.c.bf16 %v2027, %v2024
      %v2031 = vpack.c.bf16 %v2028, %v2025
      %v2032 = vld [vmem:[%s6] sm:$0xf]
      %v2033 = vld [vmem:[%s6 + $0x4] sm:$0xf]
      %s2034 = scalar_lea.vmem %s6, 8
      %v2035 = vld [vmem:[%s2034] sm:$0xf]
      %v2036 = vld [vmem:[%s2034 + $0x4] sm:$0xf]
      %v2039 = vunpack.c.l.b16 %v2035
      %v2040 = vunpack.c.l.b16 %v2036
      %v2041 = vpack.c.b16 %v2040, %v2039
      %v2046 = vunpack.c.l.b16 %v1986
      %v2047 = vunpack.c.h.b16 %v1986
      %v2048 = vunpack.c.l.b16 %v1987
      %v2049 = vunpack.c.l.b16 %v1988
      %v2050 = vunpack.c.h.b16 %v1988
      %v2051 = vunpack.c.l.b16 %v1989
      %v2052 = vpack.c.b16 %v2049, %v2046
      %v2053 = vpack.c.b16 %v2050, %v2047
      %v2054 = vpack.c.b16 %v2051, %v2048
      %2055 = vrot.lane.b32.xlu0 %v2052, 32
      %v2056 = vpop.permute.xlu0 %2055
      %2057 = vrot.lane.b32.xlu0 %v2053, 32
      %v2058 = vpop.permute.xlu0 %2057
      %2059 = vrot.lane.b32.xlu0 %v2054, 32
      %v2060 = vpop.permute.xlu0 %2059
      %vm2061 = vcmask 261120
      %v2062 = vsel %vm2061, %v2056, %v2058
      %v2063 = vsel %vm2061, %v2058, %v2060
      %v2067 = vsel %vm671, %v2041, 0
      %2069 = vmatpush.bf16.msra.mxu0 0
      %2070 = vmatpush.bf16.msra.mxu0 0
      %2071 = vmatpush.bf16.msra.mxu0 0
      %2072 = vmatpush.bf16.msra.mxu0 0
      %2073 = vmatpush.bf16.msra.mxu0 0
      %2074 = vmatpush.bf16.msra.mxu0 0
      %2075 = vmatpush.bf16.msra.mxu0 0
      %2076 = vmatpush.bf16.msra.mxu0 %v2062
      %2077 = vmatmul.bf16.gmra.mxu0 %v2067
      %v2078 = vpop.f32.mrf.mxu0
      %v2079 = vadd.f32 0.0, %v2078
      %v2080 = vpop.f32.mrf.mxu0
      %v2081 = vadd.f32 0.0, %v2080
      %2082 = vdwg.mxu0
      %2083 = vmatpush.bf16.msra.mxu0 0
      %2084 = vmatpush.bf16.msra.mxu0 0
      %2085 = vmatpush.bf16.msra.mxu0 0
      %2086 = vmatpush.bf16.msra.mxu0 0
      %2087 = vmatpush.bf16.msra.mxu0 0
      %2088 = vmatpush.bf16.msra.mxu0 0
      %2089 = vmatpush.bf16.msra.mxu0 0
      %2090 = vmatpush.bf16.msra.mxu0 %v2063
      %2091 = vmatmul.bf16.gmra.mxu0 %v2067
      %v2092 = vpop.f32.mrf.mxu0
      %v2093 = vadd.f32 0.0, %v2092
      %v2094 = vpop.f32.mrf.mxu0
      %v2095 = vadd.f32 0.0, %v2094
      %2096 = vdwg.mxu0
      %v2099 = vunpack.c.l.b16 %v2032
      %v2100 = vunpack.c.l.b16 %v2033
      %v2101 = vpack.c.b16 %v2100, %v2099
      %2105 = vrot.lane.b32.xlu0 %v2029, 34
      %v2106 = vpop.permute.xlu0 %2105
      %2107 = vrot.lane.b32.xlu0 %v2030, 34
      %v2108 = vpop.permute.xlu0 %2107
      %2109 = vrot.lane.b32.xlu0 %v2031, 34
      %v2110 = vpop.permute.xlu0 %2109
      %vm2111 = vcmask 277504
      %v2112 = vsel %vm2111, %v2106, %v2108
      %v2113 = vsel %vm2111, %v2108, %v2110
      %v2117 = vsel %vm671, %v2101, 0
      %2119 = vmatpush.bf16.msra.mxu0 0
      %2120 = vmatpush.bf16.msra.mxu0 0
      %2121 = vmatpush.bf16.msra.mxu0 0
      %2122 = vmatpush.bf16.msra.mxu0 0
      %2123 = vmatpush.bf16.msra.mxu0 0
      %2124 = vmatpush.bf16.msra.mxu0 0
      %2125 = vmatpush.bf16.msra.mxu0 0
      %2126 = vmatpush.bf16.msra.mxu0 %v2112
      %2127 = vmatmul.bf16.gmra.mxu0 %v2117
      %v2128 = vpop.f32.mrf.mxu0
      %v2129 = vadd.f32 %v2079, %v2128
      %v2130 = vpop.f32.mrf.mxu0
      %v2131 = vadd.f32 %v2081, %v2130
      %2132 = vdwg.mxu0
      %2133 = vmatpush.bf16.msra.mxu0 0
      %2134 = vmatpush.bf16.msra.mxu0 0
      %2135 = vmatpush.bf16.msra.mxu0 0
      %2136 = vmatpush.bf16.msra.mxu0 0
      %2137 = vmatpush.bf16.msra.mxu0 0
      %2138 = vmatpush.bf16.msra.mxu0 0
      %2139 = vmatpush.bf16.msra.mxu0 0
      %2140 = vmatpush.bf16.msra.mxu0 %v2113
      %2141 = vmatmul.bf16.gmra.mxu0 %v2117
      %v2142 = vpop.f32.mrf.mxu0
      %v2143 = vadd.f32 %v2093, %v2142
      %v2144 = vpop.f32.mrf.mxu0
      %v2145 = vadd.f32 %v2095, %v2144
      %2146 = vdwg.mxu0
      %v2147 = vshrl.u32 %v1994, 16
      %v2148 = vpack.i.b16 %v2147, %v2147
      %v2150 = vperm.slane %v2148, 1
      %v2151 = vshrl.u32 %v1995, 16
      %v2152 = vpack.i.b16 %v2151, %v2151
      %v2154 = vperm.slane %v2152, 1
      %v2155 = vunpack.c.l.bf16 %v2150
      %v2156 = vunpack.c.l.bf16 %v2154
      %2159 = vrot.lane.b32.xlu0 %v2155, 98
      %v2160 = vpop.permute.xlu0 %2159
      %2161 = vrot.lane.b32.xlu0 %v2156, 98
      %v2162 = vpop.permute.xlu0 %2161
      %vm2163 = vcmask 801792
      %v2164 = vsel %vm2163, %v2160, %v2162
      %v2168 = vmul.f32 %v2004, %v2160
      %v2169 = vmul.f32 %v2005, %v2164
      %v2170 = vmul.f32 %v2006, %v2162
      %v2171 = vmul.f32 %v2007, %v2160
      %v2172 = vmul.f32 %v2008, %v2164
      %v2173 = vmul.f32 %v2009, %v2162
      %v2174 = vpack.c.bf16 %v2171, %v2168
      %v2175 = vpack.c.bf16 %v2172, %v2169
      %v2176 = vpack.c.bf16 %v2173, %v2170
      %s2177 = scalar_lea.vmem %s6, 16
      %v2178 = vld [vmem:[%s2177] sm:$0xf]
      %v2179 = vld [vmem:[%s2177 + $0x4] sm:$0xf]
      %v2182 = vunpack.c.l.b16 %v2178
      %v2183 = vunpack.c.l.b16 %v2179
      %v2184 = vpack.c.b16 %v2183, %v2182
      %2188 = vrot.lane.b32.xlu0 %v2174, 30
      %v2189 = vpop.permute.xlu0 %2188
      %2190 = vrot.lane.b32.xlu0 %v2175, 30
      %v2191 = vpop.permute.xlu0 %2190
      %2192 = vrot.lane.b32.xlu0 %v2176, 30
      %v2193 = vpop.permute.xlu0 %2192
      %vm2194 = vcmask 244736
      %v2195 = vsel %vm2194, %v2189, %v2191
      %v2196 = vsel %vm2194, %v2191, %v2193
      %v2200 = vsel %vm671, %v2184, 0
      %2202 = vmatpush.bf16.msra.mxu0 0
      %2203 = vmatpush.bf16.msra.mxu0 0
      %2204 = vmatpush.bf16.msra.mxu0 0
      %2205 = vmatpush.bf16.msra.mxu0 0
      %2206 = vmatpush.bf16.msra.mxu0 0
      %2207 = vmatpush.bf16.msra.mxu0 0
      %2208 = vmatpush.bf16.msra.mxu0 0
      %2209 = vmatpush.bf16.msra.mxu0 %v2195
      %2210 = vmatmul.bf16.gmra.mxu0 %v2200
      %v2211 = vpop.f32.mrf.mxu0
      %v2212 = vadd.f32 0.0, %v2211
      %v2213 = vpop.f32.mrf.mxu0
      %v2214 = vadd.f32 0.0, %v2213
      %2215 = vdwg.mxu0
      %2216 = vmatpush.bf16.msra.mxu0 0
      %2217 = vmatpush.bf16.msra.mxu0 0
      %2218 = vmatpush.bf16.msra.mxu0 0
      %2219 = vmatpush.bf16.msra.mxu0 0
      %2220 = vmatpush.bf16.msra.mxu0 0
      %2221 = vmatpush.bf16.msra.mxu0 0
      %2222 = vmatpush.bf16.msra.mxu0 0
      %2223 = vmatpush.bf16.msra.mxu0 %v2196
      %2224 = vmatmul.bf16.gmra.mxu0 %v2200
      %v2225 = vpop.f32.mrf.mxu0
      %v2226 = vadd.f32 0.0, %v2225
      %v2227 = vpop.f32.mrf.mxu0
      %v2228 = vadd.f32 0.0, %v2227
      %2229 = vdwg.mxu0
      %v2230 = vadd.f32 %v2129, %v2212
      %v2231 = vadd.f32 %v2143, %v2226
      %v2232 = vadd.f32 %v2131, %v2214
      %v2233 = vadd.f32 %v2145, %v2228
      %2234 = vrot.lane.b32.xlu0 %v2010, 126
      %v2235 = vpop.permute.xlu0 %2234
      %2236 = vrot.lane.b32.xlu0 %v2011, 126
      %v2237 = vpop.permute.xlu0 %2236
      %vm2238 = vcmask 1031168
      %v2239 = vsel %vm2238, %v2235, %v2237
      %v2243 = vmul.f32 %v2004, %v2235
      %v2244 = vmul.f32 %v2005, %v2239
      %v2245 = vmul.f32 %v2006, %v2237
      %v2246 = vmul.f32 %v2007, %v2235
      %v2247 = vmul.f32 %v2008, %v2239
      %v2248 = vmul.f32 %v2009, %v2237
      %v2249 = vpack.c.bf16 %v2246, %v2243
      %v2250 = vpack.c.bf16 %v2247, %v2244
      %v2251 = vpack.c.bf16 %v2248, %v2245
      %s2252 = scalar_lea.vmem %s6, 24
      %v2253 = vld [vmem:[%s2252] sm:$0xf]
      %v2254 = vld [vmem:[%s2252 + $0x4] sm:$0xf]
      %v2257 = vunpack.c.l.b16 %v2253
      %v2258 = vunpack.c.l.b16 %v2254
      %v2259 = vpack.c.b16 %v2258, %v2257
      %2263 = vrot.lane.b32.xlu0 %v2249, 2
      %v2264 = vpop.permute.xlu0 %2263
      %2265 = vrot.lane.b32.xlu0 %v2250, 2
      %v2266 = vpop.permute.xlu0 %2265
      %2267 = vrot.lane.b32.xlu0 %v2251, 2
      %v2268 = vpop.permute.xlu0 %2267
      %vm2269 = vcmask 15360
      %v2270 = vsel %vm2269, %v2264, %v2266
      %v2271 = vsel %vm2269, %v2266, %v2268
      %v2275 = vsel %vm671, %v2259, 0
      %2277 = vmatpush.bf16.msra.mxu0 0
      %2278 = vmatpush.bf16.msra.mxu0 0
      %2279 = vmatpush.bf16.msra.mxu0 0
      %2280 = vmatpush.bf16.msra.mxu0 0
      %2281 = vmatpush.bf16.msra.mxu0 0
      %2282 = vmatpush.bf16.msra.mxu0 0
      %2283 = vmatpush.bf16.msra.mxu0 0
      %2284 = vmatpush.bf16.msra.mxu0 %v2270
      %2285 = vmatmul.bf16.gmra.mxu0 %v2275
      %v2286 = vpop.f32.mrf.mxu0
      %v2287 = vadd.f32 0.0, %v2286
      %v2288 = vpop.f32.mrf.mxu0
      %v2289 = vadd.f32 0.0, %v2288
      %2290 = vdwg.mxu0
      %2291 = vmatpush.bf16.msra.mxu0 0
      %2292 = vmatpush.bf16.msra.mxu0 0
      %2293 = vmatpush.bf16.msra.mxu0 0
      %2294 = vmatpush.bf16.msra.mxu0 0
      %2295 = vmatpush.bf16.msra.mxu0 0
      %2296 = vmatpush.bf16.msra.mxu0 0
      %2297 = vmatpush.bf16.msra.mxu0 0
      %2298 = vmatpush.bf16.msra.mxu0 %v2271
      %2299 = vmatmul.bf16.gmra.mxu0 %v2275
      %v2300 = vpop.f32.mrf.mxu0
      %v2301 = vadd.f32 0.0, %v2300
      %v2302 = vpop.f32.mrf.mxu0
      %v2303 = vadd.f32 0.0, %v2302
      %2304 = vdwg.mxu0
      %v2305 = vadd.f32 %v2230, %v2287
      %v2306 = vadd.f32 %v2231, %v2301
      %v2307 = vadd.f32 %v2232, %v2289
      %v2308 = vadd.f32 %v2233, %v2303
      %v2309 = vld [vmem:[#allocation2 + $0x8] sm:$0xff]
      %v2310 = vld [vmem:[#allocation2 + $0x20] sm:$0xff]
      %s2311 = scalar_lea.vmem %s6, 32
      %v2312 = vld [vmem:[%s2311] sm:$0xf]
      %v2313 = vld [vmem:[%s2311 + $0x4] sm:$0xf]
      %v2316 = vunpack.c.l.b16 %v2312
      %v2317 = vunpack.c.l.b16 %v2313
      %v2318 = vpack.c.b16 %v2317, %v2316
      %v2321 = vunpack.c.l.b16 %v2309
      %v2322 = vunpack.c.h.b16 %v2309
      %v2323 = vunpack.c.l.b16 %v2310
      %v2324 = vunpack.c.h.b16 %v2310
      %v2325 = vpack.c.b16 %v2323, %v2321
      %v2326 = vpack.c.b16 %v2324, %v2322
      %v2330 = vsel %vm671, %v2318, 0
      %2332 = vmatpush.bf16.msra.mxu0 0
      %2333 = vmatpush.bf16.msra.mxu0 0
      %2334 = vmatpush.bf16.msra.mxu0 0
      %2335 = vmatpush.bf16.msra.mxu0 0
      %2336 = vmatpush.bf16.msra.mxu0 0
      %2337 = vmatpush.bf16.msra.mxu0 0
      %2338 = vmatpush.bf16.msra.mxu0 0
      %2339 = vmatpush.bf16.msra.mxu0 %v2325
      %2340 = vmatmul.bf16.gmra.mxu0 %v2330
      %v2341 = vpop.f32.mrf.mxu0
      %v2342 = vadd.f32 0.0, %v2341
      %v2343 = vpop.f32.mrf.mxu0
      %v2344 = vadd.f32 0.0, %v2343
      %2345 = vdwg.mxu0
      %2346 = vmatpush.bf16.msra.mxu0 0
      %2347 = vmatpush.bf16.msra.mxu0 0
      %2348 = vmatpush.bf16.msra.mxu0 0
      %2349 = vmatpush.bf16.msra.mxu0 0
      %2350 = vmatpush.bf16.msra.mxu0 0
      %2351 = vmatpush.bf16.msra.mxu0 0
      %2352 = vmatpush.bf16.msra.mxu0 0
      %2353 = vmatpush.bf16.msra.mxu0 %v2326
      %2354 = vmatmul.bf16.gmra.mxu0 %v2330
      %v2355 = vpop.f32.mrf.mxu0
      %v2356 = vadd.f32 0.0, %v2355
      %v2357 = vpop.f32.mrf.mxu0
      %v2358 = vadd.f32 0.0, %v2357
      %2359 = vdwg.mxu0
      %v2360 = vadd.f32 %v2305, %v2342
      %v2361 = vadd.f32 %v2306, %v2356
      %v2362 = vadd.f32 %v2307, %v2344
      %v2363 = vadd.f32 %v2308, %v2358
      %v2364 = vld [vmem:[#allocation2 + $0x8] sm:$0xff]
      %v2365 = vld [vmem:[#allocation2 + $0x10] sm:$0xf]
      %v2366 = vld [vmem:[#allocation2 + $0x20] sm:$0xff]
      %v2367 = vld [vmem:[#allocation2 + $0x28] sm:$0xf]
      %v2368 = vunpack.c.l.bf16 %v2364
      %v2369 = vunpack.c.h.bf16 %v2364
      %v2370 = vunpack.c.l.bf16 %v2365
      %v2371 = vunpack.c.l.bf16 %v2366
      %v2372 = vunpack.c.h.bf16 %v2366
      %v2373 = vunpack.c.l.bf16 %v2367
      %2374 = vrot.lane.b32.xlu0 %v2155, 2
      %v2375 = vpop.permute.xlu0 %2374
      %2376 = vrot.lane.b32.xlu0 %v2156, 2
      %v2377 = vpop.permute.xlu0 %2376
      %vm2378 = vcmask 15360
      %v2379 = vsel %vm2378, %v2375, %v2377
      %v2383 = vmul.f32 %v2368, %v2375
      %v2384 = vmul.f32 %v2369, %v2379
      %v2385 = vmul.f32 %v2370, %v2377
      %v2386 = vmul.f32 %v2371, %v2375
      %v2387 = vmul.f32 %v2372, %v2379
      %v2388 = vmul.f32 %v2373, %v2377
      %v2389 = vpack.c.bf16 %v2386, %v2383
      %v2390 = vpack.c.bf16 %v2387, %v2384
      %v2391 = vpack.c.bf16 %v2388, %v2385
      %s2392 = scalar_lea.vmem %s6, 40
      %v2393 = vld [vmem:[%s2392] sm:$0xf]
      %v2394 = vld [vmem:[%s2392 + $0x4] sm:$0xf]
      %v2397 = vunpack.c.l.b16 %v2393
      %v2398 = vunpack.c.l.b16 %v2394
      %v2399 = vpack.c.b16 %v2398, %v2397
      %2403 = vrot.lane.b32.xlu0 %v2389, 126
      %v2404 = vpop.permute.xlu0 %2403
      %2405 = vrot.lane.b32.xlu0 %v2390, 126
      %v2406 = vpop.permute.xlu0 %2405
      %2407 = vrot.lane.b32.xlu0 %v2391, 126
      %v2408 = vpop.permute.xlu0 %2407
      %vm2409 = vcmask 1031168
      %v2410 = vsel %vm2409, %v2404, %v2406
      %v2411 = vsel %vm2409, %v2406, %v2408
      %v2415 = vsel %vm671, %v2399, 0
      %2417 = vmatpush.bf16.msra.mxu0 0
      %2418 = vmatpush.bf16.msra.mxu0 0
      %2419 = vmatpush.bf16.msra.mxu0 0
      %2420 = vmatpush.bf16.msra.mxu0 0
      %2421 = vmatpush.bf16.msra.mxu0 0
      %2422 = vmatpush.bf16.msra.mxu0 0
      %2423 = vmatpush.bf16.msra.mxu0 0
      %2424 = vmatpush.bf16.msra.mxu0 %v2410
      %2425 = vmatmul.bf16.gmra.mxu0 %v2415
      %v2426 = vpop.f32.mrf.mxu0
      %v2427 = vadd.f32 0.0, %v2426
      %v2428 = vpop.f32.mrf.mxu0
      %v2429 = vadd.f32 0.0, %v2428
      %2430 = vdwg.mxu0
      %2431 = vmatpush.bf16.msra.mxu0 0
      %2432 = vmatpush.bf16.msra.mxu0 0
      %2433 = vmatpush.bf16.msra.mxu0 0
      %2434 = vmatpush.bf16.msra.mxu0 0
      %2435 = vmatpush.bf16.msra.mxu0 0
      %2436 = vmatpush.bf16.msra.mxu0 0
      %2437 = vmatpush.bf16.msra.mxu0 0
      %2438 = vmatpush.bf16.msra.mxu0 %v2411
      %2439 = vmatmul.bf16.gmra.mxu0 %v2415
      %v2440 = vpop.f32.mrf.mxu0
      %v2441 = vadd.f32 0.0, %v2440
      %v2442 = vpop.f32.mrf.mxu0
      %v2443 = vadd.f32 0.0, %v2442
      %2444 = vdwg.mxu0
      %v2445 = vadd.f32 %v2360, %v2427
      %v2446 = vadd.f32 %v2361, %v2441
      %v2447 = vadd.f32 %v2362, %v2429
      %v2448 = vadd.f32 %v2363, %v2443
      %2449 = vrot.lane.b32.xlu0 %v2010, 30
      %v2450 = vpop.permute.xlu0 %2449
      %2451 = vrot.lane.b32.xlu0 %v2011, 30
      %v2452 = vpop.permute.xlu0 %2451
      %vm2453 = vcmask 244736
      %v2454 = vsel %vm2453, %v2450, %v2452
      %v2458 = vmul.f32 %v2368, %v2450
      %v2459 = vmul.f32 %v2369, %v2454
      %v2460 = vmul.f32 %v2370, %v2452
      %v2461 = vmul.f32 %v2371, %v2450
      %v2462 = vmul.f32 %v2372, %v2454
      %v2463 = vmul.f32 %v2373, %v2452
      %v2464 = vpack.c.bf16 %v2461, %v2458
      %v2465 = vpack.c.bf16 %v2462, %v2459
      %v2466 = vpack.c.bf16 %v2463, %v2460
      %s2467 = scalar_lea.vmem %s6, 48
      %v2468 = vld [vmem:[%s2467] sm:$0xf]
      %v2469 = vld [vmem:[%s2467 + $0x4] sm:$0xf]
      %v2472 = vunpack.c.l.b16 %v2468
      %v2473 = vunpack.c.l.b16 %v2469
      %v2474 = vpack.c.b16 %v2473, %v2472
      %2478 = vrot.lane.b32.xlu0 %v2464, 98
      %v2479 = vpop.permute.xlu0 %2478
      %2480 = vrot.lane.b32.xlu0 %v2465, 98
      %v2481 = vpop.permute.xlu0 %2480
      %2482 = vrot.lane.b32.xlu0 %v2466, 98
      %v2483 = vpop.permute.xlu0 %2482
      %vm2484 = vcmask 801792
      %v2485 = vsel %vm2484, %v2479, %v2481
      %v2486 = vsel %vm2484, %v2481, %v2483
      %v2490 = vsel %vm671, %v2474, 0
      %2492 = vmatpush.bf16.msra.mxu0 0
      %2493 = vmatpush.bf16.msra.mxu0 0
      %2494 = vmatpush.bf16.msra.mxu0 0
      %2495 = vmatpush.bf16.msra.mxu0 0
      %2496 = vmatpush.bf16.msra.mxu0 0
      %2497 = vmatpush.bf16.msra.mxu0 0
      %2498 = vmatpush.bf16.msra.mxu0 0
      %2499 = vmatpush.bf16.msra.mxu0 %v2485
      %2500 = vmatmul.bf16.gmra.mxu0 %v2490
      %v2501 = vpop.f32.mrf.mxu0
      %v2502 = vadd.f32 0.0, %v2501
      %v2503 = vpop.f32.mrf.mxu0
      %v2504 = vadd.f32 0.0, %v2503
      %2505 = vdwg.mxu0
      %2506 = vmatpush.bf16.msra.mxu0 0
      %2507 = vmatpush.bf16.msra.mxu0 0
      %2508 = vmatpush.bf16.msra.mxu0 0
      %2509 = vmatpush.bf16.msra.mxu0 0
      %2510 = vmatpush.bf16.msra.mxu0 0
      %2511 = vmatpush.bf16.msra.mxu0 0
      %2512 = vmatpush.bf16.msra.mxu0 0
      %2513 = vmatpush.bf16.msra.mxu0 %v2486
      %2514 = vmatmul.bf16.gmra.mxu0 %v2490
      %v2515 = vpop.f32.mrf.mxu0
      %v2516 = vadd.f32 0.0, %v2515
      %v2517 = vpop.f32.mrf.mxu0
      %v2518 = vadd.f32 0.0, %v2517
      %2519 = vdwg.mxu0
      %v2520 = vadd.f32 %v2445, %v2502
      %v2521 = vadd.f32 %v2446, %v2516
      %v2522 = vadd.f32 %v2447, %v2504
      %v2523 = vadd.f32 %v2448, %v2518
      %s2524 = scalar_lea.vmem %s6, 56
      %v2525 = vld [vmem:[%s2524] sm:$0xf]
      %v2526 = vld [vmem:[%s2524 + $0x4] sm:$0xf]
      %v2529 = vunpack.c.l.b16 %v2525
      %v2530 = vunpack.c.l.b16 %v2526
      %v2531 = vpack.c.b16 %v2530, %v2529
      %v2536 = vunpack.c.l.b16 %v2364
      %v2537 = vunpack.c.h.b16 %v2364
      %v2538 = vunpack.c.l.b16 %v2365
      %v2539 = vunpack.c.l.b16 %v2366
      %v2540 = vunpack.c.h.b16 %v2366
      %v2541 = vunpack.c.l.b16 %v2367
      %v2542 = vpack.c.b16 %v2539, %v2536
      %v2543 = vpack.c.b16 %v2540, %v2537
      %v2544 = vpack.c.b16 %v2541, %v2538
      %2545 = vrot.lane.b32.xlu0 %v2542, 96
      %v2546 = vpop.permute.xlu0 %2545
      %2547 = vrot.lane.b32.xlu0 %v2543, 96
      %v2548 = vpop.permute.xlu0 %2547
      %2549 = vrot.lane.b32.xlu0 %v2544, 96
      %v2550 = vpop.permute.xlu0 %2549
      %vm2551 = vcmask 785408
      %v2552 = vsel %vm2551, %v2546, %v2548
      %v2553 = vsel %vm2551, %v2548, %v2550
      %v2557 = vsel %vm671, %v2531, 0
      %2559 = vmatpush.bf16.msra.mxu0 0
      %2560 = vmatpush.bf16.msra.mxu0 0
      %2561 = vmatpush.bf16.msra.mxu0 0
      %2562 = vmatpush.bf16.msra.mxu0 0
      %2563 = vmatpush.bf16.msra.mxu0 0
      %2564 = vmatpush.bf16.msra.mxu0 0
      %2565 = vmatpush.bf16.msra.mxu0 0
      %2566 = vmatpush.bf16.msra.mxu0 %v2552
      %2567 = vmatmul.bf16.gmra.mxu0 %v2557
      %v2568 = vpop.f32.mrf.mxu0
      %v2569 = vadd.f32 0.0, %v2568
      %v2570 = vpop.f32.mrf.mxu0
      %v2571 = vadd.f32 0.0, %v2570
      %2572 = vdwg.mxu0
      %2573 = vmatpush.bf16.msra.mxu0 0
      %2574 = vmatpush.bf16.msra.mxu0 0
      %2575 = vmatpush.bf16.msra.mxu0 0
      %2576 = vmatpush.bf16.msra.mxu0 0
      %2577 = vmatpush.bf16.msra.mxu0 0
      %2578 = vmatpush.bf16.msra.mxu0 0
      %2579 = vmatpush.bf16.msra.mxu0 0
      %2580 = vmatpush.bf16.msra.mxu0 %v2553
      %2581 = vmatmul.bf16.gmra.mxu0 %v2557
      %v2582 = vpop.f32.mrf.mxu0
      %v2583 = vadd.f32 0.0, %v2582
      %v2584 = vpop.f32.mrf.mxu0
      %v2585 = vadd.f32 0.0, %v2584
      %2586 = vdwg.mxu0
      %v2587 = vadd.f32 %v2520, %v2569
      %v2588 = vadd.f32 %v2521, %v2583
      %v2589 = vadd.f32 %v2522, %v2571
      %v2590 = vadd.f32 %v2523, %v2585
      %2591 = vrot.lane.b32.xlu0 %v2155, 34
      %v2592 = vpop.permute.xlu0 %2591
      %2593 = vrot.lane.b32.xlu0 %v2156, 34
      %v2594 = vpop.permute.xlu0 %2593
      %vm2595 = vcmask 277504
      %v2596 = vsel %vm2595, %v2592, %v2594
      %v2600 = vmul.f32 %v2368, %v2592
      %v2601 = vmul.f32 %v2369, %v2596
      %v2602 = vmul.f32 %v2370, %v2594
      %v2603 = vmul.f32 %v2371, %v2592
      %v2604 = vmul.f32 %v2372, %v2596
      %v2605 = vmul.f32 %v2373, %v2594
      %v2606 = vpack.c.bf16 %v2603, %v2600
      %v2607 = vpack.c.bf16 %v2604, %v2601
      %v2608 = vpack.c.bf16 %v2605, %v2602
      %s2609 = scalar_lea.vmem %s6, 64
      %v2610 = vld [vmem:[%s2609] sm:$0xf]
      %v2611 = vld [vmem:[%s2609 + $0x4] sm:$0xf]
      %v2614 = vunpack.c.l.b16 %v2610
      %v2615 = vunpack.c.l.b16 %v2611
      %v2616 = vpack.c.b16 %v2615, %v2614
      %2620 = vrot.lane.b32.xlu0 %v2606, 94
      %v2621 = vpop.permute.xlu0 %2620
      %2622 = vrot.lane.b32.xlu0 %v2607, 94
      %v2623 = vpop.permute.xlu0 %2622
      %2624 = vrot.lane.b32.xlu0 %v2608, 94
      %v2625 = vpop.permute.xlu0 %2624
      %vm2626 = vcmask 769024
      %v2627 = vsel %vm2626, %v2621, %v2623
      %v2628 = vsel %vm2626, %v2623, %v2625
      %v2632 = vsel %vm671, %v2616, 0
      %2634 = vmatpush.bf16.msra.mxu0 0
      %2635 = vmatpush.bf16.msra.mxu0 0
      %2636 = vmatpush.bf16.msra.mxu0 0
      %2637 = vmatpush.bf16.msra.mxu0 0
      %2638 = vmatpush.bf16.msra.mxu0 0
      %2639 = vmatpush.bf16.msra.mxu0 0
      %2640 = vmatpush.bf16.msra.mxu0 0
      %2641 = vmatpush.bf16.msra.mxu0 %v2627
      %2642 = vmatmul.bf16.gmra.mxu0 %v2632
      %v2643 = vpop.f32.mrf.mxu0
      %v2644 = vadd.f32 0.0, %v2643
      %v2645 = vpop.f32.mrf.mxu0
      %v2646 = vadd.f32 0.0, %v2645
      %2647 = vdwg.mxu0
      %2648 = vmatpush.bf16.msra.mxu0 0
      %2649 = vmatpush.bf16.msra.mxu0 0
      %2650 = vmatpush.bf16.msra.mxu0 0
      %2651 = vmatpush.bf16.msra.mxu0 0
      %2652 = vmatpush.bf16.msra.mxu0 0
      %2653 = vmatpush.bf16.msra.mxu0 0
      %2654 = vmatpush.bf16.msra.mxu0 0
      %2655 = vmatpush.bf16.msra.mxu0 %v2628
      %2656 = vmatmul.bf16.gmra.mxu0 %v2632
      %v2657 = vpop.f32.mrf.mxu0
      %v2658 = vadd.f32 0.0, %v2657
      %v2659 = vpop.f32.mrf.mxu0
      %v2660 = vadd.f32 0.0, %v2659
      %2661 = vdwg.mxu0
      %v2662 = vadd.f32 %v2587, %v2644
      %v2663 = vadd.f32 %v2588, %v2658
      %v2664 = vadd.f32 %v2589, %v2646
      %v2665 = vadd.f32 %v2590, %v2660
      %2667 = vset.pattern.permute.xlu0 0
      %2668 = vperm.xlu0 %2667, %v1982
      %v2669 = vpop.permute.xlu0 %2668
      %2672 = vset.pattern.permute.xlu0 0
      %2673 = vperm.xlu0 %2672, %v1983
      %v2674 = vpop.permute.xlu0 %2673
      %v2676 = vadd.f32 %v2662, %v2669
      %v2677 = vadd.f32 %v2663, %v2669
      %v2678 = vadd.f32 %v2664, %v2674
      %v2679 = vadd.f32 %v2665, %v2674
      %v2680 = vmax.f32 %v2676, 0.0
      %v2681 = vmax.f32 %v2677, 0.0
      %v2682 = vmax.f32 %v2678, 0.0
      %v2683 = vmax.f32 %v2679, 0.0
      %v2684 = vpack.c.bf16 %v2681, %v2680
      %v2685 = vpack.c.bf16 %v2683, %v2682
      %v2686 = vld [vmem:[%s9] sm:$0xff]
      %v2687 = vld [vmem:[%s9 + $0x8] sm:$0xff]
      %2688 = vst [vmem:[#allocation2 + $0x8] sm:$0xff] %v2684
      %2689 = vst [vmem:[#allocation2 + $0x20] sm:$0xff] %v2685
      %v2690 = vld [vmem:[#allocation2 + $0x4] sm:$0xff]
      %v2691 = vld [vmem:[#allocation2 + $0xc] sm:$0xf]
      %v2692 = vld [vmem:[#allocation2 + $0x1c] sm:$0xff]
      %v2693 = vld [vmem:[#allocation2 + $0x24] sm:$0xf]
      %v2694 = vld [vmem:[%s1] sm:$0x44]
      %v2696 = vunpack.c.l.b16 %v2694
      %v2697 = vunpack.c.h.b16 %v2694
      %v2698 = vpack.c.b16 %v2696, %v2696
      %v2699 = vpack.c.b16 %v2697, %v2697
      %v2701 = vpack.i.b16 %v2698, %v2698
      %v2703 = vperm.slane %v2701, 2
      %v2705 = vpack.i.b16 %v2699, %v2699
      %v2707 = vperm.slane %v2705, 2
      %v2708 = vunpack.c.l.bf16 %v2690
      %v2709 = vunpack.c.h.bf16 %v2690
      %v2710 = vunpack.c.l.bf16 %v2691
      %v2711 = vunpack.c.l.bf16 %v2692
      %v2712 = vunpack.c.h.bf16 %v2692
      %v2713 = vunpack.c.l.bf16 %v2693
      %v2714 = vunpack.c.l.bf16 %v2703
      %v2715 = vunpack.c.l.bf16 %v2707
      %2718 = vrot.lane.b32.xlu0 %v2714, 60
      %v2719 = vpop.permute.xlu0 %2718
      %2720 = vrot.lane.b32.xlu0 %v2715, 60
      %v2721 = vpop.permute.xlu0 %2720
      %vm2722 = vcmask 490496
      %v2723 = vsel %vm2722, %v2719, %v2721
      %v2727 = vmul.f32 %v2708, %v2719
      %v2728 = vmul.f32 %v2709, %v2723
      %v2729 = vmul.f32 %v2710, %v2721
      %v2730 = vmul.f32 %v2711, %v2719
      %v2731 = vmul.f32 %v2712, %v2723
      %v2732 = vmul.f32 %v2713, %v2721
      %v2733 = vpack.c.bf16 %v2730, %v2727
      %v2734 = vpack.c.bf16 %v2731, %v2728
      %v2735 = vpack.c.bf16 %v2732, %v2729
      %v2736 = vld [vmem:[%s8] sm:$0xf]
      %v2737 = vld [vmem:[%s8 + $0x4] sm:$0xf]
      %s2738 = scalar_lea.vmem %s8, 8
      %v2739 = vld [vmem:[%s2738] sm:$0xf]
      %v2740 = vld [vmem:[%s2738 + $0x4] sm:$0xf]
      %v2743 = vunpack.c.l.b16 %v2739
      %v2744 = vunpack.c.l.b16 %v2740
      %v2745 = vpack.c.b16 %v2744, %v2743
      %v2750 = vunpack.c.l.b16 %v2690
      %v2751 = vunpack.c.h.b16 %v2690
      %v2752 = vunpack.c.l.b16 %v2691
      %v2753 = vunpack.c.l.b16 %v2692
      %v2754 = vunpack.c.h.b16 %v2692
      %v2755 = vunpack.c.l.b16 %v2693
      %v2756 = vpack.c.b16 %v2753, %v2750
      %v2757 = vpack.c.b16 %v2754, %v2751
      %v2758 = vpack.c.b16 %v2755, %v2752
      %2759 = vrot.lane.b32.xlu0 %v2756, 64
      %v2760 = vpop.permute.xlu0 %2759
      %2761 = vrot.lane.b32.xlu0 %v2757, 64
      %v2762 = vpop.permute.xlu0 %2761
      %2763 = vrot.lane.b32.xlu0 %v2758, 64
      %v2764 = vpop.permute.xlu0 %2763
      %vm2765 = vcmask 523264
      %v2766 = vsel %vm2765, %v2760, %v2762
      %v2767 = vsel %vm2765, %v2762, %v2764
      %v2771 = vsel %vm671, %v2745, 0
      %2773 = vmatpush.bf16.msra.mxu0 0
      %2774 = vmatpush.bf16.msra.mxu0 0
      %2775 = vmatpush.bf16.msra.mxu0 0
      %2776 = vmatpush.bf16.msra.mxu0 0
      %2777 = vmatpush.bf16.msra.mxu0 0
      %2778 = vmatpush.bf16.msra.mxu0 0
      %2779 = vmatpush.bf16.msra.mxu0 0
      %2780 = vmatpush.bf16.msra.mxu0 %v2766
      %2781 = vmatmul.bf16.gmra.mxu0 %v2771
      %v2782 = vpop.f32.mrf.mxu0
      %v2783 = vadd.f32 0.0, %v2782
      %v2784 = vpop.f32.mrf.mxu0
      %v2785 = vadd.f32 0.0, %v2784
      %2786 = vdwg.mxu0
      %2787 = vmatpush.bf16.msra.mxu0 0
      %2788 = vmatpush.bf16.msra.mxu0 0
      %2789 = vmatpush.bf16.msra.mxu0 0
      %2790 = vmatpush.bf16.msra.mxu0 0
      %2791 = vmatpush.bf16.msra.mxu0 0
      %2792 = vmatpush.bf16.msra.mxu0 0
      %2793 = vmatpush.bf16.msra.mxu0 0
      %2794 = vmatpush.bf16.msra.mxu0 %v2767
      %2795 = vmatmul.bf16.gmra.mxu0 %v2771
      %v2796 = vpop.f32.mrf.mxu0
      %v2797 = vadd.f32 0.0, %v2796
      %v2798 = vpop.f32.mrf.mxu0
      %v2799 = vadd.f32 0.0, %v2798
      %2800 = vdwg.mxu0
      %v2803 = vunpack.c.l.b16 %v2736
      %v2804 = vunpack.c.l.b16 %v2737
      %v2805 = vpack.c.b16 %v2804, %v2803
      %2809 = vrot.lane.b32.xlu0 %v2733, 68
      %v2810 = vpop.permute.xlu0 %2809
      %2811 = vrot.lane.b32.xlu0 %v2734, 68
      %v2812 = vpop.permute.xlu0 %2811
      %2813 = vrot.lane.b32.xlu0 %v2735, 68
      %v2814 = vpop.permute.xlu0 %2813
      %vm2815 = vcmask 556032
      %v2816 = vsel %vm2815, %v2810, %v2812
      %v2817 = vsel %vm2815, %v2812, %v2814
      %v2821 = vsel %vm671, %v2805, 0
      %2823 = vmatpush.bf16.msra.mxu0 0
      %2824 = vmatpush.bf16.msra.mxu0 0
      %2825 = vmatpush.bf16.msra.mxu0 0
      %2826 = vmatpush.bf16.msra.mxu0 0
      %2827 = vmatpush.bf16.msra.mxu0 0
      %2828 = vmatpush.bf16.msra.mxu0 0
      %2829 = vmatpush.bf16.msra.mxu0 0
      %2830 = vmatpush.bf16.msra.mxu0 %v2816
      %2831 = vmatmul.bf16.gmra.mxu0 %v2821
      %v2832 = vpop.f32.mrf.mxu0
      %v2833 = vadd.f32 %v2783, %v2832
      %v2834 = vpop.f32.mrf.mxu0
      %v2835 = vadd.f32 %v2785, %v2834
      %2836 = vdwg.mxu0
      %2837 = vmatpush.bf16.msra.mxu0 0
      %2838 = vmatpush.bf16.msra.mxu0 0
      %2839 = vmatpush.bf16.msra.mxu0 0
      %2840 = vmatpush.bf16.msra.mxu0 0
      %2841 = vmatpush.bf16.msra.mxu0 0
      %2842 = vmatpush.bf16.msra.mxu0 0
      %2843 = vmatpush.bf16.msra.mxu0 0
      %2844 = vmatpush.bf16.msra.mxu0 %v2817
      %2845 = vmatmul.bf16.gmra.mxu0 %v2821
      %v2846 = vpop.f32.mrf.mxu0
      %v2847 = vadd.f32 %v2797, %v2846
      %v2848 = vpop.f32.mrf.mxu0
      %v2849 = vadd.f32 %v2799, %v2848
      %2850 = vdwg.mxu0
      %v2851 = vshrl.u32 %v2698, 16
      %v2852 = vpack.i.b16 %v2851, %v2851
      %v2854 = vperm.slane %v2852, 2
      %v2855 = vshrl.u32 %v2699, 16
      %v2856 = vpack.i.b16 %v2855, %v2855
      %v2858 = vperm.slane %v2856, 2
      %v2859 = vunpack.c.l.bf16 %v2854
      %v2860 = vunpack.c.l.bf16 %v2858
      %2863 = vrot.lane.b32.xlu0 %v2859, 68
      %v2864 = vpop.permute.xlu0 %2863
      %2865 = vrot.lane.b32.xlu0 %v2860, 68
      %v2866 = vpop.permute.xlu0 %2865
      %vm2867 = vcmask 556032
      %v2868 = vsel %vm2867, %v2864, %v2866
      %v2872 = vmul.f32 %v2708, %v2864
      %v2873 = vmul.f32 %v2709, %v2868
      %v2874 = vmul.f32 %v2710, %v2866
      %v2875 = vmul.f32 %v2711, %v2864
      %v2876 = vmul.f32 %v2712, %v2868
      %v2877 = vmul.f32 %v2713, %v2866
      %v2878 = vpack.c.bf16 %v2875, %v2872
      %v2879 = vpack.c.bf16 %v2876, %v2873
      %v2880 = vpack.c.bf16 %v2877, %v2874
      %s2881 = scalar_lea.vmem %s8, 16
      %v2882 = vld [vmem:[%s2881] sm:$0xf]
      %v2883 = vld [vmem:[%s2881 + $0x4] sm:$0xf]
      %v2886 = vunpack.c.l.b16 %v2882
      %v2887 = vunpack.c.l.b16 %v2883
      %v2888 = vpack.c.b16 %v2887, %v2886
      %2892 = vrot.lane.b32.xlu0 %v2878, 60
      %v2893 = vpop.permute.xlu0 %2892
      %2894 = vrot.lane.b32.xlu0 %v2879, 60
      %v2895 = vpop.permute.xlu0 %2894
      %2896 = vrot.lane.b32.xlu0 %v2880, 60
      %v2897 = vpop.permute.xlu0 %2896
      %vm2898 = vcmask 490496
      %v2899 = vsel %vm2898, %v2893, %v2895
      %v2900 = vsel %vm2898, %v2895, %v2897
      %v2904 = vsel %vm671, %v2888, 0
      %2906 = vmatpush.bf16.msra.mxu0 0
      %2907 = vmatpush.bf16.msra.mxu0 0
      %2908 = vmatpush.bf16.msra.mxu0 0
      %2909 = vmatpush.bf16.msra.mxu0 0
      %2910 = vmatpush.bf16.msra.mxu0 0
      %2911 = vmatpush.bf16.msra.mxu0 0
      %2912 = vmatpush.bf16.msra.mxu0 0
      %2913 = vmatpush.bf16.msra.mxu0 %v2899
      %2914 = vmatmul.bf16.gmra.mxu0 %v2904
      %v2915 = vpop.f32.mrf.mxu0
      %v2916 = vadd.f32 0.0, %v2915
      %v2917 = vpop.f32.mrf.mxu0
      %v2918 = vadd.f32 0.0, %v2917
      %2919 = vdwg.mxu0
      %2920 = vmatpush.bf16.msra.mxu0 0
      %2921 = vmatpush.bf16.msra.mxu0 0
      %2922 = vmatpush.bf16.msra.mxu0 0
      %2923 = vmatpush.bf16.msra.mxu0 0
      %2924 = vmatpush.bf16.msra.mxu0 0
      %2925 = vmatpush.bf16.msra.mxu0 0
      %2926 = vmatpush.bf16.msra.mxu0 0
      %2927 = vmatpush.bf16.msra.mxu0 %v2900
      %2928 = vmatmul.bf16.gmra.mxu0 %v2904
      %v2929 = vpop.f32.mrf.mxu0
      %v2930 = vadd.f32 0.0, %v2929
      %v2931 = vpop.f32.mrf.mxu0
      %v2932 = vadd.f32 0.0, %v2931
      %2933 = vdwg.mxu0
      %v2934 = vadd.f32 %v2833, %v2916
      %v2935 = vadd.f32 %v2847, %v2930
      %v2936 = vadd.f32 %v2835, %v2918
      %v2937 = vadd.f32 %v2849, %v2932
      %2938 = vrot.lane.b32.xlu0 %v2714, 124
      %v2939 = vpop.permute.xlu0 %2938
      %2940 = vrot.lane.b32.xlu0 %v2715, 124
      %v2941 = vpop.permute.xlu0 %2940
      %vm2942 = vcmask 1014784
      %v2943 = vsel %vm2942, %v2939, %v2941
      %v2947 = vmul.f32 %v2708, %v2939
      %v2948 = vmul.f32 %v2709, %v2943
      %v2949 = vmul.f32 %v2710, %v2941
      %v2950 = vmul.f32 %v2711, %v2939
      %v2951 = vmul.f32 %v2712, %v2943
      %v2952 = vmul.f32 %v2713, %v2941
      %v2953 = vpack.c.bf16 %v2950, %v2947
      %v2954 = vpack.c.bf16 %v2951, %v2948
      %v2955 = vpack.c.bf16 %v2952, %v2949
      %s2956 = scalar_lea.vmem %s8, 24
      %v2957 = vld [vmem:[%s2956] sm:$0xf]
      %v2958 = vld [vmem:[%s2956 + $0x4] sm:$0xf]
      %v2961 = vunpack.c.l.b16 %v2957
      %v2962 = vunpack.c.l.b16 %v2958
      %v2963 = vpack.c.b16 %v2962, %v2961
      %2967 = vrot.lane.b32.xlu0 %v2953, 4
      %v2968 = vpop.permute.xlu0 %2967
      %2969 = vrot.lane.b32.xlu0 %v2954, 4
      %v2970 = vpop.permute.xlu0 %2969
      %2971 = vrot.lane.b32.xlu0 %v2955, 4
      %v2972 = vpop.permute.xlu0 %2971
      %vm2973 = vcmask 31744
      %v2974 = vsel %vm2973, %v2968, %v2970
      %v2975 = vsel %vm2973, %v2970, %v2972
      %v2979 = vsel %vm671, %v2963, 0
      %2981 = vmatpush.bf16.msra.mxu0 0
      %2982 = vmatpush.bf16.msra.mxu0 0
      %2983 = vmatpush.bf16.msra.mxu0 0
      %2984 = vmatpush.bf16.msra.mxu0 0
      %2985 = vmatpush.bf16.msra.mxu0 0
      %2986 = vmatpush.bf16.msra.mxu0 0
      %2987 = vmatpush.bf16.msra.mxu0 0
      %2988 = vmatpush.bf16.msra.mxu0 %v2974
      %2989 = vmatmul.bf16.gmra.mxu0 %v2979
      %v2990 = vpop.f32.mrf.mxu0
      %v2991 = vadd.f32 0.0, %v2990
      %v2992 = vpop.f32.mrf.mxu0
      %v2993 = vadd.f32 0.0, %v2992
      %2994 = vdwg.mxu0
      %2995 = vmatpush.bf16.msra.mxu0 0
      %2996 = vmatpush.bf16.msra.mxu0 0
      %2997 = vmatpush.bf16.msra.mxu0 0
      %2998 = vmatpush.bf16.msra.mxu0 0
      %2999 = vmatpush.bf16.msra.mxu0 0
      %3000 = vmatpush.bf16.msra.mxu0 0
      %3001 = vmatpush.bf16.msra.mxu0 0
      %3002 = vmatpush.bf16.msra.mxu0 %v2975
      %3003 = vmatmul.bf16.gmra.mxu0 %v2979
      %v3004 = vpop.f32.mrf.mxu0
      %v3005 = vadd.f32 0.0, %v3004
      %v3006 = vpop.f32.mrf.mxu0
      %v3007 = vadd.f32 0.0, %v3006
      %3008 = vdwg.mxu0
      %v3009 = vadd.f32 %v2934, %v2991
      %v3010 = vadd.f32 %v2935, %v3005
      %v3011 = vadd.f32 %v2936, %v2993
      %v3012 = vadd.f32 %v2937, %v3007
      %v3013 = vld [vmem:[#allocation2 + $0x8] sm:$0xff]
      %v3014 = vld [vmem:[#allocation2 + $0x20] sm:$0xff]
      %s3015 = scalar_lea.vmem %s8, 32
      %v3016 = vld [vmem:[%s3015] sm:$0xf]
      %v3017 = vld [vmem:[%s3015 + $0x4] sm:$0xf]
      %v3020 = vunpack.c.l.b16 %v3016
      %v3021 = vunpack.c.l.b16 %v3017
      %v3022 = vpack.c.b16 %v3021, %v3020
      %v3025 = vunpack.c.l.b16 %v3013
      %v3026 = vunpack.c.h.b16 %v3013
      %v3027 = vunpack.c.l.b16 %v3014
      %v3028 = vunpack.c.h.b16 %v3014
      %v3029 = vpack.c.b16 %v3027, %v3025
      %v3030 = vpack.c.b16 %v3028, %v3026
      %v3034 = vsel %vm671, %v3022, 0
      %3036 = vmatpush.bf16.msra.mxu0 0
      %3037 = vmatpush.bf16.msra.mxu0 0
      %3038 = vmatpush.bf16.msra.mxu0 0
      %3039 = vmatpush.bf16.msra.mxu0 0
      %3040 = vmatpush.bf16.msra.mxu0 0
      %3041 = vmatpush.bf16.msra.mxu0 0
      %3042 = vmatpush.bf16.msra.mxu0 0
      %3043 = vmatpush.bf16.msra.mxu0 %v3029
      %3044 = vmatmul.bf16.gmra.mxu0 %v3034
      %v3045 = vpop.f32.mrf.mxu0
      %v3046 = vadd.f32 0.0, %v3045
      %v3047 = vpop.f32.mrf.mxu0
      %v3048 = vadd.f32 0.0, %v3047
      %3049 = vdwg.mxu0
      %3050 = vmatpush.bf16.msra.mxu0 0
      %3051 = vmatpush.bf16.msra.mxu0 0
      %3052 = vmatpush.bf16.msra.mxu0 0
      %3053 = vmatpush.bf16.msra.mxu0 0
      %3054 = vmatpush.bf16.msra.mxu0 0
      %3055 = vmatpush.bf16.msra.mxu0 0
      %3056 = vmatpush.bf16.msra.mxu0 0
      %3057 = vmatpush.bf16.msra.mxu0 %v3030
      %3058 = vmatmul.bf16.gmra.mxu0 %v3034
      %v3059 = vpop.f32.mrf.mxu0
      %v3060 = vadd.f32 0.0, %v3059
      %v3061 = vpop.f32.mrf.mxu0
      %v3062 = vadd.f32 0.0, %v3061
      %3063 = vdwg.mxu0
      %v3064 = vadd.f32 %v3009, %v3046
      %v3065 = vadd.f32 %v3010, %v3060
      %v3066 = vadd.f32 %v3011, %v3048
      %v3067 = vadd.f32 %v3012, %v3062
      %v3068 = vld [vmem:[#allocation2 + $0x8] sm:$0xff]
      %v3069 = vld [vmem:[#allocation2 + $0x10] sm:$0xf]
      %v3070 = vld [vmem:[#allocation2 + $0x20] sm:$0xff]
      %v3071 = vld [vmem:[#allocation2 + $0x28] sm:$0xf]
      %v3072 = vunpack.c.l.bf16 %v3068
      %v3073 = vunpack.c.h.bf16 %v3068
      %v3074 = vunpack.c.l.bf16 %v3069
      %v3075 = vunpack.c.l.bf16 %v3070
      %v3076 = vunpack.c.h.bf16 %v3070
      %v3077 = vunpack.c.l.bf16 %v3071
      %3078 = vrot.lane.b32.xlu0 %v2859, 4
      %v3079 = vpop.permute.xlu0 %3078
      %3080 = vrot.lane.b32.xlu0 %v2860, 4
      %v3081 = vpop.permute.xlu0 %3080
      %vm3082 = vcmask 31744
      %v3083 = vsel %vm3082, %v3079, %v3081
      %v3087 = vmul.f32 %v3072, %v3079
      %v3088 = vmul.f32 %v3073, %v3083
      %v3089 = vmul.f32 %v3074, %v3081
      %v3090 = vmul.f32 %v3075, %v3079
      %v3091 = vmul.f32 %v3076, %v3083
      %v3092 = vmul.f32 %v3077, %v3081
      %v3093 = vpack.c.bf16 %v3090, %v3087
      %v3094 = vpack.c.bf16 %v3091, %v3088
      %v3095 = vpack.c.bf16 %v3092, %v3089
      %s3096 = scalar_lea.vmem %s8, 40
      %v3097 = vld [vmem:[%s3096] sm:$0xf]
      %v3098 = vld [vmem:[%s3096 + $0x4] sm:$0xf]
      %v3101 = vunpack.c.l.b16 %v3097
      %v3102 = vunpack.c.l.b16 %v3098
      %v3103 = vpack.c.b16 %v3102, %v3101
      %3107 = vrot.lane.b32.xlu0 %v3093, 124
      %v3108 = vpop.permute.xlu0 %3107
      %3109 = vrot.lane.b32.xlu0 %v3094, 124
      %v3110 = vpop.permute.xlu0 %3109
      %3111 = vrot.lane.b32.xlu0 %v3095, 124
      %v3112 = vpop.permute.xlu0 %3111
      %vm3113 = vcmask 1014784
      %v3114 = vsel %vm3113, %v3108, %v3110
      %v3115 = vsel %vm3113, %v3110, %v3112
      %v3119 = vsel %vm671, %v3103, 0
      %3121 = vmatpush.bf16.msra.mxu0 0
      %3122 = vmatpush.bf16.msra.mxu0 0
      %3123 = vmatpush.bf16.msra.mxu0 0
      %3124 = vmatpush.bf16.msra.mxu0 0
      %3125 = vmatpush.bf16.msra.mxu0 0
      %3126 = vmatpush.bf16.msra.mxu0 0
      %3127 = vmatpush.bf16.msra.mxu0 0
      %3128 = vmatpush.bf16.msra.mxu0 %v3114
      %3129 = vmatmul.bf16.gmra.mxu0 %v3119
      %v3130 = vpop.f32.mrf.mxu0
      %v3131 = vadd.f32 0.0, %v3130
      %v3132 = vpop.f32.mrf.mxu0
      %v3133 = vadd.f32 0.0, %v3132
      %3134 = vdwg.mxu0
      %3135 = vmatpush.bf16.msra.mxu0 0
      %3136 = vmatpush.bf16.msra.mxu0 0
      %3137 = vmatpush.bf16.msra.mxu0 0
      %3138 = vmatpush.bf16.msra.mxu0 0
      %3139 = vmatpush.bf16.msra.mxu0 0
      %3140 = vmatpush.bf16.msra.mxu0 0
      %3141 = vmatpush.bf16.msra.mxu0 0
      %3142 = vmatpush.bf16.msra.mxu0 %v3115
      %3143 = vmatmul.bf16.gmra.mxu0 %v3119
      %v3144 = vpop.f32.mrf.mxu0
      %v3145 = vadd.f32 0.0, %v3144
      %v3146 = vpop.f32.mrf.mxu0
      %v3147 = vadd.f32 0.0, %v3146
      %3148 = vdwg.mxu0
      %v3149 = vadd.f32 %v3064, %v3131
      %v3150 = vadd.f32 %v3065, %v3145
      %v3151 = vadd.f32 %v3066, %v3133
      %v3152 = vadd.f32 %v3067, %v3147
      %v3153 = vmul.f32 %v3072, %v2719
      %v3154 = vmul.f32 %v3073, %v2723
      %v3155 = vmul.f32 %v3074, %v2721
      %v3156 = vmul.f32 %v3075, %v2719
      %v3157 = vmul.f32 %v3076, %v2723
      %v3158 = vmul.f32 %v3077, %v2721
      %v3159 = vpack.c.bf16 %v3156, %v3153
      %v3160 = vpack.c.bf16 %v3157, %v3154
      %v3161 = vpack.c.bf16 %v3158, %v3155
      %s3162 = scalar_lea.vmem %s8, 48
      %v3163 = vld [vmem:[%s3162] sm:$0xf]
      %v3164 = vld [vmem:[%s3162 + $0x4] sm:$0xf]
      %v3167 = vunpack.c.l.b16 %v3163
      %v3168 = vunpack.c.l.b16 %v3164
      %v3169 = vpack.c.b16 %v3168, %v3167
      %3173 = vrot.lane.b32.xlu0 %v3159, 68
      %v3174 = vpop.permute.xlu0 %3173
      %3175 = vrot.lane.b32.xlu0 %v3160, 68
      %v3176 = vpop.permute.xlu0 %3175
      %3177 = vrot.lane.b32.xlu0 %v3161, 68
      %v3178 = vpop.permute.xlu0 %3177
      %v3179 = vsel %vm2815, %v3174, %v3176
      %v3180 = vsel %vm2815, %v3176, %v3178
      %v3184 = vsel %vm671, %v3169, 0
      %3186 = vmatpush.bf16.msra.mxu0 0
      %3187 = vmatpush.bf16.msra.mxu0 0
      %3188 = vmatpush.bf16.msra.mxu0 0
      %3189 = vmatpush.bf16.msra.mxu0 0
      %3190 = vmatpush.bf16.msra.mxu0 0
      %3191 = vmatpush.bf16.msra.mxu0 0
      %3192 = vmatpush.bf16.msra.mxu0 0
      %3193 = vmatpush.bf16.msra.mxu0 %v3179
      %3194 = vmatmul.bf16.gmra.mxu0 %v3184
      %v3195 = vpop.f32.mrf.mxu0
      %v3196 = vadd.f32 0.0, %v3195
      %v3197 = vpop.f32.mrf.mxu0
      %v3198 = vadd.f32 0.0, %v3197
      %3199 = vdwg.mxu0
      %3200 = vmatpush.bf16.msra.mxu0 0
      %3201 = vmatpush.bf16.msra.mxu0 0
      %3202 = vmatpush.bf16.msra.mxu0 0
      %3203 = vmatpush.bf16.msra.mxu0 0
      %3204 = vmatpush.bf16.msra.mxu0 0
      %3205 = vmatpush.bf16.msra.mxu0 0
      %3206 = vmatpush.bf16.msra.mxu0 0
      %3207 = vmatpush.bf16.msra.mxu0 %v3180
      %3208 = vmatmul.bf16.gmra.mxu0 %v3184
      %v3209 = vpop.f32.mrf.mxu0
      %v3210 = vadd.f32 0.0, %v3209
      %v3211 = vpop.f32.mrf.mxu0
      %v3212 = vadd.f32 0.0, %v3211
      %3213 = vdwg.mxu0
      %v3214 = vadd.f32 %v3149, %v3196
      %v3215 = vadd.f32 %v3150, %v3210
      %v3216 = vadd.f32 %v3151, %v3198
      %v3217 = vadd.f32 %v3152, %v3212
      %s3218 = scalar_lea.vmem %s8, 56
      %v3219 = vld [vmem:[%s3218] sm:$0xf]
      %v3220 = vld [vmem:[%s3218 + $0x4] sm:$0xf]
      %v3223 = vunpack.c.l.b16 %v3219
      %v3224 = vunpack.c.l.b16 %v3220
      %v3225 = vpack.c.b16 %v3224, %v3223
      %v3230 = vunpack.c.l.b16 %v3068
      %v3231 = vunpack.c.h.b16 %v3068
      %v3232 = vunpack.c.l.b16 %v3069
      %v3233 = vunpack.c.l.b16 %v3070
      %v3234 = vunpack.c.h.b16 %v3070
      %v3235 = vunpack.c.l.b16 %v3071
      %v3236 = vpack.c.b16 %v3233, %v3230
      %v3237 = vpack.c.b16 %v3234, %v3231
      %v3238 = vpack.c.b16 %v3235, %v3232
      %3239 = vrot.lane.b32.xlu0 %v3236, 64
      %v3240 = vpop.permute.xlu0 %3239
      %3241 = vrot.lane.b32.xlu0 %v3237, 64
      %v3242 = vpop.permute.xlu0 %3241
      %3243 = vrot.lane.b32.xlu0 %v3238, 64
      %v3244 = vpop.permute.xlu0 %3243
      %v3245 = vsel %vm2765, %v3240, %v3242
      %v3246 = vsel %vm2765, %v3242, %v3244
      %v3250 = vsel %vm671, %v3225, 0
      %3252 = vmatpush.bf16.msra.mxu0 0
      %3253 = vmatpush.bf16.msra.mxu0 0
      %3254 = vmatpush.bf16.msra.mxu0 0
      %3255 = vmatpush.bf16.msra.mxu0 0
      %3256 = vmatpush.bf16.msra.mxu0 0
      %3257 = vmatpush.bf16.msra.mxu0 0
      %3258 = vmatpush.bf16.msra.mxu0 0
      %3259 = vmatpush.bf16.msra.mxu0 %v3245
      %3260 = vmatmul.bf16.gmra.mxu0 %v3250
      %v3261 = vpop.f32.mrf.mxu0
      %v3262 = vadd.f32 0.0, %v3261
      %v3263 = vpop.f32.mrf.mxu0
      %v3264 = vadd.f32 0.0, %v3263
      %3265 = vdwg.mxu0
      %3266 = vmatpush.bf16.msra.mxu0 0
      %3267 = vmatpush.bf16.msra.mxu0 0
      %3268 = vmatpush.bf16.msra.mxu0 0
      %3269 = vmatpush.bf16.msra.mxu0 0
      %3270 = vmatpush.bf16.msra.mxu0 0
      %3271 = vmatpush.bf16.msra.mxu0 0
      %3272 = vmatpush.bf16.msra.mxu0 0
      %3273 = vmatpush.bf16.msra.mxu0 %v3246
      %3274 = vmatmul.bf16.gmra.mxu0 %v3250
      %v3275 = vpop.f32.mrf.mxu0
      %v3276 = vadd.f32 0.0, %v3275
      %v3277 = vpop.f32.mrf.mxu0
      %v3278 = vadd.f32 0.0, %v3277
      %3279 = vdwg.mxu0
      %v3280 = vadd.f32 %v3214, %v3262
      %v3281 = vadd.f32 %v3215, %v3276
      %v3282 = vadd.f32 %v3216, %v3264
      %v3283 = vadd.f32 %v3217, %v3278
      %v3284 = vmul.f32 %v3072, %v2864
      %v3285 = vmul.f32 %v3073, %v2868
      %v3286 = vmul.f32 %v3074, %v2866
      %v3287 = vmul.f32 %v3075, %v2864
      %v3288 = vmul.f32 %v3076, %v2868
      %v3289 = vmul.f32 %v3077, %v2866
      %v3290 = vpack.c.bf16 %v3287, %v3284
      %v3291 = vpack.c.bf16 %v3288, %v3285
      %v3292 = vpack.c.bf16 %v3289, %v3286
      %s3293 = scalar_lea.vmem %s8, 64
      %v3294 = vld [vmem:[%s3293] sm:$0xf]
      %v3295 = vld [vmem:[%s3293 + $0x4] sm:$0xf]
      %v3298 = vunpack.c.l.b16 %v3294
      %v3299 = vunpack.c.l.b16 %v3295
      %v3300 = vpack.c.b16 %v3299, %v3298
      %3304 = vrot.lane.b32.xlu0 %v3290, 60
      %v3305 = vpop.permute.xlu0 %3304
      %3306 = vrot.lane.b32.xlu0 %v3291, 60
      %v3307 = vpop.permute.xlu0 %3306
      %3308 = vrot.lane.b32.xlu0 %v3292, 60
      %v3309 = vpop.permute.xlu0 %3308
      %v3310 = vsel %vm2898, %v3305, %v3307
      %v3311 = vsel %vm2898, %v3307, %v3309
      %v3315 = vsel %vm671, %v3300, 0
      %3317 = vmatpush.bf16.msra.mxu0 0
      %3318 = vmatpush.bf16.msra.mxu0 0
      %3319 = vmatpush.bf16.msra.mxu0 0
      %3320 = vmatpush.bf16.msra.mxu0 0
      %3321 = vmatpush.bf16.msra.mxu0 0
      %3322 = vmatpush.bf16.msra.mxu0 0
      %3323 = vmatpush.bf16.msra.mxu0 0
      %3324 = vmatpush.bf16.msra.mxu0 %v3310
      %3325 = vmatmul.bf16.gmra.mxu0 %v3315
      %v3326 = vpop.f32.mrf.mxu0
      %v3327 = vadd.f32 0.0, %v3326
      %v3328 = vpop.f32.mrf.mxu0
      %v3329 = vadd.f32 0.0, %v3328
      %3330 = vdwg.mxu0
      %3331 = vmatpush.bf16.msra.mxu0 0
      %3332 = vmatpush.bf16.msra.mxu0 0
      %3333 = vmatpush.bf16.msra.mxu0 0
      %3334 = vmatpush.bf16.msra.mxu0 0
      %3335 = vmatpush.bf16.msra.mxu0 0
      %3336 = vmatpush.bf16.msra.mxu0 0
      %3337 = vmatpush.bf16.msra.mxu0 0
      %3338 = vmatpush.bf16.msra.mxu0 %v3311
      %3339 = vmatmul.bf16.gmra.mxu0 %v3315
      %v3340 = vpop.f32.mrf.mxu0
      %v3341 = vadd.f32 0.0, %v3340
      %v3342 = vpop.f32.mrf.mxu0
      %v3343 = vadd.f32 0.0, %v3342
      %3344 = vdwg.mxu0
      %v3345 = vadd.f32 %v3280, %v3327
      %v3346 = vadd.f32 %v3281, %v3341
      %v3347 = vadd.f32 %v3282, %v3329
      %v3348 = vadd.f32 %v3283, %v3343
      %3350 = vset.pattern.permute.xlu0 0
      %3351 = vperm.xlu0 %3350, %v2686
      %v3352 = vpop.permute.xlu0 %3351
      %3355 = vset.pattern.permute.xlu0 0
      %3356 = vperm.xlu0 %3355, %v2687
      %v3357 = vpop.permute.xlu0 %3356
      %v3359 = vadd.f32 %v3345, %v3352
      %v3360 = vadd.f32 %v3346, %v3352
      %v3361 = vadd.f32 %v3347, %v3357
      %v3362 = vadd.f32 %v3348, %v3357
      %v3363 = vmax.f32 %v3359, 0.0
      %v3364 = vmax.f32 %v3360, 0.0
      %v3365 = vmax.f32 %v3361, 0.0
      %v3366 = vmax.f32 %v3362, 0.0
      %v3367 = vpack.c.bf16 %v3364, %v3363
      %v3368 = vpack.c.bf16 %v3366, %v3365
      %v3369 = vld [vmem:[%s11] sm:$0xff]
      %v3370 = vld [vmem:[%s11 + $0x8] sm:$0xff]
      %3371 = vst [vmem:[#allocation2 + $0x8] sm:$0xff] %v3367
      %3372 = vst [vmem:[#allocation2 + $0x20] sm:$0xff] %v3368
      %v3373 = vld [vmem:[#allocation2] sm:$0xff]
      %v3374 = vld [vmem:[#allocation2 + $0x8] sm:$0xf]
      %v3375 = vld [vmem:[#allocation2 + $0x18] sm:$0xff]
      %v3376 = vld [vmem:[#allocation2 + $0x20] sm:$0xf]
      %v3377 = vld [vmem:[%s1] sm:$0x88]
      %v3379 = vunpack.c.l.b16 %v3377
      %v3380 = vunpack.c.h.b16 %v3377
      %v3381 = vpack.c.b16 %v3379, %v3379
      %v3382 = vpack.c.b16 %v3380, %v3380
      %v3384 = vpack.i.b16 %v3381, %v3381
      %v3386 = vperm.slane %v3384, 3
      %v3388 = vpack.i.b16 %v3382, %v3382
      %v3390 = vperm.slane %v3388, 3
      %v3391 = vunpack.c.l.bf16 %v3373
      %v3392 = vunpack.c.h.bf16 %v3373
      %v3393 = vunpack.c.l.bf16 %v3374
      %v3394 = vunpack.c.l.bf16 %v3375
      %v3395 = vunpack.c.h.bf16 %v3375
      %v3396 = vunpack.c.l.bf16 %v3376
      %v3397 = vunpack.c.l.bf16 %v3386
      %v3398 = vunpack.c.l.bf16 %v3390
      %3401 = vrot.lane.b32.xlu0 %v3397, 120
      %v3402 = vpop.permute.xlu0 %3401
      %3403 = vrot.lane.b32.xlu0 %v3398, 120
      %v3404 = vpop.permute.xlu0 %3403
      %vm3405 = vcmask 982016
      %v3406 = vsel %vm3405, %v3402, %v3404
      %v3410 = vmul.f32 %v3391, %v3402
      %v3411 = vmul.f32 %v3392, %v3406
      %v3412 = vmul.f32 %v3393, %v3404
      %v3413 = vmul.f32 %v3394, %v3402
      %v3414 = vmul.f32 %v3395, %v3406
      %v3415 = vmul.f32 %v3396, %v3404
      %v3416 = vpack.c.bf16 %v3413, %v3410
      %v3417 = vpack.c.bf16 %v3414, %v3411
      %v3418 = vpack.c.bf16 %v3415, %v3412
      %v3419 = vld [vmem:[%s10] sm:$0xf]
      %v3420 = vld [vmem:[%s10 + $0x4] sm:$0xf]
      %v3421 = vld [vmem:[#allocation2 + $0x4] sm:$0xff]
      %v3422 = vld [vmem:[#allocation2 + $0x1c] sm:$0xff]
      %s3423 = scalar_lea.vmem %s10, 8
      %v3424 = vld [vmem:[%s3423] sm:$0xf]
      %v3425 = vld [vmem:[%s3423 + $0x4] sm:$0xf]
      %v3428 = vunpack.c.l.b16 %v3424
      %v3429 = vunpack.c.l.b16 %v3425
      %v3430 = vpack.c.b16 %v3429, %v3428
      %v3433 = vunpack.c.l.b16 %v3421
      %v3434 = vunpack.c.h.b16 %v3421
      %v3435 = vunpack.c.l.b16 %v3422
      %v3436 = vunpack.c.h.b16 %v3422
      %v3437 = vpack.c.b16 %v3435, %v3433
      %v3438 = vpack.c.b16 %v3436, %v3434
      %v3442 = vsel %vm671, %v3430, 0
      %3444 = vmatpush.bf16.msra.mxu0 0
      %3445 = vmatpush.bf16.msra.mxu0 0
      %3446 = vmatpush.bf16.msra.mxu0 0
      %3447 = vmatpush.bf16.msra.mxu0 0
      %3448 = vmatpush.bf16.msra.mxu0 0
      %3449 = vmatpush.bf16.msra.mxu0 0
      %3450 = vmatpush.bf16.msra.mxu0 0
      %3451 = vmatpush.bf16.msra.mxu0 %v3437
      %3452 = vmatmul.bf16.gmra.mxu0 %v3442
      %v3453 = vpop.f32.mrf.mxu0
      %v3454 = vadd.f32 0.0, %v3453
      %v3455 = vpop.f32.mrf.mxu0
      %v3456 = vadd.f32 0.0, %v3455
      %3457 = vdwg.mxu0
      %3458 = vmatpush.bf16.msra.mxu0 0
      %3459 = vmatpush.bf16.msra.mxu0 0
      %3460 = vmatpush.bf16.msra.mxu0 0
      %3461 = vmatpush.bf16.msra.mxu0 0
      %3462 = vmatpush.bf16.msra.mxu0 0
      %3463 = vmatpush.bf16.msra.mxu0 0
      %3464 = vmatpush.bf16.msra.mxu0 0
      %3465 = vmatpush.bf16.msra.mxu0 %v3438
      %3466 = vmatmul.bf16.gmra.mxu0 %v3442
      %v3467 = vpop.f32.mrf.mxu0
      %v3468 = vadd.f32 0.0, %v3467
      %v3469 = vpop.f32.mrf.mxu0
      %v3470 = vadd.f32 0.0, %v3469
      %3471 = vdwg.mxu0
      %v3474 = vunpack.c.l.b16 %v3419
      %v3475 = vunpack.c.l.b16 %v3420
      %v3476 = vpack.c.b16 %v3475, %v3474
      %3480 = vrot.lane.b32.xlu0 %v3416, 8
      %v3481 = vpop.permute.xlu0 %3480
      %3482 = vrot.lane.b32.xlu0 %v3417, 8
      %v3483 = vpop.permute.xlu0 %3482
      %3484 = vrot.lane.b32.xlu0 %v3418, 8
      %v3485 = vpop.permute.xlu0 %3484
      %vm3486 = vcmask 64512
      %v3487 = vsel %vm3486, %v3481, %v3483
      %v3488 = vsel %vm3486, %v3483, %v3485
      %v3492 = vsel %vm671, %v3476, 0
      %3494 = vmatpush.bf16.msra.mxu0 0
      %3495 = vmatpush.bf16.msra.mxu0 0
      %3496 = vmatpush.bf16.msra.mxu0 0
      %3497 = vmatpush.bf16.msra.mxu0 0
      %3498 = vmatpush.bf16.msra.mxu0 0
      %3499 = vmatpush.bf16.msra.mxu0 0
      %3500 = vmatpush.bf16.msra.mxu0 0
      %3501 = vmatpush.bf16.msra.mxu0 %v3487
      %3502 = vmatmul.bf16.gmra.mxu0 %v3492
      %v3503 = vpop.f32.mrf.mxu0
      %v3504 = vadd.f32 %v3454, %v3503
      %v3505 = vpop.f32.mrf.mxu0
      %v3506 = vadd.f32 %v3456, %v3505
      %3507 = vdwg.mxu0
      %3508 = vmatpush.bf16.msra.mxu0 0
      %3509 = vmatpush.bf16.msra.mxu0 0
      %3510 = vmatpush.bf16.msra.mxu0 0
      %3511 = vmatpush.bf16.msra.mxu0 0
      %3512 = vmatpush.bf16.msra.mxu0 0
      %3513 = vmatpush.bf16.msra.mxu0 0
      %3514 = vmatpush.bf16.msra.mxu0 0
      %3515 = vmatpush.bf16.msra.mxu0 %v3488
      %3516 = vmatmul.bf16.gmra.mxu0 %v3492
      %v3517 = vpop.f32.mrf.mxu0
      %v3518 = vadd.f32 %v3468, %v3517
      %v3519 = vpop.f32.mrf.mxu0
      %v3520 = vadd.f32 %v3470, %v3519
      %3521 = vdwg.mxu0
      %v3522 = vld [vmem:[#allocation2 + $0x4] sm:$0xff]
      %v3523 = vld [vmem:[#allocation2 + $0xc] sm:$0xf]
      %v3524 = vld [vmem:[#allocation2 + $0x1c] sm:$0xff]
      %v3525 = vld [vmem:[#allocation2 + $0x24] sm:$0xf]
      %v3526 = vshrl.u32 %v3381, 16
      %v3527 = vpack.i.b16 %v3526, %v3526
      %v3529 = vperm.slane %v3527, 3
      %v3530 = vshrl.u32 %v3382, 16
      %v3531 = vpack.i.b16 %v3530, %v3530
      %v3533 = vperm.slane %v3531, 3
      %v3534 = vunpack.c.l.bf16 %v3522
      %v3535 = vunpack.c.h.bf16 %v3522
      %v3536 = vunpack.c.l.bf16 %v3523
      %v3537 = vunpack.c.l.bf16 %v3524
      %v3538 = vunpack.c.h.bf16 %v3524
      %v3539 = vunpack.c.l.bf16 %v3525
      %v3540 = vunpack.c.l.bf16 %v3529
      %v3541 = vunpack.c.l.bf16 %v3533
      %3544 = vrot.lane.b32.xlu0 %v3540, 8
      %v3545 = vpop.permute.xlu0 %3544
      %3546 = vrot.lane.b32.xlu0 %v3541, 8
      %v3547 = vpop.permute.xlu0 %3546
      %vm3548 = vcmask 64512
      %v3549 = vsel %vm3548, %v3545, %v3547
      %v3553 = vmul.f32 %v3534, %v3545
      %v3554 = vmul.f32 %v3535, %v3549
      %v3555 = vmul.f32 %v3536, %v3547
      %v3556 = vmul.f32 %v3537, %v3545
      %v3557 = vmul.f32 %v3538, %v3549
      %v3558 = vmul.f32 %v3539, %v3547
      %v3559 = vpack.c.bf16 %v3556, %v3553
      %v3560 = vpack.c.bf16 %v3557, %v3554
      %v3561 = vpack.c.bf16 %v3558, %v3555
      %s3562 = scalar_lea.vmem %s10, 16
      %v3563 = vld [vmem:[%s3562] sm:$0xf]
      %v3564 = vld [vmem:[%s3562 + $0x4] sm:$0xf]
      %v3567 = vunpack.c.l.b16 %v3563
      %v3568 = vunpack.c.l.b16 %v3564
      %v3569 = vpack.c.b16 %v3568, %v3567
      %3573 = vrot.lane.b32.xlu0 %v3559, 120
      %v3574 = vpop.permute.xlu0 %3573
      %3575 = vrot.lane.b32.xlu0 %v3560, 120
      %v3576 = vpop.permute.xlu0 %3575
      %3577 = vrot.lane.b32.xlu0 %v3561, 120
      %v3578 = vpop.permute.xlu0 %3577
      %vm3579 = vcmask 982016
      %v3580 = vsel %vm3579, %v3574, %v3576
      %v3581 = vsel %vm3579, %v3576, %v3578
      %v3585 = vsel %vm671, %v3569, 0
      %3587 = vmatpush.bf16.msra.mxu0 0
      %3588 = vmatpush.bf16.msra.mxu0 0
      %3589 = vmatpush.bf16.msra.mxu0 0
      %3590 = vmatpush.bf16.msra.mxu0 0
      %3591 = vmatpush.bf16.msra.mxu0 0
      %3592 = vmatpush.bf16.msra.mxu0 0
      %3593 = vmatpush.bf16.msra.mxu0 0
      %3594 = vmatpush.bf16.msra.mxu0 %v3580
      %3595 = vmatmul.bf16.gmra.mxu0 %v3585
      %v3596 = vpop.f32.mrf.mxu0
      %v3597 = vadd.f32 0.0, %v3596
      %v3598 = vpop.f32.mrf.mxu0
      %v3599 = vadd.f32 0.0, %v3598
      %3600 = vdwg.mxu0
      %3601 = vmatpush.bf16.msra.mxu0 0
      %3602 = vmatpush.bf16.msra.mxu0 0
      %3603 = vmatpush.bf16.msra.mxu0 0
      %3604 = vmatpush.bf16.msra.mxu0 0
      %3605 = vmatpush.bf16.msra.mxu0 0
      %3606 = vmatpush.bf16.msra.mxu0 0
      %3607 = vmatpush.bf16.msra.mxu0 0
      %3608 = vmatpush.bf16.msra.mxu0 %v3581
      %3609 = vmatmul.bf16.gmra.mxu0 %v3585
      %v3610 = vpop.f32.mrf.mxu0
      %v3611 = vadd.f32 0.0, %v3610
      %v3612 = vpop.f32.mrf.mxu0
      %v3613 = vadd.f32 0.0, %v3612
      %3614 = vdwg.mxu0
      %v3615 = vadd.f32 %v3504, %v3597
      %v3616 = vadd.f32 %v3518, %v3611
      %v3617 = vadd.f32 %v3506, %v3599
      %v3618 = vadd.f32 %v3520, %v3613
      %v3619 = vmul.f32 %v3534, %v3402
      %v3620 = vmul.f32 %v3535, %v3406
      %v3621 = vmul.f32 %v3536, %v3404
      %v3622 = vmul.f32 %v3537, %v3402
      %v3623 = vmul.f32 %v3538, %v3406
      %v3624 = vmul.f32 %v3539, %v3404
      %v3625 = vpack.c.bf16 %v3622, %v3619
      %v3626 = vpack.c.bf16 %v3623, %v3620
      %v3627 = vpack.c.bf16 %v3624, %v3621
      %s3628 = scalar_lea.vmem %s10, 24
      %v3629 = vld [vmem:[%s3628] sm:$0xf]
      %v3630 = vld [vmem:[%s3628 + $0x4] sm:$0xf]
      %v3633 = vunpack.c.l.b16 %v3629
      %v3634 = vunpack.c.l.b16 %v3630
      %v3635 = vpack.c.b16 %v3634, %v3633
      %3639 = vrot.lane.b32.xlu0 %v3625, 8
      %v3640 = vpop.permute.xlu0 %3639
      %3641 = vrot.lane.b32.xlu0 %v3626, 8
      %v3642 = vpop.permute.xlu0 %3641
      %3643 = vrot.lane.b32.xlu0 %v3627, 8
      %v3644 = vpop.permute.xlu0 %3643
      %v3645 = vsel %vm3486, %v3640, %v3642
      %v3646 = vsel %vm3486, %v3642, %v3644
      %v3650 = vsel %vm671, %v3635, 0
      %3652 = vmatpush.bf16.msra.mxu0 0
      %3653 = vmatpush.bf16.msra.mxu0 0
      %3654 = vmatpush.bf16.msra.mxu0 0
      %3655 = vmatpush.bf16.msra.mxu0 0
      %3656 = vmatpush.bf16.msra.mxu0 0
      %3657 = vmatpush.bf16.msra.mxu0 0
      %3658 = vmatpush.bf16.msra.mxu0 0
      %3659 = vmatpush.bf16.msra.mxu0 %v3645
      %3660 = vmatmul.bf16.gmra.mxu0 %v3650
      %v3661 = vpop.f32.mrf.mxu0
      %v3662 = vadd.f32 0.0, %v3661
      %v3663 = vpop.f32.mrf.mxu0
      %v3664 = vadd.f32 0.0, %v3663
      %3665 = vdwg.mxu0
      %3666 = vmatpush.bf16.msra.mxu0 0
      %3667 = vmatpush.bf16.msra.mxu0 0
      %3668 = vmatpush.bf16.msra.mxu0 0
      %3669 = vmatpush.bf16.msra.mxu0 0
      %3670 = vmatpush.bf16.msra.mxu0 0
      %3671 = vmatpush.bf16.msra.mxu0 0
      %3672 = vmatpush.bf16.msra.mxu0 0
      %3673 = vmatpush.bf16.msra.mxu0 %v3646
      %3674 = vmatmul.bf16.gmra.mxu0 %v3650
      %v3675 = vpop.f32.mrf.mxu0
      %v3676 = vadd.f32 0.0, %v3675
      %v3677 = vpop.f32.mrf.mxu0
      %v3678 = vadd.f32 0.0, %v3677
      %3679 = vdwg.mxu0
      %v3680 = vadd.f32 %v3615, %v3662
      %v3681 = vadd.f32 %v3616, %v3676
      %v3682 = vadd.f32 %v3617, %v3664
      %v3683 = vadd.f32 %v3618, %v3678
      %v3684 = vld [vmem:[#allocation2 + $0x8] sm:$0xff]
      %v3685 = vld [vmem:[#allocation2 + $0x20] sm:$0xff]
      %s3686 = scalar_lea.vmem %s10, 32
      %v3687 = vld [vmem:[%s3686] sm:$0xf]
      %v3688 = vld [vmem:[%s3686 + $0x4] sm:$0xf]
      %v3691 = vunpack.c.l.b16 %v3687
      %v3692 = vunpack.c.l.b16 %v3688
      %v3693 = vpack.c.b16 %v3692, %v3691
      %v3696 = vunpack.c.l.b16 %v3684
      %v3697 = vunpack.c.h.b16 %v3684
      %v3698 = vunpack.c.l.b16 %v3685
      %v3699 = vunpack.c.h.b16 %v3685
      %v3700 = vpack.c.b16 %v3698, %v3696
      %v3701 = vpack.c.b16 %v3699, %v3697
      %v3705 = vsel %vm671, %v3693, 0
      %3707 = vmatpush.bf16.msra.mxu0 0
      %3708 = vmatpush.bf16.msra.mxu0 0
      %3709 = vmatpush.bf16.msra.mxu0 0
      %3710 = vmatpush.bf16.msra.mxu0 0
      %3711 = vmatpush.bf16.msra.mxu0 0
      %3712 = vmatpush.bf16.msra.mxu0 0
      %3713 = vmatpush.bf16.msra.mxu0 0
      %3714 = vmatpush.bf16.msra.mxu0 %v3700
      %3715 = vmatmul.bf16.gmra.mxu0 %v3705
      %v3716 = vpop.f32.mrf.mxu0
      %v3717 = vadd.f32 0.0, %v3716
      %v3718 = vpop.f32.mrf.mxu0
      %v3719 = vadd.f32 0.0, %v3718
      %3720 = vdwg.mxu0
      %3721 = vmatpush.bf16.msra.mxu0 0
      %3722 = vmatpush.bf16.msra.mxu0 0
      %3723 = vmatpush.bf16.msra.mxu0 0
      %3724 = vmatpush.bf16.msra.mxu0 0
      %3725 = vmatpush.bf16.msra.mxu0 0
      %3726 = vmatpush.bf16.msra.mxu0 0
      %3727 = vmatpush.bf16.msra.mxu0 0
      %3728 = vmatpush.bf16.msra.mxu0 %v3701
      %3729 = vmatmul.bf16.gmra.mxu0 %v3705
      %v3730 = vpop.f32.mrf.mxu0
      %v3731 = vadd.f32 0.0, %v3730
      %v3732 = vpop.f32.mrf.mxu0
      %v3733 = vadd.f32 0.0, %v3732
      %3734 = vdwg.mxu0
      %v3735 = vadd.f32 %v3680, %v3717
      %v3736 = vadd.f32 %v3681, %v3731
      %v3737 = vadd.f32 %v3682, %v3719
      %v3738 = vadd.f32 %v3683, %v3733
      %v3739 = vld [vmem:[#allocation2 + $0x8] sm:$0xff]
      %v3740 = vld [vmem:[#allocation2 + $0x10] sm:$0xf]
      %v3741 = vld [vmem:[#allocation2 + $0x20] sm:$0xff]
      %v3742 = vld [vmem:[#allocation2 + $0x28] sm:$0xf]
      %v3743 = vunpack.c.l.bf16 %v3739
      %v3744 = vunpack.c.h.bf16 %v3739
      %v3745 = vunpack.c.l.bf16 %v3740
      %v3746 = vunpack.c.l.bf16 %v3741
      %v3747 = vunpack.c.h.bf16 %v3741
      %v3748 = vunpack.c.l.bf16 %v3742
      %v3749 = vmul.f32 %v3743, %v3545
      %v3750 = vmul.f32 %v3744, %v3549
      %v3751 = vmul.f32 %v3745, %v3547
      %v3752 = vmul.f32 %v3746, %v3545
      %v3753 = vmul.f32 %v3747, %v3549
      %v3754 = vmul.f32 %v3748, %v3547
      %v3755 = vpack.c.bf16 %v3752, %v3749
      %v3756 = vpack.c.bf16 %v3753, %v3750
      %v3757 = vpack.c.bf16 %v3754, %v3751
      %s3758 = scalar_lea.vmem %s10, 40
      %v3759 = vld [vmem:[%s3758] sm:$0xf]
      %v3760 = vld [vmem:[%s3758 + $0x4] sm:$0xf]
      %v3763 = vunpack.c.l.b16 %v3759
      %v3764 = vunpack.c.l.b16 %v3760
      %v3765 = vpack.c.b16 %v3764, %v3763
      %3769 = vrot.lane.b32.xlu0 %v3755, 120
      %v3770 = vpop.permute.xlu0 %3769
      %3771 = vrot.lane.b32.xlu0 %v3756, 120
      %v3772 = vpop.permute.xlu0 %3771
      %3773 = vrot.lane.b32.xlu0 %v3757, 120
      %v3774 = vpop.permute.xlu0 %3773
      %v3775 = vsel %vm3579, %v3770, %v3772
      %v3776 = vsel %vm3579, %v3772, %v3774
      %v3780 = vsel %vm671, %v3765, 0
      %3782 = vmatpush.bf16.msra.mxu0 0
      %3783 = vmatpush.bf16.msra.mxu0 0
      %3784 = vmatpush.bf16.msra.mxu0 0
      %3785 = vmatpush.bf16.msra.mxu0 0
      %3786 = vmatpush.bf16.msra.mxu0 0
      %3787 = vmatpush.bf16.msra.mxu0 0
      %3788 = vmatpush.bf16.msra.mxu0 0
      %3789 = vmatpush.bf16.msra.mxu0 %v3775
      %3790 = vmatmul.bf16.gmra.mxu0 %v3780
      %v3791 = vpop.f32.mrf.mxu0
      %v3792 = vadd.f32 0.0, %v3791
      %v3793 = vpop.f32.mrf.mxu0
      %v3794 = vadd.f32 0.0, %v3793
      %3795 = vdwg.mxu0
      %3796 = vmatpush.bf16.msra.mxu0 0
      %3797 = vmatpush.bf16.msra.mxu0 0
      %3798 = vmatpush.bf16.msra.mxu0 0
      %3799 = vmatpush.bf16.msra.mxu0 0
      %3800 = vmatpush.bf16.msra.mxu0 0
      %3801 = vmatpush.bf16.msra.mxu0 0
      %3802 = vmatpush.bf16.msra.mxu0 0
      %3803 = vmatpush.bf16.msra.mxu0 %v3776
      %3804 = vmatmul.bf16.gmra.mxu0 %v3780
      %v3805 = vpop.f32.mrf.mxu0
      %v3806 = vadd.f32 0.0, %v3805
      %v3807 = vpop.f32.mrf.mxu0
      %v3808 = vadd.f32 0.0, %v3807
      %3809 = vdwg.mxu0
      %v3810 = vadd.f32 %v3735, %v3792
      %v3811 = vadd.f32 %v3736, %v3806
      %v3812 = vadd.f32 %v3737, %v3794
      %v3813 = vadd.f32 %v3738, %v3808
      %v3814 = vmul.f32 %v3743, %v3402
      %v3815 = vmul.f32 %v3744, %v3406
      %v3816 = vmul.f32 %v3745, %v3404
      %v3817 = vmul.f32 %v3746, %v3402
      %v3818 = vmul.f32 %v3747, %v3406
      %v3819 = vmul.f32 %v3748, %v3404
      %v3820 = vpack.c.bf16 %v3817, %v3814
      %v3821 = vpack.c.bf16 %v3818, %v3815
      %v3822 = vpack.c.bf16 %v3819, %v3816
      %s3823 = scalar_lea.vmem %s10, 48
      %v3824 = vld [vmem:[%s3823] sm:$0xf]
      %v3825 = vld [vmem:[%s3823 + $0x4] sm:$0xf]
      %v3828 = vunpack.c.l.b16 %v3824
      %v3829 = vunpack.c.l.b16 %v3825
      %v3830 = vpack.c.b16 %v3829, %v3828
      %3834 = vrot.lane.b32.xlu0 %v3820, 8
      %v3835 = vpop.permute.xlu0 %3834
      %3836 = vrot.lane.b32.xlu0 %v3821, 8
      %v3837 = vpop.permute.xlu0 %3836
      %3838 = vrot.lane.b32.xlu0 %v3822, 8
      %v3839 = vpop.permute.xlu0 %3838
      %v3840 = vsel %vm3486, %v3835, %v3837
      %v3841 = vsel %vm3486, %v3837, %v3839
      %v3845 = vsel %vm671, %v3830, 0
      %3847 = vmatpush.bf16.msra.mxu0 0
      %3848 = vmatpush.bf16.msra.mxu0 0
      %3849 = vmatpush.bf16.msra.mxu0 0
      %3850 = vmatpush.bf16.msra.mxu0 0
      %3851 = vmatpush.bf16.msra.mxu0 0
      %3852 = vmatpush.bf16.msra.mxu0 0
      %3853 = vmatpush.bf16.msra.mxu0 0
      %3854 = vmatpush.bf16.msra.mxu0 %v3840
      %3855 = vmatmul.bf16.gmra.mxu0 %v3845
      %v3856 = vpop.f32.mrf.mxu0
      %v3857 = vadd.f32 0.0, %v3856
      %v3858 = vpop.f32.mrf.mxu0
      %v3859 = vadd.f32 0.0, %v3858
      %3860 = vdwg.mxu0
      %3861 = vmatpush.bf16.msra.mxu0 0
      %3862 = vmatpush.bf16.msra.mxu0 0
      %3863 = vmatpush.bf16.msra.mxu0 0
      %3864 = vmatpush.bf16.msra.mxu0 0
      %3865 = vmatpush.bf16.msra.mxu0 0
      %3866 = vmatpush.bf16.msra.mxu0 0
      %3867 = vmatpush.bf16.msra.mxu0 0
      %3868 = vmatpush.bf16.msra.mxu0 %v3841
      %3869 = vmatmul.bf16.gmra.mxu0 %v3845
      %v3870 = vpop.f32.mrf.mxu0
      %v3871 = vadd.f32 0.0, %v3870
      %v3872 = vpop.f32.mrf.mxu0
      %v3873 = vadd.f32 0.0, %v3872
      %3874 = vdwg.mxu0
      %v3875 = vadd.f32 %v3810, %v3857
      %v3876 = vadd.f32 %v3811, %v3871
      %v3877 = vadd.f32 %v3812, %v3859
      %v3878 = vadd.f32 %v3813, %v3873
      %v3879 = vld [vmem:[#allocation2 + $0xc] sm:$0xff]
      %v3880 = vld [vmem:[#allocation2 + $0x24] sm:$0xff]
      %s3881 = scalar_lea.vmem %s10, 56
      %v3882 = vld [vmem:[%s3881] sm:$0xf]
      %v3883 = vld [vmem:[%s3881 + $0x4] sm:$0xf]
      %v3886 = vunpack.c.l.b16 %v3882
      %v3887 = vunpack.c.l.b16 %v3883
      %v3888 = vpack.c.b16 %v3887, %v3886
      %v3891 = vunpack.c.l.b16 %v3879
      %v3892 = vunpack.c.h.b16 %v3879
      %v3893 = vunpack.c.l.b16 %v3880
      %v3894 = vunpack.c.h.b16 %v3880
      %v3895 = vpack.c.b16 %v3893, %v3891
      %v3896 = vpack.c.b16 %v3894, %v3892
      %v3900 = vsel %vm671, %v3888, 0
      %3902 = vmatpush.bf16.msra.mxu0 0
      %3903 = vmatpush.bf16.msra.mxu0 0
      %3904 = vmatpush.bf16.msra.mxu0 0
      %3905 = vmatpush.bf16.msra.mxu0 0
      %3906 = vmatpush.bf16.msra.mxu0 0
      %3907 = vmatpush.bf16.msra.mxu0 0
      %3908 = vmatpush.bf16.msra.mxu0 0
      %3909 = vmatpush.bf16.msra.mxu0 %v3895
      %3910 = vmatmul.bf16.gmra.mxu0 %v3900
      %v3911 = vpop.f32.mrf.mxu0
      %v3912 = vadd.f32 0.0, %v3911
      %v3913 = vpop.f32.mrf.mxu0
      %v3914 = vadd.f32 0.0, %v3913
      %3915 = vdwg.mxu0
      %3916 = vmatpush.bf16.msra.mxu0 0
      %3917 = vmatpush.bf16.msra.mxu0 0
      %3918 = vmatpush.bf16.msra.mxu0 0
      %3919 = vmatpush.bf16.msra.mxu0 0
      %3920 = vmatpush.bf16.msra.mxu0 0
      %3921 = vmatpush.bf16.msra.mxu0 0
      %3922 = vmatpush.bf16.msra.mxu0 0
      %3923 = vmatpush.bf16.msra.mxu0 %v3896
      %3924 = vmatmul.bf16.gmra.mxu0 %v3900
      %v3925 = vpop.f32.mrf.mxu0
      %v3926 = vadd.f32 0.0, %v3925
      %v3927 = vpop.f32.mrf.mxu0
      %v3928 = vadd.f32 0.0, %v3927
      %3929 = vdwg.mxu0
      %v3930 = vadd.f32 %v3875, %v3912
      %v3931 = vadd.f32 %v3876, %v3926
      %v3932 = vadd.f32 %v3877, %v3914
      %v3933 = vadd.f32 %v3878, %v3928
      %v3934 = vld [vmem:[#allocation2 + $0xc] sm:$0xff]
      %v3935 = vld [vmem:[#allocation2 + $0x14] sm:$0xf]
      %v3936 = vld [vmem:[#allocation2 + $0x24] sm:$0xff]
      %v3937 = vld [vmem:[#allocation2 + $0x2c] sm:$0xf]
      %v3938 = vunpack.c.l.bf16 %v3934
      %v3939 = vunpack.c.h.bf16 %v3934
      %v3940 = vunpack.c.l.bf16 %v3935
      %v3941 = vunpack.c.l.bf16 %v3936
      %v3942 = vunpack.c.h.bf16 %v3936
      %v3943 = vunpack.c.l.bf16 %v3937
      %v3944 = vmul.f32 %v3938, %v3545
      %v3945 = vmul.f32 %v3939, %v3549
      %v3946 = vmul.f32 %v3940, %v3547
      %v3947 = vmul.f32 %v3941, %v3545
      %v3948 = vmul.f32 %v3942, %v3549
      %v3949 = vmul.f32 %v3943, %v3547
      %v3950 = vpack.c.bf16 %v3947, %v3944
      %v3951 = vpack.c.bf16 %v3948, %v3945
      %v3952 = vpack.c.bf16 %v3949, %v3946
      %s3953 = scalar_lea.vmem %s10, 64
      %v3954 = vld [vmem:[%s3953] sm:$0xf]
      %v3955 = vld [vmem:[%s3953 + $0x4] sm:$0xf]
      %v3958 = vunpack.c.l.b16 %v3954
      %v3959 = vunpack.c.l.b16 %v3955
      %v3960 = vpack.c.b16 %v3959, %v3958
      %3964 = vrot.lane.b32.xlu0 %v3950, 120
      %v3965 = vpop.permute.xlu0 %3964
      %3966 = vrot.lane.b32.xlu0 %v3951, 120
      %v3967 = vpop.permute.xlu0 %3966
      %3968 = vrot.lane.b32.xlu0 %v3952, 120
      %v3969 = vpop.permute.xlu0 %3968
      %v3970 = vsel %vm3579, %v3965, %v3967
      %v3971 = vsel %vm3579, %v3967, %v3969
      %v3975 = vsel %vm671, %v3960, 0
      %3977 = vmatpush.bf16.msra.mxu0 0
      %3978 = vmatpush.bf16.msra.mxu0 0
      %3979 = vmatpush.bf16.msra.mxu0 0
      %3980 = vmatpush.bf16.msra.mxu0 0
      %3981 = vmatpush.bf16.msra.mxu0 0
      %3982 = vmatpush.bf16.msra.mxu0 0
      %3983 = vmatpush.bf16.msra.mxu0 0
      %3984 = vmatpush.bf16.msra.mxu0 %v3970
      %3985 = vmatmul.bf16.gmra.mxu0 %v3975
      %v3986 = vpop.f32.mrf.mxu0
      %v3987 = vadd.f32 0.0, %v3986
      %v3988 = vpop.f32.mrf.mxu0
      %v3989 = vadd.f32 0.0, %v3988
      %3990 = vdwg.mxu0
      %3991 = vmatpush.bf16.msra.mxu0 0
      %3992 = vmatpush.bf16.msra.mxu0 0
      %3993 = vmatpush.bf16.msra.mxu0 0
      %3994 = vmatpush.bf16.msra.mxu0 0
      %3995 = vmatpush.bf16.msra.mxu0 0
      %3996 = vmatpush.bf16.msra.mxu0 0
      %3997 = vmatpush.bf16.msra.mxu0 0
      %3998 = vmatpush.bf16.msra.mxu0 %v3971
      %3999 = vmatmul.bf16.gmra.mxu0 %v3975
      %v4000 = vpop.f32.mrf.mxu0
      %v4001 = vadd.f32 0.0, %v4000
      %v4002 = vpop.f32.mrf.mxu0
      %v4003 = vadd.f32 0.0, %v4002
      %4004 = vdwg.mxu0
      %v4005 = vadd.f32 %v3930, %v3987
      %v4006 = vadd.f32 %v3931, %v4001
      %v4007 = vadd.f32 %v3932, %v3989
      %v4008 = vadd.f32 %v3933, %v4003
      %4010 = vset.pattern.permute.xlu0 0
      %4011 = vperm.xlu0 %4010, %v3369
      %v4012 = vpop.permute.xlu0 %4011
      %4015 = vset.pattern.permute.xlu0 0
      %4016 = vperm.xlu0 %4015, %v3370
      %v4017 = vpop.permute.xlu0 %4016
      %v4019 = vadd.f32 %v4005, %v4012
      %v4020 = vadd.f32 %v4006, %v4012
      %v4021 = vadd.f32 %v4007, %v4017
      %v4022 = vadd.f32 %v4008, %v4017
      %v4023 = vmax.f32 %v4019, 0.0
      %v4024 = vmax.f32 %v4020, 0.0
      %v4025 = vmax.f32 %v4021, 0.0
      %v4026 = vmax.f32 %v4022, 0.0
      %v4027 = vpack.c.bf16 %v4024, %v4023
      %v4028 = vpack.c.bf16 %v4026, %v4025
      %v4029 = vld [vmem:[%s13] sm:$0xff]
      %v4030 = vld [vmem:[%s13 + $0x8] sm:$0xff]
      %4031 = vst [vmem:[#allocation2 + $0x8] sm:$0xff] %v4027
      %4032 = vst [vmem:[#allocation2 + $0x20] sm:$0xff] %v4028
      %4033 = vst [vmem:[#allocation2 + $0x38] sm:$0xff] %v3367
      %4034 = vst [vmem:[#allocation2 + $0x50] sm:$0xff] %v3368
      %v4035 = vld [vmem:[#allocation2 + $0x4] sm:$0xff]
      %v4036 = vld [vmem:[#allocation2 + $0xc] sm:$0xf]
      %v4037 = vld [vmem:[#allocation2 + $0x1c] sm:$0xff]
      %v4038 = vld [vmem:[#allocation2 + $0x24] sm:$0xf]
      %v4039 = vld [vmem:[#allocation2 + $0x34] sm:$0xff]
      %v4040 = vld [vmem:[#allocation2 + $0x3c] sm:$0xf]
      %v4041 = vld [vmem:[#allocation2 + $0x4c] sm:$0xff]
      %v4042 = vld [vmem:[#allocation2 + $0x54] sm:$0xf]
      %v4043 = vld [vmem:[%s1] sm:$0x44]
      %v4045 = vunpack.c.l.b16 %v4043
      %v4046 = vunpack.c.h.b16 %v4043
      %v4047 = vpack.c.b16 %v4045, %v4045
      %v4048 = vpack.c.b16 %v4046, %v4046
      %v4050 = vpack.i.b16 %v4047, %v4047
      %v4052 = vperm.slane %v4050, 2
      %v4054 = vpack.i.b16 %v4048, %v4048
      %v4056 = vperm.slane %v4054, 2
      %v4057 = vunpack.c.l.bf16 %v4035
      %v4058 = vunpack.c.h.bf16 %v4035
      %v4059 = vunpack.c.l.bf16 %v4036
      %v4060 = vunpack.c.l.bf16 %v4037
      %v4061 = vunpack.c.h.bf16 %v4037
      %v4062 = vunpack.c.l.bf16 %v4038
      %v4063 = vunpack.c.l.bf16 %v4039
      %v4064 = vunpack.c.h.bf16 %v4039
      %v4065 = vunpack.c.l.bf16 %v4040
      %v4066 = vunpack.c.l.bf16 %v4041
      %v4067 = vunpack.c.h.bf16 %v4041
      %v4068 = vunpack.c.l.bf16 %v4042
      %v4069 = vunpack.c.l.bf16 %v4052
      %v4070 = vunpack.c.l.bf16 %v4056
      %4073 = vrot.lane.b32.xlu0 %v4069, 60
      %v4074 = vpop.permute.xlu0 %4073
      %4075 = vrot.lane.b32.xlu0 %v4070, 60
      %v4076 = vpop.permute.xlu0 %4075
      %v4077 = vsel %vm2722, %v4074, %v4076
      %v4081 = vmul.f32 %v4057, %v4074
      %v4082 = vmul.f32 %v4058, %v4077
      %v4083 = vmul.f32 %v4059, %v4076
      %v4084 = vmul.f32 %v4060, %v4074
      %v4085 = vmul.f32 %v4061, %v4077
      %v4086 = vmul.f32 %v4062, %v4076
      %v4087 = vmul.f32 %v4063, %v4074
      %v4088 = vmul.f32 %v4064, %v4077
      %v4089 = vmul.f32 %v4065, %v4076
      %v4090 = vmul.f32 %v4066, %v4074
      %v4091 = vmul.f32 %v4067, %v4077
      %v4092 = vmul.f32 %v4068, %v4076
      %v4093 = vpack.c.bf16 %v4084, %v4081
      %v4094 = vpack.c.bf16 %v4085, %v4082
      %v4095 = vpack.c.bf16 %v4086, %v4083
      %v4096 = vpack.c.bf16 %v4090, %v4087
      %v4097 = vpack.c.bf16 %v4091, %v4088
      %v4098 = vpack.c.bf16 %v4092, %v4089
      %v4099 = vld [vmem:[%s12] sm:$0xf]
      %v4100 = vld [vmem:[%s12 + $0x4] sm:$0xf]
      %s4101 = scalar_lea.vmem %s12, 8
      %v4102 = vld [vmem:[%s4101] sm:$0xf]
      %v4103 = vld [vmem:[%s4101 + $0x4] sm:$0xf]
      %v4106 = vunpack.c.l.b16 %v4102
      %v4107 = vunpack.c.l.b16 %v4103
      %v4108 = vpack.c.b16 %v4107, %v4106
      %v4117 = vunpack.c.l.b16 %v4035
      %v4118 = vunpack.c.h.b16 %v4035
      %v4119 = vunpack.c.l.b16 %v4036
      %v4120 = vunpack.c.l.b16 %v4037
      %v4121 = vunpack.c.h.b16 %v4037
      %v4122 = vunpack.c.l.b16 %v4038
      %v4123 = vunpack.c.l.b16 %v4039
      %v4124 = vunpack.c.h.b16 %v4039
      %v4125 = vunpack.c.l.b16 %v4040
      %v4126 = vunpack.c.l.b16 %v4041
      %v4127 = vunpack.c.h.b16 %v4041
      %v4128 = vunpack.c.l.b16 %v4042
      %v4129 = vpack.c.b16 %v4120, %v4117
      %v4130 = vpack.c.b16 %v4121, %v4118
      %v4131 = vpack.c.b16 %v4122, %v4119
      %v4132 = vpack.c.b16 %v4126, %v4123
      %v4133 = vpack.c.b16 %v4127, %v4124
      %v4134 = vpack.c.b16 %v4128, %v4125
      %4135 = vrot.lane.b32.xlu0 %v4129, 64
      %v4136 = vpop.permute.xlu0 %4135
      %4137 = vrot.lane.b32.xlu0 %v4130, 64
      %v4138 = vpop.permute.xlu0 %4137
      %4139 = vrot.lane.b32.xlu0 %v4131, 64
      %v4140 = vpop.permute.xlu0 %4139
      %4141 = vrot.lane.b32.xlu0 %v4132, 64
      %v4142 = vpop.permute.xlu0 %4141
      %4143 = vrot.lane.b32.xlu0 %v4133, 64
      %v4144 = vpop.permute.xlu0 %4143
      %4145 = vrot.lane.b32.xlu0 %v4134, 64
      %v4146 = vpop.permute.xlu0 %4145
      %v4147 = vsel %vm2765, %v4136, %v4138
      %v4148 = vsel %vm2765, %v4138, %v4140
      %v4149 = vsel %vm2765, %v4142, %v4144
      %v4150 = vsel %vm2765, %v4144, %v4146
      %vm4155 = vcmask 261120
      %v4157 = vsel %vm4155, %v4108, 0
      %4159 = vmatpush.bf16.msra.mxu0 0
      %4160 = vmatpush.bf16.msra.mxu0 0
      %4161 = vmatpush.bf16.msra.mxu0 0
      %4162 = vmatpush.bf16.msra.mxu0 0
      %4163 = vmatpush.bf16.msra.mxu0 0
      %4164 = vmatpush.bf16.msra.mxu0 0
      %4165 = vmatpush.bf16.msra.mxu0 %v4149
      %4166 = vmatpush.bf16.msra.mxu0 %v4147
      %4167 = vmatmul.bf16.gmra.mxu0 %v4157
      %v4168 = vpop.f32.mrf.mxu0
      %v4169 = vadd.f32 0.0, %v4168
      %v4170 = vpop.f32.mrf.mxu0
      %v4171 = vadd.f32 0.0, %v4170
      %4172 = vdwg.mxu0
      %4173 = vmatpush.bf16.msra.mxu0 0
      %4174 = vmatpush.bf16.msra.mxu0 0
      %4175 = vmatpush.bf16.msra.mxu0 0
      %4176 = vmatpush.bf16.msra.mxu0 0
      %4177 = vmatpush.bf16.msra.mxu0 0
      %4178 = vmatpush.bf16.msra.mxu0 0
      %4179 = vmatpush.bf16.msra.mxu0 %v4150
      %4180 = vmatpush.bf16.msra.mxu0 %v4148
      %4181 = vmatmul.bf16.gmra.mxu0 %v4157
      %v4182 = vpop.f32.mrf.mxu0
      %v4183 = vadd.f32 0.0, %v4182
      %v4184 = vpop.f32.mrf.mxu0
      %v4185 = vadd.f32 0.0, %v4184
      %4186 = vdwg.mxu0
      %v4189 = vunpack.c.l.b16 %v4099
      %v4190 = vunpack.c.l.b16 %v4100
      %v4191 = vpack.c.b16 %v4190, %v4189
      %4198 = vrot.lane.b32.xlu0 %v4093, 68
      %v4199 = vpop.permute.xlu0 %4198
      %4200 = vrot.lane.b32.xlu0 %v4094, 68
      %v4201 = vpop.permute.xlu0 %4200
      %4202 = vrot.lane.b32.xlu0 %v4095, 68
      %v4203 = vpop.permute.xlu0 %4202
      %4204 = vrot.lane.b32.xlu0 %v4096, 68
      %v4205 = vpop.permute.xlu0 %4204
      %4206 = vrot.lane.b32.xlu0 %v4097, 68
      %v4207 = vpop.permute.xlu0 %4206
      %4208 = vrot.lane.b32.xlu0 %v4098, 68
      %v4209 = vpop.permute.xlu0 %4208
      %v4210 = vsel %vm2815, %v4199, %v4201
      %v4211 = vsel %vm2815, %v4201, %v4203
      %v4212 = vsel %vm2815, %v4205, %v4207
      %v4213 = vsel %vm2815, %v4207, %v4209
      %v4219 = vsel %vm4155, %v4191, 0
      %4221 = vmatpush.bf16.msra.mxu0 0
      %4222 = vmatpush.bf16.msra.mxu0 0
      %4223 = vmatpush.bf16.msra.mxu0 0
      %4224 = vmatpush.bf16.msra.mxu0 0
      %4225 = vmatpush.bf16.msra.mxu0 0
      %4226 = vmatpush.bf16.msra.mxu0 0
      %4227 = vmatpush.bf16.msra.mxu0 %v4212
      %4228 = vmatpush.bf16.msra.mxu0 %v4210
      %4229 = vmatmul.bf16.gmra.mxu0 %v4219
      %v4230 = vpop.f32.mrf.mxu0
      %v4231 = vadd.f32 %v4169, %v4230
      %v4232 = vpop.f32.mrf.mxu0
      %v4233 = vadd.f32 %v4171, %v4232
      %4234 = vdwg.mxu0
      %4235 = vmatpush.bf16.msra.mxu0 0
      %4236 = vmatpush.bf16.msra.mxu0 0
      %4237 = vmatpush.bf16.msra.mxu0 0
      %4238 = vmatpush.bf16.msra.mxu0 0
      %4239 = vmatpush.bf16.msra.mxu0 0
      %4240 = vmatpush.bf16.msra.mxu0 0
      %4241 = vmatpush.bf16.msra.mxu0 %v4213
      %4242 = vmatpush.bf16.msra.mxu0 %v4211
      %4243 = vmatmul.bf16.gmra.mxu0 %v4219
      %v4244 = vpop.f32.mrf.mxu0
      %v4245 = vadd.f32 %v4183, %v4244
      %v4246 = vpop.f32.mrf.mxu0
      %v4247 = vadd.f32 %v4185, %v4246
      %4248 = vdwg.mxu0
      %v4249 = vshrl.u32 %v4047, 16
      %v4250 = vpack.i.b16 %v4249, %v4249
      %v4252 = vperm.slane %v4250, 2
      %v4253 = vshrl.u32 %v4048, 16
      %v4254 = vpack.i.b16 %v4253, %v4253
      %v4256 = vperm.slane %v4254, 2
      %v4257 = vunpack.c.l.bf16 %v4252
      %v4258 = vunpack.c.l.bf16 %v4256
      %4261 = vrot.lane.b32.xlu0 %v4257, 68
      %v4262 = vpop.permute.xlu0 %4261
      %4263 = vrot.lane.b32.xlu0 %v4258, 68
      %v4264 = vpop.permute.xlu0 %4263
      %v4265 = vsel %vm2867, %v4262, %v4264
      %v4269 = vmul.f32 %v4057, %v4262
      %v4270 = vmul.f32 %v4058, %v4265
      %v4271 = vmul.f32 %v4059, %v4264
      %v4272 = vmul.f32 %v4060, %v4262
      %v4273 = vmul.f32 %v4061, %v4265
      %v4274 = vmul.f32 %v4062, %v4264
      %v4275 = vmul.f32 %v4063, %v4262
      %v4276 = vmul.f32 %v4064, %v4265
      %v4277 = vmul.f32 %v4065, %v4264
      %v4278 = vmul.f32 %v4066, %v4262
      %v4279 = vmul.f32 %v4067, %v4265
      %v4280 = vmul.f32 %v4068, %v4264
      %v4281 = vpack.c.bf16 %v4272, %v4269
      %v4282 = vpack.c.bf16 %v4273, %v4270
      %v4283 = vpack.c.bf16 %v4274, %v4271
      %v4284 = vpack.c.bf16 %v4278, %v4275
      %v4285 = vpack.c.bf16 %v4279, %v4276
      %v4286 = vpack.c.bf16 %v4280, %v4277
      %s4287 = scalar_lea.vmem %s12, 16
      %v4288 = vld [vmem:[%s4287] sm:$0xf]
      %v4289 = vld [vmem:[%s4287 + $0x4] sm:$0xf]
      %v4292 = vunpack.c.l.b16 %v4288
      %v4293 = vunpack.c.l.b16 %v4289
      %v4294 = vpack.c.b16 %v4293, %v4292
      %4301 = vrot.lane.b32.xlu0 %v4281, 60
      %v4302 = vpop.permute.xlu0 %4301
      %4303 = vrot.lane.b32.xlu0 %v4282, 60
      %v4304 = vpop.permute.xlu0 %4303
      %4305 = vrot.lane.b32.xlu0 %v4283, 60
      %v4306 = vpop.permute.xlu0 %4305
      %4307 = vrot.lane.b32.xlu0 %v4284, 60
      %v4308 = vpop.permute.xlu0 %4307
      %4309 = vrot.lane.b32.xlu0 %v4285, 60
      %v4310 = vpop.permute.xlu0 %4309
      %4311 = vrot.lane.b32.xlu0 %v4286, 60
      %v4312 = vpop.permute.xlu0 %4311
      %v4313 = vsel %vm2898, %v4302, %v4304
      %v4314 = vsel %vm2898, %v4304, %v4306
      %v4315 = vsel %vm2898, %v4308, %v4310
      %v4316 = vsel %vm2898, %v4310, %v4312
      %v4322 = vsel %vm4155, %v4294, 0
      %4324 = vmatpush.bf16.msra.mxu0 0
      %4325 = vmatpush.bf16.msra.mxu0 0
      %4326 = vmatpush.bf16.msra.mxu0 0
      %4327 = vmatpush.bf16.msra.mxu0 0
      %4328 = vmatpush.bf16.msra.mxu0 0
      %4329 = vmatpush.bf16.msra.mxu0 0
      %4330 = vmatpush.bf16.msra.mxu0 %v4315
      %4331 = vmatpush.bf16.msra.mxu0 %v4313
      %4332 = vmatmul.bf16.gmra.mxu0 %v4322
      %v4333 = vpop.f32.mrf.mxu0
      %v4334 = vadd.f32 0.0, %v4333
      %v4335 = vpop.f32.mrf.mxu0
      %v4336 = vadd.f32 0.0, %v4335
      %4337 = vdwg.mxu0
      %4338 = vmatpush.bf16.msra.mxu0 0
      %4339 = vmatpush.bf16.msra.mxu0 0
      %4340 = vmatpush.bf16.msra.mxu0 0
      %4341 = vmatpush.bf16.msra.mxu0 0
      %4342 = vmatpush.bf16.msra.mxu0 0
      %4343 = vmatpush.bf16.msra.mxu0 0
      %4344 = vmatpush.bf16.msra.mxu0 %v4316
      %4345 = vmatpush.bf16.msra.mxu0 %v4314
      %4346 = vmatmul.bf16.gmra.mxu0 %v4322
      %v4347 = vpop.f32.mrf.mxu0
      %v4348 = vadd.f32 0.0, %v4347
      %v4349 = vpop.f32.mrf.mxu0
      %v4350 = vadd.f32 0.0, %v4349
      %4351 = vdwg.mxu0
      %v4352 = vadd.f32 %v4231, %v4334
      %v4353 = vadd.f32 %v4245, %v4348
      %v4354 = vadd.f32 %v4233, %v4336
      %v4355 = vadd.f32 %v4247, %v4350
      %4356 = vrot.lane.b32.xlu0 %v4069, 124
      %v4357 = vpop.permute.xlu0 %4356
      %4358 = vrot.lane.b32.xlu0 %v4070, 124
      %v4359 = vpop.permute.xlu0 %4358
      %v4360 = vsel %vm2942, %v4357, %v4359
      %v4364 = vmul.f32 %v4057, %v4357
      %v4365 = vmul.f32 %v4058, %v4360
      %v4366 = vmul.f32 %v4059, %v4359
      %v4367 = vmul.f32 %v4060, %v4357
      %v4368 = vmul.f32 %v4061, %v4360
      %v4369 = vmul.f32 %v4062, %v4359
      %v4370 = vmul.f32 %v4063, %v4357
      %v4371 = vmul.f32 %v4064, %v4360
      %v4372 = vmul.f32 %v4065, %v4359
      %v4373 = vmul.f32 %v4066, %v4357
      %v4374 = vmul.f32 %v4067, %v4360
      %v4375 = vmul.f32 %v4068, %v4359
      %v4376 = vpack.c.bf16 %v4367, %v4364
      %v4377 = vpack.c.bf16 %v4368, %v4365
      %v4378 = vpack.c.bf16 %v4369, %v4366
      %v4379 = vpack.c.bf16 %v4373, %v4370
      %v4380 = vpack.c.bf16 %v4374, %v4371
      %v4381 = vpack.c.bf16 %v4375, %v4372
      %s4382 = scalar_lea.vmem %s12, 24
      %v4383 = vld [vmem:[%s4382] sm:$0xf]
      %v4384 = vld [vmem:[%s4382 + $0x4] sm:$0xf]
      %v4387 = vunpack.c.l.b16 %v4383
      %v4388 = vunpack.c.l.b16 %v4384
      %v4389 = vpack.c.b16 %v4388, %v4387
      %4396 = vrot.lane.b32.xlu0 %v4376, 4
      %v4397 = vpop.permute.xlu0 %4396
      %4398 = vrot.lane.b32.xlu0 %v4377, 4
      %v4399 = vpop.permute.xlu0 %4398
      %4400 = vrot.lane.b32.xlu0 %v4378, 4
      %v4401 = vpop.permute.xlu0 %4400
      %4402 = vrot.lane.b32.xlu0 %v4379, 4
      %v4403 = vpop.permute.xlu0 %4402
      %4404 = vrot.lane.b32.xlu0 %v4380, 4
      %v4405 = vpop.permute.xlu0 %4404
      %4406 = vrot.lane.b32.xlu0 %v4381, 4
      %v4407 = vpop.permute.xlu0 %4406
      %v4408 = vsel %vm2973, %v4397, %v4399
      %v4409 = vsel %vm2973, %v4399, %v4401
      %v4410 = vsel %vm2973, %v4403, %v4405
      %v4411 = vsel %vm2973, %v4405, %v4407
      %v4417 = vsel %vm4155, %v4389, 0
      %4419 = vmatpush.bf16.msra.mxu0 0
      %4420 = vmatpush.bf16.msra.mxu0 0
      %4421 = vmatpush.bf16.msra.mxu0 0
      %4422 = vmatpush.bf16.msra.mxu0 0
      %4423 = vmatpush.bf16.msra.mxu0 0
      %4424 = vmatpush.bf16.msra.mxu0 0
      %4425 = vmatpush.bf16.msra.mxu0 %v4410
      %4426 = vmatpush.bf16.msra.mxu0 %v4408
      %4427 = vmatmul.bf16.gmra.mxu0 %v4417
      %v4428 = vpop.f32.mrf.mxu0
      %v4429 = vadd.f32 0.0, %v4428
      %v4430 = vpop.f32.mrf.mxu0
      %v4431 = vadd.f32 0.0, %v4430
      %4432 = vdwg.mxu0
      %4433 = vmatpush.bf16.msra.mxu0 0
      %4434 = vmatpush.bf16.msra.mxu0 0
      %4435 = vmatpush.bf16.msra.mxu0 0
      %4436 = vmatpush.bf16.msra.mxu0 0
      %4437 = vmatpush.bf16.msra.mxu0 0
      %4438 = vmatpush.bf16.msra.mxu0 0
      %4439 = vmatpush.bf16.msra.mxu0 %v4411
      %4440 = vmatpush.bf16.msra.mxu0 %v4409
      %4441 = vmatmul.bf16.gmra.mxu0 %v4417
      %v4442 = vpop.f32.mrf.mxu0
      %v4443 = vadd.f32 0.0, %v4442
      %v4444 = vpop.f32.mrf.mxu0
      %v4445 = vadd.f32 0.0, %v4444
      %4446 = vdwg.mxu0
      %v4447 = vadd.f32 %v4352, %v4429
      %v4448 = vadd.f32 %v4353, %v4443
      %v4449 = vadd.f32 %v4354, %v4431
      %v4450 = vadd.f32 %v4355, %v4445
      %v4451 = vld [vmem:[#allocation2 + $0x8] sm:$0xff]
      %v4452 = vld [vmem:[#allocation2 + $0x20] sm:$0xff]
      %v4453 = vld [vmem:[#allocation2 + $0x38] sm:$0xff]
      %v4454 = vld [vmem:[#allocation2 + $0x50] sm:$0xff]
      %s4455 = scalar_lea.vmem %s12, 32
      %v4456 = vld [vmem:[%s4455] sm:$0xf]
      %v4457 = vld [vmem:[%s4455 + $0x4] sm:$0xf]
      %v4460 = vunpack.c.l.b16 %v4456
      %v4461 = vunpack.c.l.b16 %v4457
      %v4462 = vpack.c.b16 %v4461, %v4460
      %v4467 = vunpack.c.l.b16 %v4451
      %v4468 = vunpack.c.h.b16 %v4451
      %v4469 = vunpack.c.l.b16 %v4452
      %v4470 = vunpack.c.h.b16 %v4452
      %v4471 = vunpack.c.l.b16 %v4453
      %v4472 = vunpack.c.h.b16 %v4453
      %v4473 = vunpack.c.l.b16 %v4454
      %v4474 = vunpack.c.h.b16 %v4454
      %v4475 = vpack.c.b16 %v4469, %v4467
      %v4476 = vpack.c.b16 %v4470, %v4468
      %v4477 = vpack.c.b16 %v4473, %v4471
      %v4478 = vpack.c.b16 %v4474, %v4472
      %v4484 = vsel %vm4155, %v4462, 0
      %4486 = vmatpush.bf16.msra.mxu0 0
      %4487 = vmatpush.bf16.msra.mxu0 0
      %4488 = vmatpush.bf16.msra.mxu0 0
      %4489 = vmatpush.bf16.msra.mxu0 0
      %4490 = vmatpush.bf16.msra.mxu0 0
      %4491 = vmatpush.bf16.msra.mxu0 0
      %4492 = vmatpush.bf16.msra.mxu0 %v4477
      %4493 = vmatpush.bf16.msra.mxu0 %v4475
      %4494 = vmatmul.bf16.gmra.mxu0 %v4484
      %v4495 = vpop.f32.mrf.mxu0
      %v4496 = vadd.f32 0.0, %v4495
      %v4497 = vpop.f32.mrf.mxu0
      %v4498 = vadd.f32 0.0, %v4497
      %4499 = vdwg.mxu0
      %4500 = vmatpush.bf16.msra.mxu0 0
      %4501 = vmatpush.bf16.msra.mxu0 0
      %4502 = vmatpush.bf16.msra.mxu0 0
      %4503 = vmatpush.bf16.msra.mxu0 0
      %4504 = vmatpush.bf16.msra.mxu0 0
      %4505 = vmatpush.bf16.msra.mxu0 0
      %4506 = vmatpush.bf16.msra.mxu0 %v4478
      %4507 = vmatpush.bf16.msra.mxu0 %v4476
      %4508 = vmatmul.bf16.gmra.mxu0 %v4484
      %v4509 = vpop.f32.mrf.mxu0
      %v4510 = vadd.f32 0.0, %v4509
      %v4511 = vpop.f32.mrf.mxu0
      %v4512 = vadd.f32 0.0, %v4511
      %4513 = vdwg.mxu0
      %v4514 = vadd.f32 %v4447, %v4496
      %v4515 = vadd.f32 %v4448, %v4510
      %v4516 = vadd.f32 %v4449, %v4498
      %v4517 = vadd.f32 %v4450, %v4512
      %v4518 = vld [vmem:[#allocation2 + $0x8] sm:$0xff]
      %v4519 = vld [vmem:[#allocation2 + $0x10] sm:$0xf]
      %v4520 = vld [vmem:[#allocation2 + $0x20] sm:$0xff]
      %v4521 = vld [vmem:[#allocation2 + $0x28] sm:$0xf]
      %v4522 = vld [vmem:[#allocation2 + $0x38] sm:$0xff]
      %v4523 = vld [vmem:[#allocation2 + $0x40] sm:$0xf]
      %v4524 = vld [vmem:[#allocation2 + $0x50] sm:$0xff]
      %v4525 = vld [vmem:[#allocation2 + $0x58] sm:$0xf]
      %v4526 = vunpack.c.l.bf16 %v4518
      %v4527 = vunpack.c.h.bf16 %v4518
      %v4528 = vunpack.c.l.bf16 %v4519
      %v4529 = vunpack.c.l.bf16 %v4520
      %v4530 = vunpack.c.h.bf16 %v4520
      %v4531 = vunpack.c.l.bf16 %v4521
      %v4532 = vunpack.c.l.bf16 %v4522
      %v4533 = vunpack.c.h.bf16 %v4522
      %v4534 = vunpack.c.l.bf16 %v4523
      %v4535 = vunpack.c.l.bf16 %v4524
      %v4536 = vunpack.c.h.bf16 %v4524
      %v4537 = vunpack.c.l.bf16 %v4525
      %4538 = vrot.lane.b32.xlu0 %v4257, 4
      %v4539 = vpop.permute.xlu0 %4538
      %4540 = vrot.lane.b32.xlu0 %v4258, 4
      %v4541 = vpop.permute.xlu0 %4540
      %v4542 = vsel %vm3082, %v4539, %v4541
      %v4546 = vmul.f32 %v4526, %v4539
      %v4547 = vmul.f32 %v4527, %v4542
      %v4548 = vmul.f32 %v4528, %v4541
      %v4549 = vmul.f32 %v4529, %v4539
      %v4550 = vmul.f32 %v4530, %v4542
      %v4551 = vmul.f32 %v4531, %v4541
      %v4552 = vmul.f32 %v4532, %v4539
      %v4553 = vmul.f32 %v4533, %v4542
      %v4554 = vmul.f32 %v4534, %v4541
      %v4555 = vmul.f32 %v4535, %v4539
      %v4556 = vmul.f32 %v4536, %v4542
      %v4557 = vmul.f32 %v4537, %v4541
      %v4558 = vpack.c.bf16 %v4549, %v4546
      %v4559 = vpack.c.bf16 %v4550, %v4547
      %v4560 = vpack.c.bf16 %v4551, %v4548
      %v4561 = vpack.c.bf16 %v4555, %v4552
      %v4562 = vpack.c.bf16 %v4556, %v4553
      %v4563 = vpack.c.bf16 %v4557, %v4554
      %s4564 = scalar_lea.vmem %s12, 40
      %v4565 = vld [vmem:[%s4564] sm:$0xf]
      %v4566 = vld [vmem:[%s4564 + $0x4] sm:$0xf]
      %v4569 = vunpack.c.l.b16 %v4565
      %v4570 = vunpack.c.l.b16 %v4566
      %v4571 = vpack.c.b16 %v4570, %v4569
      %4578 = vrot.lane.b32.xlu0 %v4558, 124
      %v4579 = vpop.permute.xlu0 %4578
      %4580 = vrot.lane.b32.xlu0 %v4559, 124
      %v4581 = vpop.permute.xlu0 %4580
      %4582 = vrot.lane.b32.xlu0 %v4560, 124
      %v4583 = vpop.permute.xlu0 %4582
      %4584 = vrot.lane.b32.xlu0 %v4561, 124
      %v4585 = vpop.permute.xlu0 %4584
      %4586 = vrot.lane.b32.xlu0 %v4562, 124
      %v4587 = vpop.permute.xlu0 %4586
      %4588 = vrot.lane.b32.xlu0 %v4563, 124
      %v4589 = vpop.permute.xlu0 %4588
      %v4590 = vsel %vm3113, %v4579, %v4581
      %v4591 = vsel %vm3113, %v4581, %v4583
      %v4592 = vsel %vm3113, %v4585, %v4587
      %v4593 = vsel %vm3113, %v4587, %v4589
      %v4599 = vsel %vm4155, %v4571, 0
      %4601 = vmatpush.bf16.msra.mxu0 0
      %4602 = vmatpush.bf16.msra.mxu0 0
      %4603 = vmatpush.bf16.msra.mxu0 0
      %4604 = vmatpush.bf16.msra.mxu0 0
      %4605 = vmatpush.bf16.msra.mxu0 0
      %4606 = vmatpush.bf16.msra.mxu0 0
      %4607 = vmatpush.bf16.msra.mxu0 %v4592
      %4608 = vmatpush.bf16.msra.mxu0 %v4590
      %4609 = vmatmul.bf16.gmra.mxu0 %v4599
      %v4610 = vpop.f32.mrf.mxu0
      %v4611 = vadd.f32 0.0, %v4610
      %v4612 = vpop.f32.mrf.mxu0
      %v4613 = vadd.f32 0.0, %v4612
      %4614 = vdwg.mxu0
      %4615 = vmatpush.bf16.msra.mxu0 0
      %4616 = vmatpush.bf16.msra.mxu0 0
      %4617 = vmatpush.bf16.msra.mxu0 0
      %4618 = vmatpush.bf16.msra.mxu0 0
      %4619 = vmatpush.bf16.msra.mxu0 0
      %4620 = vmatpush.bf16.msra.mxu0 0
      %4621 = vmatpush.bf16.msra.mxu0 %v4593
      %4622 = vmatpush.bf16.msra.mxu0 %v4591
      %4623 = vmatmul.bf16.gmra.mxu0 %v4599
      %v4624 = vpop.f32.mrf.mxu0
      %v4625 = vadd.f32 0.0, %v4624
      %v4626 = vpop.f32.mrf.mxu0
      %v4627 = vadd.f32 0.0, %v4626
      %4628 = vdwg.mxu0
      %v4629 = vadd.f32 %v4514, %v4611
      %v4630 = vadd.f32 %v4515, %v4625
      %v4631 = vadd.f32 %v4516, %v4613
      %v4632 = vadd.f32 %v4517, %v4627
      %v4633 = vmul.f32 %v4526, %v4074
      %v4634 = vmul.f32 %v4527, %v4077
      %v4635 = vmul.f32 %v4528, %v4076
      %v4636 = vmul.f32 %v4529, %v4074
      %v4637 = vmul.f32 %v4530, %v4077
      %v4638 = vmul.f32 %v4531, %v4076
      %v4639 = vmul.f32 %v4532, %v4074
      %v4640 = vmul.f32 %v4533, %v4077
      %v4641 = vmul.f32 %v4534, %v4076
      %v4642 = vmul.f32 %v4535, %v4074
      %v4643 = vmul.f32 %v4536, %v4077
      %v4644 = vmul.f32 %v4537, %v4076
      %v4645 = vpack.c.bf16 %v4636, %v4633
      %v4646 = vpack.c.bf16 %v4637, %v4634
      %v4647 = vpack.c.bf16 %v4638, %v4635
      %v4648 = vpack.c.bf16 %v4642, %v4639
      %v4649 = vpack.c.bf16 %v4643, %v4640
      %v4650 = vpack.c.bf16 %v4644, %v4641
      %s4651 = scalar_lea.vmem %s12, 48
      %v4652 = vld [vmem:[%s4651] sm:$0xf]
      %v4653 = vld [vmem:[%s4651 + $0x4] sm:$0xf]
      %v4656 = vunpack.c.l.b16 %v4652
      %v4657 = vunpack.c.l.b16 %v4653
      %v4658 = vpack.c.b16 %v4657, %v4656
      %4665 = vrot.lane.b32.xlu0 %v4645, 68
      %v4666 = vpop.permute.xlu0 %4665
      %4667 = vrot.lane.b32.xlu0 %v4646, 68
      %v4668 = vpop.permute.xlu0 %4667
      %4669 = vrot.lane.b32.xlu0 %v4647, 68
      %v4670 = vpop.permute.xlu0 %4669
      %4671 = vrot.lane.b32.xlu0 %v4648, 68
      %v4672 = vpop.permute.xlu0 %4671
      %4673 = vrot.lane.b32.xlu0 %v4649, 68
      %v4674 = vpop.permute.xlu0 %4673
      %4675 = vrot.lane.b32.xlu0 %v4650, 68
      %v4676 = vpop.permute.xlu0 %4675
      %v4677 = vsel %vm2815, %v4666, %v4668
      %v4678 = vsel %vm2815, %v4668, %v4670
      %v4679 = vsel %vm2815, %v4672, %v4674
      %v4680 = vsel %vm2815, %v4674, %v4676
      %v4686 = vsel %vm4155, %v4658, 0
      %4688 = vmatpush.bf16.msra.mxu0 0
      %4689 = vmatpush.bf16.msra.mxu0 0
      %4690 = vmatpush.bf16.msra.mxu0 0
      %4691 = vmatpush.bf16.msra.mxu0 0
      %4692 = vmatpush.bf16.msra.mxu0 0
      %4693 = vmatpush.bf16.msra.mxu0 0
      %4694 = vmatpush.bf16.msra.mxu0 %v4679
      %4695 = vmatpush.bf16.msra.mxu0 %v4677
      %4696 = vmatmul.bf16.gmra.mxu0 %v4686
      %v4697 = vpop.f32.mrf.mxu0
      %v4698 = vadd.f32 0.0, %v4697
      %v4699 = vpop.f32.mrf.mxu0
      %v4700 = vadd.f32 0.0, %v4699
      %4701 = vdwg.mxu0
      %4702 = vmatpush.bf16.msra.mxu0 0
      %4703 = vmatpush.bf16.msra.mxu0 0
      %4704 = vmatpush.bf16.msra.mxu0 0
      %4705 = vmatpush.bf16.msra.mxu0 0
      %4706 = vmatpush.bf16.msra.mxu0 0
      %4707 = vmatpush.bf16.msra.mxu0 0
      %4708 = vmatpush.bf16.msra.mxu0 %v4680
      %4709 = vmatpush.bf16.msra.mxu0 %v4678
      %4710 = vmatmul.bf16.gmra.mxu0 %v4686
      %v4711 = vpop.f32.mrf.mxu0
      %v4712 = vadd.f32 0.0, %v4711
      %v4713 = vpop.f32.mrf.mxu0
      %v4714 = vadd.f32 0.0, %v4713
      %4715 = vdwg.mxu0
      %v4716 = vadd.f32 %v4629, %v4698
      %v4717 = vadd.f32 %v4630, %v4712
      %v4718 = vadd.f32 %v4631, %v4700
      %v4719 = vadd.f32 %v4632, %v4714
      %s4720 = scalar_lea.vmem %s12, 56
      %v4721 = vld [vmem:[%s4720] sm:$0xf]
      %v4722 = vld [vmem:[%s4720 + $0x4] sm:$0xf]
      %v4725 = vunpack.c.l.b16 %v4721
      %v4726 = vunpack.c.l.b16 %v4722
      %v4727 = vpack.c.b16 %v4726, %v4725
      %v4736 = vunpack.c.l.b16 %v4518
      %v4737 = vunpack.c.h.b16 %v4518
      %v4738 = vunpack.c.l.b16 %v4519
      %v4739 = vunpack.c.l.b16 %v4520
      %v4740 = vunpack.c.h.b16 %v4520
      %v4741 = vunpack.c.l.b16 %v4521
      %v4742 = vunpack.c.l.b16 %v4522
      %v4743 = vunpack.c.h.b16 %v4522
      %v4744 = vunpack.c.l.b16 %v4523
      %v4745 = vunpack.c.l.b16 %v4524
      %v4746 = vunpack.c.h.b16 %v4524
      %v4747 = vunpack.c.l.b16 %v4525
      %v4748 = vpack.c.b16 %v4739, %v4736
      %v4749 = vpack.c.b16 %v4740, %v4737
      %v4750 = vpack.c.b16 %v4741, %v4738
      %v4751 = vpack.c.b16 %v4745, %v4742
      %v4752 = vpack.c.b16 %v4746, %v4743
      %v4753 = vpack.c.b16 %v4747, %v4744
      %4754 = vrot.lane.b32.xlu0 %v4748, 64
      %v4755 = vpop.permute.xlu0 %4754
      %4756 = vrot.lane.b32.xlu0 %v4749, 64
      %v4757 = vpop.permute.xlu0 %4756
      %4758 = vrot.lane.b32.xlu0 %v4750, 64
      %v4759 = vpop.permute.xlu0 %4758
      %4760 = vrot.lane.b32.xlu0 %v4751, 64
      %v4761 = vpop.permute.xlu0 %4760
      %4762 = vrot.lane.b32.xlu0 %v4752, 64
      %v4763 = vpop.permute.xlu0 %4762
      %4764 = vrot.lane.b32.xlu0 %v4753, 64
      %v4765 = vpop.permute.xlu0 %4764
      %v4766 = vsel %vm2765, %v4755, %v4757
      %v4767 = vsel %vm2765, %v4757, %v4759
      %v4768 = vsel %vm2765, %v4761, %v4763
      %v4769 = vsel %vm2765, %v4763, %v4765
      %v4775 = vsel %vm4155, %v4727, 0
      %4777 = vmatpush.bf16.msra.mxu0 0
      %4778 = vmatpush.bf16.msra.mxu0 0
      %4779 = vmatpush.bf16.msra.mxu0 0
      %4780 = vmatpush.bf16.msra.mxu0 0
      %4781 = vmatpush.bf16.msra.mxu0 0
      %4782 = vmatpush.bf16.msra.mxu0 0
      %4783 = vmatpush.bf16.msra.mxu0 %v4768
      %4784 = vmatpush.bf16.msra.mxu0 %v4766
      %4785 = vmatmul.bf16.gmra.mxu0 %v4775
      %v4786 = vpop.f32.mrf.mxu0
      %v4787 = vadd.f32 0.0, %v4786
      %v4788 = vpop.f32.mrf.mxu0
      %v4789 = vadd.f32 0.0, %v4788
      %4790 = vdwg.mxu0
      %4791 = vmatpush.bf16.msra.mxu0 0
      %4792 = vmatpush.bf16.msra.mxu0 0
      %4793 = vmatpush.bf16.msra.mxu0 0
      %4794 = vmatpush.bf16.msra.mxu0 0
      %4795 = vmatpush.bf16.msra.mxu0 0
      %4796 = vmatpush.bf16.msra.mxu0 0
      %4797 = vmatpush.bf16.msra.mxu0 %v4769
      %4798 = vmatpush.bf16.msra.mxu0 %v4767
      %4799 = vmatmul.bf16.gmra.mxu0 %v4775
      %v4800 = vpop.f32.mrf.mxu0
      %v4801 = vadd.f32 0.0, %v4800
      %v4802 = vpop.f32.mrf.mxu0
      %v4803 = vadd.f32 0.0, %v4802
      %4804 = vdwg.mxu0
      %v4805 = vadd.f32 %v4716, %v4787
      %v4806 = vadd.f32 %v4717, %v4801
      %v4807 = vadd.f32 %v4718, %v4789
      %v4808 = vadd.f32 %v4719, %v4803
      %v4809 = vmul.f32 %v4526, %v4262
      %v4810 = vmul.f32 %v4527, %v4265
      %v4811 = vmul.f32 %v4528, %v4264
      %v4812 = vmul.f32 %v4529, %v4262
      %v4813 = vmul.f32 %v4530, %v4265
      %v4814 = vmul.f32 %v4531, %v4264
      %v4815 = vmul.f32 %v4532, %v4262
      %v4816 = vmul.f32 %v4533, %v4265
      %v4817 = vmul.f32 %v4534, %v4264
      %v4818 = vmul.f32 %v4535, %v4262
      %v4819 = vmul.f32 %v4536, %v4265
      %v4820 = vmul.f32 %v4537, %v4264
      %v4821 = vpack.c.bf16 %v4812, %v4809
      %v4822 = vpack.c.bf16 %v4813, %v4810
      %v4823 = vpack.c.bf16 %v4814, %v4811
      %v4824 = vpack.c.bf16 %v4818, %v4815
      %v4825 = vpack.c.bf16 %v4819, %v4816
      %v4826 = vpack.c.bf16 %v4820, %v4817
      %s4827 = scalar_lea.vmem %s12, 64
      %v4828 = vld [vmem:[%s4827] sm:$0xf]
      %v4829 = vld [vmem:[%s4827 + $0x4] sm:$0xf]
      %v4832 = vunpack.c.l.b16 %v4828
      %v4833 = vunpack.c.l.b16 %v4829
      %v4834 = vpack.c.b16 %v4833, %v4832
      %4841 = vrot.lane.b32.xlu0 %v4821, 60
      %v4842 = vpop.permute.xlu0 %4841
      %4843 = vrot.lane.b32.xlu0 %v4822, 60
      %v4844 = vpop.permute.xlu0 %4843
      %4845 = vrot.lane.b32.xlu0 %v4823, 60
      %v4846 = vpop.permute.xlu0 %4845
      %4847 = vrot.lane.b32.xlu0 %v4824, 60
      %v4848 = vpop.permute.xlu0 %4847
      %4849 = vrot.lane.b32.xlu0 %v4825, 60
      %v4850 = vpop.permute.xlu0 %4849
      %4851 = vrot.lane.b32.xlu0 %v4826, 60
      %v4852 = vpop.permute.xlu0 %4851
      %v4853 = vsel %vm2898, %v4842, %v4844
      %v4854 = vsel %vm2898, %v4844, %v4846
      %v4855 = vsel %vm2898, %v4848, %v4850
      %v4856 = vsel %vm2898, %v4850, %v4852
      %v4862 = vsel %vm4155, %v4834, 0
      %4864 = vmatpush.bf16.msra.mxu0 0
      %4865 = vmatpush.bf16.msra.mxu0 0
      %4866 = vmatpush.bf16.msra.mxu0 0
      %4867 = vmatpush.bf16.msra.mxu0 0
      %4868 = vmatpush.bf16.msra.mxu0 0
      %4869 = vmatpush.bf16.msra.mxu0 0
      %4870 = vmatpush.bf16.msra.mxu0 %v4855
      %4871 = vmatpush.bf16.msra.mxu0 %v4853
      %4872 = vmatmul.bf16.gmra.mxu0 %v4862
      %v4873 = vpop.f32.mrf.mxu0
      %v4874 = vadd.f32 0.0, %v4873
      %v4875 = vpop.f32.mrf.mxu0
      %v4876 = vadd.f32 0.0, %v4875
      %4877 = vdwg.mxu0
      %4878 = vmatpush.bf16.msra.mxu0 0
      %4879 = vmatpush.bf16.msra.mxu0 0
      %4880 = vmatpush.bf16.msra.mxu0 0
      %4881 = vmatpush.bf16.msra.mxu0 0
      %4882 = vmatpush.bf16.msra.mxu0 0
      %4883 = vmatpush.bf16.msra.mxu0 0
      %4884 = vmatpush.bf16.msra.mxu0 %v4856
      %4885 = vmatpush.bf16.msra.mxu0 %v4854
      %4886 = vmatmul.bf16.gmra.mxu0 %v4862
      %v4887 = vpop.f32.mrf.mxu0
      %v4888 = vadd.f32 0.0, %v4887
      %v4889 = vpop.f32.mrf.mxu0
      %v4890 = vadd.f32 0.0, %v4889
      %4891 = vdwg.mxu0
      %v4892 = vadd.f32 %v4805, %v4874
      %v4893 = vadd.f32 %v4806, %v4888
      %v4894 = vadd.f32 %v4807, %v4876
      %v4895 = vadd.f32 %v4808, %v4890
      %4897 = vset.pattern.permute.xlu0 0
      %4898 = vperm.xlu0 %4897, %v4029
      %v4899 = vpop.permute.xlu0 %4898
      %4902 = vset.pattern.permute.xlu0 0
      %4903 = vperm.xlu0 %4902, %v4030
      %v4904 = vpop.permute.xlu0 %4903
      %v4906 = vadd.f32 %v4892, %v4899
      %v4907 = vadd.f32 %v4893, %v4899
      %v4908 = vadd.f32 %v4894, %v4904
      %v4909 = vadd.f32 %v4895, %v4904
      %v4910 = vmax.f32 %v4906, 0.0
      %v4911 = vmax.f32 %v4907, 0.0
      %v4912 = vmax.f32 %v4908, 0.0
      %v4913 = vmax.f32 %v4909, 0.0
      %v4914 = vpack.c.bf16 %v4911, %v4910
      %v4915 = vpack.c.bf16 %v4913, %v4912
      %v4916 = vld [vmem:[%s15] sm:$0xff]
      %v4917 = vld [vmem:[%s15 + $0x8] sm:$0xff]
      %4918 = vst [vmem:[#allocation2 + $0x8] sm:$0xff] %v4914
      %4919 = vst [vmem:[#allocation2 + $0x20] sm:$0xff] %v4915
      %4920 = vst [vmem:[#allocation2 + $0x38] sm:$0xff] %v2684
      %4921 = vst [vmem:[#allocation2 + $0x50] sm:$0xff] %v2685
      %v4922 = vld [vmem:[#allocation2 + $0x4] sm:$0xff]
      %v4923 = vld [vmem:[#allocation2 + $0xc] sm:$0xf]
      %v4924 = vld [vmem:[#allocation2 + $0x1c] sm:$0xff]
      %v4925 = vld [vmem:[#allocation2 + $0x24] sm:$0xf]
      %v4926 = vld [vmem:[#allocation2 + $0x34] sm:$0xff]
      %v4927 = vld [vmem:[#allocation2 + $0x3c] sm:$0xf]
      %v4928 = vld [vmem:[#allocation2 + $0x4c] sm:$0xff]
      %v4929 = vld [vmem:[#allocation2 + $0x54] sm:$0xf]
      %v4930 = vld [vmem:[%s1] sm:$0x22]
      %v4932 = vunpack.c.l.b16 %v4930
      %v4933 = vunpack.c.h.b16 %v4930
      %v4934 = vpack.c.b16 %v4932, %v4932
      %v4935 = vpack.c.b16 %v4933, %v4933
      %v4937 = vpack.i.b16 %v4934, %v4934
      %v4939 = vperm.slane %v4937, 1
      %v4941 = vpack.i.b16 %v4935, %v4935
      %v4943 = vperm.slane %v4941, 1
      %v4944 = vunpack.c.l.bf16 %v4922
      %v4945 = vunpack.c.h.bf16 %v4922
      %v4946 = vunpack.c.l.bf16 %v4923
      %v4947 = vunpack.c.l.bf16 %v4924
      %v4948 = vunpack.c.h.bf16 %v4924
      %v4949 = vunpack.c.l.bf16 %v4925
      %v4950 = vunpack.c.l.bf16 %v4926
      %v4951 = vunpack.c.h.bf16 %v4926
      %v4952 = vunpack.c.l.bf16 %v4927
      %v4953 = vunpack.c.l.bf16 %v4928
      %v4954 = vunpack.c.h.bf16 %v4928
      %v4955 = vunpack.c.l.bf16 %v4929
      %v4956 = vunpack.c.l.bf16 %v4939
      %v4957 = vunpack.c.l.bf16 %v4943
      %4960 = vrot.lane.b32.xlu0 %v4956, 94
      %v4961 = vpop.permute.xlu0 %4960
      %4962 = vrot.lane.b32.xlu0 %v4957, 94
      %v4963 = vpop.permute.xlu0 %4962
      %v4964 = vsel %vm2018, %v4961, %v4963
      %v4968 = vmul.f32 %v4944, %v4961
      %v4969 = vmul.f32 %v4945, %v4964
      %v4970 = vmul.f32 %v4946, %v4963
      %v4971 = vmul.f32 %v4947, %v4961
      %v4972 = vmul.f32 %v4948, %v4964
      %v4973 = vmul.f32 %v4949, %v4963
      %v4974 = vmul.f32 %v4950, %v4961
      %v4975 = vmul.f32 %v4951, %v4964
      %v4976 = vmul.f32 %v4952, %v4963
      %v4977 = vmul.f32 %v4953, %v4961
      %v4978 = vmul.f32 %v4954, %v4964
      %v4979 = vmul.f32 %v4955, %v4963
      %v4980 = vpack.c.bf16 %v4971, %v4968
      %v4981 = vpack.c.bf16 %v4972, %v4969
      %v4982 = vpack.c.bf16 %v4973, %v4970
      %v4983 = vpack.c.bf16 %v4977, %v4974
      %v4984 = vpack.c.bf16 %v4978, %v4975
      %v4985 = vpack.c.bf16 %v4979, %v4976
      %v4986 = vld [vmem:[%s14] sm:$0xf]
      %v4987 = vld [vmem:[%s14 + $0x4] sm:$0xf]
      %s4988 = scalar_lea.vmem %s14, 8
      %v4989 = vld [vmem:[%s4988] sm:$0xf]
      %v4990 = vld [vmem:[%s4988 + $0x4] sm:$0xf]
      %v4993 = vunpack.c.l.b16 %v4989
      %v4994 = vunpack.c.l.b16 %v4990
      %v4995 = vpack.c.b16 %v4994, %v4993
      %v5004 = vunpack.c.l.b16 %v4922
      %v5005 = vunpack.c.h.b16 %v4922
      %v5006 = vunpack.c.l.b16 %v4923
      %v5007 = vunpack.c.l.b16 %v4924
      %v5008 = vunpack.c.h.b16 %v4924
      %v5009 = vunpack.c.l.b16 %v4925
      %v5010 = vunpack.c.l.b16 %v4926
      %v5011 = vunpack.c.h.b16 %v4926
      %v5012 = vunpack.c.l.b16 %v4927
      %v5013 = vunpack.c.l.b16 %v4928
      %v5014 = vunpack.c.h.b16 %v4928
      %v5015 = vunpack.c.l.b16 %v4929
      %v5016 = vpack.c.b16 %v5007, %v5004
      %v5017 = vpack.c.b16 %v5008, %v5005
      %v5018 = vpack.c.b16 %v5009, %v5006
      %v5019 = vpack.c.b16 %v5013, %v5010
      %v5020 = vpack.c.b16 %v5014, %v5011
      %v5021 = vpack.c.b16 %v5015, %v5012
      %5022 = vrot.lane.b32.xlu0 %v5016, 32
      %v5023 = vpop.permute.xlu0 %5022
      %5024 = vrot.lane.b32.xlu0 %v5017, 32
      %v5025 = vpop.permute.xlu0 %5024
      %5026 = vrot.lane.b32.xlu0 %v5018, 32
      %v5027 = vpop.permute.xlu0 %5026
      %5028 = vrot.lane.b32.xlu0 %v5019, 32
      %v5029 = vpop.permute.xlu0 %5028
      %5030 = vrot.lane.b32.xlu0 %v5020, 32
      %v5031 = vpop.permute.xlu0 %5030
      %5032 = vrot.lane.b32.xlu0 %v5021, 32
      %v5033 = vpop.permute.xlu0 %5032
      %v5034 = vsel %vm2061, %v5023, %v5025
      %v5035 = vsel %vm2061, %v5025, %v5027
      %v5036 = vsel %vm2061, %v5029, %v5031
      %v5037 = vsel %vm2061, %v5031, %v5033
      %v5043 = vsel %vm4155, %v4995, 0
      %5045 = vmatpush.bf16.msra.mxu0 0
      %5046 = vmatpush.bf16.msra.mxu0 0
      %5047 = vmatpush.bf16.msra.mxu0 0
      %5048 = vmatpush.bf16.msra.mxu0 0
      %5049 = vmatpush.bf16.msra.mxu0 0
      %5050 = vmatpush.bf16.msra.mxu0 0
      %5051 = vmatpush.bf16.msra.mxu0 %v5036
      %5052 = vmatpush.bf16.msra.mxu0 %v5034
      %5053 = vmatmul.bf16.gmra.mxu0 %v5043
      %v5054 = vpop.f32.mrf.mxu0
      %v5055 = vadd.f32 0.0, %v5054
      %v5056 = vpop.f32.mrf.mxu0
      %v5057 = vadd.f32 0.0, %v5056
      %5058 = vdwg.mxu0
      %5059 = vmatpush.bf16.msra.mxu0 0
      %5060 = vmatpush.bf16.msra.mxu0 0
      %5061 = vmatpush.bf16.msra.mxu0 0
      %5062 = vmatpush.bf16.msra.mxu0 0
      %5063 = vmatpush.bf16.msra.mxu0 0
      %5064 = vmatpush.bf16.msra.mxu0 0
      %5065 = vmatpush.bf16.msra.mxu0 %v5037
      %5066 = vmatpush.bf16.msra.mxu0 %v5035
      %5067 = vmatmul.bf16.gmra.mxu0 %v5043
      %v5068 = vpop.f32.mrf.mxu0
      %v5069 = vadd.f32 0.0, %v5068
      %v5070 = vpop.f32.mrf.mxu0
      %v5071 = vadd.f32 0.0, %v5070
      %5072 = vdwg.mxu0
      %v5075 = vunpack.c.l.b16 %v4986
      %v5076 = vunpack.c.l.b16 %v4987
      %v5077 = vpack.c.b16 %v5076, %v5075
      %5084 = vrot.lane.b32.xlu0 %v4980, 34
      %v5085 = vpop.permute.xlu0 %5084
      %5086 = vrot.lane.b32.xlu0 %v4981, 34
      %v5087 = vpop.permute.xlu0 %5086
      %5088 = vrot.lane.b32.xlu0 %v4982, 34
      %v5089 = vpop.permute.xlu0 %5088
      %5090 = vrot.lane.b32.xlu0 %v4983, 34
      %v5091 = vpop.permute.xlu0 %5090
      %5092 = vrot.lane.b32.xlu0 %v4984, 34
      %v5093 = vpop.permute.xlu0 %5092
      %5094 = vrot.lane.b32.xlu0 %v4985, 34
      %v5095 = vpop.permute.xlu0 %5094
      %v5096 = vsel %vm2111, %v5085, %v5087
      %v5097 = vsel %vm2111, %v5087, %v5089
      %v5098 = vsel %vm2111, %v5091, %v5093
      %v5099 = vsel %vm2111, %v5093, %v5095
      %v5105 = vsel %vm4155, %v5077, 0
      %5107 = vmatpush.bf16.msra.mxu0 0
      %5108 = vmatpush.bf16.msra.mxu0 0
      %5109 = vmatpush.bf16.msra.mxu0 0
      %5110 = vmatpush.bf16.msra.mxu0 0
      %5111 = vmatpush.bf16.msra.mxu0 0
      %5112 = vmatpush.bf16.msra.mxu0 0
      %5113 = vmatpush.bf16.msra.mxu0 %v5098
      %5114 = vmatpush.bf16.msra.mxu0 %v5096
      %5115 = vmatmul.bf16.gmra.mxu0 %v5105
      %v5116 = vpop.f32.mrf.mxu0
      %v5117 = vadd.f32 %v5055, %v5116
      %v5118 = vpop.f32.mrf.mxu0
      %v5119 = vadd.f32 %v5057, %v5118
      %5120 = vdwg.mxu0
      %5121 = vmatpush.bf16.msra.mxu0 0
      %5122 = vmatpush.bf16.msra.mxu0 0
      %5123 = vmatpush.bf16.msra.mxu0 0
      %5124 = vmatpush.bf16.msra.mxu0 0
      %5125 = vmatpush.bf16.msra.mxu0 0
      %5126 = vmatpush.bf16.msra.mxu0 0
      %5127 = vmatpush.bf16.msra.mxu0 %v5099
      %5128 = vmatpush.bf16.msra.mxu0 %v5097
      %5129 = vmatmul.bf16.gmra.mxu0 %v5105
      %v5130 = vpop.f32.mrf.mxu0
      %v5131 = vadd.f32 %v5069, %v5130
      %v5132 = vpop.f32.mrf.mxu0
      %v5133 = vadd.f32 %v5071, %v5132
      %5134 = vdwg.mxu0
      %v5135 = vshrl.u32 %v4934, 16
      %v5136 = vpack.i.b16 %v5135, %v5135
      %v5138 = vperm.slane %v5136, 1
      %v5139 = vshrl.u32 %v4935, 16
      %v5140 = vpack.i.b16 %v5139, %v5139
      %v5142 = vperm.slane %v5140, 1
      %v5143 = vunpack.c.l.bf16 %v5138
      %v5144 = vunpack.c.l.bf16 %v5142
      %5147 = vrot.lane.b32.xlu0 %v5143, 98
      %v5148 = vpop.permute.xlu0 %5147
      %5149 = vrot.lane.b32.xlu0 %v5144, 98
      %v5150 = vpop.permute.xlu0 %5149
      %v5151 = vsel %vm2163, %v5148, %v5150
      %v5155 = vmul.f32 %v4944, %v5148
      %v5156 = vmul.f32 %v4945, %v5151
      %v5157 = vmul.f32 %v4946, %v5150
      %v5158 = vmul.f32 %v4947, %v5148
      %v5159 = vmul.f32 %v4948, %v5151
      %v5160 = vmul.f32 %v4949, %v5150
      %v5161 = vmul.f32 %v4950, %v5148
      %v5162 = vmul.f32 %v4951, %v5151
      %v5163 = vmul.f32 %v4952, %v5150
      %v5164 = vmul.f32 %v4953, %v5148
      %v5165 = vmul.f32 %v4954, %v5151
      %v5166 = vmul.f32 %v4955, %v5150
      %v5167 = vpack.c.bf16 %v5158, %v5155
      %v5168 = vpack.c.bf16 %v5159, %v5156
      %v5169 = vpack.c.bf16 %v5160, %v5157
      %v5170 = vpack.c.bf16 %v5164, %v5161
      %v5171 = vpack.c.bf16 %v5165, %v5162
      %v5172 = vpack.c.bf16 %v5166, %v5163
      %s5173 = scalar_lea.vmem %s14, 16
      %v5174 = vld [vmem:[%s5173] sm:$0xf]
      %v5175 = vld [vmem:[%s5173 + $0x4] sm:$0xf]
      %v5178 = vunpack.c.l.b16 %v5174
      %v5179 = vunpack.c.l.b16 %v5175
      %v5180 = vpack.c.b16 %v5179, %v5178
      %5187 = vrot.lane.b32.xlu0 %v5167, 30
      %v5188 = vpop.permute.xlu0 %5187
      %5189 = vrot.lane.b32.xlu0 %v5168, 30
      %v5190 = vpop.permute.xlu0 %5189
      %5191 = vrot.lane.b32.xlu0 %v5169, 30
      %v5192 = vpop.permute.xlu0 %5191
      %5193 = vrot.lane.b32.xlu0 %v5170, 30
      %v5194 = vpop.permute.xlu0 %5193
      %5195 = vrot.lane.b32.xlu0 %v5171, 30
      %v5196 = vpop.permute.xlu0 %5195
      %5197 = vrot.lane.b32.xlu0 %v5172, 30
      %v5198 = vpop.permute.xlu0 %5197
      %v5199 = vsel %vm2194, %v5188, %v5190
      %v5200 = vsel %vm2194, %v5190, %v5192
      %v5201 = vsel %vm2194, %v5194, %v5196
      %v5202 = vsel %vm2194, %v5196, %v5198
      %v5208 = vsel %vm4155, %v5180, 0
      %5210 = vmatpush.bf16.msra.mxu0 0
      %5211 = vmatpush.bf16.msra.mxu0 0
      %5212 = vmatpush.bf16.msra.mxu0 0
      %5213 = vmatpush.bf16.msra.mxu0 0
      %5214 = vmatpush.bf16.msra.mxu0 0
      %5215 = vmatpush.bf16.msra.mxu0 0
      %5216 = vmatpush.bf16.msra.mxu0 %v5201
      %5217 = vmatpush.bf16.msra.mxu0 %v5199
      %5218 = vmatmul.bf16.gmra.mxu0 %v5208
      %v5219 = vpop.f32.mrf.mxu0
      %v5220 = vadd.f32 0.0, %v5219
      %v5221 = vpop.f32.mrf.mxu0
      %v5222 = vadd.f32 0.0, %v5221
      %5223 = vdwg.mxu0
      %5224 = vmatpush.bf16.msra.mxu0 0
      %5225 = vmatpush.bf16.msra.mxu0 0
      %5226 = vmatpush.bf16.msra.mxu0 0
      %5227 = vmatpush.bf16.msra.mxu0 0
      %5228 = vmatpush.bf16.msra.mxu0 0
      %5229 = vmatpush.bf16.msra.mxu0 0
      %5230 = vmatpush.bf16.msra.mxu0 %v5202
      %5231 = vmatpush.bf16.msra.mxu0 %v5200
      %5232 = vmatmul.bf16.gmra.mxu0 %v5208
      %v5233 = vpop.f32.mrf.mxu0
      %v5234 = vadd.f32 0.0, %v5233
      %v5235 = vpop.f32.mrf.mxu0
      %v5236 = vadd.f32 0.0, %v5235
      %5237 = vdwg.mxu0
      %v5238 = vadd.f32 %v5117, %v5220
      %v5239 = vadd.f32 %v5131, %v5234
      %v5240 = vadd.f32 %v5119, %v5222
      %v5241 = vadd.f32 %v5133, %v5236
      %5242 = vrot.lane.b32.xlu0 %v4956, 126
      %v5243 = vpop.permute.xlu0 %5242
      %5244 = vrot.lane.b32.xlu0 %v4957, 126
      %v5245 = vpop.permute.xlu0 %5244
      %v5246 = vsel %vm2238, %v5243, %v5245
      %v5250 = vmul.f32 %v4944, %v5243
      %v5251 = vmul.f32 %v4945, %v5246
      %v5252 = vmul.f32 %v4946, %v5245
      %v5253 = vmul.f32 %v4947, %v5243
      %v5254 = vmul.f32 %v4948, %v5246
      %v5255 = vmul.f32 %v4949, %v5245
      %v5256 = vmul.f32 %v4950, %v5243
      %v5257 = vmul.f32 %v4951, %v5246
      %v5258 = vmul.f32 %v4952, %v5245
      %v5259 = vmul.f32 %v4953, %v5243
      %v5260 = vmul.f32 %v4954, %v5246
      %v5261 = vmul.f32 %v4955, %v5245
      %v5262 = vpack.c.bf16 %v5253, %v5250
      %v5263 = vpack.c.bf16 %v5254, %v5251
      %v5264 = vpack.c.bf16 %v5255, %v5252
      %v5265 = vpack.c.bf16 %v5259, %v5256
      %v5266 = vpack.c.bf16 %v5260, %v5257
      %v5267 = vpack.c.bf16 %v5261, %v5258
      %s5268 = scalar_lea.vmem %s14, 24
      %v5269 = vld [vmem:[%s5268] sm:$0xf]
      %v5270 = vld [vmem:[%s5268 + $0x4] sm:$0xf]
      %v5273 = vunpack.c.l.b16 %v5269
      %v5274 = vunpack.c.l.b16 %v5270
      %v5275 = vpack.c.b16 %v5274, %v5273
      %5282 = vrot.lane.b32.xlu0 %v5262, 2
      %v5283 = vpop.permute.xlu0 %5282
      %5284 = vrot.lane.b32.xlu0 %v5263, 2
      %v5285 = vpop.permute.xlu0 %5284
      %5286 = vrot.lane.b32.xlu0 %v5264, 2
      %v5287 = vpop.permute.xlu0 %5286
      %5288 = vrot.lane.b32.xlu0 %v5265, 2
      %v5289 = vpop.permute.xlu0 %5288
      %5290 = vrot.lane.b32.xlu0 %v5266, 2
      %v5291 = vpop.permute.xlu0 %5290
      %5292 = vrot.lane.b32.xlu0 %v5267, 2
      %v5293 = vpop.permute.xlu0 %5292
      %v5294 = vsel %vm2269, %v5283, %v5285
      %v5295 = vsel %vm2269, %v5285, %v5287
      %v5296 = vsel %vm2269, %v5289, %v5291
      %v5297 = vsel %vm2269, %v5291, %v5293
      %v5303 = vsel %vm4155, %v5275, 0
      %5305 = vmatpush.bf16.msra.mxu0 0
      %5306 = vmatpush.bf16.msra.mxu0 0
      %5307 = vmatpush.bf16.msra.mxu0 0
      %5308 = vmatpush.bf16.msra.mxu0 0
      %5309 = vmatpush.bf16.msra.mxu0 0
      %5310 = vmatpush.bf16.msra.mxu0 0
      %5311 = vmatpush.bf16.msra.mxu0 %v5296
      %5312 = vmatpush.bf16.msra.mxu0 %v5294
      %5313 = vmatmul.bf16.gmra.mxu0 %v5303
      %v5314 = vpop.f32.mrf.mxu0
      %v5315 = vadd.f32 0.0, %v5314
      %v5316 = vpop.f32.mrf.mxu0
      %v5317 = vadd.f32 0.0, %v5316
      %5318 = vdwg.mxu0
      %5319 = vmatpush.bf16.msra.mxu0 0
      %5320 = vmatpush.bf16.msra.mxu0 0
      %5321 = vmatpush.bf16.msra.mxu0 0
      %5322 = vmatpush.bf16.msra.mxu0 0
      %5323 = vmatpush.bf16.msra.mxu0 0
      %5324 = vmatpush.bf16.msra.mxu0 0
      %5325 = vmatpush.bf16.msra.mxu0 %v5297
      %5326 = vmatpush.bf16.msra.mxu0 %v5295
      %5327 = vmatmul.bf16.gmra.mxu0 %v5303
      %v5328 = vpop.f32.mrf.mxu0
      %v5329 = vadd.f32 0.0, %v5328
      %v5330 = vpop.f32.mrf.mxu0
      %v5331 = vadd.f32 0.0, %v5330
      %5332 = vdwg.mxu0
      %v5333 = vadd.f32 %v5238, %v5315
      %v5334 = vadd.f32 %v5239, %v5329
      %v5335 = vadd.f32 %v5240, %v5317
      %v5336 = vadd.f32 %v5241, %v5331
      %v5337 = vld [vmem:[#allocation2 + $0x8] sm:$0xff]
      %v5338 = vld [vmem:[#allocation2 + $0x20] sm:$0xff]
      %v5339 = vld [vmem:[#allocation2 + $0x38] sm:$0xff]
      %v5340 = vld [vmem:[#allocation2 + $0x50] sm:$0xff]
      %s5341 = scalar_lea.vmem %s14, 32
      %v5342 = vld [vmem:[%s5341] sm:$0xf]
      %v5343 = vld [vmem:[%s5341 + $0x4] sm:$0xf]
      %v5346 = vunpack.c.l.b16 %v5342
      %v5347 = vunpack.c.l.b16 %v5343
      %v5348 = vpack.c.b16 %v5347, %v5346
      %v5353 = vunpack.c.l.b16 %v5337
      %v5354 = vunpack.c.h.b16 %v5337
      %v5355 = vunpack.c.l.b16 %v5338
      %v5356 = vunpack.c.h.b16 %v5338
      %v5357 = vunpack.c.l.b16 %v5339
      %v5358 = vunpack.c.h.b16 %v5339
      %v5359 = vunpack.c.l.b16 %v5340
      %v5360 = vunpack.c.h.b16 %v5340
      %v5361 = vpack.c.b16 %v5355, %v5353
      %v5362 = vpack.c.b16 %v5356, %v5354
      %v5363 = vpack.c.b16 %v5359, %v5357
      %v5364 = vpack.c.b16 %v5360, %v5358
      %v5370 = vsel %vm4155, %v5348, 0
      %5372 = vmatpush.bf16.msra.mxu0 0
      %5373 = vmatpush.bf16.msra.mxu0 0
      %5374 = vmatpush.bf16.msra.mxu0 0
      %5375 = vmatpush.bf16.msra.mxu0 0
      %5376 = vmatpush.bf16.msra.mxu0 0
      %5377 = vmatpush.bf16.msra.mxu0 0
      %5378 = vmatpush.bf16.msra.mxu0 %v5363
      %5379 = vmatpush.bf16.msra.mxu0 %v5361
      %5380 = vmatmul.bf16.gmra.mxu0 %v5370
      %v5381 = vpop.f32.mrf.mxu0
      %v5382 = vadd.f32 0.0, %v5381
      %v5383 = vpop.f32.mrf.mxu0
      %v5384 = vadd.f32 0.0, %v5383
      %5385 = vdwg.mxu0
      %5386 = vmatpush.bf16.msra.mxu0 0
      %5387 = vmatpush.bf16.msra.mxu0 0
      %5388 = vmatpush.bf16.msra.mxu0 0
      %5389 = vmatpush.bf16.msra.mxu0 0
      %5390 = vmatpush.bf16.msra.mxu0 0
      %5391 = vmatpush.bf16.msra.mxu0 0
      %5392 = vmatpush.bf16.msra.mxu0 %v5364
      %5393 = vmatpush.bf16.msra.mxu0 %v5362
      %5394 = vmatmul.bf16.gmra.mxu0 %v5370
      %v5395 = vpop.f32.mrf.mxu0
      %v5396 = vadd.f32 0.0, %v5395
      %v5397 = vpop.f32.mrf.mxu0
      %v5398 = vadd.f32 0.0, %v5397
      %5399 = vdwg.mxu0
      %v5400 = vadd.f32 %v5333, %v5382
      %v5401 = vadd.f32 %v5334, %v5396
      %v5402 = vadd.f32 %v5335, %v5384
      %v5403 = vadd.f32 %v5336, %v5398
      %v5404 = vld [vmem:[#allocation2 + $0x8] sm:$0xff]
      %v5405 = vld [vmem:[#allocation2 + $0x10] sm:$0xf]
      %v5406 = vld [vmem:[#allocation2 + $0x20] sm:$0xff]
      %v5407 = vld [vmem:[#allocation2 + $0x28] sm:$0xf]
      %v5408 = vld [vmem:[#allocation2 + $0x38] sm:$0xff]
      %v5409 = vld [vmem:[#allocation2 + $0x40] sm:$0xf]
      %v5410 = vld [vmem:[#allocation2 + $0x50] sm:$0xff]
      %v5411 = vld [vmem:[#allocation2 + $0x58] sm:$0xf]
      %v5412 = vunpack.c.l.bf16 %v5404
      %v5413 = vunpack.c.h.bf16 %v5404
      %v5414 = vunpack.c.l.bf16 %v5405
      %v5415 = vunpack.c.l.bf16 %v5406
      %v5416 = vunpack.c.h.bf16 %v5406
      %v5417 = vunpack.c.l.bf16 %v5407
      %v5418 = vunpack.c.l.bf16 %v5408
      %v5419 = vunpack.c.h.bf16 %v5408
      %v5420 = vunpack.c.l.bf16 %v5409
      %v5421 = vunpack.c.l.bf16 %v5410
      %v5422 = vunpack.c.h.bf16 %v5410
      %v5423 = vunpack.c.l.bf16 %v5411
      %5424 = vrot.lane.b32.xlu0 %v5143, 2
      %v5425 = vpop.permute.xlu0 %5424
      %5426 = vrot.lane.b32.xlu0 %v5144, 2
      %v5427 = vpop.permute.xlu0 %5426
      %v5428 = vsel %vm2378, %v5425, %v5427
      %v5432 = vmul.f32 %v5412, %v5425
      %v5433 = vmul.f32 %v5413, %v5428
      %v5434 = vmul.f32 %v5414, %v5427
      %v5435 = vmul.f32 %v5415, %v5425
      %v5436 = vmul.f32 %v5416, %v5428
      %v5437 = vmul.f32 %v5417, %v5427
      %v5438 = vmul.f32 %v5418, %v5425
      %v5439 = vmul.f32 %v5419, %v5428
      %v5440 = vmul.f32 %v5420, %v5427
      %v5441 = vmul.f32 %v5421, %v5425
      %v5442 = vmul.f32 %v5422, %v5428
      %v5443 = vmul.f32 %v5423, %v5427
      %v5444 = vpack.c.bf16 %v5435, %v5432
      %v5445 = vpack.c.bf16 %v5436, %v5433
      %v5446 = vpack.c.bf16 %v5437, %v5434
      %v5447 = vpack.c.bf16 %v5441, %v5438
      %v5448 = vpack.c.bf16 %v5442, %v5439
      %v5449 = vpack.c.bf16 %v5443, %v5440
      %s5450 = scalar_lea.vmem %s14, 40
      %v5451 = vld [vmem:[%s5450] sm:$0xf]
      %v5452 = vld [vmem:[%s5450 + $0x4] sm:$0xf]
      %v5455 = vunpack.c.l.b16 %v5451
      %v5456 = vunpack.c.l.b16 %v5452
      %v5457 = vpack.c.b16 %v5456, %v5455
      %5464 = vrot.lane.b32.xlu0 %v5444, 126
      %v5465 = vpop.permute.xlu0 %5464
      %5466 = vrot.lane.b32.xlu0 %v5445, 126
      %v5467 = vpop.permute.xlu0 %5466
      %5468 = vrot.lane.b32.xlu0 %v5446, 126
      %v5469 = vpop.permute.xlu0 %5468
      %5470 = vrot.lane.b32.xlu0 %v5447, 126
      %v5471 = vpop.permute.xlu0 %5470
      %5472 = vrot.lane.b32.xlu0 %v5448, 126
      %v5473 = vpop.permute.xlu0 %5472
      %5474 = vrot.lane.b32.xlu0 %v5449, 126
      %v5475 = vpop.permute.xlu0 %5474
      %v5476 = vsel %vm2409, %v5465, %v5467
      %v5477 = vsel %vm2409, %v5467, %v5469
      %v5478 = vsel %vm2409, %v5471, %v5473
      %v5479 = vsel %vm2409, %v5473, %v5475
      %v5485 = vsel %vm4155, %v5457, 0
      %5487 = vmatpush.bf16.msra.mxu0 0
      %5488 = vmatpush.bf16.msra.mxu0 0
      %5489 = vmatpush.bf16.msra.mxu0 0
      %5490 = vmatpush.bf16.msra.mxu0 0
      %5491 = vmatpush.bf16.msra.mxu0 0
      %5492 = vmatpush.bf16.msra.mxu0 0
      %5493 = vmatpush.bf16.msra.mxu0 %v5478
      %5494 = vmatpush.bf16.msra.mxu0 %v5476
      %5495 = vmatmul.bf16.gmra.mxu0 %v5485
      %v5496 = vpop.f32.mrf.mxu0
      %v5497 = vadd.f32 0.0, %v5496
      %v5498 = vpop.f32.mrf.mxu0
      %v5499 = vadd.f32 0.0, %v5498
      %5500 = vdwg.mxu0
      %5501 = vmatpush.bf16.msra.mxu0 0
      %5502 = vmatpush.bf16.msra.mxu0 0
      %5503 = vmatpush.bf16.msra.mxu0 0
      %5504 = vmatpush.bf16.msra.mxu0 0
      %5505 = vmatpush.bf16.msra.mxu0 0
      %5506 = vmatpush.bf16.msra.mxu0 0
      %5507 = vmatpush.bf16.msra.mxu0 %v5479
      %5508 = vmatpush.bf16.msra.mxu0 %v5477
      %5509 = vmatmul.bf16.gmra.mxu0 %v5485
      %v5510 = vpop.f32.mrf.mxu0
      %v5511 = vadd.f32 0.0, %v5510
      %v5512 = vpop.f32.mrf.mxu0
      %v5513 = vadd.f32 0.0, %v5512
      %5514 = vdwg.mxu0
      %v5515 = vadd.f32 %v5400, %v5497
      %v5516 = vadd.f32 %v5401, %v5511
      %v5517 = vadd.f32 %v5402, %v5499
      %v5518 = vadd.f32 %v5403, %v5513
      %5519 = vrot.lane.b32.xlu0 %v4956, 30
      %v5520 = vpop.permute.xlu0 %5519
      %5521 = vrot.lane.b32.xlu0 %v4957, 30
      %v5522 = vpop.permute.xlu0 %5521
      %v5523 = vsel %vm2453, %v5520, %v5522
      %v5527 = vmul.f32 %v5412, %v5520
      %v5528 = vmul.f32 %v5413, %v5523
      %v5529 = vmul.f32 %v5414, %v5522
      %v5530 = vmul.f32 %v5415, %v5520
      %v5531 = vmul.f32 %v5416, %v5523
      %v5532 = vmul.f32 %v5417, %v5522
      %v5533 = vmul.f32 %v5418, %v5520
      %v5534 = vmul.f32 %v5419, %v5523
      %v5535 = vmul.f32 %v5420, %v5522
      %v5536 = vmul.f32 %v5421, %v5520
      %v5537 = vmul.f32 %v5422, %v5523
      %v5538 = vmul.f32 %v5423, %v5522
      %v5539 = vpack.c.bf16 %v5530, %v5527
      %v5540 = vpack.c.bf16 %v5531, %v5528
      %v5541 = vpack.c.bf16 %v5532, %v5529
      %v5542 = vpack.c.bf16 %v5536, %v5533
      %v5543 = vpack.c.bf16 %v5537, %v5534
      %v5544 = vpack.c.bf16 %v5538, %v5535
      %s5545 = scalar_lea.vmem %s14, 48
      %v5546 = vld [vmem:[%s5545] sm:$0xf]
      %v5547 = vld [vmem:[%s5545 + $0x4] sm:$0xf]
      %v5550 = vunpack.c.l.b16 %v5546
      %v5551 = vunpack.c.l.b16 %v5547
      %v5552 = vpack.c.b16 %v5551, %v5550
      %5559 = vrot.lane.b32.xlu0 %v5539, 98
      %v5560 = vpop.permute.xlu0 %5559
      %5561 = vrot.lane.b32.xlu0 %v5540, 98
      %v5562 = vpop.permute.xlu0 %5561
      %5563 = vrot.lane.b32.xlu0 %v5541, 98
      %v5564 = vpop.permute.xlu0 %5563
      %5565 = vrot.lane.b32.xlu0 %v5542, 98
      %v5566 = vpop.permute.xlu0 %5565
      %5567 = vrot.lane.b32.xlu0 %v5543, 98
      %v5568 = vpop.permute.xlu0 %5567
      %5569 = vrot.lane.b32.xlu0 %v5544, 98
      %v5570 = vpop.permute.xlu0 %5569
      %v5571 = vsel %vm2484, %v5560, %v5562
      %v5572 = vsel %vm2484, %v5562, %v5564
      %v5573 = vsel %vm2484, %v5566, %v5568
      %v5574 = vsel %vm2484, %v5568, %v5570
      %v5580 = vsel %vm4155, %v5552, 0
      %5582 = vmatpush.bf16.msra.mxu0 0
      %5583 = vmatpush.bf16.msra.mxu0 0
      %5584 = vmatpush.bf16.msra.mxu0 0
      %5585 = vmatpush.bf16.msra.mxu0 0
      %5586 = vmatpush.bf16.msra.mxu0 0
      %5587 = vmatpush.bf16.msra.mxu0 0
      %5588 = vmatpush.bf16.msra.mxu0 %v5573
      %5589 = vmatpush.bf16.msra.mxu0 %v5571
      %5590 = vmatmul.bf16.gmra.mxu0 %v5580
      %v5591 = vpop.f32.mrf.mxu0
      %v5592 = vadd.f32 0.0, %v5591
      %v5593 = vpop.f32.mrf.mxu0
      %v5594 = vadd.f32 0.0, %v5593
      %5595 = vdwg.mxu0
      %5596 = vmatpush.bf16.msra.mxu0 0
      %5597 = vmatpush.bf16.msra.mxu0 0
      %5598 = vmatpush.bf16.msra.mxu0 0
      %5599 = vmatpush.bf16.msra.mxu0 0
      %5600 = vmatpush.bf16.msra.mxu0 0
      %5601 = vmatpush.bf16.msra.mxu0 0
      %5602 = vmatpush.bf16.msra.mxu0 %v5574
      %5603 = vmatpush.bf16.msra.mxu0 %v5572
      %5604 = vmatmul.bf16.gmra.mxu0 %v5580
      %v5605 = vpop.f32.mrf.mxu0
      %v5606 = vadd.f32 0.0, %v5605
      %v5607 = vpop.f32.mrf.mxu0
      %v5608 = vadd.f32 0.0, %v5607
      %5609 = vdwg.mxu0
      %v5610 = vadd.f32 %v5515, %v5592
      %v5611 = vadd.f32 %v5516, %v5606
      %v5612 = vadd.f32 %v5517, %v5594
      %v5613 = vadd.f32 %v5518, %v5608
      %s5614 = scalar_lea.vmem %s14, 56
      %v5615 = vld [vmem:[%s5614] sm:$0xf]
      %v5616 = vld [vmem:[%s5614 + $0x4] sm:$0xf]
      %v5619 = vunpack.c.l.b16 %v5615
      %v5620 = vunpack.c.l.b16 %v5616
      %v5621 = vpack.c.b16 %v5620, %v5619
      %v5630 = vunpack.c.l.b16 %v5404
      %v5631 = vunpack.c.h.b16 %v5404
      %v5632 = vunpack.c.l.b16 %v5405
      %v5633 = vunpack.c.l.b16 %v5406
      %v5634 = vunpack.c.h.b16 %v5406
      %v5635 = vunpack.c.l.b16 %v5407
      %v5636 = vunpack.c.l.b16 %v5408
      %v5637 = vunpack.c.h.b16 %v5408
      %v5638 = vunpack.c.l.b16 %v5409
      %v5639 = vunpack.c.l.b16 %v5410
      %v5640 = vunpack.c.h.b16 %v5410
      %v5641 = vunpack.c.l.b16 %v5411
      %v5642 = vpack.c.b16 %v5633, %v5630
      %v5643 = vpack.c.b16 %v5634, %v5631
      %v5644 = vpack.c.b16 %v5635, %v5632
      %v5645 = vpack.c.b16 %v5639, %v5636
      %v5646 = vpack.c.b16 %v5640, %v5637
      %v5647 = vpack.c.b16 %v5641, %v5638
      %5648 = vrot.lane.b32.xlu0 %v5642, 96
      %v5649 = vpop.permute.xlu0 %5648
      %5650 = vrot.lane.b32.xlu0 %v5643, 96
      %v5651 = vpop.permute.xlu0 %5650
      %5652 = vrot.lane.b32.xlu0 %v5644, 96
      %v5653 = vpop.permute.xlu0 %5652
      %5654 = vrot.lane.b32.xlu0 %v5645, 96
      %v5655 = vpop.permute.xlu0 %5654
      %5656 = vrot.lane.b32.xlu0 %v5646, 96
      %v5657 = vpop.permute.xlu0 %5656
      %5658 = vrot.lane.b32.xlu0 %v5647, 96
      %v5659 = vpop.permute.xlu0 %5658
      %v5660 = vsel %vm2551, %v5649, %v5651
      %v5661 = vsel %vm2551, %v5651, %v5653
      %v5662 = vsel %vm2551, %v5655, %v5657
      %v5663 = vsel %vm2551, %v5657, %v5659
      %v5669 = vsel %vm4155, %v5621, 0
      %5671 = vmatpush.bf16.msra.mxu0 0
      %5672 = vmatpush.bf16.msra.mxu0 0
      %5673 = vmatpush.bf16.msra.mxu0 0
      %5674 = vmatpush.bf16.msra.mxu0 0
      %5675 = vmatpush.bf16.msra.mxu0 0
      %5676 = vmatpush.bf16.msra.mxu0 0
      %5677 = vmatpush.bf16.msra.mxu0 %v5662
      %5678 = vmatpush.bf16.msra.mxu0 %v5660
      %5679 = vmatmul.bf16.gmra.mxu0 %v5669
      %v5680 = vpop.f32.mrf.mxu0
      %v5681 = vadd.f32 0.0, %v5680
      %v5682 = vpop.f32.mrf.mxu0
      %v5683 = vadd.f32 0.0, %v5682
      %5684 = vdwg.mxu0
      %5685 = vmatpush.bf16.msra.mxu0 0
      %5686 = vmatpush.bf16.msra.mxu0 0
      %5687 = vmatpush.bf16.msra.mxu0 0
      %5688 = vmatpush.bf16.msra.mxu0 0
      %5689 = vmatpush.bf16.msra.mxu0 0
      %5690 = vmatpush.bf16.msra.mxu0 0
      %5691 = vmatpush.bf16.msra.mxu0 %v5663
      %5692 = vmatpush.bf16.msra.mxu0 %v5661
      %5693 = vmatmul.bf16.gmra.mxu0 %v5669
      %v5694 = vpop.f32.mrf.mxu0
      %v5695 = vadd.f32 0.0, %v5694
      %v5696 = vpop.f32.mrf.mxu0
      %v5697 = vadd.f32 0.0, %v5696
      %5698 = vdwg.mxu0
      %v5699 = vadd.f32 %v5610, %v5681
      %v5700 = vadd.f32 %v5611, %v5695
      %v5701 = vadd.f32 %v5612, %v5683
      %v5702 = vadd.f32 %v5613, %v5697
      %5703 = vrot.lane.b32.xlu0 %v5143, 34
      %v5704 = vpop.permute.xlu0 %5703
      %5705 = vrot.lane.b32.xlu0 %v5144, 34
      %v5706 = vpop.permute.xlu0 %5705
      %v5707 = vsel %vm2595, %v5704, %v5706
      %v5711 = vmul.f32 %v5412, %v5704
      %v5712 = vmul.f32 %v5413, %v5707
      %v5713 = vmul.f32 %v5414, %v5706
      %v5714 = vmul.f32 %v5415, %v5704
      %v5715 = vmul.f32 %v5416, %v5707
      %v5716 = vmul.f32 %v5417, %v5706
      %v5717 = vmul.f32 %v5418, %v5704
      %v5718 = vmul.f32 %v5419, %v5707
      %v5719 = vmul.f32 %v5420, %v5706
      %v5720 = vmul.f32 %v5421, %v5704
      %v5721 = vmul.f32 %v5422, %v5707
      %v5722 = vmul.f32 %v5423, %v5706
      %v5723 = vpack.c.bf16 %v5714, %v5711
      %v5724 = vpack.c.bf16 %v5715, %v5712
      %v5725 = vpack.c.bf16 %v5716, %v5713
      %v5726 = vpack.c.bf16 %v5720, %v5717
      %v5727 = vpack.c.bf16 %v5721, %v5718
      %v5728 = vpack.c.bf16 %v5722, %v5719
      %s5729 = scalar_lea.vmem %s14, 64
      %v5730 = vld [vmem:[%s5729] sm:$0xf]
      %v5731 = vld [vmem:[%s5729 + $0x4] sm:$0xf]
      %v5734 = vunpack.c.l.b16 %v5730
      %v5735 = vunpack.c.l.b16 %v5731
      %v5736 = vpack.c.b16 %v5735, %v5734
      %5743 = vrot.lane.b32.xlu0 %v5723, 94
      %v5744 = vpop.permute.xlu0 %5743
      %5745 = vrot.lane.b32.xlu0 %v5724, 94
      %v5746 = vpop.permute.xlu0 %5745
      %5747 = vrot.lane.b32.xlu0 %v5725, 94
      %v5748 = vpop.permute.xlu0 %5747
      %5749 = vrot.lane.b32.xlu0 %v5726, 94
      %v5750 = vpop.permute.xlu0 %5749
      %5751 = vrot.lane.b32.xlu0 %v5727, 94
      %v5752 = vpop.permute.xlu0 %5751
      %5753 = vrot.lane.b32.xlu0 %v5728, 94
      %v5754 = vpop.permute.xlu0 %5753
      %v5755 = vsel %vm2626, %v5744, %v5746
      %v5756 = vsel %vm2626, %v5746, %v5748
      %v5757 = vsel %vm2626, %v5750, %v5752
      %v5758 = vsel %vm2626, %v5752, %v5754
      %v5764 = vsel %vm4155, %v5736, 0
      %5766 = vmatpush.bf16.msra.mxu0 0
      %5767 = vmatpush.bf16.msra.mxu0 0
      %5768 = vmatpush.bf16.msra.mxu0 0
      %5769 = vmatpush.bf16.msra.mxu0 0
      %5770 = vmatpush.bf16.msra.mxu0 0
      %5771 = vmatpush.bf16.msra.mxu0 0
      %5772 = vmatpush.bf16.msra.mxu0 %v5757
      %5773 = vmatpush.bf16.msra.mxu0 %v5755
      %5774 = vmatmul.bf16.gmra.mxu0 %v5764
      %v5775 = vpop.f32.mrf.mxu0
      %v5776 = vadd.f32 0.0, %v5775
      %v5777 = vpop.f32.mrf.mxu0
      %v5778 = vadd.f32 0.0, %v5777
      %5779 = vdwg.mxu0
      %5780 = vmatpush.bf16.msra.mxu0 0
      %5781 = vmatpush.bf16.msra.mxu0 0
      %5782 = vmatpush.bf16.msra.mxu0 0
      %5783 = vmatpush.bf16.msra.mxu0 0
      %5784 = vmatpush.bf16.msra.mxu0 0
      %5785 = vmatpush.bf16.msra.mxu0 0
      %5786 = vmatpush.bf16.msra.mxu0 %v5758
      %5787 = vmatpush.bf16.msra.mxu0 %v5756
      %5788 = vmatmul.bf16.gmra.mxu0 %v5764
      %v5789 = vpop.f32.mrf.mxu0
      %v5790 = vadd.f32 0.0, %v5789
      %v5791 = vpop.f32.mrf.mxu0
      %v5792 = vadd.f32 0.0, %v5791
      %5793 = vdwg.mxu0
      %v5794 = vadd.f32 %v5699, %v5776
      %v5795 = vadd.f32 %v5700, %v5790
      %v5796 = vadd.f32 %v5701, %v5778
      %v5797 = vadd.f32 %v5702, %v5792
      %5799 = vset.pattern.permute.xlu0 0
      %5800 = vperm.xlu0 %5799, %v4916
      %v5801 = vpop.permute.xlu0 %5800
      %5804 = vset.pattern.permute.xlu0 0
      %5805 = vperm.xlu0 %5804, %v4917
      %v5806 = vpop.permute.xlu0 %5805
      %v5808 = vadd.f32 %v5794, %v5801
      %v5809 = vadd.f32 %v5795, %v5801
      %v5810 = vadd.f32 %v5796, %v5806
      %v5811 = vadd.f32 %v5797, %v5806
      %v5812 = vmax.f32 %v5808, 0.0
      %v5813 = vmax.f32 %v5809, 0.0
      %v5814 = vmax.f32 %v5810, 0.0
      %v5815 = vmax.f32 %v5811, 0.0
      %v5816 = vpack.c.bf16 %v5813, %v5812
      %v5817 = vpack.c.bf16 %v5815, %v5814
      %v5818 = vld [vmem:[%s17] sm:$0xff]
      %v5819 = vld [vmem:[%s17 + $0x8] sm:$0xff]
      %5820 = vst [vmem:[#allocation2 + $0x8] sm:$0xff] %v5816
      %5821 = vst [vmem:[#allocation2 + $0x20] sm:$0xff] %v5817
      %5822 = vst [vmem:[#allocation2 + $0x38] sm:$0xff] %v1980
      %5823 = vst [vmem:[#allocation2 + $0x50] sm:$0xff] %v1981
      %v5824 = vld [vmem:[#allocation2 + $0x4] sm:$0xff]
      %v5825 = vld [vmem:[#allocation2 + $0xc] sm:$0xf]
      %v5826 = vld [vmem:[#allocation2 + $0x1c] sm:$0xff]
      %v5827 = vld [vmem:[#allocation2 + $0x24] sm:$0xf]
      %v5828 = vld [vmem:[#allocation2 + $0x34] sm:$0xff]
      %v5829 = vld [vmem:[#allocation2 + $0x3c] sm:$0xf]
      %v5830 = vld [vmem:[#allocation2 + $0x4c] sm:$0xff]
      %v5831 = vld [vmem:[#allocation2 + $0x54] sm:$0xf]
      %v5832 = vld [vmem:[%s1] sm:$0x11]
      %v5834 = vunpack.c.l.b16 %v5832
      %v5835 = vunpack.c.h.b16 %v5832
      %v5836 = vpack.c.b16 %v5834, %v5834
      %v5837 = vpack.c.b16 %v5835, %v5835
      %v5839 = vpack.i.b16 %v5836, %v5836
      %v5841 = vperm.slane %v5839, 0
      %v5843 = vpack.i.b16 %v5837, %v5837
      %v5845 = vperm.slane %v5843, 0
      %v5846 = vunpack.c.l.bf16 %v5824
      %v5847 = vunpack.c.h.bf16 %v5824
      %v5848 = vunpack.c.l.bf16 %v5825
      %v5849 = vunpack.c.l.bf16 %v5826
      %v5850 = vunpack.c.h.bf16 %v5826
      %v5851 = vunpack.c.l.bf16 %v5827
      %v5852 = vunpack.c.l.bf16 %v5828
      %v5853 = vunpack.c.h.bf16 %v5828
      %v5854 = vunpack.c.l.bf16 %v5829
      %v5855 = vunpack.c.l.bf16 %v5830
      %v5856 = vunpack.c.h.bf16 %v5830
      %v5857 = vunpack.c.l.bf16 %v5831
      %v5858 = vunpack.c.l.bf16 %v5841
      %v5859 = vunpack.c.l.bf16 %v5845
      %5862 = vrot.lane.b32.xlu0 %v5858, 111
      %v5863 = vpop.permute.xlu0 %5862
      %5864 = vrot.lane.b32.xlu0 %v5859, 111
      %v5865 = vpop.permute.xlu0 %5864
      %v5866 = vsel %vm623, %v5863, %v5865
      %v5870 = vmul.f32 %v5846, %v5863
      %v5871 = vmul.f32 %v5847, %v5866
      %v5872 = vmul.f32 %v5848, %v5865
      %v5873 = vmul.f32 %v5849, %v5863
      %v5874 = vmul.f32 %v5850, %v5866
      %v5875 = vmul.f32 %v5851, %v5865
      %v5876 = vmul.f32 %v5852, %v5863
      %v5877 = vmul.f32 %v5853, %v5866
      %v5878 = vmul.f32 %v5854, %v5865
      %v5879 = vmul.f32 %v5855, %v5863
      %v5880 = vmul.f32 %v5856, %v5866
      %v5881 = vmul.f32 %v5857, %v5865
      %v5882 = vpack.c.bf16 %v5873, %v5870
      %v5883 = vpack.c.bf16 %v5874, %v5871
      %v5884 = vpack.c.bf16 %v5875, %v5872
      %v5885 = vpack.c.bf16 %v5879, %v5876
      %v5886 = vpack.c.bf16 %v5880, %v5877
      %v5887 = vpack.c.bf16 %v5881, %v5878
      %v5888 = vld [vmem:[%s16] sm:$0xf]
      %v5889 = vld [vmem:[%s16 + $0x4] sm:$0xf]
      %s5890 = scalar_lea.vmem %s16, 8
      %v5891 = vld [vmem:[%s5890] sm:$0xf]
      %v5892 = vld [vmem:[%s5890 + $0x4] sm:$0xf]
      %v5895 = vunpack.c.l.b16 %v5891
      %v5896 = vunpack.c.l.b16 %v5892
      %v5897 = vpack.c.b16 %v5896, %v5895
      %v5906 = vunpack.c.l.b16 %v5824
      %v5907 = vunpack.c.h.b16 %v5824
      %v5908 = vunpack.c.l.b16 %v5825
      %v5909 = vunpack.c.l.b16 %v5826
      %v5910 = vunpack.c.h.b16 %v5826
      %v5911 = vunpack.c.l.b16 %v5827
      %v5912 = vunpack.c.l.b16 %v5828
      %v5913 = vunpack.c.h.b16 %v5828
      %v5914 = vunpack.c.l.b16 %v5829
      %v5915 = vunpack.c.l.b16 %v5830
      %v5916 = vunpack.c.h.b16 %v5830
      %v5917 = vunpack.c.l.b16 %v5831
      %v5918 = vpack.c.b16 %v5909, %v5906
      %v5919 = vpack.c.b16 %v5910, %v5907
      %v5920 = vpack.c.b16 %v5911, %v5908
      %v5921 = vpack.c.b16 %v5915, %v5912
      %v5922 = vpack.c.b16 %v5916, %v5913
      %v5923 = vpack.c.b16 %v5917, %v5914
      %5924 = vrot.lane.b32.xlu0 %v5918, 16
      %v5925 = vpop.permute.xlu0 %5924
      %5926 = vrot.lane.b32.xlu0 %v5919, 16
      %v5927 = vpop.permute.xlu0 %5926
      %5928 = vrot.lane.b32.xlu0 %v5920, 16
      %v5929 = vpop.permute.xlu0 %5928
      %5930 = vrot.lane.b32.xlu0 %v5921, 16
      %v5931 = vpop.permute.xlu0 %5930
      %5932 = vrot.lane.b32.xlu0 %v5922, 16
      %v5933 = vpop.permute.xlu0 %5932
      %5934 = vrot.lane.b32.xlu0 %v5923, 16
      %v5935 = vpop.permute.xlu0 %5934
      %v5936 = vsel %vm666, %v5925, %v5927
      %v5937 = vsel %vm666, %v5927, %v5929
      %v5938 = vsel %vm666, %v5931, %v5933
      %v5939 = vsel %vm666, %v5933, %v5935
      %v5945 = vsel %vm4155, %v5897, 0
      %5947 = vmatpush.bf16.msra.mxu0 0
      %5948 = vmatpush.bf16.msra.mxu0 0
      %5949 = vmatpush.bf16.msra.mxu0 0
      %5950 = vmatpush.bf16.msra.mxu0 0
      %5951 = vmatpush.bf16.msra.mxu0 0
      %5952 = vmatpush.bf16.msra.mxu0 0
      %5953 = vmatpush.bf16.msra.mxu0 %v5938
      %5954 = vmatpush.bf16.msra.mxu0 %v5936
      %5955 = vmatmul.bf16.gmra.mxu0 %v5945
      %v5956 = vpop.f32.mrf.mxu0
      %v5957 = vadd.f32 0.0, %v5956
      %v5958 = vpop.f32.mrf.mxu0
      %v5959 = vadd.f32 0.0, %v5958
      %5960 = vdwg.mxu0
      %5961 = vmatpush.bf16.msra.mxu0 0
      %5962 = vmatpush.bf16.msra.mxu0 0
      %5963 = vmatpush.bf16.msra.mxu0 0
      %5964 = vmatpush.bf16.msra.mxu0 0
      %5965 = vmatpush.bf16.msra.mxu0 0
      %5966 = vmatpush.bf16.msra.mxu0 0
      %5967 = vmatpush.bf16.msra.mxu0 %v5939
      %5968 = vmatpush.bf16.msra.mxu0 %v5937
      %5969 = vmatmul.bf16.gmra.mxu0 %v5945
      %v5970 = vpop.f32.mrf.mxu0
      %v5971 = vadd.f32 0.0, %v5970
      %v5972 = vpop.f32.mrf.mxu0
      %v5973 = vadd.f32 0.0, %v5972
      %5974 = vdwg.mxu0
      %v5977 = vunpack.c.l.b16 %v5888
      %v5978 = vunpack.c.l.b16 %v5889
      %v5979 = vpack.c.b16 %v5978, %v5977
      %5986 = vrot.lane.b32.xlu0 %v5882, 17
      %v5987 = vpop.permute.xlu0 %5986
      %5988 = vrot.lane.b32.xlu0 %v5883, 17
      %v5989 = vpop.permute.xlu0 %5988
      %5990 = vrot.lane.b32.xlu0 %v5884, 17
      %v5991 = vpop.permute.xlu0 %5990
      %5992 = vrot.lane.b32.xlu0 %v5885, 17
      %v5993 = vpop.permute.xlu0 %5992
      %5994 = vrot.lane.b32.xlu0 %v5886, 17
      %v5995 = vpop.permute.xlu0 %5994
      %5996 = vrot.lane.b32.xlu0 %v5887, 17
      %v5997 = vpop.permute.xlu0 %5996
      %v5998 = vsel %vm717, %v5987, %v5989
      %v5999 = vsel %vm717, %v5989, %v5991
      %v6000 = vsel %vm717, %v5993, %v5995
      %v6001 = vsel %vm717, %v5995, %v5997
      %v6007 = vsel %vm4155, %v5979, 0
      %6009 = vmatpush.bf16.msra.mxu0 0
      %6010 = vmatpush.bf16.msra.mxu0 0
      %6011 = vmatpush.bf16.msra.mxu0 0
      %6012 = vmatpush.bf16.msra.mxu0 0
      %6013 = vmatpush.bf16.msra.mxu0 0
      %6014 = vmatpush.bf16.msra.mxu0 0
      %6015 = vmatpush.bf16.msra.mxu0 %v6000
      %6016 = vmatpush.bf16.msra.mxu0 %v5998
      %6017 = vmatmul.bf16.gmra.mxu0 %v6007
      %v6018 = vpop.f32.mrf.mxu0
      %v6019 = vadd.f32 %v5957, %v6018
      %v6020 = vpop.f32.mrf.mxu0
      %v6021 = vadd.f32 %v5959, %v6020
      %6022 = vdwg.mxu0
      %6023 = vmatpush.bf16.msra.mxu0 0
      %6024 = vmatpush.bf16.msra.mxu0 0
      %6025 = vmatpush.bf16.msra.mxu0 0
      %6026 = vmatpush.bf16.msra.mxu0 0
      %6027 = vmatpush.bf16.msra.mxu0 0
      %6028 = vmatpush.bf16.msra.mxu0 0
      %6029 = vmatpush.bf16.msra.mxu0 %v6001
      %6030 = vmatpush.bf16.msra.mxu0 %v5999
      %6031 = vmatmul.bf16.gmra.mxu0 %v6007
      %v6032 = vpop.f32.mrf.mxu0
      %v6033 = vadd.f32 %v5971, %v6032
      %v6034 = vpop.f32.mrf.mxu0
      %v6035 = vadd.f32 %v5973, %v6034
      %6036 = vdwg.mxu0
      %v6037 = vshrl.u32 %v5836, 16
      %v6038 = vpack.i.b16 %v6037, %v6037
      %v6040 = vperm.slane %v6038, 0
      %v6041 = vshrl.u32 %v5837, 16
      %v6042 = vpack.i.b16 %v6041, %v6041
      %v6044 = vperm.slane %v6042, 0
      %v6045 = vunpack.c.l.bf16 %v6040
      %v6046 = vunpack.c.l.bf16 %v6044
      %6049 = vrot.lane.b32.xlu0 %v6045, 113
      %v6050 = vpop.permute.xlu0 %6049
      %6051 = vrot.lane.b32.xlu0 %v6046, 113
      %v6052 = vpop.permute.xlu0 %6051
      %v6053 = vsel %vm769, %v6050, %v6052
      %v6057 = vmul.f32 %v5846, %v6050
      %v6058 = vmul.f32 %v5847, %v6053
      %v6059 = vmul.f32 %v5848, %v6052
      %v6060 = vmul.f32 %v5849, %v6050
      %v6061 = vmul.f32 %v5850, %v6053
      %v6062 = vmul.f32 %v5851, %v6052
      %v6063 = vmul.f32 %v5852, %v6050
      %v6064 = vmul.f32 %v5853, %v6053
      %v6065 = vmul.f32 %v5854, %v6052
      %v6066 = vmul.f32 %v5855, %v6050
      %v6067 = vmul.f32 %v5856, %v6053
      %v6068 = vmul.f32 %v5857, %v6052
      %v6069 = vpack.c.bf16 %v6060, %v6057
      %v6070 = vpack.c.bf16 %v6061, %v6058
      %v6071 = vpack.c.bf16 %v6062, %v6059
      %v6072 = vpack.c.bf16 %v6066, %v6063
      %v6073 = vpack.c.bf16 %v6067, %v6064
      %v6074 = vpack.c.bf16 %v6068, %v6065
      %s6075 = scalar_lea.vmem %s16, 16
      %v6076 = vld [vmem:[%s6075] sm:$0xf]
      %v6077 = vld [vmem:[%s6075 + $0x4] sm:$0xf]
      %v6080 = vunpack.c.l.b16 %v6076
      %v6081 = vunpack.c.l.b16 %v6077
      %v6082 = vpack.c.b16 %v6081, %v6080
      %6089 = vrot.lane.b32.xlu0 %v6069, 15
      %v6090 = vpop.permute.xlu0 %6089
      %6091 = vrot.lane.b32.xlu0 %v6070, 15
      %v6092 = vpop.permute.xlu0 %6091
      %6093 = vrot.lane.b32.xlu0 %v6071, 15
      %v6094 = vpop.permute.xlu0 %6093
      %6095 = vrot.lane.b32.xlu0 %v6072, 15
      %v6096 = vpop.permute.xlu0 %6095
      %6097 = vrot.lane.b32.xlu0 %v6073, 15
      %v6098 = vpop.permute.xlu0 %6097
      %6099 = vrot.lane.b32.xlu0 %v6074, 15
      %v6100 = vpop.permute.xlu0 %6099
      %v6101 = vsel %vm800, %v6090, %v6092
      %v6102 = vsel %vm800, %v6092, %v6094
      %v6103 = vsel %vm800, %v6096, %v6098
      %v6104 = vsel %vm800, %v6098, %v6100
      %v6110 = vsel %vm4155, %v6082, 0
      %6112 = vmatpush.bf16.msra.mxu0 0
      %6113 = vmatpush.bf16.msra.mxu0 0
      %6114 = vmatpush.bf16.msra.mxu0 0
      %6115 = vmatpush.bf16.msra.mxu0 0
      %6116 = vmatpush.bf16.msra.mxu0 0
      %6117 = vmatpush.bf16.msra.mxu0 0
      %6118 = vmatpush.bf16.msra.mxu0 %v6103
      %6119 = vmatpush.bf16.msra.mxu0 %v6101
      %6120 = vmatmul.bf16.gmra.mxu0 %v6110
      %v6121 = vpop.f32.mrf.mxu0
      %v6122 = vadd.f32 0.0, %v6121
      %v6123 = vpop.f32.mrf.mxu0
      %v6124 = vadd.f32 0.0, %v6123
      %6125 = vdwg.mxu0
      %6126 = vmatpush.bf16.msra.mxu0 0
      %6127 = vmatpush.bf16.msra.mxu0 0
      %6128 = vmatpush.bf16.msra.mxu0 0
      %6129 = vmatpush.bf16.msra.mxu0 0
      %6130 = vmatpush.bf16.msra.mxu0 0
      %6131 = vmatpush.bf16.msra.mxu0 0
      %6132 = vmatpush.bf16.msra.mxu0 %v6104
      %6133 = vmatpush.bf16.msra.mxu0 %v6102
      %6134 = vmatmul.bf16.gmra.mxu0 %v6110
      %v6135 = vpop.f32.mrf.mxu0
      %v6136 = vadd.f32 0.0, %v6135
      %v6137 = vpop.f32.mrf.mxu0
      %v6138 = vadd.f32 0.0, %v6137
      %6139 = vdwg.mxu0
      %v6140 = vadd.f32 %v6019, %v6122
      %v6141 = vadd.f32 %v6033, %v6136
      %v6142 = vadd.f32 %v6021, %v6124
      %v6143 = vadd.f32 %v6035, %v6138
      %6144 = vrot.lane.b32.xlu0 %v5858, 127
      %v6145 = vpop.permute.xlu0 %6144
      %6146 = vrot.lane.b32.xlu0 %v5859, 127
      %v6147 = vpop.permute.xlu0 %6146
      %v6148 = vsel %vm844, %v6145, %v6147
      %v6152 = vmul.f32 %v5846, %v6145
      %v6153 = vmul.f32 %v5847, %v6148
      %v6154 = vmul.f32 %v5848, %v6147
      %v6155 = vmul.f32 %v5849, %v6145
      %v6156 = vmul.f32 %v5850, %v6148
      %v6157 = vmul.f32 %v5851, %v6147
      %v6158 = vmul.f32 %v5852, %v6145
      %v6159 = vmul.f32 %v5853, %v6148
      %v6160 = vmul.f32 %v5854, %v6147
      %v6161 = vmul.f32 %v5855, %v6145
      %v6162 = vmul.f32 %v5856, %v6148
      %v6163 = vmul.f32 %v5857, %v6147
      %v6164 = vpack.c.bf16 %v6155, %v6152
      %v6165 = vpack.c.bf16 %v6156, %v6153
      %v6166 = vpack.c.bf16 %v6157, %v6154
      %v6167 = vpack.c.bf16 %v6161, %v6158
      %v6168 = vpack.c.bf16 %v6162, %v6159
      %v6169 = vpack.c.bf16 %v6163, %v6160
      %s6170 = scalar_lea.vmem %s16, 24
      %v6171 = vld [vmem:[%s6170] sm:$0xf]
      %v6172 = vld [vmem:[%s6170 + $0x4] sm:$0xf]
      %v6175 = vunpack.c.l.b16 %v6171
      %v6176 = vunpack.c.l.b16 %v6172
      %v6177 = vpack.c.b16 %v6176, %v6175
      %6184 = vrot.lane.b32.xlu0 %v6164, 1
      %v6185 = vpop.permute.xlu0 %6184
      %6186 = vrot.lane.b32.xlu0 %v6165, 1
      %v6187 = vpop.permute.xlu0 %6186
      %6188 = vrot.lane.b32.xlu0 %v6166, 1
      %v6189 = vpop.permute.xlu0 %6188
      %6190 = vrot.lane.b32.xlu0 %v6167, 1
      %v6191 = vpop.permute.xlu0 %6190
      %6192 = vrot.lane.b32.xlu0 %v6168, 1
      %v6193 = vpop.permute.xlu0 %6192
      %6194 = vrot.lane.b32.xlu0 %v6169, 1
      %v6195 = vpop.permute.xlu0 %6194
      %v6196 = vsel %vm875, %v6185, %v6187
      %v6197 = vsel %vm875, %v6187, %v6189
      %v6198 = vsel %vm875, %v6191, %v6193
      %v6199 = vsel %vm875, %v6193, %v6195
      %v6205 = vsel %vm4155, %v6177, 0
      %6207 = vmatpush.bf16.msra.mxu0 0
      %6208 = vmatpush.bf16.msra.mxu0 0
      %6209 = vmatpush.bf16.msra.mxu0 0
      %6210 = vmatpush.bf16.msra.mxu0 0
      %6211 = vmatpush.bf16.msra.mxu0 0
      %6212 = vmatpush.bf16.msra.mxu0 0
      %6213 = vmatpush.bf16.msra.mxu0 %v6198
      %6214 = vmatpush.bf16.msra.mxu0 %v6196
      %6215 = vmatmul.bf16.gmra.mxu0 %v6205
      %v6216 = vpop.f32.mrf.mxu0
      %v6217 = vadd.f32 0.0, %v6216
      %v6218 = vpop.f32.mrf.mxu0
      %v6219 = vadd.f32 0.0, %v6218
      %6220 = vdwg.mxu0
      %6221 = vmatpush.bf16.msra.mxu0 0
      %6222 = vmatpush.bf16.msra.mxu0 0
      %6223 = vmatpush.bf16.msra.mxu0 0
      %6224 = vmatpush.bf16.msra.mxu0 0
      %6225 = vmatpush.bf16.msra.mxu0 0
      %6226 = vmatpush.bf16.msra.mxu0 0
      %6227 = vmatpush.bf16.msra.mxu0 %v6199
      %6228 = vmatpush.bf16.msra.mxu0 %v6197
      %6229 = vmatmul.bf16.gmra.mxu0 %v6205
      %v6230 = vpop.f32.mrf.mxu0
      %v6231 = vadd.f32 0.0, %v6230
      %v6232 = vpop.f32.mrf.mxu0
      %v6233 = vadd.f32 0.0, %v6232
      %6234 = vdwg.mxu0
      %v6235 = vadd.f32 %v6140, %v6217
      %v6236 = vadd.f32 %v6141, %v6231
      %v6237 = vadd.f32 %v6142, %v6219
      %v6238 = vadd.f32 %v6143, %v6233
      %v6239 = vld [vmem:[#allocation2 + $0x8] sm:$0xff]
      %v6240 = vld [vmem:[#allocation2 + $0x20] sm:$0xff]
      %v6241 = vld [vmem:[#allocation2 + $0x38] sm:$0xff]
      %v6242 = vld [vmem:[#allocation2 + $0x50] sm:$0xff]
      %s6243 = scalar_lea.vmem %s16, 32
      %v6244 = vld [vmem:[%s6243] sm:$0xf]
      %v6245 = vld [vmem:[%s6243 + $0x4] sm:$0xf]
      %v6248 = vunpack.c.l.b16 %v6244
      %v6249 = vunpack.c.l.b16 %v6245
      %v6250 = vpack.c.b16 %v6249, %v6248
      %v6255 = vunpack.c.l.b16 %v6239
      %v6256 = vunpack.c.h.b16 %v6239
      %v6257 = vunpack.c.l.b16 %v6240
      %v6258 = vunpack.c.h.b16 %v6240
      %v6259 = vunpack.c.l.b16 %v6241
      %v6260 = vunpack.c.h.b16 %v6241
      %v6261 = vunpack.c.l.b16 %v6242
      %v6262 = vunpack.c.h.b16 %v6242
      %v6263 = vpack.c.b16 %v6257, %v6255
      %v6264 = vpack.c.b16 %v6258, %v6256
      %v6265 = vpack.c.b16 %v6261, %v6259
      %v6266 = vpack.c.b16 %v6262, %v6260
      %v6272 = vsel %vm4155, %v6250, 0
      %6274 = vmatpush.bf16.msra.mxu0 0
      %6275 = vmatpush.bf16.msra.mxu0 0
      %6276 = vmatpush.bf16.msra.mxu0 0
      %6277 = vmatpush.bf16.msra.mxu0 0
      %6278 = vmatpush.bf16.msra.mxu0 0
      %6279 = vmatpush.bf16.msra.mxu0 0
      %6280 = vmatpush.bf16.msra.mxu0 %v6265
      %6281 = vmatpush.bf16.msra.mxu0 %v6263
      %6282 = vmatmul.bf16.gmra.mxu0 %v6272
      %v6283 = vpop.f32.mrf.mxu0
      %v6284 = vadd.f32 0.0, %v6283
      %v6285 = vpop.f32.mrf.mxu0
      %v6286 = vadd.f32 0.0, %v6285
      %6287 = vdwg.mxu0
      %6288 = vmatpush.bf16.msra.mxu0 0
      %6289 = vmatpush.bf16.msra.mxu0 0
      %6290 = vmatpush.bf16.msra.mxu0 0
      %6291 = vmatpush.bf16.msra.mxu0 0
      %6292 = vmatpush.bf16.msra.mxu0 0
      %6293 = vmatpush.bf16.msra.mxu0 0
      %6294 = vmatpush.bf16.msra.mxu0 %v6266
      %6295 = vmatpush.bf16.msra.mxu0 %v6264
      %6296 = vmatmul.bf16.gmra.mxu0 %v6272
      %v6297 = vpop.f32.mrf.mxu0
      %v6298 = vadd.f32 0.0, %v6297
      %v6299 = vpop.f32.mrf.mxu0
      %v6300 = vadd.f32 0.0, %v6299
      %6301 = vdwg.mxu0
      %v6302 = vadd.f32 %v6235, %v6284
      %v6303 = vadd.f32 %v6236, %v6298
      %v6304 = vadd.f32 %v6237, %v6286
      %v6305 = vadd.f32 %v6238, %v6300
      %v6306 = vld [vmem:[#allocation2 + $0x8] sm:$0xff]
      %v6307 = vld [vmem:[#allocation2 + $0x10] sm:$0xf]
      %v6308 = vld [vmem:[#allocation2 + $0x20] sm:$0xff]
      %v6309 = vld [vmem:[#allocation2 + $0x28] sm:$0xf]
      %v6310 = vld [vmem:[#allocation2 + $0x38] sm:$0xff]
      %v6311 = vld [vmem:[#allocation2 + $0x40] sm:$0xf]
      %v6312 = vld [vmem:[#allocation2 + $0x50] sm:$0xff]
      %v6313 = vld [vmem:[#allocation2 + $0x58] sm:$0xf]
      %v6314 = vunpack.c.l.bf16 %v6306
      %v6315 = vunpack.c.h.bf16 %v6306
      %v6316 = vunpack.c.l.bf16 %v6307
      %v6317 = vunpack.c.l.bf16 %v6308
      %v6318 = vunpack.c.h.bf16 %v6308
      %v6319 = vunpack.c.l.bf16 %v6309
      %v6320 = vunpack.c.l.bf16 %v6310
      %v6321 = vunpack.c.h.bf16 %v6310
      %v6322 = vunpack.c.l.bf16 %v6311
      %v6323 = vunpack.c.l.bf16 %v6312
      %v6324 = vunpack.c.h.bf16 %v6312
      %v6325 = vunpack.c.l.bf16 %v6313
      %6326 = vrot.lane.b32.xlu0 %v6045, 1
      %v6327 = vpop.permute.xlu0 %6326
      %6328 = vrot.lane.b32.xlu0 %v6046, 1
      %v6329 = vpop.permute.xlu0 %6328
      %v6330 = vsel %vm984, %v6327, %v6329
      %v6334 = vmul.f32 %v6314, %v6327
      %v6335 = vmul.f32 %v6315, %v6330
      %v6336 = vmul.f32 %v6316, %v6329
      %v6337 = vmul.f32 %v6317, %v6327
      %v6338 = vmul.f32 %v6318, %v6330
      %v6339 = vmul.f32 %v6319, %v6329
      %v6340 = vmul.f32 %v6320, %v6327
      %v6341 = vmul.f32 %v6321, %v6330
      %v6342 = vmul.f32 %v6322, %v6329
      %v6343 = vmul.f32 %v6323, %v6327
      %v6344 = vmul.f32 %v6324, %v6330
      %v6345 = vmul.f32 %v6325, %v6329
      %v6346 = vpack.c.bf16 %v6337, %v6334
      %v6347 = vpack.c.bf16 %v6338, %v6335
      %v6348 = vpack.c.bf16 %v6339, %v6336
      %v6349 = vpack.c.bf16 %v6343, %v6340
      %v6350 = vpack.c.bf16 %v6344, %v6341
      %v6351 = vpack.c.bf16 %v6345, %v6342
      %s6352 = scalar_lea.vmem %s16, 40
      %v6353 = vld [vmem:[%s6352] sm:$0xf]
      %v6354 = vld [vmem:[%s6352 + $0x4] sm:$0xf]
      %v6357 = vunpack.c.l.b16 %v6353
      %v6358 = vunpack.c.l.b16 %v6354
      %v6359 = vpack.c.b16 %v6358, %v6357
      %6366 = vrot.lane.b32.xlu0 %v6346, 127
      %v6367 = vpop.permute.xlu0 %6366
      %6368 = vrot.lane.b32.xlu0 %v6347, 127
      %v6369 = vpop.permute.xlu0 %6368
      %6370 = vrot.lane.b32.xlu0 %v6348, 127
      %v6371 = vpop.permute.xlu0 %6370
      %6372 = vrot.lane.b32.xlu0 %v6349, 127
      %v6373 = vpop.permute.xlu0 %6372
      %6374 = vrot.lane.b32.xlu0 %v6350, 127
      %v6375 = vpop.permute.xlu0 %6374
      %6376 = vrot.lane.b32.xlu0 %v6351, 127
      %v6377 = vpop.permute.xlu0 %6376
      %v6378 = vsel %vm1015, %v6367, %v6369
      %v6379 = vsel %vm1015, %v6369, %v6371
      %v6380 = vsel %vm1015, %v6373, %v6375
      %v6381 = vsel %vm1015, %v6375, %v6377
      %v6387 = vsel %vm4155, %v6359, 0
      %6389 = vmatpush.bf16.msra.mxu0 0
      %6390 = vmatpush.bf16.msra.mxu0 0
      %6391 = vmatpush.bf16.msra.mxu0 0
      %6392 = vmatpush.bf16.msra.mxu0 0
      %6393 = vmatpush.bf16.msra.mxu0 0
      %6394 = vmatpush.bf16.msra.mxu0 0
      %6395 = vmatpush.bf16.msra.mxu0 %v6380
      %6396 = vmatpush.bf16.msra.mxu0 %v6378
      %6397 = vmatmul.bf16.gmra.mxu0 %v6387
      %v6398 = vpop.f32.mrf.mxu0
      %v6399 = vadd.f32 0.0, %v6398
      %v6400 = vpop.f32.mrf.mxu0
      %v6401 = vadd.f32 0.0, %v6400
      %6402 = vdwg.mxu0
      %6403 = vmatpush.bf16.msra.mxu0 0
      %6404 = vmatpush.bf16.msra.mxu0 0
      %6405 = vmatpush.bf16.msra.mxu0 0
      %6406 = vmatpush.bf16.msra.mxu0 0
      %6407 = vmatpush.bf16.msra.mxu0 0
      %6408 = vmatpush.bf16.msra.mxu0 0
      %6409 = vmatpush.bf16.msra.mxu0 %v6381
      %6410 = vmatpush.bf16.msra.mxu0 %v6379
      %6411 = vmatmul.bf16.gmra.mxu0 %v6387
      %v6412 = vpop.f32.mrf.mxu0
      %v6413 = vadd.f32 0.0, %v6412
      %v6414 = vpop.f32.mrf.mxu0
      %v6415 = vadd.f32 0.0, %v6414
      %6416 = vdwg.mxu0
      %v6417 = vadd.f32 %v6302, %v6399
      %v6418 = vadd.f32 %v6303, %v6413
      %v6419 = vadd.f32 %v6304, %v6401
      %v6420 = vadd.f32 %v6305, %v6415
      %6421 = vrot.lane.b32.xlu0 %v5858, 15
      %v6422 = vpop.permute.xlu0 %6421
      %6423 = vrot.lane.b32.xlu0 %v5859, 15
      %v6424 = vpop.permute.xlu0 %6423
      %v6425 = vsel %vm1059, %v6422, %v6424
      %v6429 = vmul.f32 %v6314, %v6422
      %v6430 = vmul.f32 %v6315, %v6425
      %v6431 = vmul.f32 %v6316, %v6424
      %v6432 = vmul.f32 %v6317, %v6422
      %v6433 = vmul.f32 %v6318, %v6425
      %v6434 = vmul.f32 %v6319, %v6424
      %v6435 = vmul.f32 %v6320, %v6422
      %v6436 = vmul.f32 %v6321, %v6425
      %v6437 = vmul.f32 %v6322, %v6424
      %v6438 = vmul.f32 %v6323, %v6422
      %v6439 = vmul.f32 %v6324, %v6425
      %v6440 = vmul.f32 %v6325, %v6424
      %v6441 = vpack.c.bf16 %v6432, %v6429
      %v6442 = vpack.c.bf16 %v6433, %v6430
      %v6443 = vpack.c.bf16 %v6434, %v6431
      %v6444 = vpack.c.bf16 %v6438, %v6435
      %v6445 = vpack.c.bf16 %v6439, %v6436
      %v6446 = vpack.c.bf16 %v6440, %v6437
      %s6447 = scalar_lea.vmem %s16, 48
      %v6448 = vld [vmem:[%s6447] sm:$0xf]
      %v6449 = vld [vmem:[%s6447 + $0x4] sm:$0xf]
      %v6452 = vunpack.c.l.b16 %v6448
      %v6453 = vunpack.c.l.b16 %v6449
      %v6454 = vpack.c.b16 %v6453, %v6452
      %6461 = vrot.lane.b32.xlu0 %v6441, 113
      %v6462 = vpop.permute.xlu0 %6461
      %6463 = vrot.lane.b32.xlu0 %v6442, 113
      %v6464 = vpop.permute.xlu0 %6463
      %6465 = vrot.lane.b32.xlu0 %v6443, 113
      %v6466 = vpop.permute.xlu0 %6465
      %6467 = vrot.lane.b32.xlu0 %v6444, 113
      %v6468 = vpop.permute.xlu0 %6467
      %6469 = vrot.lane.b32.xlu0 %v6445, 113
      %v6470 = vpop.permute.xlu0 %6469
      %6471 = vrot.lane.b32.xlu0 %v6446, 113
      %v6472 = vpop.permute.xlu0 %6471
      %v6473 = vsel %vm1090, %v6462, %v6464
      %v6474 = vsel %vm1090, %v6464, %v6466
      %v6475 = vsel %vm1090, %v6468, %v6470
      %v6476 = vsel %vm1090, %v6470, %v6472
      %v6482 = vsel %vm4155, %v6454, 0
      %6484 = vmatpush.bf16.msra.mxu0 0
      %6485 = vmatpush.bf16.msra.mxu0 0
      %6486 = vmatpush.bf16.msra.mxu0 0
      %6487 = vmatpush.bf16.msra.mxu0 0
      %6488 = vmatpush.bf16.msra.mxu0 0
      %6489 = vmatpush.bf16.msra.mxu0 0
      %6490 = vmatpush.bf16.msra.mxu0 %v6475
      %6491 = vmatpush.bf16.msra.mxu0 %v6473
      %6492 = vmatmul.bf16.gmra.mxu0 %v6482
      %v6493 = vpop.f32.mrf.mxu0
      %v6494 = vadd.f32 0.0, %v6493
      %v6495 = vpop.f32.mrf.mxu0
      %v6496 = vadd.f32 0.0, %v6495
      %6497 = vdwg.mxu0
      %6498 = vmatpush.bf16.msra.mxu0 0
      %6499 = vmatpush.bf16.msra.mxu0 0
      %6500 = vmatpush.bf16.msra.mxu0 0
      %6501 = vmatpush.bf16.msra.mxu0 0
      %6502 = vmatpush.bf16.msra.mxu0 0
      %6503 = vmatpush.bf16.msra.mxu0 0
      %6504 = vmatpush.bf16.msra.mxu0 %v6476
      %6505 = vmatpush.bf16.msra.mxu0 %v6474
      %6506 = vmatmul.bf16.gmra.mxu0 %v6482
      %v6507 = vpop.f32.mrf.mxu0
      %v6508 = vadd.f32 0.0, %v6507
      %v6509 = vpop.f32.mrf.mxu0
      %v6510 = vadd.f32 0.0, %v6509
      %6511 = vdwg.mxu0
      %v6512 = vadd.f32 %v6417, %v6494
      %v6513 = vadd.f32 %v6418, %v6508
      %v6514 = vadd.f32 %v6419, %v6496
      %v6515 = vadd.f32 %v6420, %v6510
      %s6516 = scalar_lea.vmem %s16, 56
      %v6517 = vld [vmem:[%s6516] sm:$0xf]
      %v6518 = vld [vmem:[%s6516 + $0x4] sm:$0xf]
      %v6521 = vunpack.c.l.b16 %v6517
      %v6522 = vunpack.c.l.b16 %v6518
      %v6523 = vpack.c.b16 %v6522, %v6521
      %v6532 = vunpack.c.l.b16 %v6306
      %v6533 = vunpack.c.h.b16 %v6306
      %v6534 = vunpack.c.l.b16 %v6307
      %v6535 = vunpack.c.l.b16 %v6308
      %v6536 = vunpack.c.h.b16 %v6308
      %v6537 = vunpack.c.l.b16 %v6309
      %v6538 = vunpack.c.l.b16 %v6310
      %v6539 = vunpack.c.h.b16 %v6310
      %v6540 = vunpack.c.l.b16 %v6311
      %v6541 = vunpack.c.l.b16 %v6312
      %v6542 = vunpack.c.h.b16 %v6312
      %v6543 = vunpack.c.l.b16 %v6313
      %v6544 = vpack.c.b16 %v6535, %v6532
      %v6545 = vpack.c.b16 %v6536, %v6533
      %v6546 = vpack.c.b16 %v6537, %v6534
      %v6547 = vpack.c.b16 %v6541, %v6538
      %v6548 = vpack.c.b16 %v6542, %v6539
      %v6549 = vpack.c.b16 %v6543, %v6540
      %6550 = vrot.lane.b32.xlu0 %v6544, 112
      %v6551 = vpop.permute.xlu0 %6550
      %6552 = vrot.lane.b32.xlu0 %v6545, 112
      %v6553 = vpop.permute.xlu0 %6552
      %6554 = vrot.lane.b32.xlu0 %v6546, 112
      %v6555 = vpop.permute.xlu0 %6554
      %6556 = vrot.lane.b32.xlu0 %v6547, 112
      %v6557 = vpop.permute.xlu0 %6556
      %6558 = vrot.lane.b32.xlu0 %v6548, 112
      %v6559 = vpop.permute.xlu0 %6558
      %6560 = vrot.lane.b32.xlu0 %v6549, 112
      %v6561 = vpop.permute.xlu0 %6560
      %v6562 = vsel %vm1157, %v6551, %v6553
      %v6563 = vsel %vm1157, %v6553, %v6555
      %v6564 = vsel %vm1157, %v6557, %v6559
      %v6565 = vsel %vm1157, %v6559, %v6561
      %v6571 = vsel %vm4155, %v6523, 0
      %6573 = vmatpush.bf16.msra.mxu0 0
      %6574 = vmatpush.bf16.msra.mxu0 0
      %6575 = vmatpush.bf16.msra.mxu0 0
      %6576 = vmatpush.bf16.msra.mxu0 0
      %6577 = vmatpush.bf16.msra.mxu0 0
      %6578 = vmatpush.bf16.msra.mxu0 0
      %6579 = vmatpush.bf16.msra.mxu0 %v6564
      %6580 = vmatpush.bf16.msra.mxu0 %v6562
      %6581 = vmatmul.bf16.gmra.mxu0 %v6571
      %v6582 = vpop.f32.mrf.mxu0
      %v6583 = vadd.f32 0.0, %v6582
      %v6584 = vpop.f32.mrf.mxu0
      %v6585 = vadd.f32 0.0, %v6584
      %6586 = vdwg.mxu0
      %6587 = vmatpush.bf16.msra.mxu0 0
      %6588 = vmatpush.bf16.msra.mxu0 0
      %6589 = vmatpush.bf16.msra.mxu0 0
      %6590 = vmatpush.bf16.msra.mxu0 0
      %6591 = vmatpush.bf16.msra.mxu0 0
      %6592 = vmatpush.bf16.msra.mxu0 0
      %6593 = vmatpush.bf16.msra.mxu0 %v6565
      %6594 = vmatpush.bf16.msra.mxu0 %v6563
      %6595 = vmatmul.bf16.gmra.mxu0 %v6571
      %v6596 = vpop.f32.mrf.mxu0
      %v6597 = vadd.f32 0.0, %v6596
      %v6598 = vpop.f32.mrf.mxu0
      %v6599 = vadd.f32 0.0, %v6598
      %6600 = vdwg.mxu0
      %v6601 = vadd.f32 %v6512, %v6583
      %v6602 = vadd.f32 %v6513, %v6597
      %v6603 = vadd.f32 %v6514, %v6585
      %v6604 = vadd.f32 %v6515, %v6599
      %6605 = vrot.lane.b32.xlu0 %v6045, 17
      %v6606 = vpop.permute.xlu0 %6605
      %6607 = vrot.lane.b32.xlu0 %v6046, 17
      %v6608 = vpop.permute.xlu0 %6607
      %v6609 = vsel %vm1201, %v6606, %v6608
      %v6613 = vmul.f32 %v6314, %v6606
      %v6614 = vmul.f32 %v6315, %v6609
      %v6615 = vmul.f32 %v6316, %v6608
      %v6616 = vmul.f32 %v6317, %v6606
      %v6617 = vmul.f32 %v6318, %v6609
      %v6618 = vmul.f32 %v6319, %v6608
      %v6619 = vmul.f32 %v6320, %v6606
      %v6620 = vmul.f32 %v6321, %v6609
      %v6621 = vmul.f32 %v6322, %v6608
      %v6622 = vmul.f32 %v6323, %v6606
      %v6623 = vmul.f32 %v6324, %v6609
      %v6624 = vmul.f32 %v6325, %v6608
      %v6625 = vpack.c.bf16 %v6616, %v6613
      %v6626 = vpack.c.bf16 %v6617, %v6614
      %v6627 = vpack.c.bf16 %v6618, %v6615
      %v6628 = vpack.c.bf16 %v6622, %v6619
      %v6629 = vpack.c.bf16 %v6623, %v6620
      %v6630 = vpack.c.bf16 %v6624, %v6621
      %s6631 = scalar_lea.vmem %s16, 64
      %v6632 = vld [vmem:[%s6631] sm:$0xf]
      %v6633 = vld [vmem:[%s6631 + $0x4] sm:$0xf]
      %v6636 = vunpack.c.l.b16 %v6632
      %v6637 = vunpack.c.l.b16 %v6633
      %v6638 = vpack.c.b16 %v6637, %v6636
      %6645 = vrot.lane.b32.xlu0 %v6625, 111
      %v6646 = vpop.permute.xlu0 %6645
      %6647 = vrot.lane.b32.xlu0 %v6626, 111
      %v6648 = vpop.permute.xlu0 %6647
      %6649 = vrot.lane.b32.xlu0 %v6627, 111
      %v6650 = vpop.permute.xlu0 %6649
      %6651 = vrot.lane.b32.xlu0 %v6628, 111
      %v6652 = vpop.permute.xlu0 %6651
      %6653 = vrot.lane.b32.xlu0 %v6629, 111
      %v6654 = vpop.permute.xlu0 %6653
      %6655 = vrot.lane.b32.xlu0 %v6630, 111
      %v6656 = vpop.permute.xlu0 %6655
      %v6657 = vsel %vm1232, %v6646, %v6648
      %v6658 = vsel %vm1232, %v6648, %v6650
      %v6659 = vsel %vm1232, %v6652, %v6654
      %v6660 = vsel %vm1232, %v6654, %v6656
      %v6666 = vsel %vm4155, %v6638, 0
      %6668 = vmatpush.bf16.msra.mxu0 0
      %6669 = vmatpush.bf16.msra.mxu0 0
      %6670 = vmatpush.bf16.msra.mxu0 0
      %6671 = vmatpush.bf16.msra.mxu0 0
      %6672 = vmatpush.bf16.msra.mxu0 0
      %6673 = vmatpush.bf16.msra.mxu0 0
      %6674 = vmatpush.bf16.msra.mxu0 %v6659
      %6675 = vmatpush.bf16.msra.mxu0 %v6657
      %6676 = vmatmul.bf16.gmra.mxu0 %v6666
      %v6677 = vpop.f32.mrf.mxu0
      %v6678 = vadd.f32 0.0, %v6677
      %v6679 = vpop.f32.mrf.mxu0
      %v6680 = vadd.f32 0.0, %v6679
      %6681 = vdwg.mxu0
      %6682 = vmatpush.bf16.msra.mxu0 0
      %6683 = vmatpush.bf16.msra.mxu0 0
      %6684 = vmatpush.bf16.msra.mxu0 0
      %6685 = vmatpush.bf16.msra.mxu0 0
      %6686 = vmatpush.bf16.msra.mxu0 0
      %6687 = vmatpush.bf16.msra.mxu0 0
      %6688 = vmatpush.bf16.msra.mxu0 %v6660
      %6689 = vmatpush.bf16.msra.mxu0 %v6658
      %6690 = vmatmul.bf16.gmra.mxu0 %v6666
      %v6691 = vpop.f32.mrf.mxu0
      %v6692 = vadd.f32 0.0, %v6691
      %v6693 = vpop.f32.mrf.mxu0
      %v6694 = vadd.f32 0.0, %v6693
      %6695 = vdwg.mxu0
      %v6696 = vadd.f32 %v6601, %v6678
      %v6697 = vadd.f32 %v6602, %v6692
      %v6698 = vadd.f32 %v6603, %v6680
      %v6699 = vadd.f32 %v6604, %v6694
      %6701 = vset.pattern.permute.xlu0 0
      %6702 = vperm.xlu0 %6701, %v5818
      %v6703 = vpop.permute.xlu0 %6702
      %6706 = vset.pattern.permute.xlu0 0
      %6707 = vperm.xlu0 %6706, %v5819
      %v6708 = vpop.permute.xlu0 %6707
      %v6710 = vadd.f32 %v6696, %v6703
      %v6711 = vadd.f32 %v6697, %v6703
      %v6712 = vadd.f32 %v6698, %v6708
      %v6713 = vadd.f32 %v6699, %v6708
      %v6714 = vmax.f32 %v6710, 0.0
      %v6715 = vmax.f32 %v6711, 0.0
      %v6716 = vmax.f32 %v6712, 0.0
      %v6717 = vmax.f32 %v6713, 0.0
      %v6718 = vadd.f32 %v6714, %v1286
      %v6719 = vadd.f32 %v6715, %v1287
      %v6720 = vadd.f32 %v6716, %v1288
      %v6721 = vadd.f32 %v6717, %v1289
      %6722 = vst [vmem:[%s575] sm:$0xff] %v6718
      %6723 = vst [vmem:[%s575 + $0x8] sm:$0xff] %v6719
      %6724 = vst [vmem:[%s575 + $0x10] sm:$0xff] %v6720
      %6725 = vst [vmem:[%s575 + $0x18] sm:$0xff] %v6721
      %p6726 = scmp.lt.s32.totalorder %s29, 1
      %s6727 = scalar_select %p6726, %s29, 1
      %s6728 = smul.addr %s6727, 4
      %s6729 = smul.addr %s6728, 8
      %s6730 = scalar_lea.vmem %s18, %s6729
      // Predicated region
      $region93: #{rsu4f_forward.1} parent=91 // pred_check
        %p6731 = pneg %p430
      $region94: #{rsu4f_forward.1} parent=91 // pred_check_branch
        %6733 = sbr.rel (%p6731) target = $region96
      $region95: #{rsu4f_forward.1} parent=91 // pred_region
        _
      $region96: #{rsu4f_forward.1} parent=91 // pred_fallthru
        _
    $region92: #{rsu4f_forward.1} parent=5 // pred_fallthru
      _
    %p6734 = scmp.le.s32.totalorder 2, %s24
    // Predicated region
    $region97: #{rsu4f_forward.1} parent=5 // pred_check
      %p6735 = pneg %p6734
    $region98: #{rsu4f_forward.1} parent=5 // pred_check_branch
      %6737 = sbr.rel (%p6735) target = $region100
    $region99: #{rsu4f_forward.1} parent=5 // pred_region
      %s6738 = ssub.s32 %s24, 2
      // Predicated region
      $region101: #{rsu4f_forward.1} parent=99 // pred_check
        %p6739 = pneg %p436
      $region102: #{rsu4f_forward.1} parent=99 // pred_check_branch
        %6741 = sbr.rel (%p6739) target = $region104
      $region103: #{rsu4f_forward.1} parent=99 // pred_region
        %p6742 = scmp.lt.s32.totalorder %s30, 1
        %s6743 = scalar_select %p6742, %s30, 1
        %s6744 = smul.addr %s6743, 4
        %s6745 = smul.addr %s6744, 8
        %s6746 = scalar_lea.vmem %s18, %s6745
      $region104: #{rsu4f_forward.1} parent=99 // pred_fallthru
        _
    $region100: #{rsu4f_forward.1} parent=5 // pred_fallthru
      _
  $region6: #{rsu4f_forward.1} parent=0 // loop_footer
    %s28 = sadd.s32 1, %s24
  $region7: #{rsu4f_forward.1} parent=0 // loop_footer_branch
    %23 = sbr.rel target = $region3
  $region8: #{rsu4f_forward.1} parent=0 // loop_exit
    _

</llo_original>
